<compile_context>
chip_gen: v5e
topology: v5e:2x2
jax: 0.10.0
libtpu: 0.0.40
codegen_flags: <defaults>
</compile_context>

<pallas_src>
import jax
import jax.numpy as jnp
from jax.experimental import pallas as pl
from jax.experimental.pallas import tpu as pltpu

HIDDEN = 1024


def _fqe_kernel(x_ref,
                w1_ref, b1_ref,
                w2_ref, b2_ref,
                w3_ref, b3_ref,
                w4_ref, b4_ref,
                w5_ref, b5_ref,
                o_ref):
    """Fused 5-layer MLP for one (TM, input_dim) batch tile."""
    # ---- Layer 1: bf16 MXU matmul over the pre-concatenated input, f32 accumulate. ----
    h = jnp.dot(x_ref[...], w1_ref[...],
                preferred_element_type=jnp.float32) + b1_ref[...]
    h = jnp.maximum(h, 0.0)                          # f32 ReLU on the VPU (v5e-safe)

    # ---- Layers 2-4: bf16 MXU matmul, f32 accumulation, f32 bias + ReLU. ----
    for w_ref, b_ref in ((w2_ref, b2_ref), (w3_ref, b3_ref), (w4_ref, b4_ref)):
        h = jnp.dot(h.astype(jnp.bfloat16), w_ref[...],
                    preferred_element_type=jnp.float32) + b_ref[...]
        h = jnp.maximum(h, 0.0)

    # ---- Layer 5 (1024 -> 1): VPU multiply + cross-lane reduce, no N=1 MXU pass. ----
    out = jnp.sum(h * w5_ref[...].astype(jnp.float32), axis=-1, keepdims=True)
    o_ref[...] = (out + b5_ref[...]).astype(o_ref.dtype)


def _pick_tm(batch: int) -> int:
    """Batch tile size.

    * Cap at 512 rows: fewer grid steps (~0.35 us/step), taller MXU M per layer.
    * When the batch is big enough, target >= 2 tiles so both v7x TensorCores get
      work; on 1-TC v5e/v6e the extra tile is just a cheap second grid step.
    """
    cap = 512
    b8 = max(8, -(-batch // 8) * 8)          # round batch up to a sublane multiple
    half = -(-b8 // 2)                       # ceil(b8 / 2)
    half = -(-half // 8) * 8                 # ... rounded up to a multiple of 8
    return max(8, min(cap, half))


def fqe_forward(obs, action, params):
    """obs: (B, obs_dim), action: (B, act_dim); returns (B, 1) f32."""
    B = obs.shape[0]
    (w1, b1), (w2, b2), (w3, b3), (w4, b4), (w5, b5) = params
    input_dim = w1.shape[0]

    # Concat once in the wrapper (single K=input_dim layer-1 matmul in the kernel).
    x = jnp.concatenate([obs, action], axis=1).astype(jnp.bfloat16)
    assert x.shape[1] == input_dim, (x.shape, input_dim)
    w5_row = w5.reshape(1, HIDDEN)           # (1, HIDDEN) for the VPU reduce

    # Pad the batch so it tiles cleanly; slice the padding off at the end.
    tm = _pick_tm(B)
    num_tiles = pl.cdiv(B, tm)
    b_pad = num_tiles * tm
    if b_pad != B:
        x = jnp.pad(x, ((0, b_pad - B), (0, 0)))

    # Constant-index weight/bias blocks: fetched once, held SINGLE-buffered in VMEM.
    _single = {"pipeline_mode": pl.Buffered(1)} if hasattr(pl, "Buffered") else {}

    def const_spec(a):
        return pl.BlockSpec(a.shape, lambda i: (0, 0), **_single)

    out = pl.pallas_call(
        _fqe_kernel,
        out_shape=jax.ShapeDtypeStruct((b_pad, 1), jnp.float32),
        grid=(num_tiles,),
        in_specs=[
            pl.BlockSpec((tm, input_dim), lambda i: (i, 0)),   # input tile (pipelined)
            const_spec(w1), const_spec(b1),
            const_spec(w2), const_spec(b2),
            const_spec(w3), const_spec(b3),
            const_spec(w4), const_spec(b4),
            const_spec(w5_row), const_spec(b5),
        ],
        out_specs=pl.BlockSpec((tm, 1), lambda i: (i, 0)),
        compiler_params=pltpu.CompilerParams(
            dimension_semantics=(pltpu.PARALLEL,),             # batch tiles split across TCs
            vmem_limit_bytes=40 * 1024 * 1024,                 # fits v7x 64 MiB physical
        ),
    )(x, w1, b1, w2, b2, w3, b3, w4, b4, w5_row, b5)

    return out[:B]


def init_params(key, input_dim):
    """Synthetic parameters with nn.Linear-style init.

    Weights stored as (in_features, out_features) bf16 (y = x @ W + b, i.e. the
    transpose of PyTorch's (out, in) storage); biases stored as (1, out) f32."""
    dims = [(input_dim, HIDDEN), (HIDDEN, HIDDEN), (HIDDEN, HIDDEN),
            (HIDDEN, HIDDEN), (HIDDEN, 1)]
    params = []
    for din, dout in dims:
        key, kw, kb = jax.random.split(key, 3)
        bound = 1.0 / jnp.sqrt(din)
        w = jax.random.uniform(kw, (din, dout), jnp.float32, -bound, bound)
        b = jax.random.uniform(kb, (1, dout), jnp.float32, -bound, bound)
        params.append((w.astype(jnp.bfloat16), b))
    return params


def fqe_reference(obs, action, params):
    """Pure-JAX reference mirroring the kernel's precision policy
    (bf16 matmul inputs, f32 accumulation / elementwise)."""
    (w1, b1), (w2, b2), (w3, b3), (w4, b4), (w5, b5) = params
    x = jnp.concatenate([obs, action], axis=1).astype(jnp.bfloat16)
    h = jnp.dot(x, w1, preferred_element_type=jnp.float32) + b1
    h = jnp.maximum(h, 0.0)
    for w, b in ((w2, b2), (w3, b3), (w4, b4)):
        h = jnp.dot(h.astype(jnp.bfloat16), w, preferred_element_type=jnp.float32) + b
        h = jnp.maximum(h, 0.0)
    out = jnp.dot(h, w5.astype(jnp.float32), preferred_element_type=jnp.float32) + b5
    return out


if __name__ == "__main__":
    key = jax.random.PRNGKey(0)
    k_obs, k_act, k_param = jax.random.split(key, 3)

    B, OBS_DIM, ACT_DIM = 2, 24, 8           # input_dim = 32
    obs = jax.random.normal(k_obs, (B, OBS_DIM), jnp.float32)
    action = jax.random.normal(k_act, (B, ACT_DIM), jnp.float32)

    params = init_params(k_param, OBS_DIM + ACT_DIM)

    out = fqe_forward(obs, action, params)
    out = jax.block_until_ready(out)

    ref = fqe_reference(obs, action, params)
    assert out.shape == (B, 1), out.shape
    assert jnp.allclose(out, ref, atol=1e-2, rtol=1e-2), (out, ref)

    print("KERNEL_OK")
</pallas_src>

<mosaic_0001>
module attributes {stable_mosaic.version = 11 : i64} {
  func.func @_fqe_kernel(%arg0: i32, %arg1: memref<8x32xbf16, #tpu.memory_space<vmem>>, %arg2: memref<32x1024xbf16, #tpu.memory_space<vmem>>, %arg3: memref<1x1024xf32, #tpu.memory_space<vmem>>, %arg4: memref<1024x1024xbf16, #tpu.memory_space<vmem>>, %arg5: memref<1x1024xf32, #tpu.memory_space<vmem>>, %arg6: memref<1024x1024xbf16, #tpu.memory_space<vmem>>, %arg7: memref<1x1024xf32, #tpu.memory_space<vmem>>, %arg8: memref<1024x1024xbf16, #tpu.memory_space<vmem>>, %arg9: memref<1x1024xf32, #tpu.memory_space<vmem>>, %arg10: memref<1x1024xbf16, #tpu.memory_space<vmem>>, %arg11: memref<1x1xf32, #tpu.memory_space<vmem>>, %arg12: memref<8x1xf32, #tpu.memory_space<vmem>>) attributes {dimension_semantics = [#tpu.dimension_semantics<parallel>], iteration_bounds = array<i64: 1>, scalar_prefetch = 0 : i64, scratch_operands = 0 : i64, tpu.core_type = #tpu.core_type<tc>, window_params = [{transform_indices = @transform_0, window_bounds = array<i64: 8, 32>}, {pipeline_mode = #tpu.pipeline_mode<synchronous>, transform_indices = @transform_1, window_bounds = array<i64: 32, 1024>}, {pipeline_mode = #tpu.pipeline_mode<synchronous>, transform_indices = @transform_2, window_bounds = array<i64: 1, 1024>}, {pipeline_mode = #tpu.pipeline_mode<synchronous>, transform_indices = @transform_3, window_bounds = array<i64: 1024, 1024>}, {pipeline_mode = #tpu.pipeline_mode<synchronous>, transform_indices = @transform_4, window_bounds = array<i64: 1, 1024>}, {pipeline_mode = #tpu.pipeline_mode<synchronous>, transform_indices = @transform_5, window_bounds = array<i64: 1024, 1024>}, {pipeline_mode = #tpu.pipeline_mode<synchronous>, transform_indices = @transform_6, window_bounds = array<i64: 1, 1024>}, {pipeline_mode = #tpu.pipeline_mode<synchronous>, transform_indices = @transform_7, window_bounds = array<i64: 1024, 1024>}, {pipeline_mode = #tpu.pipeline_mode<synchronous>, transform_indices = @transform_8, window_bounds = array<i64: 1, 1024>}, {pipeline_mode = #tpu.pipeline_mode<synchronous>, transform_indices = @transform_9, window_bounds = array<i64: 1, 1024>}, {pipeline_mode = #tpu.pipeline_mode<synchronous>, transform_indices = @transform_10, window_bounds = array<i64: 1, 1>}, {transform_indices = @transform_11, window_bounds = array<i64: 8, 1>}]} {
    %c0 = arith.constant 0 : index
    %c0_0 = arith.constant 0 : index
    %0 = vector.load %arg1[%c0, %c0_0] : memref<8x32xbf16, #tpu.memory_space<vmem>>, vector<8x32xbf16>
    %c0_1 = arith.constant 0 : index
    %c0_2 = arith.constant 0 : index
    %1 = vector.load %arg2[%c0_1, %c0_2] : memref<32x1024xbf16, #tpu.memory_space<vmem>>, vector<32x1024xbf16>
    %cst = arith.constant dense<0.000000e+00> : vector<8x1024xf32>
    %2 = tpu.matmul %0, %1, %cst {dimension_numbers = #tpu.dot_dimension_numbers<[1], [0], [0], [1], [0, 0, 1, 1], [], []>} : vector<8x32xbf16>, vector<32x1024xbf16>, vector<8x1024xf32> -> vector<8x1024xf32>
    %c0_3 = arith.constant 0 : index
    %c0_4 = arith.constant 0 : index
    %3 = vector.load %arg3[%c0_3, %c0_4] : memref<1x1024xf32, #tpu.memory_space<vmem>>, vector<1x1024xf32>
    %4 = vector.broadcast %3 : vector<1x1024xf32> to vector<8x1024xf32>
    %5 = arith.addf %2, %4 : vector<8x1024xf32>
    %cst_5 = arith.constant 0.000000e+00 : f32
    %6 = vector.broadcast %cst_5 : f32 to vector<8x1024xf32>
    %7 = arith.maximumf %5, %6 : vector<8x1024xf32>
    %8 = arith.truncf %7 : vector<8x1024xf32> to vector<8x1024xbf16>
    %c0_6 = arith.constant 0 : index
    %c0_7 = arith.constant 0 : index
    %9 = vector.load %arg4[%c0_6, %c0_7] : memref<1024x1024xbf16, #tpu.memory_space<vmem>>, vector<1024x1024xbf16>
    %cst_8 = arith.constant dense<0.000000e+00> : vector<8x1024xf32>
    %10 = tpu.matmul %8, %9, %cst_8 {dimension_numbers = #tpu.dot_dimension_numbers<[1], [0], [0], [1], [0, 0, 1, 1], [], []>} : vector<8x1024xbf16>, vector<1024x1024xbf16>, vector<8x1024xf32> -> vector<8x1024xf32>
    %c0_9 = arith.constant 0 : index
    %c0_10 = arith.constant 0 : index
    %11 = vector.load %arg5[%c0_9, %c0_10] : memref<1x1024xf32, #tpu.memory_space<vmem>>, vector<1x1024xf32>
    %12 = vector.broadcast %11 : vector<1x1024xf32> to vector<8x1024xf32>
    %13 = arith.addf %10, %12 : vector<8x1024xf32>
    %cst_11 = arith.constant 0.000000e+00 : f32
    %14 = vector.broadcast %cst_11 : f32 to vector<8x1024xf32>
    %15 = arith.maximumf %13, %14 : vector<8x1024xf32>
    %16 = arith.truncf %15 : vector<8x1024xf32> to vector<8x1024xbf16>
    %c0_12 = arith.constant 0 : index
    %c0_13 = arith.constant 0 : index
    %17 = vector.load %arg6[%c0_12, %c0_13] : memref<1024x1024xbf16, #tpu.memory_space<vmem>>, vector<1024x1024xbf16>
    %cst_14 = arith.constant dense<0.000000e+00> : vector<8x1024xf32>
    %18 = tpu.matmul %16, %17, %cst_14 {dimension_numbers = #tpu.dot_dimension_numbers<[1], [0], [0], [1], [0, 0, 1, 1], [], []>} : vector<8x1024xbf16>, vector<1024x1024xbf16>, vector<8x1024xf32> -> vector<8x1024xf32>
    %c0_15 = arith.constant 0 : index
    %c0_16 = arith.constant 0 : index
    %19 = vector.load %arg7[%c0_15, %c0_16] : memref<1x1024xf32, #tpu.memory_space<vmem>>, vector<1x1024xf32>
    %20 = vector.broadcast %19 : vector<1x1024xf32> to vector<8x1024xf32>
    %21 = arith.addf %18, %20 : vector<8x1024xf32>
    %cst_17 = arith.constant 0.000000e+00 : f32
    %22 = vector.broadcast %cst_17 : f32 to vector<8x1024xf32>
    %23 = arith.maximumf %21, %22 : vector<8x1024xf32>
    %24 = arith.truncf %23 : vector<8x1024xf32> to vector<8x1024xbf16>
    %c0_18 = arith.constant 0 : index
    %c0_19 = arith.constant 0 : index
    %25 = vector.load %arg8[%c0_18, %c0_19] : memref<1024x1024xbf16, #tpu.memory_space<vmem>>, vector<1024x1024xbf16>
    %cst_20 = arith.constant dense<0.000000e+00> : vector<8x1024xf32>
    %26 = tpu.matmul %24, %25, %cst_20 {dimension_numbers = #tpu.dot_dimension_numbers<[1], [0], [0], [1], [0, 0, 1, 1], [], []>} : vector<8x1024xbf16>, vector<1024x1024xbf16>, vector<8x1024xf32> -> vector<8x1024xf32>
    %c0_21 = arith.constant 0 : index
    %c0_22 = arith.constant 0 : index
    %27 = vector.load %arg9[%c0_21, %c0_22] : memref<1x1024xf32, #tpu.memory_space<vmem>>, vector<1x1024xf32>
    %28 = vector.broadcast %27 : vector<1x1024xf32> to vector<8x1024xf32>
    %29 = arith.addf %26, %28 : vector<8x1024xf32>
    %cst_23 = arith.constant 0.000000e+00 : f32
    %30 = vector.broadcast %cst_23 : f32 to vector<8x1024xf32>
    %31 = arith.maximumf %29, %30 : vector<8x1024xf32>
    %c0_24 = arith.constant 0 : index
    %c0_25 = arith.constant 0 : index
    %32 = vector.load %arg10[%c0_24, %c0_25] : memref<1x1024xbf16, #tpu.memory_space<vmem>>, vector<1x1024xbf16>
    %33 = arith.extf %32 : vector<1x1024xbf16> to vector<1x1024xf32>
    %34 = vector.broadcast %33 : vector<1x1024xf32> to vector<8x1024xf32>
    %35 = arith.mulf %31, %34 : vector<8x1024xf32>
    %cst_26 = arith.constant dense<0.000000e+00> : vector<8xf32>
    %36 = vector.multi_reduction <add>, %35, %cst_26 [1] : vector<8x1024xf32> to vector<8xf32>
    %37 = vector.shape_cast %36 : vector<8xf32> to vector<8x1xf32>
    %c0_27 = arith.constant 0 : index
    %c0_28 = arith.constant 0 : index
    %38 = vector.load %arg11[%c0_27, %c0_28] : memref<1x1xf32, #tpu.memory_space<vmem>>, vector<1x1xf32>
    %39 = vector.broadcast %38 : vector<1x1xf32> to vector<8x1xf32>
    %40 = arith.addf %37, %39 : vector<8x1xf32>
    %c0_29 = arith.constant 0 : index
    %c0_30 = arith.constant 0 : index
    %41 = vector.load %arg12[%c0_29, %c0_30] : memref<8x1xf32, #tpu.memory_space<vmem>>, vector<8x1xf32>
    tpu.vector_store %arg12[%c0_29, %c0_30], %40 {strides = array<i32>} : memref<8x1xf32, #tpu.memory_space<vmem>>, vector<8x1xf32>,
    return
  }
  func.func @transform_0(%arg0: i32) -> (i32, i32) {
    %c0_i32 = arith.constant 0 : i32
    %c0_i32_0 = arith.constant 0 : i32
    return %arg0, %c0_i32 : i32, i32
  }
  func.func @transform_1(%arg0: i32) -> (i32, i32) {
    %c0_i32 = arith.constant 0 : i32
    %c0_i32_0 = arith.constant 0 : i32
    %c0_i32_1 = arith.constant 0 : i32
    return %c0_i32, %c0_i32_0 : i32, i32
  }
  func.func @transform_2(%arg0: i32) -> (i32, i32) {
    %c0_i32 = arith.constant 0 : i32
    %c0_i32_0 = arith.constant 0 : i32
    %c0_i32_1 = arith.constant 0 : i32
    return %c0_i32, %c0_i32_0 : i32, i32
  }
  func.func @transform_3(%arg0: i32) -> (i32, i32) {
    %c0_i32 = arith.constant 0 : i32
    %c0_i32_0 = arith.constant 0 : i32
    %c0_i32_1 = arith.constant 0 : i32
    return %c0_i32, %c0_i32_0 : i32, i32
  }
  func.func @transform_4(%arg0: i32) -> (i32, i32) {
    %c0_i32 = arith.constant 0 : i32
    %c0_i32_0 = arith.constant 0 : i32
    %c0_i32_1 = arith.constant 0 : i32
    return %c0_i32, %c0_i32_0 : i32, i32
  }
  func.func @transform_5(%arg0: i32) -> (i32, i32) {
    %c0_i32 = arith.constant 0 : i32
    %c0_i32_0 = arith.constant 0 : i32
    %c0_i32_1 = arith.constant 0 : i32
    return %c0_i32, %c0_i32_0 : i32, i32
  }
  func.func @transform_6(%arg0: i32) -> (i32, i32) {
    %c0_i32 = arith.constant 0 : i32
    %c0_i32_0 = arith.constant 0 : i32
    %c0_i32_1 = arith.constant 0 : i32
    return %c0_i32, %c0_i32_0 : i32, i32
  }
  func.func @transform_7(%arg0: i32) -> (i32, i32) {
    %c0_i32 = arith.constant 0 : i32
    %c0_i32_0 = arith.constant 0 : i32
    %c0_i32_1 = arith.constant 0 : i32
    return %c0_i32, %c0_i32_0 : i32, i32
  }
  func.func @transform_8(%arg0: i32) -> (i32, i32) {
    %c0_i32 = arith.constant 0 : i32
    %c0_i32_0 = arith.constant 0 : i32
    %c0_i32_1 = arith.constant 0 : i32
    return %c0_i32, %c0_i32_0 : i32, i32
  }
  func.func @transform_9(%arg0: i32) -> (i32, i32) {
    %c0_i32 = arith.constant 0 : i32
    %c0_i32_0 = arith.constant 0 : i32
    %c0_i32_1 = arith.constant 0 : i32
    return %c0_i32, %c0_i32_0 : i32, i32
  }
  func.func @transform_10(%arg0: i32) -> (i32, i32) {
    %c0_i32 = arith.constant 0 : i32
    %c0_i32_0 = arith.constant 0 : i32
    %c0_i32_1 = arith.constant 0 : i32
    return %c0_i32, %c0_i32_0 : i32, i32
  }
  func.func @transform_11(%arg0: i32) -> (i32, i32) {
    %c0_i32 = arith.constant 0 : i32
    %c0_i32_0 = arith.constant 0 : i32
    return %arg0, %c0_i32 : i32, i32
  }
}

</mosaic_0001>

<llo_original>
// kernel: tpu_custom_call.1
$region0: #{tpu_custom_call.1}
  #allocation0 [shape = 'u32[]', space=smem, size = 0x4, offset = 0x4, fixed_abs, tag = 'smem constant byte address 0x4 - core index']
  #allocation1 [shape = 'u32[72,128]{1,0:T(1,128)}', space=vmem, size = 0x9000, scoped, tag = 'internal scratch']
  #allocation2 [shape = 'f32[1,1]{1,0:T(1,128)S(1)}', space=vmem, size = 0x200, scoped, tag = 'scoped memory for tpu_custom_call.1']
  %s0 = inlined_call_operand.hbm [shape: bf16[8,32], index: 0, kind: input, shape index: {}]
  %s1 = inlined_call_operand.hbm [shape: bf16[32,1024], index: 1, kind: input, shape index: {}]
  %s2 = inlined_call_operand.hbm [shape: f32[1,1024], index: 2, kind: input, shape index: {}]
  %s3 = inlined_call_operand.hbm [shape: bf16[1024,1024], index: 3, kind: input, shape index: {}]
  %s4 = inlined_call_operand.hbm [shape: f32[1,1024], index: 4, kind: input, shape index: {}]
  %s5 = inlined_call_operand.hbm [shape: bf16[1024,1024], index: 5, kind: input, shape index: {}]
  %s6 = inlined_call_operand.hbm [shape: f32[1,1024], index: 6, kind: input, shape index: {}]
  %s7 = inlined_call_operand.hbm [shape: bf16[1024,1024], index: 7, kind: input, shape index: {}]
  %s8 = inlined_call_operand.hbm [shape: f32[1,1024], index: 8, kind: input, shape index: {}]
  %s9 = inlined_call_operand.hbm [shape: bf16[1,1024], index: 9, kind: input, shape index: {}]
  %s10 = inlined_call_operand.<no memory space> [shape: f32[1,1], index: 10, kind: input, shape index: {}]
  %s11 = inlined_call_operand.vmem [shape: f32[8,1], index: 11, kind: output, shape index: {}]
  %s12 = sld [smem:[#allocation0]]
  $region94: #{tpu_custom_call.1} parent=0
    _
  %s14 = ssub.s32 1, %s12
  %s15 = scalar_select 0, %s14, %s12
  %v16 = vstv %s10
  %17 = vst [vmem:[#allocation2] sm:$0x1] %v16
  $region1: #{tpu_custom_call.1} parent=0
    #allocation3 [shape = 'u8[2048]{0}', space=vmem, size = 0x800, scoped, tag = 'input window, operand 0, single buffered']
    #allocation4 [shape = 's32[1]{0}', space=sflag, size = 0x4, scoped, tag = 'scoped memory for tpu_custom_call.1']
    #allocation5 [shape = 'u8[65536]{0}', space=vmem, size = 0x10000, scoped, tag = 'input window, operand 1, single buffered']
    #allocation6 [shape = 's32[1]{0}', space=sflag, size = 0x4, scoped, tag = 'scoped memory for tpu_custom_call.1']
    #allocation7 [shape = 'u8[4096]{0}', space=vmem, size = 0x1000, scoped, tag = 'input window, operand 2, single buffered']
    #allocation8 [shape = 'u8[2097152]{0}', space=vmem, size = 0x200000, scoped, tag = 'input window, operand 3, single buffered']
    #allocation9 [shape = 's32[1]{0}', space=sflag, size = 0x4, scoped, tag = 'scoped memory for tpu_custom_call.1']
    #allocation10 [shape = 'u8[4096]{0}', space=vmem, size = 0x1000, scoped, tag = 'input window, operand 4, single buffered']
    #allocation11 [shape = 'u8[2097152]{0}', space=vmem, size = 0x200000, scoped, tag = 'input window, operand 5, single buffered']
    #allocation12 [shape = 's32[1]{0}', space=sflag, size = 0x4, scoped, tag = 'scoped memory for tpu_custom_call.1']
    #allocation13 [shape = 'u8[4096]{0}', space=vmem, size = 0x1000, scoped, tag = 'input window, operand 6, single buffered']
    #allocation14 [shape = 'u8[2097152]{0}', space=vmem, size = 0x200000, scoped, tag = 'input window, operand 7, single buffered']
    #allocation15 [shape = 's32[1]{0}', space=sflag, size = 0x4, scoped, tag = 'scoped memory for tpu_custom_call.1']
    #allocation16 [shape = 'u8[4096]{0}', space=vmem, size = 0x1000, scoped, tag = 'input window, operand 8, single buffered']
    #allocation17 [shape = 'u8[4096]{0}', space=vmem, size = 0x1000, scoped, tag = 'input window, operand 9, single buffered']
    #allocation18 [shape = 's32[1]{0}', space=sflag, size = 0x4, scoped, tag = 'scoped memory for tpu_custom_call.1']
    %18 = vsyncpa [#allocation4], 0
    %19 = vsyncpa [#allocation6], 0
    %20 = vsyncpa [#allocation9], 0
    %21 = vsyncpa [#allocation12], 0
    %22 = vsyncpa [#allocation15], 0
    %23 = vsyncpa [#allocation18], 0
    // Predicated region
    $region2: #{tpu_custom_call.1} parent=1 // pred_check
      _
    $region3: #{tpu_custom_call.1} parent=1 // pred_check_branch
      %25 = sbr.rel (0) target = $region5
    $region4: #{tpu_custom_call.1} parent=1 // pred_region
      %27 = vsyncadd [#allocation4], 0
      %s29 = sshll.u32 %s0, 4
      %s30 = int_to_ptr.hbm [resolvable:$true] %s29
      %s31 = sshll.u32 [#allocation3], 4
      %s32 = int_to_ptr.vmem [resolvable:$true] %s31
      %34 = dma.hbm_to_vmem [thread:$0]  %s30, 64, %s32, [#allocation4]
    $region5: #{tpu_custom_call.1} parent=1 // pred_fallthru
      _
    // Predicated region
    $region6: #{tpu_custom_call.1} parent=1 // pred_check
      _
    $region7: #{tpu_custom_call.1} parent=1 // pred_check_branch
      %36 = sbr.rel (0) target = $region9
    $region8: #{tpu_custom_call.1} parent=1 // pred_region
      %38 = vsyncadd [#allocation6], 0
      %s39 = sshll.u32 %s1, 4
      %s40 = int_to_ptr.hbm [resolvable:$true] %s39
      %s41 = sshll.u32 [#allocation5], 4
      %s42 = int_to_ptr.vmem [resolvable:$true] %s41
      %47 = dma.hbm_to_vmem [thread:$0]  %s40, 2048, %s42, [#allocation6], 512, 512, 32
    $region9: #{tpu_custom_call.1} parent=1 // pred_fallthru
      _
    // Predicated region
    $region10: #{tpu_custom_call.1} parent=1 // pred_check
      _
    $region11: #{tpu_custom_call.1} parent=1 // pred_check_branch
      %49 = sbr.rel (0) target = $region13
    $region12: #{tpu_custom_call.1} parent=1 // pred_region
      %51 = vsyncadd [#allocation6], 0
      %s53 = sshll.u32 %s2, 4
      %s54 = int_to_ptr.hbm [resolvable:$true] %s53
      %s55 = sshll.u32 [#allocation7], 4
      %s56 = int_to_ptr.vmem [resolvable:$true] %s55
      %58 = dma.hbm_to_vmem [thread:$0]  %s54, 128, %s56, [#allocation6]
    $region13: #{tpu_custom_call.1} parent=1 // pred_fallthru
      _
    // Predicated region
    $region14: #{tpu_custom_call.1} parent=1 // pred_check
      _
    $region15: #{tpu_custom_call.1} parent=1 // pred_check_branch
      %60 = sbr.rel (0) target = $region17
    $region16: #{tpu_custom_call.1} parent=1 // pred_region
      %62 = vsyncadd [#allocation9], 0
      %s63 = sshll.u32 %s3, 4
      %s64 = int_to_ptr.hbm [resolvable:$true] %s63
      %s65 = sshll.u32 [#allocation8], 4
      %s66 = int_to_ptr.vmem [resolvable:$true] %s65
      %71 = dma.hbm_to_vmem [thread:$0]  %s64, 65536, %s66, [#allocation9], 512, 512, 32
    $region17: #{tpu_custom_call.1} parent=1 // pred_fallthru
      _
    // Predicated region
    $region18: #{tpu_custom_call.1} parent=1 // pred_check
      _
    $region19: #{tpu_custom_call.1} parent=1 // pred_check_branch
      %73 = sbr.rel (0) target = $region21
    $region20: #{tpu_custom_call.1} parent=1 // pred_region
      %75 = vsyncadd [#allocation9], 0
      %s77 = sshll.u32 %s4, 4
      %s78 = int_to_ptr.hbm [resolvable:$true] %s77
      %s79 = sshll.u32 [#allocation10], 4
      %s80 = int_to_ptr.vmem [resolvable:$true] %s79
      %82 = dma.hbm_to_vmem [thread:$0]  %s78, 128, %s80, [#allocation9]
    $region21: #{tpu_custom_call.1} parent=1 // pred_fallthru
      _
    // Predicated region
    $region22: #{tpu_custom_call.1} parent=1 // pred_check
      _
    $region23: #{tpu_custom_call.1} parent=1 // pred_check_branch
      %84 = sbr.rel (0) target = $region25
    $region24: #{tpu_custom_call.1} parent=1 // pred_region
      %86 = vsyncadd [#allocation12], 0
      %s87 = sshll.u32 %s5, 4
      %s88 = int_to_ptr.hbm [resolvable:$true] %s87
      %s89 = sshll.u32 [#allocation11], 4
      %s90 = int_to_ptr.vmem [resolvable:$true] %s89
      %95 = dma.hbm_to_vmem [thread:$0]  %s88, 65536, %s90, [#allocation12], 512, 512, 32
    $region25: #{tpu_custom_call.1} parent=1 // pred_fallthru
      _
    // Predicated region
    $region26: #{tpu_custom_call.1} parent=1 // pred_check
      _
    $region27: #{tpu_custom_call.1} parent=1 // pred_check_branch
      %97 = sbr.rel (0) target = $region29
    $region28: #{tpu_custom_call.1} parent=1 // pred_region
      %99 = vsyncadd [#allocation12], 0
      %s101 = sshll.u32 %s6, 4
      %s102 = int_to_ptr.hbm [resolvable:$true] %s101
      %s103 = sshll.u32 [#allocation13], 4
      %s104 = int_to_ptr.vmem [resolvable:$true] %s103
      %106 = dma.hbm_to_vmem [thread:$0]  %s102, 128, %s104, [#allocation12]
    $region29: #{tpu_custom_call.1} parent=1 // pred_fallthru
      _
    // Predicated region
    $region30: #{tpu_custom_call.1} parent=1 // pred_check
      _
    $region31: #{tpu_custom_call.1} parent=1 // pred_check_branch
      %108 = sbr.rel (0) target = $region33
    $region32: #{tpu_custom_call.1} parent=1 // pred_region
      %110 = vsyncadd [#allocation15], 0
      %s111 = sshll.u32 %s7, 4
      %s112 = int_to_ptr.hbm [resolvable:$true] %s111
      %s113 = sshll.u32 [#allocation14], 4
      %s114 = int_to_ptr.vmem [resolvable:$true] %s113
      %119 = dma.hbm_to_vmem [thread:$0]  %s112, 65536, %s114, [#allocation15], 512, 512, 32
    $region33: #{tpu_custom_call.1} parent=1 // pred_fallthru
      _
    // Predicated region
    $region34: #{tpu_custom_call.1} parent=1 // pred_check
      _
    $region35: #{tpu_custom_call.1} parent=1 // pred_check_branch
      %121 = sbr.rel (0) target = $region37
    $region36: #{tpu_custom_call.1} parent=1 // pred_region
      %123 = vsyncadd [#allocation15], 0
      %s125 = sshll.u32 %s8, 4
      %s126 = int_to_ptr.hbm [resolvable:$true] %s125
      %s127 = sshll.u32 [#allocation16], 4
      %s128 = int_to_ptr.vmem [resolvable:$true] %s127
      %130 = dma.hbm_to_vmem [thread:$0]  %s126, 128, %s128, [#allocation15]
    $region37: #{tpu_custom_call.1} parent=1 // pred_fallthru
      _
    // Predicated region
    $region38: #{tpu_custom_call.1} parent=1 // pred_check
      _
    $region39: #{tpu_custom_call.1} parent=1 // pred_check_branch
      %132 = sbr.rel (0) target = $region41
    $region40: #{tpu_custom_call.1} parent=1 // pred_region
      %134 = vsyncadd [#allocation18], 0
      %s136 = sshll.u32 %s9, 4
      %s137 = int_to_ptr.hbm [resolvable:$true] %s136
      %s138 = sshll.u32 [#allocation17], 4
      %s139 = int_to_ptr.vmem [resolvable:$true] %s138
      %141 = dma.hbm_to_vmem [thread:$0]  %s137, 128, %s139, [#allocation18]
    $region41: #{tpu_custom_call.1} parent=1 // pred_fallthru
      _
    // Predicated region
    $region42: #{tpu_custom_call.1} parent=1 // pred_check
      _
    $region43: #{tpu_custom_call.1} parent=1 // pred_check_branch
      %143 = sbr.rel (0) target = $region45
    $region44: #{tpu_custom_call.1} parent=1 // pred_region
      _
    $region45: #{tpu_custom_call.1} parent=1 // pred_fallthru
      _
    // Predicated region
    $region46: #{tpu_custom_call.1} parent=1 // pred_check
      _
    $region47: #{tpu_custom_call.1} parent=1 // pred_check_branch
      %145 = sbr.rel (0) target = $region49
    $region48: #{tpu_custom_call.1} parent=1 // pred_region
      %147 = dma.done [#allocation4], 64
    $region49: #{tpu_custom_call.1} parent=1 // pred_fallthru
      _
    // Predicated region
    $region50: #{tpu_custom_call.1} parent=1 // pred_check
      _
    $region51: #{tpu_custom_call.1} parent=1 // pred_check_branch
      %149 = sbr.rel (0) target = $region53
    $region52: #{tpu_custom_call.1} parent=1 // pred_region
      %151 = dma.done [#allocation6], 2048
    $region53: #{tpu_custom_call.1} parent=1 // pred_fallthru
      _
    // Predicated region
    $region54: #{tpu_custom_call.1} parent=1 // pred_check
      _
    $region55: #{tpu_custom_call.1} parent=1 // pred_check_branch
      %153 = sbr.rel (0) target = $region57
    $region56: #{tpu_custom_call.1} parent=1 // pred_region
      %155 = dma.done [#allocation6], 128
    $region57: #{tpu_custom_call.1} parent=1 // pred_fallthru
      _
    // Predicated region
    $region58: #{tpu_custom_call.1} parent=1 // pred_check
      _
    $region59: #{tpu_custom_call.1} parent=1 // pred_check_branch
      %157 = sbr.rel (0) target = $region61
    $region60: #{tpu_custom_call.1} parent=1 // pred_region
      %159 = dma.done [#allocation9], 65536
    $region61: #{tpu_custom_call.1} parent=1 // pred_fallthru
      _
    // Predicated region
    $region62: #{tpu_custom_call.1} parent=1 // pred_check
      _
    $region63: #{tpu_custom_call.1} parent=1 // pred_check_branch
      %161 = sbr.rel (0) target = $region65
    $region64: #{tpu_custom_call.1} parent=1 // pred_region
      %163 = dma.done [#allocation9], 128
    $region65: #{tpu_custom_call.1} parent=1 // pred_fallthru
      _
    // Predicated region
    $region66: #{tpu_custom_call.1} parent=1 // pred_check
      _
    $region67: #{tpu_custom_call.1} parent=1 // pred_check_branch
      %165 = sbr.rel (0) target = $region69
    $region68: #{tpu_custom_call.1} parent=1 // pred_region
      %167 = dma.done [#allocation12], 65536
    $region69: #{tpu_custom_call.1} parent=1 // pred_fallthru
      _
    // Predicated region
    $region70: #{tpu_custom_call.1} parent=1 // pred_check
      _
    $region71: #{tpu_custom_call.1} parent=1 // pred_check_branch
      %169 = sbr.rel (0) target = $region73
    $region72: #{tpu_custom_call.1} parent=1 // pred_region
      %171 = dma.done [#allocation12], 128
    $region73: #{tpu_custom_call.1} parent=1 // pred_fallthru
      _
    // Predicated region
    $region74: #{tpu_custom_call.1} parent=1 // pred_check
      _
    $region75: #{tpu_custom_call.1} parent=1 // pred_check_branch
      %173 = sbr.rel (0) target = $region77
    $region76: #{tpu_custom_call.1} parent=1 // pred_region
      %175 = dma.done [#allocation15], 65536
    $region77: #{tpu_custom_call.1} parent=1 // pred_fallthru
      _
    // Predicated region
    $region78: #{tpu_custom_call.1} parent=1 // pred_check
      _
    $region79: #{tpu_custom_call.1} parent=1 // pred_check_branch
      %177 = sbr.rel (0) target = $region81
    $region80: #{tpu_custom_call.1} parent=1 // pred_region
      %179 = dma.done [#allocation15], 128
    $region81: #{tpu_custom_call.1} parent=1 // pred_fallthru
      _
    // Predicated region
    $region82: #{tpu_custom_call.1} parent=1 // pred_check
      _
    $region83: #{tpu_custom_call.1} parent=1 // pred_check_branch
      %181 = sbr.rel (0) target = $region85
    $region84: #{tpu_custom_call.1} parent=1 // pred_region
      %183 = dma.done [#allocation18], 128
    $region85: #{tpu_custom_call.1} parent=1 // pred_fallthru
      _
    %v185 = vld [vmem:[#allocation3] sm:$0xf]
    %v186 = vld [vmem:[#allocation5] sm:$0xff]
    %v187 = vld [vmem:[#allocation5 + $0x8] sm:$0xff]
    %v188 = vld [vmem:[#allocation5 + $0x10] sm:$0xff]
    %v189 = vld [vmem:[#allocation5 + $0x18] sm:$0xff]
    %v190 = vld [vmem:[#allocation5 + $0x20] sm:$0xff]
    %v191 = vld [vmem:[#allocation5 + $0x28] sm:$0xff]
    %v192 = vld [vmem:[#allocation5 + $0x30] sm:$0xff]
    %v193 = vld [vmem:[#allocation5 + $0x38] sm:$0xff]
    %v194 = vld [vmem:[#allocation5 + $0x40] sm:$0xff]
    %v195 = vld [vmem:[#allocation5 + $0x48] sm:$0xff]
    %v196 = vld [vmem:[#allocation5 + $0x50] sm:$0xff]
    %v197 = vld [vmem:[#allocation5 + $0x58] sm:$0xff]
    %v198 = vld [vmem:[#allocation5 + $0x60] sm:$0xff]
    %v199 = vld [vmem:[#allocation5 + $0x68] sm:$0xff]
    %v200 = vld [vmem:[#allocation5 + $0x70] sm:$0xff]
    %v201 = vld [vmem:[#allocation5 + $0x78] sm:$0xff]
    %v202 = vld [vmem:[#allocation7] sm:$0xff]
    %v204 = vperm.slane %v202, 0
    %v205 = vperm.slane %v202, 1
    %v206 = vperm.slane %v202, 2
    %v207 = vperm.slane %v202, 3
    %v208 = vperm.slane %v202, 4
    %v209 = vperm.slane %v202, 5
    %v210 = vperm.slane %v202, 6
    %v211 = vperm.slane %v202, 7
    %v236 = vunpack.c.l.b16 %v186
    %v237 = vunpack.c.h.b16 %v186
    %v238 = vunpack.c.l.b16 %v187
    %v239 = vunpack.c.h.b16 %v187
    %v240 = vunpack.c.l.b16 %v188
    %v241 = vunpack.c.h.b16 %v188
    %v242 = vunpack.c.l.b16 %v189
    %v243 = vunpack.c.h.b16 %v189
    %v244 = vunpack.c.l.b16 %v190
    %v245 = vunpack.c.h.b16 %v190
    %v246 = vunpack.c.l.b16 %v191
    %v247 = vunpack.c.h.b16 %v191
    %v248 = vunpack.c.l.b16 %v192
    %v249 = vunpack.c.h.b16 %v192
    %v250 = vunpack.c.l.b16 %v193
    %v251 = vunpack.c.h.b16 %v193
    %v252 = vunpack.c.l.b16 %v194
    %v253 = vunpack.c.h.b16 %v194
    %v254 = vunpack.c.l.b16 %v195
    %v255 = vunpack.c.h.b16 %v195
    %v256 = vunpack.c.l.b16 %v196
    %v257 = vunpack.c.h.b16 %v196
    %v258 = vunpack.c.l.b16 %v197
    %v259 = vunpack.c.h.b16 %v197
    %v260 = vunpack.c.l.b16 %v198
    %v261 = vunpack.c.h.b16 %v198
    %v262 = vunpack.c.l.b16 %v199
    %v263 = vunpack.c.h.b16 %v199
    %v264 = vunpack.c.l.b16 %v200
    %v265 = vunpack.c.h.b16 %v200
    %v266 = vunpack.c.l.b16 %v201
    %v267 = vunpack.c.h.b16 %v201
    %v268 = vpack.c.b16 %v244, %v236
    %v269 = vpack.c.b16 %v245, %v237
    %v270 = vpack.c.b16 %v246, %v238
    %v271 = vpack.c.b16 %v247, %v239
    %v272 = vpack.c.b16 %v248, %v240
    %v273 = vpack.c.b16 %v249, %v241
    %v274 = vpack.c.b16 %v250, %v242
    %v275 = vpack.c.b16 %v251, %v243
    %v276 = vpack.c.b16 %v260, %v252
    %v277 = vpack.c.b16 %v261, %v253
    %v278 = vpack.c.b16 %v262, %v254
    %v279 = vpack.c.b16 %v263, %v255
    %v280 = vpack.c.b16 %v264, %v256
    %v281 = vpack.c.b16 %v265, %v257
    %v282 = vpack.c.b16 %v266, %v258
    %v283 = vpack.c.b16 %v267, %v259
    %vm300 = vcmask 261120
    %v302 = vsel %vm300, %v185, 0
    %304 = vmatpush.bf16.msra.mxu0 0
    %305 = vmatpush.bf16.msra.mxu0 0
    %306 = vmatpush.bf16.msra.mxu0 0
    %307 = vmatpush.bf16.msra.mxu0 0
    %308 = vmatpush.bf16.msra.mxu0 0
    %309 = vmatpush.bf16.msra.mxu0 0
    %310 = vmatpush.bf16.msra.mxu0 %v276
    %311 = vmatpush.bf16.msra.mxu0 %v268
    %312 = vmatmul.bf16.gmra.mxu0 %v302
    %v313 = vpop.f32.mrf.mxu0
    %v314 = vadd.f32 %v204, %v313
    %v315 = vpop.f32.mrf.mxu0
    %316 = vdwg.mxu0
    %317 = vmatpush.bf16.msra.mxu0 0
    %318 = vmatpush.bf16.msra.mxu0 0
    %319 = vmatpush.bf16.msra.mxu0 0
    %320 = vmatpush.bf16.msra.mxu0 0
    %321 = vmatpush.bf16.msra.mxu0 0
    %322 = vmatpush.bf16.msra.mxu0 0
    %323 = vmatpush.bf16.msra.mxu0 %v277
    %324 = vmatpush.bf16.msra.mxu0 %v269
    %325 = vmatmul.bf16.gmra.mxu0 %v302
    %v326 = vpop.f32.mrf.mxu0
    %v327 = vadd.f32 %v205, %v326
    %v328 = vpop.f32.mrf.mxu0
    %329 = vdwg.mxu0
    %330 = vmatpush.bf16.msra.mxu0 0
    %331 = vmatpush.bf16.msra.mxu0 0
    %332 = vmatpush.bf16.msra.mxu0 0
    %333 = vmatpush.bf16.msra.mxu0 0
    %334 = vmatpush.bf16.msra.mxu0 0
    %335 = vmatpush.bf16.msra.mxu0 0
    %336 = vmatpush.bf16.msra.mxu0 %v278
    %337 = vmatpush.bf16.msra.mxu0 %v270
    %338 = vmatmul.bf16.gmra.mxu0 %v302
    %v339 = vpop.f32.mrf.mxu0
    %v340 = vadd.f32 %v206, %v339
    %v341 = vpop.f32.mrf.mxu0
    %342 = vdwg.mxu0
    %343 = vmatpush.bf16.msra.mxu0 0
    %344 = vmatpush.bf16.msra.mxu0 0
    %345 = vmatpush.bf16.msra.mxu0 0
    %346 = vmatpush.bf16.msra.mxu0 0
    %347 = vmatpush.bf16.msra.mxu0 0
    %348 = vmatpush.bf16.msra.mxu0 0
    %349 = vmatpush.bf16.msra.mxu0 %v279
    %350 = vmatpush.bf16.msra.mxu0 %v271
    %351 = vmatmul.bf16.gmra.mxu0 %v302
    %v352 = vpop.f32.mrf.mxu0
    %v353 = vadd.f32 %v207, %v352
    %v354 = vpop.f32.mrf.mxu0
    %355 = vdwg.mxu0
    %356 = vmatpush.bf16.msra.mxu0 0
    %357 = vmatpush.bf16.msra.mxu0 0
    %358 = vmatpush.bf16.msra.mxu0 0
    %359 = vmatpush.bf16.msra.mxu0 0
    %360 = vmatpush.bf16.msra.mxu0 0
    %361 = vmatpush.bf16.msra.mxu0 0
    %362 = vmatpush.bf16.msra.mxu0 %v280
    %363 = vmatpush.bf16.msra.mxu0 %v272
    %364 = vmatmul.bf16.gmra.mxu0 %v302
    %v365 = vpop.f32.mrf.mxu0
    %v366 = vadd.f32 %v208, %v365
    %v367 = vpop.f32.mrf.mxu0
    %368 = vdwg.mxu0
    %369 = vmatpush.bf16.msra.mxu0 0
    %370 = vmatpush.bf16.msra.mxu0 0
    %371 = vmatpush.bf16.msra.mxu0 0
    %372 = vmatpush.bf16.msra.mxu0 0
    %373 = vmatpush.bf16.msra.mxu0 0
    %374 = vmatpush.bf16.msra.mxu0 0
    %375 = vmatpush.bf16.msra.mxu0 %v281
    %376 = vmatpush.bf16.msra.mxu0 %v273
    %377 = vmatmul.bf16.gmra.mxu0 %v302
    %v378 = vpop.f32.mrf.mxu0
    %v379 = vadd.f32 %v209, %v378
    %v380 = vpop.f32.mrf.mxu0
    %381 = vdwg.mxu0
    %382 = vmatpush.bf16.msra.mxu0 0
    %383 = vmatpush.bf16.msra.mxu0 0
    %384 = vmatpush.bf16.msra.mxu0 0
    %385 = vmatpush.bf16.msra.mxu0 0
    %386 = vmatpush.bf16.msra.mxu0 0
    %387 = vmatpush.bf16.msra.mxu0 0
    %388 = vmatpush.bf16.msra.mxu0 %v282
    %389 = vmatpush.bf16.msra.mxu0 %v274
    %390 = vmatmul.bf16.gmra.mxu0 %v302
    %v391 = vpop.f32.mrf.mxu0
    %v392 = vadd.f32 %v210, %v391
    %v393 = vpop.f32.mrf.mxu0
    %394 = vdwg.mxu0
    %395 = vmatpush.bf16.msra.mxu0 0
    %396 = vmatpush.bf16.msra.mxu0 0
    %397 = vmatpush.bf16.msra.mxu0 0
    %398 = vmatpush.bf16.msra.mxu0 0
    %399 = vmatpush.bf16.msra.mxu0 0
    %400 = vmatpush.bf16.msra.mxu0 0
    %401 = vmatpush.bf16.msra.mxu0 %v283
    %402 = vmatpush.bf16.msra.mxu0 %v275
    %403 = vmatmul.bf16.gmra.mxu0 %v302
    %v404 = vpop.f32.mrf.mxu0
    %v405 = vadd.f32 %v211, %v404
    %v406 = vpop.f32.mrf.mxu0
    %407 = vdwg.mxu0
    %v408 = vmax.f32 %v314, 0.0
    %v409 = vmax.f32 %v327, 0.0
    %v410 = vmax.f32 %v340, 0.0
    %v411 = vmax.f32 %v353, 0.0
    %v412 = vmax.f32 %v366, 0.0
    %v413 = vmax.f32 %v379, 0.0
    %v414 = vmax.f32 %v392, 0.0
    %v415 = vmax.f32 %v405, 0.0
    %v416 = vpack.c.bf16 %v408, %v408
    %v417 = vpack.c.bf16 %v409, %v409
    %v418 = vpack.c.bf16 %v410, %v410
    %v419 = vpack.c.bf16 %v411, %v411
    %v420 = vpack.c.bf16 %v412, %v412
    %v421 = vpack.c.bf16 %v413, %v413
    %v422 = vpack.c.bf16 %v414, %v414
    %v423 = vpack.c.bf16 %v415, %v415
    %v424 = vld [vmem:[#allocation8] sm:$0xff]
    %v425 = vld [vmem:[#allocation8 + $0x8] sm:$0xff]
    %v426 = vld [vmem:[#allocation8 + $0x10] sm:$0xff]
    %v427 = vld [vmem:[#allocation8 + $0x18] sm:$0xff]
    %v428 = vld [vmem:[#allocation8 + $0x20] sm:$0xff]
    %v429 = vld [vmem:[#allocation8 + $0x28] sm:$0xff]
    %v430 = vld [vmem:[#allocation8 + $0x30] sm:$0xff]
    %v431 = vld [vmem:[#allocation8 + $0x38] sm:$0xff]
    %v432 = vld [vmem:[#allocation8 + $0x40] sm:$0xff]
    %v433 = vld [vmem:[#allocation8 + $0x48] sm:$0xff]
    %v434 = vld [vmem:[#allocation8 + $0x50] sm:$0xff]
    %v435 = vld [vmem:[#allocation8 + $0x58] sm:$0xff]
    %v436 = vld [vmem:[#allocation8 + $0x60] sm:$0xff]
    %v437 = vld [vmem:[#allocation8 + $0x68] sm:$0xff]
    %v438 = vld [vmem:[#allocation8 + $0x70] sm:$0xff]
    %v439 = vld [vmem:[#allocation8 + $0x78] sm:$0xff]
    %v440 = vld [vmem:[#allocation8 + $0x80] sm:$0xff]
    %v441 = vld [vmem:[#allocation8 + $0x88] sm:$0xff]
    %v442 = vld [vmem:[#allocation8 + $0x90] sm:$0xff]
    %v443 = vld [vmem:[#allocation8 + $0x98] sm:$0xff]
    %v444 = vld [vmem:[#allocation8 + $0xa0] sm:$0xff]
    %v445 = vld [vmem:[#allocation8 + $0xa8] sm:$0xff]
    %v446 = vld [vmem:[#allocation8 + $0xb0] sm:$0xff]
    %v447 = vld [vmem:[#allocation8 + $0xb8] sm:$0xff]
    %v448 = vld [vmem:[#allocation8 + $0xc0] sm:$0xff]
    %v449 = vld [vmem:[#allocation8 + $0xc8] sm:$0xff]
    %v450 = vld [vmem:[#allocation8 + $0xd0] sm:$0xff]
    %v451 = vld [vmem:[#allocation8 + $0xd8] sm:$0xff]
    %v452 = vld [vmem:[#allocation8 + $0xe0] sm:$0xff]
    %v453 = vld [vmem:[#allocation8 + $0xe8] sm:$0xff]
    %v454 = vld [vmem:[#allocation8 + $0xf0] sm:$0xff]
    %v455 = vld [vmem:[#allocation8 + $0xf8] sm:$0xff]
    %v456 = vld [vmem:[#allocation8 + $0x100] sm:$0xff]
    %v457 = vld [vmem:[#allocation8 + $0x108] sm:$0xff]
    %v458 = vld [vmem:[#allocation8 + $0x110] sm:$0xff]
    %v459 = vld [vmem:[#allocation8 + $0x118] sm:$0xff]
    %v460 = vld [vmem:[#allocation8 + $0x120] sm:$0xff]
    %v461 = vld [vmem:[#allocation8 + $0x128] sm:$0xff]
    %v462 = vld [vmem:[#allocation8 + $0x130] sm:$0xff]
    %v463 = vld [vmem:[#allocation8 + $0x138] sm:$0xff]
    %v464 = vld [vmem:[#allocation8 + $0x140] sm:$0xff]
    %v465 = vld [vmem:[#allocation8 + $0x148] sm:$0xff]
    %v466 = vld [vmem:[#allocation8 + $0x150] sm:$0xff]
    %v467 = vld [vmem:[#allocation8 + $0x158] sm:$0xff]
    %v468 = vld [vmem:[#allocation8 + $0x160] sm:$0xff]
    %v469 = vld [vmem:[#allocation8 + $0x168] sm:$0xff]
    %v470 = vld [vmem:[#allocation8 + $0x170] sm:$0xff]
    %v471 = vld [vmem:[#allocation8 + $0x178] sm:$0xff]
    %v472 = vld [vmem:[#allocation8 + $0x180] sm:$0xff]
    %v473 = vld [vmem:[#allocation8 + $0x188] sm:$0xff]
    %v474 = vld [vmem:[#allocation8 + $0x190] sm:$0xff]
    %v475 = vld [vmem:[#allocation8 + $0x198] sm:$0xff]
    %v476 = vld [vmem:[#allocation8 + $0x1a0] sm:$0xff]
    %v477 = vld [vmem:[#allocation8 + $0x1a8] sm:$0xff]
    %v478 = vld [vmem:[#allocation8 + $0x1b0] sm:$0xff]
    %v479 = vld [vmem:[#allocation8 + $0x1b8] sm:$0xff]
    %v480 = vld [vmem:[#allocation8 + $0x1c0] sm:$0xff]
    %v481 = vld [vmem:[#allocation8 + $0x1c8] sm:$0xff]
    %v482 = vld [vmem:[#allocation8 + $0x1d0] sm:$0xff]
    %v483 = vld [vmem:[#allocation8 + $0x1d8] sm:$0xff]
    %v484 = vld [vmem:[#allocation8 + $0x1e0] sm:$0xff]
    %v485 = vld [vmem:[#allocation8 + $0x1e8] sm:$0xff]
    %v486 = vld [vmem:[#allocation8 + $0x1f0] sm:$0xff]
    %v487 = vld [vmem:[#allocation8 + $0x1f8] sm:$0xff]
    %v488 = vld [vmem:[#allocation8 + $0x200] sm:$0xff]
    %v489 = vld [vmem:[#allocation8 + $0x208] sm:$0xff]
    %v490 = vld [vmem:[#allocation8 + $0x210] sm:$0xff]
    %v491 = vld [vmem:[#allocation8 + $0x218] sm:$0xff]
    %v492 = vld [vmem:[#allocation8 + $0x220] sm:$0xff]
    %v493 = vld [vmem:[#allocation8 + $0x228] sm:$0xff]
    %v494 = vld [vmem:[#allocation8 + $0x230] sm:$0xff]
    %v495 = vld [vmem:[#allocation8 + $0x238] sm:$0xff]
    %v496 = vld [vmem:[#allocation8 + $0x240] sm:$0xff]
    %v497 = vld [vmem:[#allocation8 + $0x248] sm:$0xff]
    %v498 = vld [vmem:[#allocation8 + $0x250] sm:$0xff]
    %v499 = vld [vmem:[#allocation8 + $0x258] sm:$0xff]
    %v500 = vld [vmem:[#allocation8 + $0x260] sm:$0xff]
    %v501 = vld [vmem:[#allocation8 + $0x268] sm:$0xff]
    %v502 = vld [vmem:[#allocation8 + $0x270] sm:$0xff]
    %v503 = vld [vmem:[#allocation8 + $0x278] sm:$0xff]
    %v504 = vld [vmem:[#allocation8 + $0x280] sm:$0xff]
    %v505 = vld [vmem:[#allocation8 + $0x288] sm:$0xff]
    %v506 = vld [vmem:[#allocation8 + $0x290] sm:$0xff]
    %v507 = vld [vmem:[#allocation8 + $0x298] sm:$0xff]
    %v508 = vld [vmem:[#allocation8 + $0x2a0] sm:$0xff]
    %v509 = vld [vmem:[#allocation8 + $0x2a8] sm:$0xff]
    %v510 = vld [vmem:[#allocation8 + $0x2b0] sm:$0xff]
    %v511 = vld [vmem:[#allocation8 + $0x2b8] sm:$0xff]
    %v512 = vld [vmem:[#allocation8 + $0x2c0] sm:$0xff]
    %v513 = vld [vmem:[#allocation8 + $0x2c8] sm:$0xff]
    %v514 = vld [vmem:[#allocation8 + $0x2d0] sm:$0xff]
    %v515 = vld [vmem:[#allocation8 + $0x2d8] sm:$0xff]
    %v516 = vld [vmem:[#allocation8 + $0x2e0] sm:$0xff]
    %v517 = vld [vmem:[#allocation8 + $0x2e8] sm:$0xff]
    %v518 = vld [vmem:[#allocation8 + $0x2f0] sm:$0xff]
    %v519 = vld [vmem:[#allocation8 + $0x2f8] sm:$0xff]
    %v520 = vld [vmem:[#allocation8 + $0x300] sm:$0xff]
    %v521 = vld [vmem:[#allocation8 + $0x308] sm:$0xff]
    %v522 = vld [vmem:[#allocation8 + $0x310] sm:$0xff]
    %v523 = vld [vmem:[#allocation8 + $0x318] sm:$0xff]
    %v524 = vld [vmem:[#allocation8 + $0x320] sm:$0xff]
    %v525 = vld [vmem:[#allocation8 + $0x328] sm:$0xff]
    %v526 = vld [vmem:[#allocation8 + $0x330] sm:$0xff]
    %v527 = vld [vmem:[#allocation8 + $0x338] sm:$0xff]
    %v528 = vld [vmem:[#allocation8 + $0x340] sm:$0xff]
    %v529 = vld [vmem:[#allocation8 + $0x348] sm:$0xff]
    %v530 = vld [vmem:[#allocation8 + $0x350] sm:$0xff]
    %v531 = vld [vmem:[#allocation8 + $0x358] sm:$0xff]
    %v532 = vld [vmem:[#allocation8 + $0x360] sm:$0xff]
    %v533 = vld [vmem:[#allocation8 + $0x368] sm:$0xff]
    %v534 = vld [vmem:[#allocation8 + $0x370] sm:$0xff]
    %v535 = vld [vmem:[#allocation8 + $0x378] sm:$0xff]
    %v536 = vld [vmem:[#allocation8 + $0x380] sm:$0xff]
    %v537 = vld [vmem:[#allocation8 + $0x388] sm:$0xff]
    %v538 = vld [vmem:[#allocation8 + $0x390] sm:$0xff]
    %v539 = vld [vmem:[#allocation8 + $0x398] sm:$0xff]
    %v540 = vld [vmem:[#allocation8 + $0x3a0] sm:$0xff]
    %v541 = vld [vmem:[#allocation8 + $0x3a8] sm:$0xff]
    %v542 = vld [vmem:[#allocation8 + $0x3b0] sm:$0xff]
    %v543 = vld [vmem:[#allocation8 + $0x3b8] sm:$0xff]
    %v544 = vld [vmem:[#allocation8 + $0x3c0] sm:$0xff]
    %v545 = vld [vmem:[#allocation8 + $0x3c8] sm:$0xff]
    %v546 = vld [vmem:[#allocation8 + $0x3d0] sm:$0xff]
    %v547 = vld [vmem:[#allocation8 + $0x3d8] sm:$0xff]
    %v548 = vld [vmem:[#allocation8 + $0x3e0] sm:$0xff]
    %v549 = vld [vmem:[#allocation8 + $0x3e8] sm:$0xff]
    %v550 = vld [vmem:[#allocation8 + $0x3f0] sm:$0xff]
    %v551 = vld [vmem:[#allocation8 + $0x3f8] sm:$0xff]
    %v552 = vld [vmem:[#allocation8 + $0x400] sm:$0xff]
    %v553 = vld [vmem:[#allocation8 + $0x408] sm:$0xff]
    %v554 = vld [vmem:[#allocation8 + $0x410] sm:$0xff]
    %v555 = vld [vmem:[#allocation8 + $0x418] sm:$0xff]
    %v556 = vld [vmem:[#allocation8 + $0x420] sm:$0xff]
    %v557 = vld [vmem:[#allocation8 + $0x428] sm:$0xff]
    %v558 = vld [vmem:[#allocation8 + $0x430] sm:$0xff]
    %v559 = vld [vmem:[#allocation8 + $0x438] sm:$0xff]
    %v560 = vld [vmem:[#allocation8 + $0x440] sm:$0xff]
    %v561 = vld [vmem:[#allocation8 + $0x448] sm:$0xff]
    %v562 = vld [vmem:[#allocation8 + $0x450] sm:$0xff]
    %v563 = vld [vmem:[#allocation8 + $0x458] sm:$0xff]
    %v564 = vld [vmem:[#allocation8 + $0x460] sm:$0xff]
    %v565 = vld [vmem:[#allocation8 + $0x468] sm:$0xff]
    %v566 = vld [vmem:[#allocation8 + $0x470] sm:$0xff]
    %v567 = vld [vmem:[#allocation8 + $0x478] sm:$0xff]
    %v568 = vld [vmem:[#allocation8 + $0x480] sm:$0xff]
    %v569 = vld [vmem:[#allocation8 + $0x488] sm:$0xff]
    %v570 = vld [vmem:[#allocation8 + $0x490] sm:$0xff]
    %v571 = vld [vmem:[#allocation8 + $0x498] sm:$0xff]
    %v572 = vld [vmem:[#allocation8 + $0x4a0] sm:$0xff]
    %v573 = vld [vmem:[#allocation8 + $0x4a8] sm:$0xff]
    %v574 = vld [vmem:[#allocation8 + $0x4b0] sm:$0xff]
    %v575 = vld [vmem:[#allocation8 + $0x4b8] sm:$0xff]
    %v576 = vld [vmem:[#allocation8 + $0x4c0] sm:$0xff]
    %v577 = vld [vmem:[#allocation8 + $0x4c8] sm:$0xff]
    %v578 = vld [vmem:[#allocation8 + $0x4d0] sm:$0xff]
    %v579 = vld [vmem:[#allocation8 + $0x4d8] sm:$0xff]
    %v580 = vld [vmem:[#allocation8 + $0x4e0] sm:$0xff]
    %v581 = vld [vmem:[#allocation8 + $0x4e8] sm:$0xff]
    %v582 = vld [vmem:[#allocation8 + $0x4f0] sm:$0xff]
    %v583 = vld [vmem:[#allocation8 + $0x4f8] sm:$0xff]
    %v584 = vld [vmem:[#allocation8 + $0x500] sm:$0xff]
    %v585 = vld [vmem:[#allocation8 + $0x508] sm:$0xff]
    %v586 = vld [vmem:[#allocation8 + $0x510] sm:$0xff]
    %v587 = vld [vmem:[#allocation8 + $0x518] sm:$0xff]
    %v588 = vld [vmem:[#allocation8 + $0x520] sm:$0xff]
    %v589 = vld [vmem:[#allocation8 + $0x528] sm:$0xff]
    %v590 = vld [vmem:[#allocation8 + $0x530] sm:$0xff]
    %v591 = vld [vmem:[#allocation8 + $0x538] sm:$0xff]
    %v592 = vld [vmem:[#allocation8 + $0x540] sm:$0xff]
    %v593 = vld [vmem:[#allocation8 + $0x548] sm:$0xff]
    %v594 = vld [vmem:[#allocation8 + $0x550] sm:$0xff]
    %v595 = vld [vmem:[#allocation8 + $0x558] sm:$0xff]
    %v596 = vld [vmem:[#allocation8 + $0x560] sm:$0xff]
    %v597 = vld [vmem:[#allocation8 + $0x568] sm:$0xff]
    %v598 = vld [vmem:[#allocation8 + $0x570] sm:$0xff]
    %v599 = vld [vmem:[#allocation8 + $0x578] sm:$0xff]
    %v600 = vld [vmem:[#allocation8 + $0x580] sm:$0xff]
    %v601 = vld [vmem:[#allocation8 + $0x588] sm:$0xff]
    %v602 = vld [vmem:[#allocation8 + $0x590] sm:$0xff]
    %v603 = vld [vmem:[#allocation8 + $0x598] sm:$0xff]
    %v604 = vld [vmem:[#allocation8 + $0x5a0] sm:$0xff]
    %v605 = vld [vmem:[#allocation8 + $0x5a8] sm:$0xff]
    %v606 = vld [vmem:[#allocation8 + $0x5b0] sm:$0xff]
    %v607 = vld [vmem:[#allocation8 + $0x5b8] sm:$0xff]
    %v608 = vld [vmem:[#allocation8 + $0x5c0] sm:$0xff]
    %v609 = vld [vmem:[#allocation8 + $0x5c8] sm:$0xff]
    %v610 = vld [vmem:[#allocation8 + $0x5d0] sm:$0xff]
    %v611 = vld [vmem:[#allocation8 + $0x5d8] sm:$0xff]
    %v612 = vld [vmem:[#allocation8 + $0x5e0] sm:$0xff]
    %v613 = vld [vmem:[#allocation8 + $0x5e8] sm:$0xff]
    %v614 = vld [vmem:[#allocation8 + $0x5f0] sm:$0xff]
    %v615 = vld [vmem:[#allocation8 + $0x5f8] sm:$0xff]
    %v616 = vld [vmem:[#allocation8 + $0x600] sm:$0xff]
    %v617 = vld [vmem:[#allocation8 + $0x608] sm:$0xff]
    %v618 = vld [vmem:[#allocation8 + $0x610] sm:$0xff]
    %v619 = vld [vmem:[#allocation8 + $0x618] sm:$0xff]
    %v620 = vld [vmem:[#allocation8 + $0x620] sm:$0xff]
    %v621 = vld [vmem:[#allocation8 + $0x628] sm:$0xff]
    %v622 = vld [vmem:[#allocation8 + $0x630] sm:$0xff]
    %v623 = vld [vmem:[#allocation8 + $0x638] sm:$0xff]
    %v624 = vld [vmem:[#allocation8 + $0x640] sm:$0xff]
    %v625 = vld [vmem:[#allocation8 + $0x648] sm:$0xff]
    %v626 = vld [vmem:[#allocation8 + $0x650] sm:$0xff]
    %v627 = vld [vmem:[#allocation8 + $0x658] sm:$0xff]
    %v628 = vld [vmem:[#allocation8 + $0x660] sm:$0xff]
    %v629 = vld [vmem:[#allocation8 + $0x668] sm:$0xff]
    %v630 = vld [vmem:[#allocation8 + $0x670] sm:$0xff]
    %v631 = vld [vmem:[#allocation8 + $0x678] sm:$0xff]
    %v632 = vld [vmem:[#allocation8 + $0x680] sm:$0xff]
    %v633 = vld [vmem:[#allocation8 + $0x688] sm:$0xff]
    %v634 = vld [vmem:[#allocation8 + $0x690] sm:$0xff]
    %v635 = vld [vmem:[#allocation8 + $0x698] sm:$0xff]
    %v636 = vld [vmem:[#allocation8 + $0x6a0] sm:$0xff]
    %v637 = vld [vmem:[#allocation8 + $0x6a8] sm:$0xff]
    %v638 = vld [vmem:[#allocation8 + $0x6b0] sm:$0xff]
    %v639 = vld [vmem:[#allocation8 + $0x6b8] sm:$0xff]
    %v640 = vld [vmem:[#allocation8 + $0x6c0] sm:$0xff]
    %v641 = vld [vmem:[#allocation8 + $0x6c8] sm:$0xff]
    %v642 = vld [vmem:[#allocation8 + $0x6d0] sm:$0xff]
    %v643 = vld [vmem:[#allocation8 + $0x6d8] sm:$0xff]
    %v644 = vld [vmem:[#allocation8 + $0x6e0] sm:$0xff]
    %v645 = vld [vmem:[#allocation8 + $0x6e8] sm:$0xff]
    %v646 = vld [vmem:[#allocation8 + $0x6f0] sm:$0xff]
    %v647 = vld [vmem:[#allocation8 + $0x6f8] sm:$0xff]
    %v648 = vld [vmem:[#allocation8 + $0x700] sm:$0xff]
    %v649 = vld [vmem:[#allocation8 + $0x708] sm:$0xff]
    %v650 = vld [vmem:[#allocation8 + $0x710] sm:$0xff]
    %v651 = vld [vmem:[#allocation8 + $0x718] sm:$0xff]
    %v652 = vld [vmem:[#allocation8 + $0x720] sm:$0xff]
    %v653 = vld [vmem:[#allocation8 + $0x728] sm:$0xff]
    %v654 = vld [vmem:[#allocation8 + $0x730] sm:$0xff]
    %v655 = vld [vmem:[#allocation8 + $0x738] sm:$0xff]
    %v656 = vld [vmem:[#allocation8 + $0x740] sm:$0xff]
    %v657 = vld [vmem:[#allocation8 + $0x748] sm:$0xff]
    %v658 = vld [vmem:[#allocation8 + $0x750] sm:$0xff]
    %v659 = vld [vmem:[#allocation8 + $0x758] sm:$0xff]
    %v660 = vld [vmem:[#allocation8 + $0x760] sm:$0xff]
    %v661 = vld [vmem:[#allocation8 + $0x768] sm:$0xff]
    %v662 = vld [vmem:[#allocation8 + $0x770] sm:$0xff]
    %v663 = vld [vmem:[#allocation8 + $0x778] sm:$0xff]
    %v664 = vld [vmem:[#allocation8 + $0x780] sm:$0xff]
    %v665 = vld [vmem:[#allocation8 + $0x788] sm:$0xff]
    %v666 = vld [vmem:[#allocation8 + $0x790] sm:$0xff]
    %v667 = vld [vmem:[#allocation8 + $0x798] sm:$0xff]
    %v668 = vld [vmem:[#allocation8 + $0x7a0] sm:$0xff]
    %v669 = vld [vmem:[#allocation8 + $0x7a8] sm:$0xff]
    %v670 = vld [vmem:[#allocation8 + $0x7b0] sm:$0xff]
    %v671 = vld [vmem:[#allocation8 + $0x7b8] sm:$0xff]
    %v672 = vld [vmem:[#allocation8 + $0x7c0] sm:$0xff]
    %v673 = vld [vmem:[#allocation8 + $0x7c8] sm:$0xff]
    %v674 = vld [vmem:[#allocation8 + $0x7d0] sm:$0xff]
    %v675 = vld [vmem:[#allocation8 + $0x7d8] sm:$0xff]
    %v676 = vld [vmem:[#allocation8 + $0x7e0] sm:$0xff]
    %v677 = vld [vmem:[#allocation8 + $0x7e8] sm:$0xff]
    %v678 = vld [vmem:[#allocation8 + $0x7f0] sm:$0xff]
    %v679 = vld [vmem:[#allocation8 + $0x7f8] sm:$0xff]
    %v680 = vld [vmem:[#allocation8 + $0x800] sm:$0xff]
    %v681 = vld [vmem:[#allocation8 + $0x808] sm:$0xff]
    %v682 = vld [vmem:[#allocation8 + $0x810] sm:$0xff]
    %v683 = vld [vmem:[#allocation8 + $0x818] sm:$0xff]
    %v684 = vld [vmem:[#allocation8 + $0x820] sm:$0xff]
    %v685 = vld [vmem:[#allocation8 + $0x828] sm:$0xff]
    %v686 = vld [vmem:[#allocation8 + $0x830] sm:$0xff]
    %v687 = vld [vmem:[#allocation8 + $0x838] sm:$0xff]
    %v688 = vld [vmem:[#allocation8 + $0x840] sm:$0xff]
    %v689 = vld [vmem:[#allocation8 + $0x848] sm:$0xff]
    %v690 = vld [vmem:[#allocation8 + $0x850] sm:$0xff]
    %v691 = vld [vmem:[#allocation8 + $0x858] sm:$0xff]
    %v692 = vld [vmem:[#allocation8 + $0x860] sm:$0xff]
    %v693 = vld [vmem:[#allocation8 + $0x868] sm:$0xff]
    %v694 = vld [vmem:[#allocation8 + $0x870] sm:$0xff]
    %v695 = vld [vmem:[#allocation8 + $0x878] sm:$0xff]
    %v696 = vld [vmem:[#allocation8 + $0x880] sm:$0xff]
    %v697 = vld [vmem:[#allocation8 + $0x888] sm:$0xff]
    %v698 = vld [vmem:[#allocation8 + $0x890] sm:$0xff]
    %v699 = vld [vmem:[#allocation8 + $0x898] sm:$0xff]
    %v700 = vld [vmem:[#allocation8 + $0x8a0] sm:$0xff]
    %v701 = vld [vmem:[#allocation8 + $0x8a8] sm:$0xff]
    %v702 = vld [vmem:[#allocation8 + $0x8b0] sm:$0xff]
    %v703 = vld [vmem:[#allocation8 + $0x8b8] sm:$0xff]
    %v704 = vld [vmem:[#allocation8 + $0x8c0] sm:$0xff]
    %v705 = vld [vmem:[#allocation8 + $0x8c8] sm:$0xff]
    %v706 = vld [vmem:[#allocation8 + $0x8d0] sm:$0xff]
    %v707 = vld [vmem:[#allocation8 + $0x8d8] sm:$0xff]
    %v708 = vld [vmem:[#allocation8 + $0x8e0] sm:$0xff]
    %v709 = vld [vmem:[#allocation8 + $0x8e8] sm:$0xff]
    %v710 = vld [vmem:[#allocation8 + $0x8f0] sm:$0xff]
    %v711 = vld [vmem:[#allocation8 + $0x8f8] sm:$0xff]
    %v712 = vld [vmem:[#allocation8 + $0x900] sm:$0xff]
    %v713 = vld [vmem:[#allocation8 + $0x908] sm:$0xff]
    %v714 = vld [vmem:[#allocation8 + $0x910] sm:$0xff]
    %v715 = vld [vmem:[#allocation8 + $0x918] sm:$0xff]
    %v716 = vld [vmem:[#allocation8 + $0x920] sm:$0xff]
    %v717 = vld [vmem:[#allocation8 + $0x928] sm:$0xff]
    %v718 = vld [vmem:[#allocation8 + $0x930] sm:$0xff]
    %v719 = vld [vmem:[#allocation8 + $0x938] sm:$0xff]
    %v720 = vld [vmem:[#allocation8 + $0x940] sm:$0xff]
    %v721 = vld [vmem:[#allocation8 + $0x948] sm:$0xff]
    %v722 = vld [vmem:[#allocation8 + $0x950] sm:$0xff]
    %v723 = vld [vmem:[#allocation8 + $0x958] sm:$0xff]
    %v724 = vld [vmem:[#allocation8 + $0x960] sm:$0xff]
    %v725 = vld [vmem:[#allocation8 + $0x968] sm:$0xff]
    %v726 = vld [vmem:[#allocation8 + $0x970] sm:$0xff]
    %v727 = vld [vmem:[#allocation8 + $0x978] sm:$0xff]
    %v728 = vld [vmem:[#allocation8 + $0x980] sm:$0xff]
    %v729 = vld [vmem:[#allocation8 + $0x988] sm:$0xff]
    %v730 = vld [vmem:[#allocation8 + $0x990] sm:$0xff]
    %v731 = vld [vmem:[#allocation8 + $0x998] sm:$0xff]
    %v732 = vld [vmem:[#allocation8 + $0x9a0] sm:$0xff]
    %v733 = vld [vmem:[#allocation8 + $0x9a8] sm:$0xff]
    %v734 = vld [vmem:[#allocation8 + $0x9b0] sm:$0xff]
    %v735 = vld [vmem:[#allocation8 + $0x9b8] sm:$0xff]
    %v736 = vld [vmem:[#allocation8 + $0x9c0] sm:$0xff]
    %v737 = vld [vmem:[#allocation8 + $0x9c8] sm:$0xff]
    %v738 = vld [vmem:[#allocation8 + $0x9d0] sm:$0xff]
    %v739 = vld [vmem:[#allocation8 + $0x9d8] sm:$0xff]
    %v740 = vld [vmem:[#allocation8 + $0x9e0] sm:$0xff]
    %v741 = vld [vmem:[#allocation8 + $0x9e8] sm:$0xff]
    %v742 = vld [vmem:[#allocation8 + $0x9f0] sm:$0xff]
    %v743 = vld [vmem:[#allocation8 + $0x9f8] sm:$0xff]
    %v744 = vld [vmem:[#allocation8 + $0xa00] sm:$0xff]
    %v745 = vld [vmem:[#allocation8 + $0xa08] sm:$0xff]
    %v746 = vld [vmem:[#allocation8 + $0xa10] sm:$0xff]
    %v747 = vld [vmem:[#allocation8 + $0xa18] sm:$0xff]
    %v748 = vld [vmem:[#allocation8 + $0xa20] sm:$0xff]
    %v749 = vld [vmem:[#allocation8 + $0xa28] sm:$0xff]
    %v750 = vld [vmem:[#allocation8 + $0xa30] sm:$0xff]
    %v751 = vld [vmem:[#allocation8 + $0xa38] sm:$0xff]
    %v752 = vld [vmem:[#allocation8 + $0xa40] sm:$0xff]
    %v753 = vld [vmem:[#allocation8 + $0xa48] sm:$0xff]
    %v754 = vld [vmem:[#allocation8 + $0xa50] sm:$0xff]
    %v755 = vld [vmem:[#allocation8 + $0xa58] sm:$0xff]
    %v756 = vld [vmem:[#allocation8 + $0xa60] sm:$0xff]
    %v757 = vld [vmem:[#allocation8 + $0xa68] sm:$0xff]
    %v758 = vld [vmem:[#allocation8 + $0xa70] sm:$0xff]
    %v759 = vld [vmem:[#allocation8 + $0xa78] sm:$0xff]
    %v760 = vld [vmem:[#allocation8 + $0xa80] sm:$0xff]
    %v761 = vld [vmem:[#allocation8 + $0xa88] sm:$0xff]
    %v762 = vld [vmem:[#allocation8 + $0xa90] sm:$0xff]
    %v763 = vld [vmem:[#allocation8 + $0xa98] sm:$0xff]
    %v764 = vld [vmem:[#allocation8 + $0xaa0] sm:$0xff]
    %v765 = vld [vmem:[#allocation8 + $0xaa8] sm:$0xff]
    %v766 = vld [vmem:[#allocation8 + $0xab0] sm:$0xff]
    %v767 = vld [vmem:[#allocation8 + $0xab8] sm:$0xff]
    %v768 = vld [vmem:[#allocation8 + $0xac0] sm:$0xff]
    %v769 = vld [vmem:[#allocation8 + $0xac8] sm:$0xff]
    %v770 = vld [vmem:[#allocation8 + $0xad0] sm:$0xff]
    %v771 = vld [vmem:[#allocation8 + $0xad8] sm:$0xff]
    %v772 = vld [vmem:[#allocation8 + $0xae0] sm:$0xff]
    %v773 = vld [vmem:[#allocation8 + $0xae8] sm:$0xff]
    %v774 = vld [vmem:[#allocation8 + $0xaf0] sm:$0xff]
    %v775 = vld [vmem:[#allocation8 + $0xaf8] sm:$0xff]
    %v776 = vld [vmem:[#allocation8 + $0xb00] sm:$0xff]
    %v777 = vld [vmem:[#allocation8 + $0xb08] sm:$0xff]
    %v778 = vld [vmem:[#allocation8 + $0xb10] sm:$0xff]
    %v779 = vld [vmem:[#allocation8 + $0xb18] sm:$0xff]
    %v780 = vld [vmem:[#allocation8 + $0xb20] sm:$0xff]
    %v781 = vld [vmem:[#allocation8 + $0xb28] sm:$0xff]
    %v782 = vld [vmem:[#allocation8 + $0xb30] sm:$0xff]
    %v783 = vld [vmem:[#allocation8 + $0xb38] sm:$0xff]
    %v784 = vld [vmem:[#allocation8 + $0xb40] sm:$0xff]
    %v785 = vld [vmem:[#allocation8 + $0xb48] sm:$0xff]
    %v786 = vld [vmem:[#allocation8 + $0xb50] sm:$0xff]
    %v787 = vld [vmem:[#allocation8 + $0xb58] sm:$0xff]
    %v788 = vld [vmem:[#allocation8 + $0xb60] sm:$0xff]
    %v789 = vld [vmem:[#allocation8 + $0xb68] sm:$0xff]
    %v790 = vld [vmem:[#allocation8 + $0xb70] sm:$0xff]
    %v791 = vld [vmem:[#allocation8 + $0xb78] sm:$0xff]
    %v792 = vld [vmem:[#allocation8 + $0xb80] sm:$0xff]
    %v793 = vld [vmem:[#allocation8 + $0xb88] sm:$0xff]
    %v794 = vld [vmem:[#allocation8 + $0xb90] sm:$0xff]
    %v795 = vld [vmem:[#allocation8 + $0xb98] sm:$0xff]
    %v796 = vld [vmem:[#allocation8 + $0xba0] sm:$0xff]
    %v797 = vld [vmem:[#allocation8 + $0xba8] sm:$0xff]
    %v798 = vld [vmem:[#allocation8 + $0xbb0] sm:$0xff]
    %v799 = vld [vmem:[#allocation8 + $0xbb8] sm:$0xff]
    %v800 = vld [vmem:[#allocation8 + $0xbc0] sm:$0xff]
    %v801 = vld [vmem:[#allocation8 + $0xbc8] sm:$0xff]
    %v802 = vld [vmem:[#allocation8 + $0xbd0] sm:$0xff]
    %v803 = vld [vmem:[#allocation8 + $0xbd8] sm:$0xff]
    %v804 = vld [vmem:[#allocation8 + $0xbe0] sm:$0xff]
    %v805 = vld [vmem:[#allocation8 + $0xbe8] sm:$0xff]
    %v806 = vld [vmem:[#allocation8 + $0xbf0] sm:$0xff]
    %v807 = vld [vmem:[#allocation8 + $0xbf8] sm:$0xff]
    %v808 = vld [vmem:[#allocation8 + $0xc00] sm:$0xff]
    %v809 = vld [vmem:[#allocation8 + $0xc08] sm:$0xff]
    %v810 = vld [vmem:[#allocation8 + $0xc10] sm:$0xff]
    %v811 = vld [vmem:[#allocation8 + $0xc18] sm:$0xff]
    %v812 = vld [vmem:[#allocation8 + $0xc20] sm:$0xff]
    %v813 = vld [vmem:[#allocation8 + $0xc28] sm:$0xff]
    %v814 = vld [vmem:[#allocation8 + $0xc30] sm:$0xff]
    %v815 = vld [vmem:[#allocation8 + $0xc38] sm:$0xff]
    %v816 = vld [vmem:[#allocation8 + $0xc40] sm:$0xff]
    %v817 = vld [vmem:[#allocation8 + $0xc48] sm:$0xff]
    %v818 = vld [vmem:[#allocation8 + $0xc50] sm:$0xff]
    %v819 = vld [vmem:[#allocation8 + $0xc58] sm:$0xff]
    %v820 = vld [vmem:[#allocation8 + $0xc60] sm:$0xff]
    %v821 = vld [vmem:[#allocation8 + $0xc68] sm:$0xff]
    %v822 = vld [vmem:[#allocation8 + $0xc70] sm:$0xff]
    %v823 = vld [vmem:[#allocation8 + $0xc78] sm:$0xff]
    %v824 = vld [vmem:[#allocation8 + $0xc80] sm:$0xff]
    %v825 = vld [vmem:[#allocation8 + $0xc88] sm:$0xff]
    %v826 = vld [vmem:[#allocation8 + $0xc90] sm:$0xff]
    %v827 = vld [vmem:[#allocation8 + $0xc98] sm:$0xff]
    %v828 = vld [vmem:[#allocation8 + $0xca0] sm:$0xff]
    %v829 = vld [vmem:[#allocation8 + $0xca8] sm:$0xff]
    %v830 = vld [vmem:[#allocation8 + $0xcb0] sm:$0xff]
    %v831 = vld [vmem:[#allocation8 + $0xcb8] sm:$0xff]
    %v832 = vld [vmem:[#allocation8 + $0xcc0] sm:$0xff]
    %v833 = vld [vmem:[#allocation8 + $0xcc8] sm:$0xff]
    %v834 = vld [vmem:[#allocation8 + $0xcd0] sm:$0xff]
    %v835 = vld [vmem:[#allocation8 + $0xcd8] sm:$0xff]
    %v836 = vld [vmem:[#allocation8 + $0xce0] sm:$0xff]
    %v837 = vld [vmem:[#allocation8 + $0xce8] sm:$0xff]
    %v838 = vld [vmem:[#allocation8 + $0xcf0] sm:$0xff]
    %v839 = vld [vmem:[#allocation8 + $0xcf8] sm:$0xff]
    %v840 = vld [vmem:[#allocation8 + $0xd00] sm:$0xff]
    %v841 = vld [vmem:[#allocation8 + $0xd08] sm:$0xff]
    %v842 = vld [vmem:[#allocation8 + $0xd10] sm:$0xff]
    %v843 = vld [vmem:[#allocation8 + $0xd18] sm:$0xff]
    %v844 = vld [vmem:[#allocation8 + $0xd20] sm:$0xff]
    %v845 = vld [vmem:[#allocation8 + $0xd28] sm:$0xff]
    %v846 = vld [vmem:[#allocation8 + $0xd30] sm:$0xff]
    %v847 = vld [vmem:[#allocation8 + $0xd38] sm:$0xff]
    %v848 = vld [vmem:[#allocation8 + $0xd40] sm:$0xff]
    %v849 = vld [vmem:[#allocation8 + $0xd48] sm:$0xff]
    %v850 = vld [vmem:[#allocation8 + $0xd50] sm:$0xff]
    %v851 = vld [vmem:[#allocation8 + $0xd58] sm:$0xff]
    %v852 = vld [vmem:[#allocation8 + $0xd60] sm:$0xff]
    %v853 = vld [vmem:[#allocation8 + $0xd68] sm:$0xff]
    %v854 = vld [vmem:[#allocation8 + $0xd70] sm:$0xff]
    %v855 = vld [vmem:[#allocation8 + $0xd78] sm:$0xff]
    %v856 = vld [vmem:[#allocation8 + $0xd80] sm:$0xff]
    %v857 = vld [vmem:[#allocation8 + $0xd88] sm:$0xff]
    %v858 = vld [vmem:[#allocation8 + $0xd90] sm:$0xff]
    %v859 = vld [vmem:[#allocation8 + $0xd98] sm:$0xff]
    %v860 = vld [vmem:[#allocation8 + $0xda0] sm:$0xff]
    %v861 = vld [vmem:[#allocation8 + $0xda8] sm:$0xff]
    %v862 = vld [vmem:[#allocation8 + $0xdb0] sm:$0xff]
    %v863 = vld [vmem:[#allocation8 + $0xdb8] sm:$0xff]
    %v864 = vld [vmem:[#allocation8 + $0xdc0] sm:$0xff]
    %v865 = vld [vmem:[#allocation8 + $0xdc8] sm:$0xff]
    %v866 = vld [vmem:[#allocation8 + $0xdd0] sm:$0xff]
    %v867 = vld [vmem:[#allocation8 + $0xdd8] sm:$0xff]
    %v868 = vld [vmem:[#allocation8 + $0xde0] sm:$0xff]
    %v869 = vld [vmem:[#allocation8 + $0xde8] sm:$0xff]
    %v870 = vld [vmem:[#allocation8 + $0xdf0] sm:$0xff]
    %v871 = vld [vmem:[#allocation8 + $0xdf8] sm:$0xff]
    %v872 = vld [vmem:[#allocation8 + $0xe00] sm:$0xff]
    %v873 = vld [vmem:[#allocation8 + $0xe08] sm:$0xff]
    %v874 = vld [vmem:[#allocation8 + $0xe10] sm:$0xff]
    %v875 = vld [vmem:[#allocation8 + $0xe18] sm:$0xff]
    %v876 = vld [vmem:[#allocation8 + $0xe20] sm:$0xff]
    %v877 = vld [vmem:[#allocation8 + $0xe28] sm:$0xff]
    %v878 = vld [vmem:[#allocation8 + $0xe30] sm:$0xff]
    %v879 = vld [vmem:[#allocation8 + $0xe38] sm:$0xff]
    %v880 = vld [vmem:[#allocation8 + $0xe40] sm:$0xff]
    %v881 = vld [vmem:[#allocation8 + $0xe48] sm:$0xff]
    %v882 = vld [vmem:[#allocation8 + $0xe50] sm:$0xff]
    %v883 = vld [vmem:[#allocation8 + $0xe58] sm:$0xff]
    %v884 = vld [vmem:[#allocation8 + $0xe60] sm:$0xff]
    %v885 = vld [vmem:[#allocation8 + $0xe68] sm:$0xff]
    %v886 = vld [vmem:[#allocation8 + $0xe70] sm:$0xff]
    %v887 = vld [vmem:[#allocation8 + $0xe78] sm:$0xff]
    %v888 = vld [vmem:[#allocation8 + $0xe80] sm:$0xff]
    %v889 = vld [vmem:[#allocation8 + $0xe88] sm:$0xff]
    %v890 = vld [vmem:[#allocation8 + $0xe90] sm:$0xff]
    %v891 = vld [vmem:[#allocation8 + $0xe98] sm:$0xff]
    %v892 = vld [vmem:[#allocation8 + $0xea0] sm:$0xff]
    %v893 = vld [vmem:[#allocation8 + $0xea8] sm:$0xff]
    %v894 = vld [vmem:[#allocation8 + $0xeb0] sm:$0xff]
    %v895 = vld [vmem:[#allocation8 + $0xeb8] sm:$0xff]
    %v896 = vld [vmem:[#allocation8 + $0xec0] sm:$0xff]
    %v897 = vld [vmem:[#allocation8 + $0xec8] sm:$0xff]
    %v898 = vld [vmem:[#allocation8 + $0xed0] sm:$0xff]
    %v899 = vld [vmem:[#allocation8 + $0xed8] sm:$0xff]
    %v900 = vld [vmem:[#allocation8 + $0xee0] sm:$0xff]
    %v901 = vld [vmem:[#allocation8 + $0xee8] sm:$0xff]
    %v902 = vld [vmem:[#allocation8 + $0xef0] sm:$0xff]
    %v903 = vld [vmem:[#allocation8 + $0xef8] sm:$0xff]
    %v904 = vld [vmem:[#allocation8 + $0xf00] sm:$0xff]
    %v905 = vld [vmem:[#allocation8 + $0xf08] sm:$0xff]
    %v906 = vld [vmem:[#allocation8 + $0xf10] sm:$0xff]
    %v907 = vld [vmem:[#allocation8 + $0xf18] sm:$0xff]
    %v908 = vld [vmem:[#allocation8 + $0xf20] sm:$0xff]
    %v909 = vld [vmem:[#allocation8 + $0xf28] sm:$0xff]
    %v910 = vld [vmem:[#allocation8 + $0xf30] sm:$0xff]
    %v911 = vld [vmem:[#allocation8 + $0xf38] sm:$0xff]
    %v912 = vld [vmem:[#allocation8 + $0xf40] sm:$0xff]
    %v913 = vld [vmem:[#allocation8 + $0xf48] sm:$0xff]
    %v914 = vld [vmem:[#allocation8 + $0xf50] sm:$0xff]
    %v915 = vld [vmem:[#allocation8 + $0xf58] sm:$0xff]
    %v916 = vld [vmem:[#allocation8 + $0xf60] sm:$0xff]
    %v917 = vld [vmem:[#allocation8 + $0xf68] sm:$0xff]
    %v918 = vld [vmem:[#allocation8 + $0xf70] sm:$0xff]
    %v919 = vld [vmem:[#allocation8 + $0xf78] sm:$0xff]
    %v920 = vld [vmem:[#allocation8 + $0xf80] sm:$0xff]
    %v921 = vld [vmem:[#allocation8 + $0xf88] sm:$0xff]
    %v922 = vld [vmem:[#allocation8 + $0xf90] sm:$0xff]
    %v923 = vld [vmem:[#allocation8 + $0xf98] sm:$0xff]
    %v924 = vld [vmem:[#allocation8 + $0xfa0] sm:$0xff]
    %v925 = vld [vmem:[#allocation8 + $0xfa8] sm:$0xff]
    %v926 = vld [vmem:[#allocation8 + $0xfb0] sm:$0xff]
    %v927 = vld [vmem:[#allocation8 + $0xfb8] sm:$0xff]
    %v928 = vld [vmem:[#allocation8 + $0xfc0] sm:$0xff]
    %v929 = vld [vmem:[#allocation8 + $0xfc8] sm:$0xff]
    %v930 = vld [vmem:[#allocation8 + $0xfd0] sm:$0xff]
    %v931 = vld [vmem:[#allocation8 + $0xfd8] sm:$0xff]
    %v932 = vld [vmem:[#allocation8 + $0xfe0] sm:$0xff]
    %v933 = vld [vmem:[#allocation8 + $0xfe8] sm:$0xff]
    %v934 = vld [vmem:[#allocation8 + $0xff0] sm:$0xff]
    %v935 = vld [vmem:[#allocation8 + $0xff8] sm:$0xff]
    %v936 = vld [vmem:[#allocation10] sm:$0xff]
    %v938 = vperm.slane %v936, 0
    %v939 = vperm.slane %v936, 1
    %v940 = vperm.slane %v936, 2
    %v941 = vperm.slane %v936, 3
    %v942 = vperm.slane %v936, 4
    %v943 = vperm.slane %v936, 5
    %v944 = vperm.slane %v936, 6
    %v945 = vperm.slane %v936, 7
    %v1466 = vunpack.c.l.b16 %v424
    %v1467 = vunpack.c.h.b16 %v424
    %v1468 = vunpack.c.l.b16 %v425
    %v1469 = vunpack.c.h.b16 %v425
    %v1470 = vunpack.c.l.b16 %v426
    %v1471 = vunpack.c.h.b16 %v426
    %v1472 = vunpack.c.l.b16 %v427
    %v1473 = vunpack.c.h.b16 %v427
    %v1474 = vunpack.c.l.b16 %v428
    %v1475 = vunpack.c.h.b16 %v428
    %v1476 = vunpack.c.l.b16 %v429
    %v1477 = vunpack.c.h.b16 %v429
    %v1478 = vunpack.c.l.b16 %v430
    %v1479 = vunpack.c.h.b16 %v430
    %v1480 = vunpack.c.l.b16 %v431
    %v1481 = vunpack.c.h.b16 %v431
    %v1482 = vunpack.c.l.b16 %v432
    %v1483 = vunpack.c.h.b16 %v432
    %v1484 = vunpack.c.l.b16 %v433
    %v1485 = vunpack.c.h.b16 %v433
    %v1486 = vunpack.c.l.b16 %v434
    %v1487 = vunpack.c.h.b16 %v434
    %v1488 = vunpack.c.l.b16 %v435
    %v1489 = vunpack.c.h.b16 %v435
    %v1490 = vunpack.c.l.b16 %v436
    %v1491 = vunpack.c.h.b16 %v436
    %v1492 = vunpack.c.l.b16 %v437
    %v1493 = vunpack.c.h.b16 %v437
    %v1494 = vunpack.c.l.b16 %v438
    %v1495 = vunpack.c.h.b16 %v438
    %v1496 = vunpack.c.l.b16 %v439
    %v1497 = vunpack.c.h.b16 %v439
    %v1498 = vunpack.c.l.b16 %v440
    %v1499 = vunpack.c.h.b16 %v440
    %v1500 = vunpack.c.l.b16 %v441
    %v1501 = vunpack.c.h.b16 %v441
    %v1502 = vunpack.c.l.b16 %v442
    %v1503 = vunpack.c.h.b16 %v442
    %v1504 = vunpack.c.l.b16 %v443
    %v1505 = vunpack.c.h.b16 %v443
    %v1506 = vunpack.c.l.b16 %v444
    %v1507 = vunpack.c.h.b16 %v444
    %v1508 = vunpack.c.l.b16 %v445
    %v1509 = vunpack.c.h.b16 %v445
    %v1510 = vunpack.c.l.b16 %v446
    %v1511 = vunpack.c.h.b16 %v446
    %v1512 = vunpack.c.l.b16 %v447
    %v1513 = vunpack.c.h.b16 %v447
    %v1514 = vunpack.c.l.b16 %v448
    %v1515 = vunpack.c.h.b16 %v448
    %v1516 = vunpack.c.l.b16 %v449
    %v1517 = vunpack.c.h.b16 %v449
    %v1518 = vunpack.c.l.b16 %v450
    %v1519 = vunpack.c.h.b16 %v450
    %v1520 = vunpack.c.l.b16 %v451
    %v1521 = vunpack.c.h.b16 %v451
    %v1522 = vunpack.c.l.b16 %v452
    %v1523 = vunpack.c.h.b16 %v452
    %v1524 = vunpack.c.l.b16 %v453
    %v1525 = vunpack.c.h.b16 %v453
    %v1526 = vunpack.c.l.b16 %v454
    %v1527 = vunpack.c.h.b16 %v454
    %v1528 = vunpack.c.l.b16 %v455
    %v1529 = vunpack.c.h.b16 %v455
    %v1530 = vunpack.c.l.b16 %v456
    %v1531 = vunpack.c.h.b16 %v456
    %v1532 = vunpack.c.l.b16 %v457
    %v1533 = vunpack.c.h.b16 %v457
    %v1534 = vunpack.c.l.b16 %v458
    %v1535 = vunpack.c.h.b16 %v458
    %v1536 = vunpack.c.l.b16 %v459
    %v1537 = vunpack.c.h.b16 %v459
    %v1538 = vunpack.c.l.b16 %v460
    %v1539 = vunpack.c.h.b16 %v460
    %v1540 = vunpack.c.l.b16 %v461
    %v1541 = vunpack.c.h.b16 %v461
    %v1542 = vunpack.c.l.b16 %v462
    %v1543 = vunpack.c.h.b16 %v462
    %v1544 = vunpack.c.l.b16 %v463
    %v1545 = vunpack.c.h.b16 %v463
    %v1546 = vunpack.c.l.b16 %v464
    %v1547 = vunpack.c.h.b16 %v464
    %v1548 = vunpack.c.l.b16 %v465
    %v1549 = vunpack.c.h.b16 %v465
    %v1550 = vunpack.c.l.b16 %v466
    %v1551 = vunpack.c.h.b16 %v466
    %v1552 = vunpack.c.l.b16 %v467
    %v1553 = vunpack.c.h.b16 %v467
    %v1554 = vunpack.c.l.b16 %v468
    %v1555 = vunpack.c.h.b16 %v468
    %v1556 = vunpack.c.l.b16 %v469
    %v1557 = vunpack.c.h.b16 %v469
    %v1558 = vunpack.c.l.b16 %v470
    %v1559 = vunpack.c.h.b16 %v470
    %v1560 = vunpack.c.l.b16 %v471
    %v1561 = vunpack.c.h.b16 %v471
    %v1562 = vunpack.c.l.b16 %v472
    %v1563 = vunpack.c.h.b16 %v472
    %v1564 = vunpack.c.l.b16 %v473
    %v1565 = vunpack.c.h.b16 %v473
    %v1566 = vunpack.c.l.b16 %v474
    %v1567 = vunpack.c.h.b16 %v474
    %v1568 = vunpack.c.l.b16 %v475
    %v1569 = vunpack.c.h.b16 %v475
    %v1570 = vunpack.c.l.b16 %v476
    %v1571 = vunpack.c.h.b16 %v476
    %v1572 = vunpack.c.l.b16 %v477
    %v1573 = vunpack.c.h.b16 %v477
    %v1574 = vunpack.c.l.b16 %v478
    %v1575 = vunpack.c.h.b16 %v478
    %v1576 = vunpack.c.l.b16 %v479
    %v1577 = vunpack.c.h.b16 %v479
    %v1578 = vunpack.c.l.b16 %v480
    %v1579 = vunpack.c.h.b16 %v480
    %v1580 = vunpack.c.l.b16 %v481
    %v1581 = vunpack.c.h.b16 %v481
    %v1582 = vunpack.c.l.b16 %v482
    %v1583 = vunpack.c.h.b16 %v482
    %v1584 = vunpack.c.l.b16 %v483
    %v1585 = vunpack.c.h.b16 %v483
    %v1586 = vunpack.c.l.b16 %v484
    %v1587 = vunpack.c.h.b16 %v484
    %v1588 = vunpack.c.l.b16 %v485
    %v1589 = vunpack.c.h.b16 %v485
    %v1590 = vunpack.c.l.b16 %v486
    %v1591 = vunpack.c.h.b16 %v486
    %v1592 = vunpack.c.l.b16 %v487
    %v1593 = vunpack.c.h.b16 %v487
    %v1594 = vunpack.c.l.b16 %v488
    %v1595 = vunpack.c.h.b16 %v488
    %v1596 = vunpack.c.l.b16 %v489
    %v1597 = vunpack.c.h.b16 %v489
    %v1598 = vunpack.c.l.b16 %v490
    %v1599 = vunpack.c.h.b16 %v490
    %v1600 = vunpack.c.l.b16 %v491
    %v1601 = vunpack.c.h.b16 %v491
    %v1602 = vunpack.c.l.b16 %v492
    %v1603 = vunpack.c.h.b16 %v492
    %v1604 = vunpack.c.l.b16 %v493
    %v1605 = vunpack.c.h.b16 %v493
    %v1606 = vunpack.c.l.b16 %v494
    %v1607 = vunpack.c.h.b16 %v494
    %v1608 = vunpack.c.l.b16 %v495
    %v1609 = vunpack.c.h.b16 %v495
    %v1610 = vunpack.c.l.b16 %v496
    %v1611 = vunpack.c.h.b16 %v496
    %v1612 = vunpack.c.l.b16 %v497
    %v1613 = vunpack.c.h.b16 %v497
    %v1614 = vunpack.c.l.b16 %v498
    %v1615 = vunpack.c.h.b16 %v498
    %v1616 = vunpack.c.l.b16 %v499
    %v1617 = vunpack.c.h.b16 %v499
    %v1618 = vunpack.c.l.b16 %v500
    %v1619 = vunpack.c.h.b16 %v500
    %v1620 = vunpack.c.l.b16 %v501
    %v1621 = vunpack.c.h.b16 %v501
    %v1622 = vunpack.c.l.b16 %v502
    %v1623 = vunpack.c.h.b16 %v502
    %v1624 = vunpack.c.l.b16 %v503
    %v1625 = vunpack.c.h.b16 %v503
    %v1626 = vunpack.c.l.b16 %v504
    %v1627 = vunpack.c.h.b16 %v504
    %v1628 = vunpack.c.l.b16 %v505
    %v1629 = vunpack.c.h.b16 %v505
    %v1630 = vunpack.c.l.b16 %v506
    %v1631 = vunpack.c.h.b16 %v506
    %v1632 = vunpack.c.l.b16 %v507
    %v1633 = vunpack.c.h.b16 %v507
    %v1634 = vunpack.c.l.b16 %v508
    %v1635 = vunpack.c.h.b16 %v508
    %v1636 = vunpack.c.l.b16 %v509
    %v1637 = vunpack.c.h.b16 %v509
    %v1638 = vunpack.c.l.b16 %v510
    %v1639 = vunpack.c.h.b16 %v510
    %v1640 = vunpack.c.l.b16 %v511
    %v1641 = vunpack.c.h.b16 %v511
    %v1642 = vunpack.c.l.b16 %v512
    %v1643 = vunpack.c.h.b16 %v512
    %v1644 = vunpack.c.l.b16 %v513
    %v1645 = vunpack.c.h.b16 %v513
    %v1646 = vunpack.c.l.b16 %v514
    %v1647 = vunpack.c.h.b16 %v514
    %v1648 = vunpack.c.l.b16 %v515
    %v1649 = vunpack.c.h.b16 %v515
    %v1650 = vunpack.c.l.b16 %v516
    %v1651 = vunpack.c.h.b16 %v516
    %v1652 = vunpack.c.l.b16 %v517
    %v1653 = vunpack.c.h.b16 %v517
    %v1654 = vunpack.c.l.b16 %v518
    %v1655 = vunpack.c.h.b16 %v518
    %v1656 = vunpack.c.l.b16 %v519
    %v1657 = vunpack.c.h.b16 %v519
    %v1658 = vunpack.c.l.b16 %v520
    %v1659 = vunpack.c.h.b16 %v520
    %v1660 = vunpack.c.l.b16 %v521
    %v1661 = vunpack.c.h.b16 %v521
    %v1662 = vunpack.c.l.b16 %v522
    %v1663 = vunpack.c.h.b16 %v522
    %v1664 = vunpack.c.l.b16 %v523
    %v1665 = vunpack.c.h.b16 %v523
    %v1666 = vunpack.c.l.b16 %v524
    %v1667 = vunpack.c.h.b16 %v524
    %v1668 = vunpack.c.l.b16 %v525
    %v1669 = vunpack.c.h.b16 %v525
    %v1670 = vunpack.c.l.b16 %v526
    %v1671 = vunpack.c.h.b16 %v526
    %v1672 = vunpack.c.l.b16 %v527
    %v1673 = vunpack.c.h.b16 %v527
    %v1674 = vunpack.c.l.b16 %v528
    %v1675 = vunpack.c.h.b16 %v528
    %v1676 = vunpack.c.l.b16 %v529
    %v1677 = vunpack.c.h.b16 %v529
    %v1678 = vunpack.c.l.b16 %v530
    %v1679 = vunpack.c.h.b16 %v530
    %v1680 = vunpack.c.l.b16 %v531
    %v1681 = vunpack.c.h.b16 %v531
    %v1682 = vunpack.c.l.b16 %v532
    %v1683 = vunpack.c.h.b16 %v532
    %v1684 = vunpack.c.l.b16 %v533
    %v1685 = vunpack.c.h.b16 %v533
    %v1686 = vunpack.c.l.b16 %v534
    %v1687 = vunpack.c.h.b16 %v534
    %v1688 = vunpack.c.l.b16 %v535
    %v1689 = vunpack.c.h.b16 %v535
    %v1690 = vunpack.c.l.b16 %v536
    %v1691 = vunpack.c.h.b16 %v536
    %v1692 = vunpack.c.l.b16 %v537
    %v1693 = vunpack.c.h.b16 %v537
    %v1694 = vunpack.c.l.b16 %v538
    %v1695 = vunpack.c.h.b16 %v538
    %v1696 = vunpack.c.l.b16 %v539
    %v1697 = vunpack.c.h.b16 %v539
    %v1698 = vunpack.c.l.b16 %v540
    %v1699 = vunpack.c.h.b16 %v540
    %v1700 = vunpack.c.l.b16 %v541
    %v1701 = vunpack.c.h.b16 %v541
    %v1702 = vunpack.c.l.b16 %v542
    %v1703 = vunpack.c.h.b16 %v542
    %v1704 = vunpack.c.l.b16 %v543
    %v1705 = vunpack.c.h.b16 %v543
    %v1706 = vunpack.c.l.b16 %v544
    %v1707 = vunpack.c.h.b16 %v544
    %v1708 = vunpack.c.l.b16 %v545
    %v1709 = vunpack.c.h.b16 %v545
    %v1710 = vunpack.c.l.b16 %v546
    %v1711 = vunpack.c.h.b16 %v546
    %v1712 = vunpack.c.l.b16 %v547
    %v1713 = vunpack.c.h.b16 %v547
    %v1714 = vunpack.c.l.b16 %v548
    %v1715 = vunpack.c.h.b16 %v548
    %v1716 = vunpack.c.l.b16 %v549
    %v1717 = vunpack.c.h.b16 %v549
    %v1718 = vunpack.c.l.b16 %v550
    %v1719 = vunpack.c.h.b16 %v550
    %v1720 = vunpack.c.l.b16 %v551
    %v1721 = vunpack.c.h.b16 %v551
    %v1722 = vunpack.c.l.b16 %v552
    %v1723 = vunpack.c.h.b16 %v552
    %v1724 = vunpack.c.l.b16 %v553
    %v1725 = vunpack.c.h.b16 %v553
    %v1726 = vunpack.c.l.b16 %v554
    %v1727 = vunpack.c.h.b16 %v554
    %v1728 = vunpack.c.l.b16 %v555
    %v1729 = vunpack.c.h.b16 %v555
    %v1730 = vunpack.c.l.b16 %v556
    %v1731 = vunpack.c.h.b16 %v556
    %v1732 = vunpack.c.l.b16 %v557
    %v1733 = vunpack.c.h.b16 %v557
    %v1734 = vunpack.c.l.b16 %v558
    %v1735 = vunpack.c.h.b16 %v558
    %v1736 = vunpack.c.l.b16 %v559
    %v1737 = vunpack.c.h.b16 %v559
    %v1738 = vunpack.c.l.b16 %v560
    %v1739 = vunpack.c.h.b16 %v560
    %v1740 = vunpack.c.l.b16 %v561
    %v1741 = vunpack.c.h.b16 %v561
    %v1742 = vunpack.c.l.b16 %v562
    %v1743 = vunpack.c.h.b16 %v562
    %v1744 = vunpack.c.l.b16 %v563
    %v1745 = vunpack.c.h.b16 %v563
    %v1746 = vunpack.c.l.b16 %v564
    %v1747 = vunpack.c.h.b16 %v564
    %v1748 = vunpack.c.l.b16 %v565
    %v1749 = vunpack.c.h.b16 %v565
    %v1750 = vunpack.c.l.b16 %v566
    %v1751 = vunpack.c.h.b16 %v566
    %v1752 = vunpack.c.l.b16 %v567
    %v1753 = vunpack.c.h.b16 %v567
    %v1754 = vunpack.c.l.b16 %v568
    %v1755 = vunpack.c.h.b16 %v568
    %v1756 = vunpack.c.l.b16 %v569
    %v1757 = vunpack.c.h.b16 %v569
    %v1758 = vunpack.c.l.b16 %v570
    %v1759 = vunpack.c.h.b16 %v570
    %v1760 = vunpack.c.l.b16 %v571
    %v1761 = vunpack.c.h.b16 %v571
    %v1762 = vunpack.c.l.b16 %v572
    %v1763 = vunpack.c.h.b16 %v572
    %v1764 = vunpack.c.l.b16 %v573
    %v1765 = vunpack.c.h.b16 %v573
    %v1766 = vunpack.c.l.b16 %v574
    %v1767 = vunpack.c.h.b16 %v574
    %v1768 = vunpack.c.l.b16 %v575
    %v1769 = vunpack.c.h.b16 %v575
    %v1770 = vunpack.c.l.b16 %v576
    %v1771 = vunpack.c.h.b16 %v576
    %v1772 = vunpack.c.l.b16 %v577
    %v1773 = vunpack.c.h.b16 %v577
    %v1774 = vunpack.c.l.b16 %v578
    %v1775 = vunpack.c.h.b16 %v578
    %v1776 = vunpack.c.l.b16 %v579
    %v1777 = vunpack.c.h.b16 %v579
    %v1778 = vunpack.c.l.b16 %v580
    %v1779 = vunpack.c.h.b16 %v580
    %v1780 = vunpack.c.l.b16 %v581
    %v1781 = vunpack.c.h.b16 %v581
    %v1782 = vunpack.c.l.b16 %v582
    %v1783 = vunpack.c.h.b16 %v582
    %v1784 = vunpack.c.l.b16 %v583
    %v1785 = vunpack.c.h.b16 %v583
    %v1786 = vunpack.c.l.b16 %v584
    %v1787 = vunpack.c.h.b16 %v584
    %v1788 = vunpack.c.l.b16 %v585
    %v1789 = vunpack.c.h.b16 %v585
    %v1790 = vunpack.c.l.b16 %v586
    %v1791 = vunpack.c.h.b16 %v586
    %v1792 = vunpack.c.l.b16 %v587
    %v1793 = vunpack.c.h.b16 %v587
    %v1794 = vunpack.c.l.b16 %v588
    %v1795 = vunpack.c.h.b16 %v588
    %v1796 = vunpack.c.l.b16 %v589
    %v1797 = vunpack.c.h.b16 %v589
    %v1798 = vunpack.c.l.b16 %v590
    %v1799 = vunpack.c.h.b16 %v590
    %v1800 = vunpack.c.l.b16 %v591
    %v1801 = vunpack.c.h.b16 %v591
    %v1802 = vunpack.c.l.b16 %v592
    %v1803 = vunpack.c.h.b16 %v592
    %v1804 = vunpack.c.l.b16 %v593
    %v1805 = vunpack.c.h.b16 %v593
    %v1806 = vunpack.c.l.b16 %v594
    %v1807 = vunpack.c.h.b16 %v594
    %v1808 = vunpack.c.l.b16 %v595
    %v1809 = vunpack.c.h.b16 %v595
    %v1810 = vunpack.c.l.b16 %v596
    %v1811 = vunpack.c.h.b16 %v596
    %v1812 = vunpack.c.l.b16 %v597
    %v1813 = vunpack.c.h.b16 %v597
    %v1814 = vunpack.c.l.b16 %v598
    %v1815 = vunpack.c.h.b16 %v598
    %v1816 = vunpack.c.l.b16 %v599
    %v1817 = vunpack.c.h.b16 %v599
    %v1818 = vunpack.c.l.b16 %v600
    %v1819 = vunpack.c.h.b16 %v600
    %v1820 = vunpack.c.l.b16 %v601
    %v1821 = vunpack.c.h.b16 %v601
    %v1822 = vunpack.c.l.b16 %v602
    %v1823 = vunpack.c.h.b16 %v602
    %v1824 = vunpack.c.l.b16 %v603
    %v1825 = vunpack.c.h.b16 %v603
    %v1826 = vunpack.c.l.b16 %v604
    %v1827 = vunpack.c.h.b16 %v604
    %v1828 = vunpack.c.l.b16 %v605
    %v1829 = vunpack.c.h.b16 %v605
    %v1830 = vunpack.c.l.b16 %v606
    %v1831 = vunpack.c.h.b16 %v606
    %v1832 = vunpack.c.l.b16 %v607
    %v1833 = vunpack.c.h.b16 %v607
    %v1834 = vunpack.c.l.b16 %v608
    %v1835 = vunpack.c.h.b16 %v608
    %v1836 = vunpack.c.l.b16 %v609
    %v1837 = vunpack.c.h.b16 %v609
    %v1838 = vunpack.c.l.b16 %v610
    %v1839 = vunpack.c.h.b16 %v610
    %v1840 = vunpack.c.l.b16 %v611
    %v1841 = vunpack.c.h.b16 %v611
    %v1842 = vunpack.c.l.b16 %v612
    %v1843 = vunpack.c.h.b16 %v612
    %v1844 = vunpack.c.l.b16 %v613
    %v1845 = vunpack.c.h.b16 %v613
    %v1846 = vunpack.c.l.b16 %v614
    %v1847 = vunpack.c.h.b16 %v614
    %v1848 = vunpack.c.l.b16 %v615
    %v1849 = vunpack.c.h.b16 %v615
    %v1850 = vunpack.c.l.b16 %v616
    %v1851 = vunpack.c.h.b16 %v616
    %v1852 = vunpack.c.l.b16 %v617
    %v1853 = vunpack.c.h.b16 %v617
    %v1854 = vunpack.c.l.b16 %v618
    %v1855 = vunpack.c.h.b16 %v618
    %v1856 = vunpack.c.l.b16 %v619
    %v1857 = vunpack.c.h.b16 %v619
    %v1858 = vunpack.c.l.b16 %v620
    %v1859 = vunpack.c.h.b16 %v620
    %v1860 = vunpack.c.l.b16 %v621
    %v1861 = vunpack.c.h.b16 %v621
    %v1862 = vunpack.c.l.b16 %v622
    %v1863 = vunpack.c.h.b16 %v622
    %v1864 = vunpack.c.l.b16 %v623
    %v1865 = vunpack.c.h.b16 %v623
    %v1866 = vunpack.c.l.b16 %v624
    %v1867 = vunpack.c.h.b16 %v624
    %v1868 = vunpack.c.l.b16 %v625
    %v1869 = vunpack.c.h.b16 %v625
    %v1870 = vunpack.c.l.b16 %v626
    %v1871 = vunpack.c.h.b16 %v626
    %v1872 = vunpack.c.l.b16 %v627
    %v1873 = vunpack.c.h.b16 %v627
    %v1874 = vunpack.c.l.b16 %v628
    %v1875 = vunpack.c.h.b16 %v628
    %v1876 = vunpack.c.l.b16 %v629
    %v1877 = vunpack.c.h.b16 %v629
    %v1878 = vunpack.c.l.b16 %v630
    %v1879 = vunpack.c.h.b16 %v630
    %v1880 = vunpack.c.l.b16 %v631
    %v1881 = vunpack.c.h.b16 %v631
    %v1882 = vunpack.c.l.b16 %v632
    %v1883 = vunpack.c.h.b16 %v632
    %v1884 = vunpack.c.l.b16 %v633
    %v1885 = vunpack.c.h.b16 %v633
    %v1886 = vunpack.c.l.b16 %v634
    %v1887 = vunpack.c.h.b16 %v634
    %v1888 = vunpack.c.l.b16 %v635
    %v1889 = vunpack.c.h.b16 %v635
    %v1890 = vunpack.c.l.b16 %v636
    %v1891 = vunpack.c.h.b16 %v636
    %v1892 = vunpack.c.l.b16 %v637
    %v1893 = vunpack.c.h.b16 %v637
    %v1894 = vunpack.c.l.b16 %v638
    %v1895 = vunpack.c.h.b16 %v638
    %v1896 = vunpack.c.l.b16 %v639
    %v1897 = vunpack.c.h.b16 %v639
    %v1898 = vunpack.c.l.b16 %v640
    %v1899 = vunpack.c.h.b16 %v640
    %v1900 = vunpack.c.l.b16 %v641
    %v1901 = vunpack.c.h.b16 %v641
    %v1902 = vunpack.c.l.b16 %v642
    %v1903 = vunpack.c.h.b16 %v642
    %v1904 = vunpack.c.l.b16 %v643
    %v1905 = vunpack.c.h.b16 %v643
    %v1906 = vunpack.c.l.b16 %v644
    %v1907 = vunpack.c.h.b16 %v644
    %v1908 = vunpack.c.l.b16 %v645
    %v1909 = vunpack.c.h.b16 %v645
    %v1910 = vunpack.c.l.b16 %v646
    %v1911 = vunpack.c.h.b16 %v646
    %v1912 = vunpack.c.l.b16 %v647
    %v1913 = vunpack.c.h.b16 %v647
    %v1914 = vunpack.c.l.b16 %v648
    %v1915 = vunpack.c.h.b16 %v648
    %v1916 = vunpack.c.l.b16 %v649
    %v1917 = vunpack.c.h.b16 %v649
    %v1918 = vunpack.c.l.b16 %v650
    %v1919 = vunpack.c.h.b16 %v650
    %v1920 = vunpack.c.l.b16 %v651
    %v1921 = vunpack.c.h.b16 %v651
    %v1922 = vunpack.c.l.b16 %v652
    %v1923 = vunpack.c.h.b16 %v652
    %v1924 = vunpack.c.l.b16 %v653
    %v1925 = vunpack.c.h.b16 %v653
    %v1926 = vunpack.c.l.b16 %v654
    %v1927 = vunpack.c.h.b16 %v654
    %v1928 = vunpack.c.l.b16 %v655
    %v1929 = vunpack.c.h.b16 %v655
    %v1930 = vunpack.c.l.b16 %v656
    %v1931 = vunpack.c.h.b16 %v656
    %v1932 = vunpack.c.l.b16 %v657
    %v1933 = vunpack.c.h.b16 %v657
    %v1934 = vunpack.c.l.b16 %v658
    %v1935 = vunpack.c.h.b16 %v658
    %v1936 = vunpack.c.l.b16 %v659
    %v1937 = vunpack.c.h.b16 %v659
    %v1938 = vunpack.c.l.b16 %v660
    %v1939 = vunpack.c.h.b16 %v660
    %v1940 = vunpack.c.l.b16 %v661
    %v1941 = vunpack.c.h.b16 %v661
    %v1942 = vunpack.c.l.b16 %v662
    %v1943 = vunpack.c.h.b16 %v662
    %v1944 = vunpack.c.l.b16 %v663
    %v1945 = vunpack.c.h.b16 %v663
    %v1946 = vunpack.c.l.b16 %v664
    %v1947 = vunpack.c.h.b16 %v664
    %v1948 = vunpack.c.l.b16 %v665
    %v1949 = vunpack.c.h.b16 %v665
    %v1950 = vunpack.c.l.b16 %v666
    %v1951 = vunpack.c.h.b16 %v666
    %v1952 = vunpack.c.l.b16 %v667
    %v1953 = vunpack.c.h.b16 %v667
    %v1954 = vunpack.c.l.b16 %v668
    %v1955 = vunpack.c.h.b16 %v668
    %v1956 = vunpack.c.l.b16 %v669
    %v1957 = vunpack.c.h.b16 %v669
    %v1958 = vunpack.c.l.b16 %v670
    %v1959 = vunpack.c.h.b16 %v670
    %v1960 = vunpack.c.l.b16 %v671
    %v1961 = vunpack.c.h.b16 %v671
    %v1962 = vunpack.c.l.b16 %v672
    %v1963 = vunpack.c.h.b16 %v672
    %v1964 = vunpack.c.l.b16 %v673
    %v1965 = vunpack.c.h.b16 %v673
    %v1966 = vunpack.c.l.b16 %v674
    %v1967 = vunpack.c.h.b16 %v674
    %v1968 = vunpack.c.l.b16 %v675
    %v1969 = vunpack.c.h.b16 %v675
    %v1970 = vunpack.c.l.b16 %v676
    %v1971 = vunpack.c.h.b16 %v676
    %v1972 = vunpack.c.l.b16 %v677
    %v1973 = vunpack.c.h.b16 %v677
    %v1974 = vunpack.c.l.b16 %v678
    %v1975 = vunpack.c.h.b16 %v678
    %v1976 = vunpack.c.l.b16 %v679
    %v1977 = vunpack.c.h.b16 %v679
    %v1978 = vunpack.c.l.b16 %v680
    %v1979 = vunpack.c.h.b16 %v680
    %v1980 = vunpack.c.l.b16 %v681
    %v1981 = vunpack.c.h.b16 %v681
    %v1982 = vunpack.c.l.b16 %v682
    %v1983 = vunpack.c.h.b16 %v682
    %v1984 = vunpack.c.l.b16 %v683
    %v1985 = vunpack.c.h.b16 %v683
    %v1986 = vunpack.c.l.b16 %v684
    %v1987 = vunpack.c.h.b16 %v684
    %v1988 = vunpack.c.l.b16 %v685
    %v1989 = vunpack.c.h.b16 %v685
    %v1990 = vunpack.c.l.b16 %v686
    %v1991 = vunpack.c.h.b16 %v686
    %v1992 = vunpack.c.l.b16 %v687
    %v1993 = vunpack.c.h.b16 %v687
    %v1994 = vunpack.c.l.b16 %v688
    %v1995 = vunpack.c.h.b16 %v688
    %v1996 = vunpack.c.l.b16 %v689
    %v1997 = vunpack.c.h.b16 %v689
    %v1998 = vunpack.c.l.b16 %v690
    %v1999 = vunpack.c.h.b16 %v690
    %v2000 = vunpack.c.l.b16 %v691
    %v2001 = vunpack.c.h.b16 %v691
    %v2002 = vunpack.c.l.b16 %v692
    %v2003 = vunpack.c.h.b16 %v692
    %v2004 = vunpack.c.l.b16 %v693
    %v2005 = vunpack.c.h.b16 %v693
    %v2006 = vunpack.c.l.b16 %v694
    %v2007 = vunpack.c.h.b16 %v694
    %v2008 = vunpack.c.l.b16 %v695
    %v2009 = vunpack.c.h.b16 %v695
    %v2010 = vunpack.c.l.b16 %v696
    %v2011 = vunpack.c.h.b16 %v696
    %v2012 = vunpack.c.l.b16 %v697
    %v2013 = vunpack.c.h.b16 %v697
    %v2014 = vunpack.c.l.b16 %v698
    %v2015 = vunpack.c.h.b16 %v698
    %v2016 = vunpack.c.l.b16 %v699
    %v2017 = vunpack.c.h.b16 %v699
    %v2018 = vunpack.c.l.b16 %v700
    %v2019 = vunpack.c.h.b16 %v700
    %v2020 = vunpack.c.l.b16 %v701
    %v2021 = vunpack.c.h.b16 %v701
    %v2022 = vunpack.c.l.b16 %v702
    %v2023 = vunpack.c.h.b16 %v702
    %v2024 = vunpack.c.l.b16 %v703
    %v2025 = vunpack.c.h.b16 %v703
    %v2026 = vunpack.c.l.b16 %v704
    %v2027 = vunpack.c.h.b16 %v704
    %v2028 = vunpack.c.l.b16 %v705
    %v2029 = vunpack.c.h.b16 %v705
    %v2030 = vunpack.c.l.b16 %v706
    %v2031 = vunpack.c.h.b16 %v706
    %v2032 = vunpack.c.l.b16 %v707
    %v2033 = vunpack.c.h.b16 %v707
    %v2034 = vunpack.c.l.b16 %v708
    %v2035 = vunpack.c.h.b16 %v708
    %v2036 = vunpack.c.l.b16 %v709
    %v2037 = vunpack.c.h.b16 %v709
    %v2038 = vunpack.c.l.b16 %v710
    %v2039 = vunpack.c.h.b16 %v710
    %v2040 = vunpack.c.l.b16 %v711
    %v2041 = vunpack.c.h.b16 %v711
    %v2042 = vunpack.c.l.b16 %v712
    %v2043 = vunpack.c.h.b16 %v712
    %v2044 = vunpack.c.l.b16 %v713
    %v2045 = vunpack.c.h.b16 %v713
    %v2046 = vunpack.c.l.b16 %v714
    %v2047 = vunpack.c.h.b16 %v714
    %v2048 = vunpack.c.l.b16 %v715
    %v2049 = vunpack.c.h.b16 %v715
    %v2050 = vunpack.c.l.b16 %v716
    %v2051 = vunpack.c.h.b16 %v716
    %v2052 = vunpack.c.l.b16 %v717
    %v2053 = vunpack.c.h.b16 %v717
    %v2054 = vunpack.c.l.b16 %v718
    %v2055 = vunpack.c.h.b16 %v718
    %v2056 = vunpack.c.l.b16 %v719
    %v2057 = vunpack.c.h.b16 %v719
    %v2058 = vunpack.c.l.b16 %v720
    %v2059 = vunpack.c.h.b16 %v720
    %v2060 = vunpack.c.l.b16 %v721
    %v2061 = vunpack.c.h.b16 %v721
    %v2062 = vunpack.c.l.b16 %v722
    %v2063 = vunpack.c.h.b16 %v722
    %v2064 = vunpack.c.l.b16 %v723
    %v2065 = vunpack.c.h.b16 %v723
    %v2066 = vunpack.c.l.b16 %v724
    %v2067 = vunpack.c.h.b16 %v724
    %v2068 = vunpack.c.l.b16 %v725
    %v2069 = vunpack.c.h.b16 %v725
    %v2070 = vunpack.c.l.b16 %v726
    %v2071 = vunpack.c.h.b16 %v726
    %v2072 = vunpack.c.l.b16 %v727
    %v2073 = vunpack.c.h.b16 %v727
    %v2074 = vunpack.c.l.b16 %v728
    %v2075 = vunpack.c.h.b16 %v728
    %v2076 = vunpack.c.l.b16 %v729
    %v2077 = vunpack.c.h.b16 %v729
    %v2078 = vunpack.c.l.b16 %v730
    %v2079 = vunpack.c.h.b16 %v730
    %v2080 = vunpack.c.l.b16 %v731
    %v2081 = vunpack.c.h.b16 %v731
    %v2082 = vunpack.c.l.b16 %v732
    %v2083 = vunpack.c.h.b16 %v732
    %v2084 = vunpack.c.l.b16 %v733
    %v2085 = vunpack.c.h.b16 %v733
    %v2086 = vunpack.c.l.b16 %v734
    %v2087 = vunpack.c.h.b16 %v734
    %v2088 = vunpack.c.l.b16 %v735
    %v2089 = vunpack.c.h.b16 %v735
    %v2090 = vunpack.c.l.b16 %v736
    %v2091 = vunpack.c.h.b16 %v736
    %v2092 = vunpack.c.l.b16 %v737
    %v2093 = vunpack.c.h.b16 %v737
    %v2094 = vunpack.c.l.b16 %v738
    %v2095 = vunpack.c.h.b16 %v738
    %v2096 = vunpack.c.l.b16 %v739
    %v2097 = vunpack.c.h.b16 %v739
    %v2098 = vunpack.c.l.b16 %v740
    %v2099 = vunpack.c.h.b16 %v740
    %v2100 = vunpack.c.l.b16 %v741
    %v2101 = vunpack.c.h.b16 %v741
    %v2102 = vunpack.c.l.b16 %v742
    %v2103 = vunpack.c.h.b16 %v742
    %v2104 = vunpack.c.l.b16 %v743
    %v2105 = vunpack.c.h.b16 %v743
    %v2106 = vunpack.c.l.b16 %v744
    %v2107 = vunpack.c.h.b16 %v744
    %v2108 = vunpack.c.l.b16 %v745
    %v2109 = vunpack.c.h.b16 %v745
    %v2110 = vunpack.c.l.b16 %v746
    %v2111 = vunpack.c.h.b16 %v746
    %v2112 = vunpack.c.l.b16 %v747
    %v2113 = vunpack.c.h.b16 %v747
    %v2114 = vunpack.c.l.b16 %v748
    %v2115 = vunpack.c.h.b16 %v748
    %v2116 = vunpack.c.l.b16 %v749
    %v2117 = vunpack.c.h.b16 %v749
    %v2118 = vunpack.c.l.b16 %v750
    %v2119 = vunpack.c.h.b16 %v750
    %v2120 = vunpack.c.l.b16 %v751
    %v2121 = vunpack.c.h.b16 %v751
    %v2122 = vunpack.c.l.b16 %v752
    %v2123 = vunpack.c.h.b16 %v752
    %v2124 = vunpack.c.l.b16 %v753
    %v2125 = vunpack.c.h.b16 %v753
    %v2126 = vunpack.c.l.b16 %v754
    %v2127 = vunpack.c.h.b16 %v754
    %v2128 = vunpack.c.l.b16 %v755
    %v2129 = vunpack.c.h.b16 %v755
    %v2130 = vunpack.c.l.b16 %v756
    %v2131 = vunpack.c.h.b16 %v756
    %v2132 = vunpack.c.l.b16 %v757
    %v2133 = vunpack.c.h.b16 %v757
    %v2134 = vunpack.c.l.b16 %v758
    %v2135 = vunpack.c.h.b16 %v758
    %v2136 = vunpack.c.l.b16 %v759
    %v2137 = vunpack.c.h.b16 %v759
    %v2138 = vunpack.c.l.b16 %v760
    %v2139 = vunpack.c.h.b16 %v760
    %v2140 = vunpack.c.l.b16 %v761
    %v2141 = vunpack.c.h.b16 %v761
    %v2142 = vunpack.c.l.b16 %v762
    %v2143 = vunpack.c.h.b16 %v762
    %v2144 = vunpack.c.l.b16 %v763
    %v2145 = vunpack.c.h.b16 %v763
    %v2146 = vunpack.c.l.b16 %v764
    %v2147 = vunpack.c.h.b16 %v764
    %v2148 = vunpack.c.l.b16 %v765
    %v2149 = vunpack.c.h.b16 %v765
    %v2150 = vunpack.c.l.b16 %v766
    %v2151 = vunpack.c.h.b16 %v766
    %v2152 = vunpack.c.l.b16 %v767
    %v2153 = vunpack.c.h.b16 %v767
    %v2154 = vunpack.c.l.b16 %v768
    %v2155 = vunpack.c.h.b16 %v768
    %v2156 = vunpack.c.l.b16 %v769
    %v2157 = vunpack.c.h.b16 %v769
    %v2158 = vunpack.c.l.b16 %v770
    %v2159 = vunpack.c.h.b16 %v770
    %v2160 = vunpack.c.l.b16 %v771
    %v2161 = vunpack.c.h.b16 %v771
    %v2162 = vunpack.c.l.b16 %v772
    %v2163 = vunpack.c.h.b16 %v772
    %v2164 = vunpack.c.l.b16 %v773
    %v2165 = vunpack.c.h.b16 %v773
    %v2166 = vunpack.c.l.b16 %v774
    %v2167 = vunpack.c.h.b16 %v774
    %v2168 = vunpack.c.l.b16 %v775
    %v2169 = vunpack.c.h.b16 %v775
    %v2170 = vunpack.c.l.b16 %v776
    %v2171 = vunpack.c.h.b16 %v776
    %v2172 = vunpack.c.l.b16 %v777
    %v2173 = vunpack.c.h.b16 %v777
    %v2174 = vunpack.c.l.b16 %v778
    %v2175 = vunpack.c.h.b16 %v778
    %v2176 = vunpack.c.l.b16 %v779
    %v2177 = vunpack.c.h.b16 %v779
    %v2178 = vunpack.c.l.b16 %v780
    %v2179 = vunpack.c.h.b16 %v780
    %v2180 = vunpack.c.l.b16 %v781
    %v2181 = vunpack.c.h.b16 %v781
    %v2182 = vunpack.c.l.b16 %v782
    %v2183 = vunpack.c.h.b16 %v782
    %v2184 = vunpack.c.l.b16 %v783
    %v2185 = vunpack.c.h.b16 %v783
    %v2186 = vunpack.c.l.b16 %v784
    %v2187 = vunpack.c.h.b16 %v784
    %v2188 = vunpack.c.l.b16 %v785
    %v2189 = vunpack.c.h.b16 %v785
    %v2190 = vunpack.c.l.b16 %v786
    %v2191 = vunpack.c.h.b16 %v786
    %v2192 = vunpack.c.l.b16 %v787
    %v2193 = vunpack.c.h.b16 %v787
    %v2194 = vunpack.c.l.b16 %v788
    %v2195 = vunpack.c.h.b16 %v788
    %v2196 = vunpack.c.l.b16 %v789
    %v2197 = vunpack.c.h.b16 %v789
    %v2198 = vunpack.c.l.b16 %v790
    %v2199 = vunpack.c.h.b16 %v790
    %v2200 = vunpack.c.l.b16 %v791
    %v2201 = vunpack.c.h.b16 %v791
    %v2202 = vunpack.c.l.b16 %v792
    %v2203 = vunpack.c.h.b16 %v792
    %v2204 = vunpack.c.l.b16 %v793
    %v2205 = vunpack.c.h.b16 %v793
    %v2206 = vunpack.c.l.b16 %v794
    %v2207 = vunpack.c.h.b16 %v794
    %v2208 = vunpack.c.l.b16 %v795
    %v2209 = vunpack.c.h.b16 %v795
    %v2210 = vunpack.c.l.b16 %v796
    %v2211 = vunpack.c.h.b16 %v796
    %v2212 = vunpack.c.l.b16 %v797
    %v2213 = vunpack.c.h.b16 %v797
    %v2214 = vunpack.c.l.b16 %v798
    %v2215 = vunpack.c.h.b16 %v798
    %v2216 = vunpack.c.l.b16 %v799
    %v2217 = vunpack.c.h.b16 %v799
    %v2218 = vunpack.c.l.b16 %v800
    %v2219 = vunpack.c.h.b16 %v800
    %v2220 = vunpack.c.l.b16 %v801
    %v2221 = vunpack.c.h.b16 %v801
    %v2222 = vunpack.c.l.b16 %v802
    %v2223 = vunpack.c.h.b16 %v802
    %v2224 = vunpack.c.l.b16 %v803
    %v2225 = vunpack.c.h.b16 %v803
    %v2226 = vunpack.c.l.b16 %v804
    %v2227 = vunpack.c.h.b16 %v804
    %v2228 = vunpack.c.l.b16 %v805
    %v2229 = vunpack.c.h.b16 %v805
    %v2230 = vunpack.c.l.b16 %v806
    %v2231 = vunpack.c.h.b16 %v806
    %v2232 = vunpack.c.l.b16 %v807
    %v2233 = vunpack.c.h.b16 %v807
    %v2234 = vunpack.c.l.b16 %v808
    %v2235 = vunpack.c.h.b16 %v808
    %v2236 = vunpack.c.l.b16 %v809
    %v2237 = vunpack.c.h.b16 %v809
    %v2238 = vunpack.c.l.b16 %v810
    %v2239 = vunpack.c.h.b16 %v810
    %v2240 = vunpack.c.l.b16 %v811
    %v2241 = vunpack.c.h.b16 %v811
    %v2242 = vunpack.c.l.b16 %v812
    %v2243 = vunpack.c.h.b16 %v812
    %v2244 = vunpack.c.l.b16 %v813
    %v2245 = vunpack.c.h.b16 %v813
    %v2246 = vunpack.c.l.b16 %v814
    %v2247 = vunpack.c.h.b16 %v814
    %v2248 = vunpack.c.l.b16 %v815
    %v2249 = vunpack.c.h.b16 %v815
    %v2250 = vunpack.c.l.b16 %v816
    %v2251 = vunpack.c.h.b16 %v816
    %v2252 = vunpack.c.l.b16 %v817
    %v2253 = vunpack.c.h.b16 %v817
    %v2254 = vunpack.c.l.b16 %v818
    %v2255 = vunpack.c.h.b16 %v818
    %v2256 = vunpack.c.l.b16 %v819
    %v2257 = vunpack.c.h.b16 %v819
    %v2258 = vunpack.c.l.b16 %v820
    %v2259 = vunpack.c.h.b16 %v820
    %v2260 = vunpack.c.l.b16 %v821
    %v2261 = vunpack.c.h.b16 %v821
    %v2262 = vunpack.c.l.b16 %v822
    %v2263 = vunpack.c.h.b16 %v822
    %v2264 = vunpack.c.l.b16 %v823
    %v2265 = vunpack.c.h.b16 %v823
    %v2266 = vunpack.c.l.b16 %v824
    %v2267 = vunpack.c.h.b16 %v824
    %v2268 = vunpack.c.l.b16 %v825
    %v2269 = vunpack.c.h.b16 %v825
    %v2270 = vunpack.c.l.b16 %v826
    %v2271 = vunpack.c.h.b16 %v826
    %v2272 = vunpack.c.l.b16 %v827
    %v2273 = vunpack.c.h.b16 %v827
    %v2274 = vunpack.c.l.b16 %v828
    %v2275 = vunpack.c.h.b16 %v828
    %v2276 = vunpack.c.l.b16 %v829
    %v2277 = vunpack.c.h.b16 %v829
    %v2278 = vunpack.c.l.b16 %v830
    %v2279 = vunpack.c.h.b16 %v830
    %v2280 = vunpack.c.l.b16 %v831
    %v2281 = vunpack.c.h.b16 %v831
    %v2282 = vunpack.c.l.b16 %v832
    %v2283 = vunpack.c.h.b16 %v832
    %v2284 = vunpack.c.l.b16 %v833
    %v2285 = vunpack.c.h.b16 %v833
    %v2286 = vunpack.c.l.b16 %v834
    %v2287 = vunpack.c.h.b16 %v834
    %v2288 = vunpack.c.l.b16 %v835
    %v2289 = vunpack.c.h.b16 %v835
    %v2290 = vunpack.c.l.b16 %v836
    %v2291 = vunpack.c.h.b16 %v836
    %v2292 = vunpack.c.l.b16 %v837
    %v2293 = vunpack.c.h.b16 %v837
    %v2294 = vunpack.c.l.b16 %v838
    %v2295 = vunpack.c.h.b16 %v838
    %v2296 = vunpack.c.l.b16 %v839
    %v2297 = vunpack.c.h.b16 %v839
    %v2298 = vunpack.c.l.b16 %v840
    %v2299 = vunpack.c.h.b16 %v840
    %v2300 = vunpack.c.l.b16 %v841
    %v2301 = vunpack.c.h.b16 %v841
    %v2302 = vunpack.c.l.b16 %v842
    %v2303 = vunpack.c.h.b16 %v842
    %v2304 = vunpack.c.l.b16 %v843
    %v2305 = vunpack.c.h.b16 %v843
    %v2306 = vunpack.c.l.b16 %v844
    %v2307 = vunpack.c.h.b16 %v844
    %v2308 = vunpack.c.l.b16 %v845
    %v2309 = vunpack.c.h.b16 %v845
    %v2310 = vunpack.c.l.b16 %v846
    %v2311 = vunpack.c.h.b16 %v846
    %v2312 = vunpack.c.l.b16 %v847
    %v2313 = vunpack.c.h.b16 %v847
    %v2314 = vunpack.c.l.b16 %v848
    %v2315 = vunpack.c.h.b16 %v848
    %v2316 = vunpack.c.l.b16 %v849
    %v2317 = vunpack.c.h.b16 %v849
    %v2318 = vunpack.c.l.b16 %v850
    %v2319 = vunpack.c.h.b16 %v850
    %v2320 = vunpack.c.l.b16 %v851
    %v2321 = vunpack.c.h.b16 %v851
    %v2322 = vunpack.c.l.b16 %v852
    %v2323 = vunpack.c.h.b16 %v852
    %v2324 = vunpack.c.l.b16 %v853
    %v2325 = vunpack.c.h.b16 %v853
    %v2326 = vunpack.c.l.b16 %v854
    %v2327 = vunpack.c.h.b16 %v854
    %v2328 = vunpack.c.l.b16 %v855
    %v2329 = vunpack.c.h.b16 %v855
    %v2330 = vunpack.c.l.b16 %v856
    %v2331 = vunpack.c.h.b16 %v856
    %v2332 = vunpack.c.l.b16 %v857
    %v2333 = vunpack.c.h.b16 %v857
    %v2334 = vunpack.c.l.b16 %v858
    %v2335 = vunpack.c.h.b16 %v858
    %v2336 = vunpack.c.l.b16 %v859
    %v2337 = vunpack.c.h.b16 %v859
    %v2338 = vunpack.c.l.b16 %v860
    %v2339 = vunpack.c.h.b16 %v860
    %v2340 = vunpack.c.l.b16 %v861
    %v2341 = vunpack.c.h.b16 %v861
    %v2342 = vunpack.c.l.b16 %v862
    %v2343 = vunpack.c.h.b16 %v862
    %v2344 = vunpack.c.l.b16 %v863
    %v2345 = vunpack.c.h.b16 %v863
    %v2346 = vunpack.c.l.b16 %v864
    %v2347 = vunpack.c.h.b16 %v864
    %v2348 = vunpack.c.l.b16 %v865
    %v2349 = vunpack.c.h.b16 %v865
    %v2350 = vunpack.c.l.b16 %v866
    %v2351 = vunpack.c.h.b16 %v866
    %v2352 = vunpack.c.l.b16 %v867
    %v2353 = vunpack.c.h.b16 %v867
    %v2354 = vunpack.c.l.b16 %v868
    %v2355 = vunpack.c.h.b16 %v868
    %v2356 = vunpack.c.l.b16 %v869
    %v2357 = vunpack.c.h.b16 %v869
    %v2358 = vunpack.c.l.b16 %v870
    %v2359 = vunpack.c.h.b16 %v870
    %v2360 = vunpack.c.l.b16 %v871
    %v2361 = vunpack.c.h.b16 %v871
    %v2362 = vunpack.c.l.b16 %v872
    %v2363 = vunpack.c.h.b16 %v872
    %v2364 = vunpack.c.l.b16 %v873
    %v2365 = vunpack.c.h.b16 %v873
    %v2366 = vunpack.c.l.b16 %v874
    %v2367 = vunpack.c.h.b16 %v874
    %v2368 = vunpack.c.l.b16 %v875
    %v2369 = vunpack.c.h.b16 %v875
    %v2370 = vunpack.c.l.b16 %v876
    %v2371 = vunpack.c.h.b16 %v876
    %v2372 = vunpack.c.l.b16 %v877
    %v2373 = vunpack.c.h.b16 %v877
    %v2374 = vunpack.c.l.b16 %v878
    %v2375 = vunpack.c.h.b16 %v878
    %v2376 = vunpack.c.l.b16 %v879
    %v2377 = vunpack.c.h.b16 %v879
    %v2378 = vunpack.c.l.b16 %v880
    %v2379 = vunpack.c.h.b16 %v880
    %v2380 = vunpack.c.l.b16 %v881
    %v2381 = vunpack.c.h.b16 %v881
    %v2382 = vunpack.c.l.b16 %v882
    %v2383 = vunpack.c.h.b16 %v882
    %v2384 = vunpack.c.l.b16 %v883
    %v2385 = vunpack.c.h.b16 %v883
    %v2386 = vunpack.c.l.b16 %v884
    %v2387 = vunpack.c.h.b16 %v884
    %v2388 = vunpack.c.l.b16 %v885
    %v2389 = vunpack.c.h.b16 %v885
    %v2390 = vunpack.c.l.b16 %v886
    %v2391 = vunpack.c.h.b16 %v886
    %v2392 = vunpack.c.l.b16 %v887
    %v2393 = vunpack.c.h.b16 %v887
    %v2394 = vunpack.c.l.b16 %v888
    %v2395 = vunpack.c.h.b16 %v888
    %v2396 = vunpack.c.l.b16 %v889
    %v2397 = vunpack.c.h.b16 %v889
    %v2398 = vunpack.c.l.b16 %v890
    %v2399 = vunpack.c.h.b16 %v890
    %v2400 = vunpack.c.l.b16 %v891
    %v2401 = vunpack.c.h.b16 %v891
    %v2402 = vunpack.c.l.b16 %v892
    %v2403 = vunpack.c.h.b16 %v892
    %v2404 = vunpack.c.l.b16 %v893
    %v2405 = vunpack.c.h.b16 %v893
    %v2406 = vunpack.c.l.b16 %v894
    %v2407 = vunpack.c.h.b16 %v894
    %v2408 = vunpack.c.l.b16 %v895
    %v2409 = vunpack.c.h.b16 %v895
    %v2410 = vunpack.c.l.b16 %v896
    %v2411 = vunpack.c.h.b16 %v896
    %v2412 = vunpack.c.l.b16 %v897
    %v2413 = vunpack.c.h.b16 %v897
    %v2414 = vunpack.c.l.b16 %v898
    %v2415 = vunpack.c.h.b16 %v898
    %v2416 = vunpack.c.l.b16 %v899
    %v2417 = vunpack.c.h.b16 %v899
    %v2418 = vunpack.c.l.b16 %v900
    %v2419 = vunpack.c.h.b16 %v900
    %v2420 = vunpack.c.l.b16 %v901
    %v2421 = vunpack.c.h.b16 %v901
    %v2422 = vunpack.c.l.b16 %v902
    %v2423 = vunpack.c.h.b16 %v902
    %v2424 = vunpack.c.l.b16 %v903
    %v2425 = vunpack.c.h.b16 %v903
    %v2426 = vunpack.c.l.b16 %v904
    %v2427 = vunpack.c.h.b16 %v904
    %v2428 = vunpack.c.l.b16 %v905
    %v2429 = vunpack.c.h.b16 %v905
    %v2430 = vunpack.c.l.b16 %v906
    %v2431 = vunpack.c.h.b16 %v906
    %v2432 = vunpack.c.l.b16 %v907
    %v2433 = vunpack.c.h.b16 %v907
    %v2434 = vunpack.c.l.b16 %v908
    %v2435 = vunpack.c.h.b16 %v908
    %v2436 = vunpack.c.l.b16 %v909
    %v2437 = vunpack.c.h.b16 %v909
    %v2438 = vunpack.c.l.b16 %v910
    %v2439 = vunpack.c.h.b16 %v910
    %v2440 = vunpack.c.l.b16 %v911
    %v2441 = vunpack.c.h.b16 %v911
    %v2442 = vunpack.c.l.b16 %v912
    %v2443 = vunpack.c.h.b16 %v912
    %v2444 = vunpack.c.l.b16 %v913
    %v2445 = vunpack.c.h.b16 %v913
    %v2446 = vunpack.c.l.b16 %v914
    %v2447 = vunpack.c.h.b16 %v914
    %v2448 = vunpack.c.l.b16 %v915
    %v2449 = vunpack.c.h.b16 %v915
    %v2450 = vunpack.c.l.b16 %v916
    %v2451 = vunpack.c.h.b16 %v916
    %v2452 = vunpack.c.l.b16 %v917
    %v2453 = vunpack.c.h.b16 %v917
    %v2454 = vunpack.c.l.b16 %v918
    %v2455 = vunpack.c.h.b16 %v918
    %v2456 = vunpack.c.l.b16 %v919
    %v2457 = vunpack.c.h.b16 %v919
    %v2458 = vunpack.c.l.b16 %v920
    %v2459 = vunpack.c.h.b16 %v920
    %v2460 = vunpack.c.l.b16 %v921
    %v2461 = vunpack.c.h.b16 %v921
    %v2462 = vunpack.c.l.b16 %v922
    %v2463 = vunpack.c.h.b16 %v922
    %v2464 = vunpack.c.l.b16 %v923
    %v2465 = vunpack.c.h.b16 %v923
    %v2466 = vunpack.c.l.b16 %v924
    %v2467 = vunpack.c.h.b16 %v924
    %v2468 = vunpack.c.l.b16 %v925
    %v2469 = vunpack.c.h.b16 %v925
    %v2470 = vunpack.c.l.b16 %v926
    %v2471 = vunpack.c.h.b16 %v926
    %v2472 = vunpack.c.l.b16 %v927
    %v2473 = vunpack.c.h.b16 %v927
    %v2474 = vunpack.c.l.b16 %v928
    %v2475 = vunpack.c.h.b16 %v928
    %v2476 = vunpack.c.l.b16 %v929
    %v2477 = vunpack.c.h.b16 %v929
    %v2478 = vunpack.c.l.b16 %v930
    %v2479 = vunpack.c.h.b16 %v930
    %v2480 = vunpack.c.l.b16 %v931
    %v2481 = vunpack.c.h.b16 %v931
    %v2482 = vunpack.c.l.b16 %v932
    %v2483 = vunpack.c.h.b16 %v932
    %v2484 = vunpack.c.l.b16 %v933
    %v2485 = vunpack.c.h.b16 %v933
    %v2486 = vunpack.c.l.b16 %v934
    %v2487 = vunpack.c.h.b16 %v934
    %v2488 = vunpack.c.l.b16 %v935
    %v2489 = vunpack.c.h.b16 %v935
    %v2490 = vpack.c.b16 %v1474, %v1466
    %v2491 = vpack.c.b16 %v1475, %v1467
    %v2492 = vpack.c.b16 %v1476, %v1468
    %v2493 = vpack.c.b16 %v1477, %v1469
    %v2494 = vpack.c.b16 %v1478, %v1470
    %v2495 = vpack.c.b16 %v1479, %v1471
    %v2496 = vpack.c.b16 %v1480, %v1472
    %v2497 = vpack.c.b16 %v1481, %v1473
    %v2498 = vpack.c.b16 %v1490, %v1482
    %v2499 = vpack.c.b16 %v1491, %v1483
    %v2500 = vpack.c.b16 %v1492, %v1484
    %v2501 = vpack.c.b16 %v1493, %v1485
    %v2502 = vpack.c.b16 %v1494, %v1486
    %v2503 = vpack.c.b16 %v1495, %v1487
    %v2504 = vpack.c.b16 %v1496, %v1488
    %v2505 = vpack.c.b16 %v1497, %v1489
    %v2506 = vpack.c.b16 %v1506, %v1498
    %v2507 = vpack.c.b16 %v1507, %v1499
    %v2508 = vpack.c.b16 %v1508, %v1500
    %v2509 = vpack.c.b16 %v1509, %v1501
    %v2510 = vpack.c.b16 %v1510, %v1502
    %v2511 = vpack.c.b16 %v1511, %v1503
    %v2512 = vpack.c.b16 %v1512, %v1504
    %v2513 = vpack.c.b16 %v1513, %v1505
    %v2514 = vpack.c.b16 %v1522, %v1514
    %v2515 = vpack.c.b16 %v1523, %v1515
    %v2516 = vpack.c.b16 %v1524, %v1516
    %v2517 = vpack.c.b16 %v1525, %v1517
    %v2518 = vpack.c.b16 %v1526, %v1518
    %v2519 = vpack.c.b16 %v1527, %v1519
    %v2520 = vpack.c.b16 %v1528, %v1520
    %v2521 = vpack.c.b16 %v1529, %v1521
    %v2522 = vpack.c.b16 %v1538, %v1530
    %v2523 = vpack.c.b16 %v1539, %v1531
    %v2524 = vpack.c.b16 %v1540, %v1532
    %v2525 = vpack.c.b16 %v1541, %v1533
    %v2526 = vpack.c.b16 %v1542, %v1534
    %v2527 = vpack.c.b16 %v1543, %v1535
    %v2528 = vpack.c.b16 %v1544, %v1536
    %v2529 = vpack.c.b16 %v1545, %v1537
    %v2530 = vpack.c.b16 %v1554, %v1546
    %v2531 = vpack.c.b16 %v1555, %v1547
    %v2532 = vpack.c.b16 %v1556, %v1548
    %v2533 = vpack.c.b16 %v1557, %v1549
    %v2534 = vpack.c.b16 %v1558, %v1550
    %v2535 = vpack.c.b16 %v1559, %v1551
    %v2536 = vpack.c.b16 %v1560, %v1552
    %v2537 = vpack.c.b16 %v1561, %v1553
    %v2538 = vpack.c.b16 %v1570, %v1562
    %v2539 = vpack.c.b16 %v1571, %v1563
    %v2540 = vpack.c.b16 %v1572, %v1564
    %v2541 = vpack.c.b16 %v1573, %v1565
    %v2542 = vpack.c.b16 %v1574, %v1566
    %v2543 = vpack.c.b16 %v1575, %v1567
    %v2544 = vpack.c.b16 %v1576, %v1568
    %v2545 = vpack.c.b16 %v1577, %v1569
    %v2546 = vpack.c.b16 %v1586, %v1578
    %v2547 = vpack.c.b16 %v1587, %v1579
    %v2548 = vpack.c.b16 %v1588, %v1580
    %v2549 = vpack.c.b16 %v1589, %v1581
    %v2550 = vpack.c.b16 %v1590, %v1582
    %v2551 = vpack.c.b16 %v1591, %v1583
    %v2552 = vpack.c.b16 %v1592, %v1584
    %v2553 = vpack.c.b16 %v1593, %v1585
    %v2554 = vpack.c.b16 %v1602, %v1594
    %v2555 = vpack.c.b16 %v1603, %v1595
    %v2556 = vpack.c.b16 %v1604, %v1596
    %v2557 = vpack.c.b16 %v1605, %v1597
    %v2558 = vpack.c.b16 %v1606, %v1598
    %v2559 = vpack.c.b16 %v1607, %v1599
    %v2560 = vpack.c.b16 %v1608, %v1600
    %v2561 = vpack.c.b16 %v1609, %v1601
    %v2562 = vpack.c.b16 %v1618, %v1610
    %v2563 = vpack.c.b16 %v1619, %v1611
    %v2564 = vpack.c.b16 %v1620, %v1612
    %v2565 = vpack.c.b16 %v1621, %v1613
    %v2566 = vpack.c.b16 %v1622, %v1614
    %v2567 = vpack.c.b16 %v1623, %v1615
    %v2568 = vpack.c.b16 %v1624, %v1616
    %v2569 = vpack.c.b16 %v1625, %v1617
    %v2570 = vpack.c.b16 %v1634, %v1626
    %v2571 = vpack.c.b16 %v1635, %v1627
    %v2572 = vpack.c.b16 %v1636, %v1628
    %v2573 = vpack.c.b16 %v1637, %v1629
    %v2574 = vpack.c.b16 %v1638, %v1630
    %v2575 = vpack.c.b16 %v1639, %v1631
    %v2576 = vpack.c.b16 %v1640, %v1632
    %v2577 = vpack.c.b16 %v1641, %v1633
    %v2578 = vpack.c.b16 %v1650, %v1642
    %v2579 = vpack.c.b16 %v1651, %v1643
    %v2580 = vpack.c.b16 %v1652, %v1644
    %v2581 = vpack.c.b16 %v1653, %v1645
    %v2582 = vpack.c.b16 %v1654, %v1646
    %v2583 = vpack.c.b16 %v1655, %v1647
    %v2584 = vpack.c.b16 %v1656, %v1648
    %v2585 = vpack.c.b16 %v1657, %v1649
    %v2586 = vpack.c.b16 %v1666, %v1658
    %v2587 = vpack.c.b16 %v1667, %v1659
    %v2588 = vpack.c.b16 %v1668, %v1660
    %v2589 = vpack.c.b16 %v1669, %v1661
    %v2590 = vpack.c.b16 %v1670, %v1662
    %v2591 = vpack.c.b16 %v1671, %v1663
    %v2592 = vpack.c.b16 %v1672, %v1664
    %v2593 = vpack.c.b16 %v1673, %v1665
    %v2594 = vpack.c.b16 %v1682, %v1674
    %v2595 = vpack.c.b16 %v1683, %v1675
    %v2596 = vpack.c.b16 %v1684, %v1676
    %v2597 = vpack.c.b16 %v1685, %v1677
    %v2598 = vpack.c.b16 %v1686, %v1678
    %v2599 = vpack.c.b16 %v1687, %v1679
    %v2600 = vpack.c.b16 %v1688, %v1680
    %v2601 = vpack.c.b16 %v1689, %v1681
    %v2602 = vpack.c.b16 %v1698, %v1690
    %v2603 = vpack.c.b16 %v1699, %v1691
    %v2604 = vpack.c.b16 %v1700, %v1692
    %v2605 = vpack.c.b16 %v1701, %v1693
    %v2606 = vpack.c.b16 %v1702, %v1694
    %v2607 = vpack.c.b16 %v1703, %v1695
    %v2608 = vpack.c.b16 %v1704, %v1696
    %v2609 = vpack.c.b16 %v1705, %v1697
    %v2610 = vpack.c.b16 %v1714, %v1706
    %v2611 = vpack.c.b16 %v1715, %v1707
    %v2612 = vpack.c.b16 %v1716, %v1708
    %v2613 = vpack.c.b16 %v1717, %v1709
    %v2614 = vpack.c.b16 %v1718, %v1710
    %v2615 = vpack.c.b16 %v1719, %v1711
    %v2616 = vpack.c.b16 %v1720, %v1712
    %v2617 = vpack.c.b16 %v1721, %v1713
    %v2618 = vpack.c.b16 %v1730, %v1722
    %v2619 = vpack.c.b16 %v1731, %v1723
    %v2620 = vpack.c.b16 %v1732, %v1724
    %v2621 = vpack.c.b16 %v1733, %v1725
    %v2622 = vpack.c.b16 %v1734, %v1726
    %v2623 = vpack.c.b16 %v1735, %v1727
    %v2624 = vpack.c.b16 %v1736, %v1728
    %v2625 = vpack.c.b16 %v1737, %v1729
    %v2626 = vpack.c.b16 %v1746, %v1738
    %v2627 = vpack.c.b16 %v1747, %v1739
    %v2628 = vpack.c.b16 %v1748, %v1740
    %v2629 = vpack.c.b16 %v1749, %v1741
    %v2630 = vpack.c.b16 %v1750, %v1742
    %v2631 = vpack.c.b16 %v1751, %v1743
    %v2632 = vpack.c.b16 %v1752, %v1744
    %v2633 = vpack.c.b16 %v1753, %v1745
    %v2634 = vpack.c.b16 %v1762, %v1754
    %v2635 = vpack.c.b16 %v1763, %v1755
    %v2636 = vpack.c.b16 %v1764, %v1756
    %v2637 = vpack.c.b16 %v1765, %v1757
    %v2638 = vpack.c.b16 %v1766, %v1758
    %v2639 = vpack.c.b16 %v1767, %v1759
    %v2640 = vpack.c.b16 %v1768, %v1760
    %v2641 = vpack.c.b16 %v1769, %v1761
    %v2642 = vpack.c.b16 %v1778, %v1770
    %v2643 = vpack.c.b16 %v1779, %v1771
    %v2644 = vpack.c.b16 %v1780, %v1772
    %v2645 = vpack.c.b16 %v1781, %v1773
    %v2646 = vpack.c.b16 %v1782, %v1774
    %v2647 = vpack.c.b16 %v1783, %v1775
    %v2648 = vpack.c.b16 %v1784, %v1776
    %v2649 = vpack.c.b16 %v1785, %v1777
    %v2650 = vpack.c.b16 %v1794, %v1786
    %v2651 = vpack.c.b16 %v1795, %v1787
    %v2652 = vpack.c.b16 %v1796, %v1788
    %v2653 = vpack.c.b16 %v1797, %v1789
    %v2654 = vpack.c.b16 %v1798, %v1790
    %v2655 = vpack.c.b16 %v1799, %v1791
    %v2656 = vpack.c.b16 %v1800, %v1792
    %v2657 = vpack.c.b16 %v1801, %v1793
    %v2658 = vpack.c.b16 %v1810, %v1802
    %v2659 = vpack.c.b16 %v1811, %v1803
    %v2660 = vpack.c.b16 %v1812, %v1804
    %v2661 = vpack.c.b16 %v1813, %v1805
    %v2662 = vpack.c.b16 %v1814, %v1806
    %v2663 = vpack.c.b16 %v1815, %v1807
    %v2664 = vpack.c.b16 %v1816, %v1808
    %v2665 = vpack.c.b16 %v1817, %v1809
    %v2666 = vpack.c.b16 %v1826, %v1818
    %v2667 = vpack.c.b16 %v1827, %v1819
    %v2668 = vpack.c.b16 %v1828, %v1820
    %v2669 = vpack.c.b16 %v1829, %v1821
    %v2670 = vpack.c.b16 %v1830, %v1822
    %v2671 = vpack.c.b16 %v1831, %v1823
    %v2672 = vpack.c.b16 %v1832, %v1824
    %v2673 = vpack.c.b16 %v1833, %v1825
    %v2674 = vpack.c.b16 %v1842, %v1834
    %v2675 = vpack.c.b16 %v1843, %v1835
    %v2676 = vpack.c.b16 %v1844, %v1836
    %v2677 = vpack.c.b16 %v1845, %v1837
    %v2678 = vpack.c.b16 %v1846, %v1838
    %v2679 = vpack.c.b16 %v1847, %v1839
    %v2680 = vpack.c.b16 %v1848, %v1840
    %v2681 = vpack.c.b16 %v1849, %v1841
    %v2682 = vpack.c.b16 %v1858, %v1850
    %v2683 = vpack.c.b16 %v1859, %v1851
    %v2684 = vpack.c.b16 %v1860, %v1852
    %v2685 = vpack.c.b16 %v1861, %v1853
    %v2686 = vpack.c.b16 %v1862, %v1854
    %v2687 = vpack.c.b16 %v1863, %v1855
    %v2688 = vpack.c.b16 %v1864, %v1856
    %v2689 = vpack.c.b16 %v1865, %v1857
    %v2690 = vpack.c.b16 %v1874, %v1866
    %v2691 = vpack.c.b16 %v1875, %v1867
    %v2692 = vpack.c.b16 %v1876, %v1868
    %v2693 = vpack.c.b16 %v1877, %v1869
    %v2694 = vpack.c.b16 %v1878, %v1870
    %v2695 = vpack.c.b16 %v1879, %v1871
    %v2696 = vpack.c.b16 %v1880, %v1872
    %v2697 = vpack.c.b16 %v1881, %v1873
    %v2698 = vpack.c.b16 %v1890, %v1882
    %v2699 = vpack.c.b16 %v1891, %v1883
    %v2700 = vpack.c.b16 %v1892, %v1884
    %v2701 = vpack.c.b16 %v1893, %v1885
    %v2702 = vpack.c.b16 %v1894, %v1886
    %v2703 = vpack.c.b16 %v1895, %v1887
    %v2704 = vpack.c.b16 %v1896, %v1888
    %v2705 = vpack.c.b16 %v1897, %v1889
    %v2706 = vpack.c.b16 %v1906, %v1898
    %v2707 = vpack.c.b16 %v1907, %v1899
    %v2708 = vpack.c.b16 %v1908, %v1900
    %v2709 = vpack.c.b16 %v1909, %v1901
    %v2710 = vpack.c.b16 %v1910, %v1902
    %v2711 = vpack.c.b16 %v1911, %v1903
    %v2712 = vpack.c.b16 %v1912, %v1904
    %v2713 = vpack.c.b16 %v1913, %v1905
    %v2714 = vpack.c.b16 %v1922, %v1914
    %v2715 = vpack.c.b16 %v1923, %v1915
    %v2716 = vpack.c.b16 %v1924, %v1916
    %v2717 = vpack.c.b16 %v1925, %v1917
    %v2718 = vpack.c.b16 %v1926, %v1918
    %v2719 = vpack.c.b16 %v1927, %v1919
    %v2720 = vpack.c.b16 %v1928, %v1920
    %v2721 = vpack.c.b16 %v1929, %v1921
    %v2722 = vpack.c.b16 %v1938, %v1930
    %v2723 = vpack.c.b16 %v1939, %v1931
    %v2724 = vpack.c.b16 %v1940, %v1932
    %v2725 = vpack.c.b16 %v1941, %v1933
    %v2726 = vpack.c.b16 %v1942, %v1934
    %v2727 = vpack.c.b16 %v1943, %v1935
    %v2728 = vpack.c.b16 %v1944, %v1936
    %v2729 = vpack.c.b16 %v1945, %v1937
    %v2730 = vpack.c.b16 %v1954, %v1946
    %v2731 = vpack.c.b16 %v1955, %v1947
    %v2732 = vpack.c.b16 %v1956, %v1948
    %v2733 = vpack.c.b16 %v1957, %v1949
    %v2734 = vpack.c.b16 %v1958, %v1950
    %v2735 = vpack.c.b16 %v1959, %v1951
    %v2736 = vpack.c.b16 %v1960, %v1952
    %v2737 = vpack.c.b16 %v1961, %v1953
    %v2738 = vpack.c.b16 %v1970, %v1962
    %v2739 = vpack.c.b16 %v1971, %v1963
    %v2740 = vpack.c.b16 %v1972, %v1964
    %v2741 = vpack.c.b16 %v1973, %v1965
    %v2742 = vpack.c.b16 %v1974, %v1966
    %v2743 = vpack.c.b16 %v1975, %v1967
    %v2744 = vpack.c.b16 %v1976, %v1968
    %v2745 = vpack.c.b16 %v1977, %v1969
    %v2746 = vpack.c.b16 %v1986, %v1978
    %v2747 = vpack.c.b16 %v1987, %v1979
    %v2748 = vpack.c.b16 %v1988, %v1980
    %v2749 = vpack.c.b16 %v1989, %v1981
    %v2750 = vpack.c.b16 %v1990, %v1982
    %v2751 = vpack.c.b16 %v1991, %v1983
    %v2752 = vpack.c.b16 %v1992, %v1984
    %v2753 = vpack.c.b16 %v1993, %v1985
    %v2754 = vpack.c.b16 %v2002, %v1994
    %v2755 = vpack.c.b16 %v2003, %v1995
    %v2756 = vpack.c.b16 %v2004, %v1996
    %v2757 = vpack.c.b16 %v2005, %v1997
    %v2758 = vpack.c.b16 %v2006, %v1998
    %v2759 = vpack.c.b16 %v2007, %v1999
    %v2760 = vpack.c.b16 %v2008, %v2000
    %v2761 = vpack.c.b16 %v2009, %v2001
    %v2762 = vpack.c.b16 %v2018, %v2010
    %v2763 = vpack.c.b16 %v2019, %v2011
    %v2764 = vpack.c.b16 %v2020, %v2012
    %v2765 = vpack.c.b16 %v2021, %v2013
    %v2766 = vpack.c.b16 %v2022, %v2014
    %v2767 = vpack.c.b16 %v2023, %v2015
    %v2768 = vpack.c.b16 %v2024, %v2016
    %v2769 = vpack.c.b16 %v2025, %v2017
    %v2770 = vpack.c.b16 %v2034, %v2026
    %v2771 = vpack.c.b16 %v2035, %v2027
    %v2772 = vpack.c.b16 %v2036, %v2028
    %v2773 = vpack.c.b16 %v2037, %v2029
    %v2774 = vpack.c.b16 %v2038, %v2030
    %v2775 = vpack.c.b16 %v2039, %v2031
    %v2776 = vpack.c.b16 %v2040, %v2032
    %v2777 = vpack.c.b16 %v2041, %v2033
    %v2778 = vpack.c.b16 %v2050, %v2042
    %v2779 = vpack.c.b16 %v2051, %v2043
    %v2780 = vpack.c.b16 %v2052, %v2044
    %v2781 = vpack.c.b16 %v2053, %v2045
    %v2782 = vpack.c.b16 %v2054, %v2046
    %v2783 = vpack.c.b16 %v2055, %v2047
    %v2784 = vpack.c.b16 %v2056, %v2048
    %v2785 = vpack.c.b16 %v2057, %v2049
    %v2786 = vpack.c.b16 %v2066, %v2058
    %v2787 = vpack.c.b16 %v2067, %v2059
    %v2788 = vpack.c.b16 %v2068, %v2060
    %v2789 = vpack.c.b16 %v2069, %v2061
    %v2790 = vpack.c.b16 %v2070, %v2062
    %v2791 = vpack.c.b16 %v2071, %v2063
    %v2792 = vpack.c.b16 %v2072, %v2064
    %v2793 = vpack.c.b16 %v2073, %v2065
    %v2794 = vpack.c.b16 %v2082, %v2074
    %v2795 = vpack.c.b16 %v2083, %v2075
    %v2796 = vpack.c.b16 %v2084, %v2076
    %v2797 = vpack.c.b16 %v2085, %v2077
    %v2798 = vpack.c.b16 %v2086, %v2078
    %v2799 = vpack.c.b16 %v2087, %v2079
    %v2800 = vpack.c.b16 %v2088, %v2080
    %v2801 = vpack.c.b16 %v2089, %v2081
    %v2802 = vpack.c.b16 %v2098, %v2090
    %v2803 = vpack.c.b16 %v2099, %v2091
    %v2804 = vpack.c.b16 %v2100, %v2092
    %v2805 = vpack.c.b16 %v2101, %v2093
    %v2806 = vpack.c.b16 %v2102, %v2094
    %v2807 = vpack.c.b16 %v2103, %v2095
    %v2808 = vpack.c.b16 %v2104, %v2096
    %v2809 = vpack.c.b16 %v2105, %v2097
    %v2810 = vpack.c.b16 %v2114, %v2106
    %v2811 = vpack.c.b16 %v2115, %v2107
    %v2812 = vpack.c.b16 %v2116, %v2108
    %v2813 = vpack.c.b16 %v2117, %v2109
    %v2814 = vpack.c.b16 %v2118, %v2110
    %v2815 = vpack.c.b16 %v2119, %v2111
    %v2816 = vpack.c.b16 %v2120, %v2112
    %v2817 = vpack.c.b16 %v2121, %v2113
    %v2818 = vpack.c.b16 %v2130, %v2122
    %v2819 = vpack.c.b16 %v2131, %v2123
    %v2820 = vpack.c.b16 %v2132, %v2124
    %v2821 = vpack.c.b16 %v2133, %v2125
    %v2822 = vpack.c.b16 %v2134, %v2126
    %v2823 = vpack.c.b16 %v2135, %v2127
    %v2824 = vpack.c.b16 %v2136, %v2128
    %v2825 = vpack.c.b16 %v2137, %v2129
    %v2826 = vpack.c.b16 %v2146, %v2138
    %v2827 = vpack.c.b16 %v2147, %v2139
    %v2828 = vpack.c.b16 %v2148, %v2140
    %v2829 = vpack.c.b16 %v2149, %v2141
    %v2830 = vpack.c.b16 %v2150, %v2142
    %v2831 = vpack.c.b16 %v2151, %v2143
    %v2832 = vpack.c.b16 %v2152, %v2144
    %v2833 = vpack.c.b16 %v2153, %v2145
    %v2834 = vpack.c.b16 %v2162, %v2154
    %v2835 = vpack.c.b16 %v2163, %v2155
    %v2836 = vpack.c.b16 %v2164, %v2156
    %v2837 = vpack.c.b16 %v2165, %v2157
    %v2838 = vpack.c.b16 %v2166, %v2158
    %v2839 = vpack.c.b16 %v2167, %v2159
    %v2840 = vpack.c.b16 %v2168, %v2160
    %v2841 = vpack.c.b16 %v2169, %v2161
    %v2842 = vpack.c.b16 %v2178, %v2170
    %v2843 = vpack.c.b16 %v2179, %v2171
    %v2844 = vpack.c.b16 %v2180, %v2172
    %v2845 = vpack.c.b16 %v2181, %v2173
    %v2846 = vpack.c.b16 %v2182, %v2174
    %v2847 = vpack.c.b16 %v2183, %v2175
    %v2848 = vpack.c.b16 %v2184, %v2176
    %v2849 = vpack.c.b16 %v2185, %v2177
    %v2850 = vpack.c.b16 %v2194, %v2186
    %v2851 = vpack.c.b16 %v2195, %v2187
    %v2852 = vpack.c.b16 %v2196, %v2188
    %v2853 = vpack.c.b16 %v2197, %v2189
    %v2854 = vpack.c.b16 %v2198, %v2190
    %v2855 = vpack.c.b16 %v2199, %v2191
    %v2856 = vpack.c.b16 %v2200, %v2192
    %v2857 = vpack.c.b16 %v2201, %v2193
    %v2858 = vpack.c.b16 %v2210, %v2202
    %v2859 = vpack.c.b16 %v2211, %v2203
    %v2860 = vpack.c.b16 %v2212, %v2204
    %v2861 = vpack.c.b16 %v2213, %v2205
    %v2862 = vpack.c.b16 %v2214, %v2206
    %v2863 = vpack.c.b16 %v2215, %v2207
    %v2864 = vpack.c.b16 %v2216, %v2208
    %v2865 = vpack.c.b16 %v2217, %v2209
    %v2866 = vpack.c.b16 %v2226, %v2218
    %v2867 = vpack.c.b16 %v2227, %v2219
    %v2868 = vpack.c.b16 %v2228, %v2220
    %v2869 = vpack.c.b16 %v2229, %v2221
    %v2870 = vpack.c.b16 %v2230, %v2222
    %v2871 = vpack.c.b16 %v2231, %v2223
    %v2872 = vpack.c.b16 %v2232, %v2224
    %v2873 = vpack.c.b16 %v2233, %v2225
    %v2874 = vpack.c.b16 %v2242, %v2234
    %v2875 = vpack.c.b16 %v2243, %v2235
    %v2876 = vpack.c.b16 %v2244, %v2236
    %v2877 = vpack.c.b16 %v2245, %v2237
    %v2878 = vpack.c.b16 %v2246, %v2238
    %v2879 = vpack.c.b16 %v2247, %v2239
    %v2880 = vpack.c.b16 %v2248, %v2240
    %v2881 = vpack.c.b16 %v2249, %v2241
    %v2882 = vpack.c.b16 %v2258, %v2250
    %v2883 = vpack.c.b16 %v2259, %v2251
    %v2884 = vpack.c.b16 %v2260, %v2252
    %v2885 = vpack.c.b16 %v2261, %v2253
    %v2886 = vpack.c.b16 %v2262, %v2254
    %v2887 = vpack.c.b16 %v2263, %v2255
    %v2888 = vpack.c.b16 %v2264, %v2256
    %v2889 = vpack.c.b16 %v2265, %v2257
    %v2890 = vpack.c.b16 %v2274, %v2266
    %v2891 = vpack.c.b16 %v2275, %v2267
    %v2892 = vpack.c.b16 %v2276, %v2268
    %v2893 = vpack.c.b16 %v2277, %v2269
    %v2894 = vpack.c.b16 %v2278, %v2270
    %v2895 = vpack.c.b16 %v2279, %v2271
    %v2896 = vpack.c.b16 %v2280, %v2272
    %v2897 = vpack.c.b16 %v2281, %v2273
    %v2898 = vpack.c.b16 %v2290, %v2282
    %v2899 = vpack.c.b16 %v2291, %v2283
    %v2900 = vpack.c.b16 %v2292, %v2284
    %v2901 = vpack.c.b16 %v2293, %v2285
    %v2902 = vpack.c.b16 %v2294, %v2286
    %v2903 = vpack.c.b16 %v2295, %v2287
    %v2904 = vpack.c.b16 %v2296, %v2288
    %v2905 = vpack.c.b16 %v2297, %v2289
    %v2906 = vpack.c.b16 %v2306, %v2298
    %v2907 = vpack.c.b16 %v2307, %v2299
    %v2908 = vpack.c.b16 %v2308, %v2300
    %v2909 = vpack.c.b16 %v2309, %v2301
    %v2910 = vpack.c.b16 %v2310, %v2302
    %v2911 = vpack.c.b16 %v2311, %v2303
    %v2912 = vpack.c.b16 %v2312, %v2304
    %v2913 = vpack.c.b16 %v2313, %v2305
    %v2914 = vpack.c.b16 %v2322, %v2314
    %v2915 = vpack.c.b16 %v2323, %v2315
    %v2916 = vpack.c.b16 %v2324, %v2316
    %v2917 = vpack.c.b16 %v2325, %v2317
    %v2918 = vpack.c.b16 %v2326, %v2318
    %v2919 = vpack.c.b16 %v2327, %v2319
    %v2920 = vpack.c.b16 %v2328, %v2320
    %v2921 = vpack.c.b16 %v2329, %v2321
    %v2922 = vpack.c.b16 %v2338, %v2330
    %v2923 = vpack.c.b16 %v2339, %v2331
    %v2924 = vpack.c.b16 %v2340, %v2332
    %v2925 = vpack.c.b16 %v2341, %v2333
    %v2926 = vpack.c.b16 %v2342, %v2334
    %v2927 = vpack.c.b16 %v2343, %v2335
    %v2928 = vpack.c.b16 %v2344, %v2336
    %v2929 = vpack.c.b16 %v2345, %v2337
    %v2930 = vpack.c.b16 %v2354, %v2346
    %v2931 = vpack.c.b16 %v2355, %v2347
    %v2932 = vpack.c.b16 %v2356, %v2348
    %v2933 = vpack.c.b16 %v2357, %v2349
    %v2934 = vpack.c.b16 %v2358, %v2350
    %v2935 = vpack.c.b16 %v2359, %v2351
    %v2936 = vpack.c.b16 %v2360, %v2352
    %v2937 = vpack.c.b16 %v2361, %v2353
    %v2938 = vpack.c.b16 %v2370, %v2362
    %v2939 = vpack.c.b16 %v2371, %v2363
    %v2940 = vpack.c.b16 %v2372, %v2364
    %v2941 = vpack.c.b16 %v2373, %v2365
    %v2942 = vpack.c.b16 %v2374, %v2366
    %v2943 = vpack.c.b16 %v2375, %v2367
    %v2944 = vpack.c.b16 %v2376, %v2368
    %v2945 = vpack.c.b16 %v2377, %v2369
    %v2946 = vpack.c.b16 %v2386, %v2378
    %v2947 = vpack.c.b16 %v2387, %v2379
    %v2948 = vpack.c.b16 %v2388, %v2380
    %v2949 = vpack.c.b16 %v2389, %v2381
    %v2950 = vpack.c.b16 %v2390, %v2382
    %v2951 = vpack.c.b16 %v2391, %v2383
    %v2952 = vpack.c.b16 %v2392, %v2384
    %v2953 = vpack.c.b16 %v2393, %v2385
    %v2954 = vpack.c.b16 %v2402, %v2394
    %v2955 = vpack.c.b16 %v2403, %v2395
    %v2956 = vpack.c.b16 %v2404, %v2396
    %v2957 = vpack.c.b16 %v2405, %v2397
    %v2958 = vpack.c.b16 %v2406, %v2398
    %v2959 = vpack.c.b16 %v2407, %v2399
    %v2960 = vpack.c.b16 %v2408, %v2400
    %v2961 = vpack.c.b16 %v2409, %v2401
    %v2962 = vpack.c.b16 %v2418, %v2410
    %v2963 = vpack.c.b16 %v2419, %v2411
    %v2964 = vpack.c.b16 %v2420, %v2412
    %v2965 = vpack.c.b16 %v2421, %v2413
    %v2966 = vpack.c.b16 %v2422, %v2414
    %v2967 = vpack.c.b16 %v2423, %v2415
    %v2968 = vpack.c.b16 %v2424, %v2416
    %v2969 = vpack.c.b16 %v2425, %v2417
    %v2970 = vpack.c.b16 %v2434, %v2426
    %v2971 = vpack.c.b16 %v2435, %v2427
    %v2972 = vpack.c.b16 %v2436, %v2428
    %v2973 = vpack.c.b16 %v2437, %v2429
    %v2974 = vpack.c.b16 %v2438, %v2430
    %v2975 = vpack.c.b16 %v2439, %v2431
    %v2976 = vpack.c.b16 %v2440, %v2432
    %v2977 = vpack.c.b16 %v2441, %v2433
    %v2978 = vpack.c.b16 %v2450, %v2442
    %v2979 = vpack.c.b16 %v2451, %v2443
    %v2980 = vpack.c.b16 %v2452, %v2444
    %v2981 = vpack.c.b16 %v2453, %v2445
    %v2982 = vpack.c.b16 %v2454, %v2446
    %v2983 = vpack.c.b16 %v2455, %v2447
    %v2984 = vpack.c.b16 %v2456, %v2448
    %v2985 = vpack.c.b16 %v2457, %v2449
    %v2986 = vpack.c.b16 %v2466, %v2458
    %v2987 = vpack.c.b16 %v2467, %v2459
    %v2988 = vpack.c.b16 %v2468, %v2460
    %v2989 = vpack.c.b16 %v2469, %v2461
    %v2990 = vpack.c.b16 %v2470, %v2462
    %v2991 = vpack.c.b16 %v2471, %v2463
    %v2992 = vpack.c.b16 %v2472, %v2464
    %v2993 = vpack.c.b16 %v2473, %v2465
    %v2994 = vpack.c.b16 %v2482, %v2474
    %v2995 = vpack.c.b16 %v2483, %v2475
    %v2996 = vpack.c.b16 %v2484, %v2476
    %v2997 = vpack.c.b16 %v2485, %v2477
    %v2998 = vpack.c.b16 %v2486, %v2478
    %v2999 = vpack.c.b16 %v2487, %v2479
    %v3000 = vpack.c.b16 %v2488, %v2480
    %v3001 = vpack.c.b16 %v2489, %v2481
    %3514 = vmatpush.bf16.msra.mxu0 %v2546
    %3515 = vmatpush.bf16.msra.mxu0 %v2538
    %3516 = vmatpush.bf16.msra.mxu0 %v2530
    %3517 = vmatpush.bf16.msra.mxu0 %v2522
    %3518 = vmatpush.bf16.msra.mxu0 %v2514
    %3519 = vmatpush.bf16.msra.mxu0 %v2506
    %3520 = vmatpush.bf16.msra.mxu0 %v2498
    %3521 = vmatpush.bf16.msra.mxu0 %v2490
    %3522 = vmatmul.bf16.gmra.mxu0 %v416
    %v3523 = vpop.f32.mrf.mxu0
    %v3524 = vadd.f32 %v938, %v3523
    %v3525 = vpop.f32.mrf.mxu0
    %3526 = vdwg.mxu0
    %3527 = vmatpush.bf16.msra.mxu0 %v2610
    %3528 = vmatpush.bf16.msra.mxu0 %v2602
    %3529 = vmatpush.bf16.msra.mxu0 %v2594
    %3530 = vmatpush.bf16.msra.mxu0 %v2586
    %3531 = vmatpush.bf16.msra.mxu0 %v2578
    %3532 = vmatpush.bf16.msra.mxu0 %v2570
    %3533 = vmatpush.bf16.msra.mxu0 %v2562
    %3534 = vmatpush.bf16.msra.mxu0 %v2554
    %3535 = vmatmul.bf16.gmra.mxu0 %v417
    %v3536 = vpop.f32.mrf.mxu0
    %v3537 = vadd.f32 %v3524, %v3536
    %v3538 = vpop.f32.mrf.mxu0
    %3539 = vdwg.mxu0
    %3540 = vmatpush.bf16.msra.mxu0 %v2674
    %3541 = vmatpush.bf16.msra.mxu0 %v2666
    %3542 = vmatpush.bf16.msra.mxu0 %v2658
    %3543 = vmatpush.bf16.msra.mxu0 %v2650
    %3544 = vmatpush.bf16.msra.mxu0 %v2642
    %3545 = vmatpush.bf16.msra.mxu0 %v2634
    %3546 = vmatpush.bf16.msra.mxu0 %v2626
    %3547 = vmatpush.bf16.msra.mxu0 %v2618
    %3548 = vmatmul.bf16.gmra.mxu0 %v418
    %v3549 = vpop.f32.mrf.mxu0
    %v3550 = vadd.f32 %v3537, %v3549
    %v3551 = vpop.f32.mrf.mxu0
    %3552 = vdwg.mxu0
    %3553 = vmatpush.bf16.msra.mxu0 %v2738
    %3554 = vmatpush.bf16.msra.mxu0 %v2730
    %3555 = vmatpush.bf16.msra.mxu0 %v2722
    %3556 = vmatpush.bf16.msra.mxu0 %v2714
    %3557 = vmatpush.bf16.msra.mxu0 %v2706
    %3558 = vmatpush.bf16.msra.mxu0 %v2698
    %3559 = vmatpush.bf16.msra.mxu0 %v2690
    %3560 = vmatpush.bf16.msra.mxu0 %v2682
    %3561 = vmatmul.bf16.gmra.mxu0 %v419
    %v3562 = vpop.f32.mrf.mxu0
    %v3563 = vadd.f32 %v3550, %v3562
    %v3564 = vpop.f32.mrf.mxu0
    %3565 = vdwg.mxu0
    %3566 = vmatpush.bf16.msra.mxu0 %v2802
    %3567 = vmatpush.bf16.msra.mxu0 %v2794
    %3568 = vmatpush.bf16.msra.mxu0 %v2786
    %3569 = vmatpush.bf16.msra.mxu0 %v2778
    %3570 = vmatpush.bf16.msra.mxu0 %v2770
    %3571 = vmatpush.bf16.msra.mxu0 %v2762
    %3572 = vmatpush.bf16.msra.mxu0 %v2754
    %3573 = vmatpush.bf16.msra.mxu0 %v2746
    %3574 = vmatmul.bf16.gmra.mxu0 %v420
    %v3575 = vpop.f32.mrf.mxu0
    %v3576 = vadd.f32 %v3563, %v3575
    %v3577 = vpop.f32.mrf.mxu0
    %3578 = vdwg.mxu0
    %3579 = vmatpush.bf16.msra.mxu0 %v2866
    %3580 = vmatpush.bf16.msra.mxu0 %v2858
    %3581 = vmatpush.bf16.msra.mxu0 %v2850
    %3582 = vmatpush.bf16.msra.mxu0 %v2842
    %3583 = vmatpush.bf16.msra.mxu0 %v2834
    %3584 = vmatpush.bf16.msra.mxu0 %v2826
    %3585 = vmatpush.bf16.msra.mxu0 %v2818
    %3586 = vmatpush.bf16.msra.mxu0 %v2810
    %3587 = vmatmul.bf16.gmra.mxu0 %v421
    %v3588 = vpop.f32.mrf.mxu0
    %v3589 = vadd.f32 %v3576, %v3588
    %v3590 = vpop.f32.mrf.mxu0
    %3591 = vdwg.mxu0
    %3592 = vmatpush.bf16.msra.mxu0 %v2930
    %3593 = vmatpush.bf16.msra.mxu0 %v2922
    %3594 = vmatpush.bf16.msra.mxu0 %v2914
    %3595 = vmatpush.bf16.msra.mxu0 %v2906
    %3596 = vmatpush.bf16.msra.mxu0 %v2898
    %3597 = vmatpush.bf16.msra.mxu0 %v2890
    %3598 = vmatpush.bf16.msra.mxu0 %v2882
    %3599 = vmatpush.bf16.msra.mxu0 %v2874
    %3600 = vmatmul.bf16.gmra.mxu0 %v422
    %v3601 = vpop.f32.mrf.mxu0
    %v3602 = vadd.f32 %v3589, %v3601
    %v3603 = vpop.f32.mrf.mxu0
    %3604 = vdwg.mxu0
    %3605 = vmatpush.bf16.msra.mxu0 %v2994
    %3606 = vmatpush.bf16.msra.mxu0 %v2986
    %3607 = vmatpush.bf16.msra.mxu0 %v2978
    %3608 = vmatpush.bf16.msra.mxu0 %v2970
    %3609 = vmatpush.bf16.msra.mxu0 %v2962
    %3610 = vmatpush.bf16.msra.mxu0 %v2954
    %3611 = vmatpush.bf16.msra.mxu0 %v2946
    %3612 = vmatpush.bf16.msra.mxu0 %v2938
    %3613 = vmatmul.bf16.gmra.mxu0 %v423
    %v3614 = vpop.f32.mrf.mxu0
    %v3615 = vadd.f32 %v3602, %v3614
    %v3616 = vpop.f32.mrf.mxu0
    %3617 = vdwg.mxu0
    %3618 = vmatpush.bf16.msra.mxu0 %v2547
    %3619 = vmatpush.bf16.msra.mxu0 %v2539
    %3620 = vmatpush.bf16.msra.mxu0 %v2531
    %3621 = vmatpush.bf16.msra.mxu0 %v2523
    %3622 = vmatpush.bf16.msra.mxu0 %v2515
    %3623 = vmatpush.bf16.msra.mxu0 %v2507
    %3624 = vmatpush.bf16.msra.mxu0 %v2499
    %3625 = vmatpush.bf16.msra.mxu0 %v2491
    %3626 = vmatmul.bf16.gmra.mxu0 %v416
    %v3627 = vpop.f32.mrf.mxu0
    %v3628 = vadd.f32 %v939, %v3627
    %v3629 = vpop.f32.mrf.mxu0
    %3630 = vdwg.mxu0
    %3631 = vmatpush.bf16.msra.mxu0 %v2611
    %3632 = vmatpush.bf16.msra.mxu0 %v2603
    %3633 = vmatpush.bf16.msra.mxu0 %v2595
    %3634 = vmatpush.bf16.msra.mxu0 %v2587
    %3635 = vmatpush.bf16.msra.mxu0 %v2579
    %3636 = vmatpush.bf16.msra.mxu0 %v2571
    %3637 = vmatpush.bf16.msra.mxu0 %v2563
    %3638 = vmatpush.bf16.msra.mxu0 %v2555
    %3639 = vmatmul.bf16.gmra.mxu0 %v417
    %v3640 = vpop.f32.mrf.mxu0
    %v3641 = vadd.f32 %v3628, %v3640
    %v3642 = vpop.f32.mrf.mxu0
    %3643 = vdwg.mxu0
    %3644 = vmatpush.bf16.msra.mxu0 %v2675
    %3645 = vmatpush.bf16.msra.mxu0 %v2667
    %3646 = vmatpush.bf16.msra.mxu0 %v2659
    %3647 = vmatpush.bf16.msra.mxu0 %v2651
    %3648 = vmatpush.bf16.msra.mxu0 %v2643
    %3649 = vmatpush.bf16.msra.mxu0 %v2635
    %3650 = vmatpush.bf16.msra.mxu0 %v2627
    %3651 = vmatpush.bf16.msra.mxu0 %v2619
    %3652 = vmatmul.bf16.gmra.mxu0 %v418
    %v3653 = vpop.f32.mrf.mxu0
    %v3654 = vadd.f32 %v3641, %v3653
    %v3655 = vpop.f32.mrf.mxu0
    %3656 = vdwg.mxu0
    %3657 = vmatpush.bf16.msra.mxu0 %v2739
    %3658 = vmatpush.bf16.msra.mxu0 %v2731
    %3659 = vmatpush.bf16.msra.mxu0 %v2723
    %3660 = vmatpush.bf16.msra.mxu0 %v2715
    %3661 = vmatpush.bf16.msra.mxu0 %v2707
    %3662 = vmatpush.bf16.msra.mxu0 %v2699
    %3663 = vmatpush.bf16.msra.mxu0 %v2691
    %3664 = vmatpush.bf16.msra.mxu0 %v2683
    %3665 = vmatmul.bf16.gmra.mxu0 %v419
    %v3666 = vpop.f32.mrf.mxu0
    %v3667 = vadd.f32 %v3654, %v3666
    %v3668 = vpop.f32.mrf.mxu0
    %3669 = vdwg.mxu0
    %3670 = vmatpush.bf16.msra.mxu0 %v2803
    %3671 = vmatpush.bf16.msra.mxu0 %v2795
    %3672 = vmatpush.bf16.msra.mxu0 %v2787
    %3673 = vmatpush.bf16.msra.mxu0 %v2779
    %3674 = vmatpush.bf16.msra.mxu0 %v2771
    %3675 = vmatpush.bf16.msra.mxu0 %v2763
    %3676 = vmatpush.bf16.msra.mxu0 %v2755
    %3677 = vmatpush.bf16.msra.mxu0 %v2747
    %3678 = vmatmul.bf16.gmra.mxu0 %v420
    %v3679 = vpop.f32.mrf.mxu0
    %v3680 = vadd.f32 %v3667, %v3679
    %v3681 = vpop.f32.mrf.mxu0
    %3682 = vdwg.mxu0
    %3683 = vmatpush.bf16.msra.mxu0 %v2867
    %3684 = vmatpush.bf16.msra.mxu0 %v2859
    %3685 = vmatpush.bf16.msra.mxu0 %v2851
    %3686 = vmatpush.bf16.msra.mxu0 %v2843
    %3687 = vmatpush.bf16.msra.mxu0 %v2835
    %3688 = vmatpush.bf16.msra.mxu0 %v2827
    %3689 = vmatpush.bf16.msra.mxu0 %v2819
    %3690 = vmatpush.bf16.msra.mxu0 %v2811
    %3691 = vmatmul.bf16.gmra.mxu0 %v421
    %v3692 = vpop.f32.mrf.mxu0
    %v3693 = vadd.f32 %v3680, %v3692
    %v3694 = vpop.f32.mrf.mxu0
    %3695 = vdwg.mxu0
    %3696 = vmatpush.bf16.msra.mxu0 %v2931
    %3697 = vmatpush.bf16.msra.mxu0 %v2923
    %3698 = vmatpush.bf16.msra.mxu0 %v2915
    %3699 = vmatpush.bf16.msra.mxu0 %v2907
    %3700 = vmatpush.bf16.msra.mxu0 %v2899
    %3701 = vmatpush.bf16.msra.mxu0 %v2891
    %3702 = vmatpush.bf16.msra.mxu0 %v2883
    %3703 = vmatpush.bf16.msra.mxu0 %v2875
    %3704 = vmatmul.bf16.gmra.mxu0 %v422
    %v3705 = vpop.f32.mrf.mxu0
    %v3706 = vadd.f32 %v3693, %v3705
    %v3707 = vpop.f32.mrf.mxu0
    %3708 = vdwg.mxu0
    %3709 = vmatpush.bf16.msra.mxu0 %v2995
    %3710 = vmatpush.bf16.msra.mxu0 %v2987
    %3711 = vmatpush.bf16.msra.mxu0 %v2979
    %3712 = vmatpush.bf16.msra.mxu0 %v2971
    %3713 = vmatpush.bf16.msra.mxu0 %v2963
    %3714 = vmatpush.bf16.msra.mxu0 %v2955
    %3715 = vmatpush.bf16.msra.mxu0 %v2947
    %3716 = vmatpush.bf16.msra.mxu0 %v2939
    %3717 = vmatmul.bf16.gmra.mxu0 %v423
    %v3718 = vpop.f32.mrf.mxu0
    %v3719 = vadd.f32 %v3706, %v3718
    %v3720 = vpop.f32.mrf.mxu0
    %3721 = vdwg.mxu0
    %3722 = vmatpush.bf16.msra.mxu0 %v2548
    %3723 = vmatpush.bf16.msra.mxu0 %v2540
    %3724 = vmatpush.bf16.msra.mxu0 %v2532
    %3725 = vmatpush.bf16.msra.mxu0 %v2524
    %3726 = vmatpush.bf16.msra.mxu0 %v2516
    %3727 = vmatpush.bf16.msra.mxu0 %v2508
    %3728 = vmatpush.bf16.msra.mxu0 %v2500
    %3729 = vmatpush.bf16.msra.mxu0 %v2492
    %3730 = vmatmul.bf16.gmra.mxu0 %v416
    %v3731 = vpop.f32.mrf.mxu0
    %v3732 = vadd.f32 %v940, %v3731
    %v3733 = vpop.f32.mrf.mxu0
    %3734 = vdwg.mxu0
    %3735 = vmatpush.bf16.msra.mxu0 %v2612
    %3736 = vmatpush.bf16.msra.mxu0 %v2604
    %3737 = vmatpush.bf16.msra.mxu0 %v2596
    %3738 = vmatpush.bf16.msra.mxu0 %v2588
    %3739 = vmatpush.bf16.msra.mxu0 %v2580
    %3740 = vmatpush.bf16.msra.mxu0 %v2572
    %3741 = vmatpush.bf16.msra.mxu0 %v2564
    %3742 = vmatpush.bf16.msra.mxu0 %v2556
    %3743 = vmatmul.bf16.gmra.mxu0 %v417
    %v3744 = vpop.f32.mrf.mxu0
    %v3745 = vadd.f32 %v3732, %v3744
    %v3746 = vpop.f32.mrf.mxu0
    %3747 = vdwg.mxu0
    %3748 = vmatpush.bf16.msra.mxu0 %v2676
    %3749 = vmatpush.bf16.msra.mxu0 %v2668
    %3750 = vmatpush.bf16.msra.mxu0 %v2660
    %3751 = vmatpush.bf16.msra.mxu0 %v2652
    %3752 = vmatpush.bf16.msra.mxu0 %v2644
    %3753 = vmatpush.bf16.msra.mxu0 %v2636
    %3754 = vmatpush.bf16.msra.mxu0 %v2628
    %3755 = vmatpush.bf16.msra.mxu0 %v2620
    %3756 = vmatmul.bf16.gmra.mxu0 %v418
    %v3757 = vpop.f32.mrf.mxu0
    %v3758 = vadd.f32 %v3745, %v3757
    %v3759 = vpop.f32.mrf.mxu0
    %3760 = vdwg.mxu0
    %3761 = vmatpush.bf16.msra.mxu0 %v2740
    %3762 = vmatpush.bf16.msra.mxu0 %v2732
    %3763 = vmatpush.bf16.msra.mxu0 %v2724
    %3764 = vmatpush.bf16.msra.mxu0 %v2716
    %3765 = vmatpush.bf16.msra.mxu0 %v2708
    %3766 = vmatpush.bf16.msra.mxu0 %v2700
    %3767 = vmatpush.bf16.msra.mxu0 %v2692
    %3768 = vmatpush.bf16.msra.mxu0 %v2684
    %3769 = vmatmul.bf16.gmra.mxu0 %v419
    %v3770 = vpop.f32.mrf.mxu0
    %v3771 = vadd.f32 %v3758, %v3770
    %v3772 = vpop.f32.mrf.mxu0
    %3773 = vdwg.mxu0
    %3774 = vmatpush.bf16.msra.mxu0 %v2804
    %3775 = vmatpush.bf16.msra.mxu0 %v2796
    %3776 = vmatpush.bf16.msra.mxu0 %v2788
    %3777 = vmatpush.bf16.msra.mxu0 %v2780
    %3778 = vmatpush.bf16.msra.mxu0 %v2772
    %3779 = vmatpush.bf16.msra.mxu0 %v2764
    %3780 = vmatpush.bf16.msra.mxu0 %v2756
    %3781 = vmatpush.bf16.msra.mxu0 %v2748
    %3782 = vmatmul.bf16.gmra.mxu0 %v420
    %v3783 = vpop.f32.mrf.mxu0
    %v3784 = vadd.f32 %v3771, %v3783
    %v3785 = vpop.f32.mrf.mxu0
    %3786 = vdwg.mxu0
    %3787 = vmatpush.bf16.msra.mxu0 %v2868
    %3788 = vmatpush.bf16.msra.mxu0 %v2860
    %3789 = vmatpush.bf16.msra.mxu0 %v2852
    %3790 = vmatpush.bf16.msra.mxu0 %v2844
    %3791 = vmatpush.bf16.msra.mxu0 %v2836
    %3792 = vmatpush.bf16.msra.mxu0 %v2828
    %3793 = vmatpush.bf16.msra.mxu0 %v2820
    %3794 = vmatpush.bf16.msra.mxu0 %v2812
    %3795 = vmatmul.bf16.gmra.mxu0 %v421
    %v3796 = vpop.f32.mrf.mxu0
    %v3797 = vadd.f32 %v3784, %v3796
    %v3798 = vpop.f32.mrf.mxu0
    %3799 = vdwg.mxu0
    %3800 = vmatpush.bf16.msra.mxu0 %v2932
    %3801 = vmatpush.bf16.msra.mxu0 %v2924
    %3802 = vmatpush.bf16.msra.mxu0 %v2916
    %3803 = vmatpush.bf16.msra.mxu0 %v2908
    %3804 = vmatpush.bf16.msra.mxu0 %v2900
    %3805 = vmatpush.bf16.msra.mxu0 %v2892
    %3806 = vmatpush.bf16.msra.mxu0 %v2884
    %3807 = vmatpush.bf16.msra.mxu0 %v2876
    %3808 = vmatmul.bf16.gmra.mxu0 %v422
    %v3809 = vpop.f32.mrf.mxu0
    %v3810 = vadd.f32 %v3797, %v3809
    %v3811 = vpop.f32.mrf.mxu0
    %3812 = vdwg.mxu0
    %3813 = vmatpush.bf16.msra.mxu0 %v2996
    %3814 = vmatpush.bf16.msra.mxu0 %v2988
    %3815 = vmatpush.bf16.msra.mxu0 %v2980
    %3816 = vmatpush.bf16.msra.mxu0 %v2972
    %3817 = vmatpush.bf16.msra.mxu0 %v2964
    %3818 = vmatpush.bf16.msra.mxu0 %v2956
    %3819 = vmatpush.bf16.msra.mxu0 %v2948
    %3820 = vmatpush.bf16.msra.mxu0 %v2940
    %3821 = vmatmul.bf16.gmra.mxu0 %v423
    %v3822 = vpop.f32.mrf.mxu0
    %v3823 = vadd.f32 %v3810, %v3822
    %v3824 = vpop.f32.mrf.mxu0
    %3825 = vdwg.mxu0
    %3826 = vmatpush.bf16.msra.mxu0 %v2549
    %3827 = vmatpush.bf16.msra.mxu0 %v2541
    %3828 = vmatpush.bf16.msra.mxu0 %v2533
    %3829 = vmatpush.bf16.msra.mxu0 %v2525
    %3830 = vmatpush.bf16.msra.mxu0 %v2517
    %3831 = vmatpush.bf16.msra.mxu0 %v2509
    %3832 = vmatpush.bf16.msra.mxu0 %v2501
    %3833 = vmatpush.bf16.msra.mxu0 %v2493
    %3834 = vmatmul.bf16.gmra.mxu0 %v416
    %v3835 = vpop.f32.mrf.mxu0
    %v3836 = vadd.f32 %v941, %v3835
    %v3837 = vpop.f32.mrf.mxu0
    %3838 = vdwg.mxu0
    %3839 = vmatpush.bf16.msra.mxu0 %v2613
    %3840 = vmatpush.bf16.msra.mxu0 %v2605
    %3841 = vmatpush.bf16.msra.mxu0 %v2597
    %3842 = vmatpush.bf16.msra.mxu0 %v2589
    %3843 = vmatpush.bf16.msra.mxu0 %v2581
    %3844 = vmatpush.bf16.msra.mxu0 %v2573
    %3845 = vmatpush.bf16.msra.mxu0 %v2565
    %3846 = vmatpush.bf16.msra.mxu0 %v2557
    %3847 = vmatmul.bf16.gmra.mxu0 %v417
    %v3848 = vpop.f32.mrf.mxu0
    %v3849 = vadd.f32 %v3836, %v3848
    %v3850 = vpop.f32.mrf.mxu0
    %3851 = vdwg.mxu0
    %3852 = vmatpush.bf16.msra.mxu0 %v2677
    %3853 = vmatpush.bf16.msra.mxu0 %v2669
    %3854 = vmatpush.bf16.msra.mxu0 %v2661
    %3855 = vmatpush.bf16.msra.mxu0 %v2653
    %3856 = vmatpush.bf16.msra.mxu0 %v2645
    %3857 = vmatpush.bf16.msra.mxu0 %v2637
    %3858 = vmatpush.bf16.msra.mxu0 %v2629
    %3859 = vmatpush.bf16.msra.mxu0 %v2621
    %3860 = vmatmul.bf16.gmra.mxu0 %v418
    %v3861 = vpop.f32.mrf.mxu0
    %v3862 = vadd.f32 %v3849, %v3861
    %v3863 = vpop.f32.mrf.mxu0
    %3864 = vdwg.mxu0
    %3865 = vmatpush.bf16.msra.mxu0 %v2741
    %3866 = vmatpush.bf16.msra.mxu0 %v2733
    %3867 = vmatpush.bf16.msra.mxu0 %v2725
    %3868 = vmatpush.bf16.msra.mxu0 %v2717
    %3869 = vmatpush.bf16.msra.mxu0 %v2709
    %3870 = vmatpush.bf16.msra.mxu0 %v2701
    %3871 = vmatpush.bf16.msra.mxu0 %v2693
    %3872 = vmatpush.bf16.msra.mxu0 %v2685
    %3873 = vmatmul.bf16.gmra.mxu0 %v419
    %v3874 = vpop.f32.mrf.mxu0
    %v3875 = vadd.f32 %v3862, %v3874
    %v3876 = vpop.f32.mrf.mxu0
    %3877 = vdwg.mxu0
    %3878 = vmatpush.bf16.msra.mxu0 %v2805
    %3879 = vmatpush.bf16.msra.mxu0 %v2797
    %3880 = vmatpush.bf16.msra.mxu0 %v2789
    %3881 = vmatpush.bf16.msra.mxu0 %v2781
    %3882 = vmatpush.bf16.msra.mxu0 %v2773
    %3883 = vmatpush.bf16.msra.mxu0 %v2765
    %3884 = vmatpush.bf16.msra.mxu0 %v2757
    %3885 = vmatpush.bf16.msra.mxu0 %v2749
    %3886 = vmatmul.bf16.gmra.mxu0 %v420
    %v3887 = vpop.f32.mrf.mxu0
    %v3888 = vadd.f32 %v3875, %v3887
    %v3889 = vpop.f32.mrf.mxu0
    %3890 = vdwg.mxu0
    %3891 = vmatpush.bf16.msra.mxu0 %v2869
    %3892 = vmatpush.bf16.msra.mxu0 %v2861
    %3893 = vmatpush.bf16.msra.mxu0 %v2853
    %3894 = vmatpush.bf16.msra.mxu0 %v2845
    %3895 = vmatpush.bf16.msra.mxu0 %v2837
    %3896 = vmatpush.bf16.msra.mxu0 %v2829
    %3897 = vmatpush.bf16.msra.mxu0 %v2821
    %3898 = vmatpush.bf16.msra.mxu0 %v2813
    %3899 = vmatmul.bf16.gmra.mxu0 %v421
    %v3900 = vpop.f32.mrf.mxu0
    %v3901 = vadd.f32 %v3888, %v3900
    %v3902 = vpop.f32.mrf.mxu0
    %3903 = vdwg.mxu0
    %3904 = vmatpush.bf16.msra.mxu0 %v2933
    %3905 = vmatpush.bf16.msra.mxu0 %v2925
    %3906 = vmatpush.bf16.msra.mxu0 %v2917
    %3907 = vmatpush.bf16.msra.mxu0 %v2909
    %3908 = vmatpush.bf16.msra.mxu0 %v2901
    %3909 = vmatpush.bf16.msra.mxu0 %v2893
    %3910 = vmatpush.bf16.msra.mxu0 %v2885
    %3911 = vmatpush.bf16.msra.mxu0 %v2877
    %3912 = vmatmul.bf16.gmra.mxu0 %v422
    %v3913 = vpop.f32.mrf.mxu0
    %v3914 = vadd.f32 %v3901, %v3913
    %v3915 = vpop.f32.mrf.mxu0
    %3916 = vdwg.mxu0
    %3917 = vmatpush.bf16.msra.mxu0 %v2997
    %3918 = vmatpush.bf16.msra.mxu0 %v2989
    %3919 = vmatpush.bf16.msra.mxu0 %v2981
    %3920 = vmatpush.bf16.msra.mxu0 %v2973
    %3921 = vmatpush.bf16.msra.mxu0 %v2965
    %3922 = vmatpush.bf16.msra.mxu0 %v2957
    %3923 = vmatpush.bf16.msra.mxu0 %v2949
    %3924 = vmatpush.bf16.msra.mxu0 %v2941
    %3925 = vmatmul.bf16.gmra.mxu0 %v423
    %v3926 = vpop.f32.mrf.mxu0
    %v3927 = vadd.f32 %v3914, %v3926
    %v3928 = vpop.f32.mrf.mxu0
    %3929 = vdwg.mxu0
    %3930 = vmatpush.bf16.msra.mxu0 %v2550
    %3931 = vmatpush.bf16.msra.mxu0 %v2542
    %3932 = vmatpush.bf16.msra.mxu0 %v2534
    %3933 = vmatpush.bf16.msra.mxu0 %v2526
    %3934 = vmatpush.bf16.msra.mxu0 %v2518
    %3935 = vmatpush.bf16.msra.mxu0 %v2510
    %3936 = vmatpush.bf16.msra.mxu0 %v2502
    %3937 = vmatpush.bf16.msra.mxu0 %v2494
    %3938 = vmatmul.bf16.gmra.mxu0 %v416
    %v3939 = vpop.f32.mrf.mxu0
    %v3940 = vadd.f32 %v942, %v3939
    %v3941 = vpop.f32.mrf.mxu0
    %3942 = vdwg.mxu0
    %3943 = vmatpush.bf16.msra.mxu0 %v2614
    %3944 = vmatpush.bf16.msra.mxu0 %v2606
    %3945 = vmatpush.bf16.msra.mxu0 %v2598
    %3946 = vmatpush.bf16.msra.mxu0 %v2590
    %3947 = vmatpush.bf16.msra.mxu0 %v2582
    %3948 = vmatpush.bf16.msra.mxu0 %v2574
    %3949 = vmatpush.bf16.msra.mxu0 %v2566
    %3950 = vmatpush.bf16.msra.mxu0 %v2558
    %3951 = vmatmul.bf16.gmra.mxu0 %v417
    %v3952 = vpop.f32.mrf.mxu0
    %v3953 = vadd.f32 %v3940, %v3952
    %v3954 = vpop.f32.mrf.mxu0
    %3955 = vdwg.mxu0
    %3956 = vmatpush.bf16.msra.mxu0 %v2678
    %3957 = vmatpush.bf16.msra.mxu0 %v2670
    %3958 = vmatpush.bf16.msra.mxu0 %v2662
    %3959 = vmatpush.bf16.msra.mxu0 %v2654
    %3960 = vmatpush.bf16.msra.mxu0 %v2646
    %3961 = vmatpush.bf16.msra.mxu0 %v2638
    %3962 = vmatpush.bf16.msra.mxu0 %v2630
    %3963 = vmatpush.bf16.msra.mxu0 %v2622
    %3964 = vmatmul.bf16.gmra.mxu0 %v418
    %v3965 = vpop.f32.mrf.mxu0
    %v3966 = vadd.f32 %v3953, %v3965
    %v3967 = vpop.f32.mrf.mxu0
    %3968 = vdwg.mxu0
    %3969 = vmatpush.bf16.msra.mxu0 %v2742
    %3970 = vmatpush.bf16.msra.mxu0 %v2734
    %3971 = vmatpush.bf16.msra.mxu0 %v2726
    %3972 = vmatpush.bf16.msra.mxu0 %v2718
    %3973 = vmatpush.bf16.msra.mxu0 %v2710
    %3974 = vmatpush.bf16.msra.mxu0 %v2702
    %3975 = vmatpush.bf16.msra.mxu0 %v2694
    %3976 = vmatpush.bf16.msra.mxu0 %v2686
    %3977 = vmatmul.bf16.gmra.mxu0 %v419
    %v3978 = vpop.f32.mrf.mxu0
    %v3979 = vadd.f32 %v3966, %v3978
    %v3980 = vpop.f32.mrf.mxu0
    %3981 = vdwg.mxu0
    %3982 = vmatpush.bf16.msra.mxu0 %v2806
    %3983 = vmatpush.bf16.msra.mxu0 %v2798
    %3984 = vmatpush.bf16.msra.mxu0 %v2790
    %3985 = vmatpush.bf16.msra.mxu0 %v2782
    %3986 = vmatpush.bf16.msra.mxu0 %v2774
    %3987 = vmatpush.bf16.msra.mxu0 %v2766
    %3988 = vmatpush.bf16.msra.mxu0 %v2758
    %3989 = vmatpush.bf16.msra.mxu0 %v2750
    %3990 = vmatmul.bf16.gmra.mxu0 %v420
    %v3991 = vpop.f32.mrf.mxu0
    %v3992 = vadd.f32 %v3979, %v3991
    %v3993 = vpop.f32.mrf.mxu0
    %3994 = vdwg.mxu0
    %3995 = vmatpush.bf16.msra.mxu0 %v2870
    %3996 = vmatpush.bf16.msra.mxu0 %v2862
    %3997 = vmatpush.bf16.msra.mxu0 %v2854
    %3998 = vmatpush.bf16.msra.mxu0 %v2846
    %3999 = vmatpush.bf16.msra.mxu0 %v2838
    %4000 = vmatpush.bf16.msra.mxu0 %v2830
    %4001 = vmatpush.bf16.msra.mxu0 %v2822
    %4002 = vmatpush.bf16.msra.mxu0 %v2814
    %4003 = vmatmul.bf16.gmra.mxu0 %v421
    %v4004 = vpop.f32.mrf.mxu0
    %v4005 = vadd.f32 %v3992, %v4004
    %v4006 = vpop.f32.mrf.mxu0
    %4007 = vdwg.mxu0
    %4008 = vmatpush.bf16.msra.mxu0 %v2934
    %4009 = vmatpush.bf16.msra.mxu0 %v2926
    %4010 = vmatpush.bf16.msra.mxu0 %v2918
    %4011 = vmatpush.bf16.msra.mxu0 %v2910
    %4012 = vmatpush.bf16.msra.mxu0 %v2902
    %4013 = vmatpush.bf16.msra.mxu0 %v2894
    %4014 = vmatpush.bf16.msra.mxu0 %v2886
    %4015 = vmatpush.bf16.msra.mxu0 %v2878
    %4016 = vmatmul.bf16.gmra.mxu0 %v422
    %v4017 = vpop.f32.mrf.mxu0
    %v4018 = vadd.f32 %v4005, %v4017
    %v4019 = vpop.f32.mrf.mxu0
    %4020 = vdwg.mxu0
    %4021 = vmatpush.bf16.msra.mxu0 %v2998
    %4022 = vmatpush.bf16.msra.mxu0 %v2990
    %4023 = vmatpush.bf16.msra.mxu0 %v2982
    %4024 = vmatpush.bf16.msra.mxu0 %v2974
    %4025 = vmatpush.bf16.msra.mxu0 %v2966
    %4026 = vmatpush.bf16.msra.mxu0 %v2958
    %4027 = vmatpush.bf16.msra.mxu0 %v2950
    %4028 = vmatpush.bf16.msra.mxu0 %v2942
    %4029 = vmatmul.bf16.gmra.mxu0 %v423
    %v4030 = vpop.f32.mrf.mxu0
    %v4031 = vadd.f32 %v4018, %v4030
    %v4032 = vpop.f32.mrf.mxu0
    %4033 = vdwg.mxu0
    %4034 = vmatpush.bf16.msra.mxu0 %v2551
    %4035 = vmatpush.bf16.msra.mxu0 %v2543
    %4036 = vmatpush.bf16.msra.mxu0 %v2535
    %4037 = vmatpush.bf16.msra.mxu0 %v2527
    %4038 = vmatpush.bf16.msra.mxu0 %v2519
    %4039 = vmatpush.bf16.msra.mxu0 %v2511
    %4040 = vmatpush.bf16.msra.mxu0 %v2503
    %4041 = vmatpush.bf16.msra.mxu0 %v2495
    %4042 = vmatmul.bf16.gmra.mxu0 %v416
    %v4043 = vpop.f32.mrf.mxu0
    %v4044 = vadd.f32 %v943, %v4043
    %v4045 = vpop.f32.mrf.mxu0
    %4046 = vdwg.mxu0
    %4047 = vmatpush.bf16.msra.mxu0 %v2615
    %4048 = vmatpush.bf16.msra.mxu0 %v2607
    %4049 = vmatpush.bf16.msra.mxu0 %v2599
    %4050 = vmatpush.bf16.msra.mxu0 %v2591
    %4051 = vmatpush.bf16.msra.mxu0 %v2583
    %4052 = vmatpush.bf16.msra.mxu0 %v2575
    %4053 = vmatpush.bf16.msra.mxu0 %v2567
    %4054 = vmatpush.bf16.msra.mxu0 %v2559
    %4055 = vmatmul.bf16.gmra.mxu0 %v417
    %v4056 = vpop.f32.mrf.mxu0
    %v4057 = vadd.f32 %v4044, %v4056
    %v4058 = vpop.f32.mrf.mxu0
    %4059 = vdwg.mxu0
    %4060 = vmatpush.bf16.msra.mxu0 %v2679
    %4061 = vmatpush.bf16.msra.mxu0 %v2671
    %4062 = vmatpush.bf16.msra.mxu0 %v2663
    %4063 = vmatpush.bf16.msra.mxu0 %v2655
    %4064 = vmatpush.bf16.msra.mxu0 %v2647
    %4065 = vmatpush.bf16.msra.mxu0 %v2639
    %4066 = vmatpush.bf16.msra.mxu0 %v2631
    %4067 = vmatpush.bf16.msra.mxu0 %v2623
    %4068 = vmatmul.bf16.gmra.mxu0 %v418
    %v4069 = vpop.f32.mrf.mxu0
    %v4070 = vadd.f32 %v4057, %v4069
    %v4071 = vpop.f32.mrf.mxu0
    %4072 = vdwg.mxu0
    %4073 = vmatpush.bf16.msra.mxu0 %v2743
    %4074 = vmatpush.bf16.msra.mxu0 %v2735
    %4075 = vmatpush.bf16.msra.mxu0 %v2727
    %4076 = vmatpush.bf16.msra.mxu0 %v2719
    %4077 = vmatpush.bf16.msra.mxu0 %v2711
    %4078 = vmatpush.bf16.msra.mxu0 %v2703
    %4079 = vmatpush.bf16.msra.mxu0 %v2695
    %4080 = vmatpush.bf16.msra.mxu0 %v2687
    %4081 = vmatmul.bf16.gmra.mxu0 %v419
    %v4082 = vpop.f32.mrf.mxu0
    %v4083 = vadd.f32 %v4070, %v4082
    %v4084 = vpop.f32.mrf.mxu0
    %4085 = vdwg.mxu0
    %4086 = vmatpush.bf16.msra.mxu0 %v2807
    %4087 = vmatpush.bf16.msra.mxu0 %v2799
    %4088 = vmatpush.bf16.msra.mxu0 %v2791
    %4089 = vmatpush.bf16.msra.mxu0 %v2783
    %4090 = vmatpush.bf16.msra.mxu0 %v2775
    %4091 = vmatpush.bf16.msra.mxu0 %v2767
    %4092 = vmatpush.bf16.msra.mxu0 %v2759
    %4093 = vmatpush.bf16.msra.mxu0 %v2751
    %4094 = vmatmul.bf16.gmra.mxu0 %v420
    %v4095 = vpop.f32.mrf.mxu0
    %v4096 = vadd.f32 %v4083, %v4095
    %v4097 = vpop.f32.mrf.mxu0
    %4098 = vdwg.mxu0
    %4099 = vmatpush.bf16.msra.mxu0 %v2871
    %4100 = vmatpush.bf16.msra.mxu0 %v2863
    %4101 = vmatpush.bf16.msra.mxu0 %v2855
    %4102 = vmatpush.bf16.msra.mxu0 %v2847
    %4103 = vmatpush.bf16.msra.mxu0 %v2839
    %4104 = vmatpush.bf16.msra.mxu0 %v2831
    %4105 = vmatpush.bf16.msra.mxu0 %v2823
    %4106 = vmatpush.bf16.msra.mxu0 %v2815
    %4107 = vmatmul.bf16.gmra.mxu0 %v421
    %v4108 = vpop.f32.mrf.mxu0
    %v4109 = vadd.f32 %v4096, %v4108
    %v4110 = vpop.f32.mrf.mxu0
    %4111 = vdwg.mxu0
    %4112 = vmatpush.bf16.msra.mxu0 %v2935
    %4113 = vmatpush.bf16.msra.mxu0 %v2927
    %4114 = vmatpush.bf16.msra.mxu0 %v2919
    %4115 = vmatpush.bf16.msra.mxu0 %v2911
    %4116 = vmatpush.bf16.msra.mxu0 %v2903
    %4117 = vmatpush.bf16.msra.mxu0 %v2895
    %4118 = vmatpush.bf16.msra.mxu0 %v2887
    %4119 = vmatpush.bf16.msra.mxu0 %v2879
    %4120 = vmatmul.bf16.gmra.mxu0 %v422
    %v4121 = vpop.f32.mrf.mxu0
    %v4122 = vadd.f32 %v4109, %v4121
    %v4123 = vpop.f32.mrf.mxu0
    %4124 = vdwg.mxu0
    %4125 = vmatpush.bf16.msra.mxu0 %v2999
    %4126 = vmatpush.bf16.msra.mxu0 %v2991
    %4127 = vmatpush.bf16.msra.mxu0 %v2983
    %4128 = vmatpush.bf16.msra.mxu0 %v2975
    %4129 = vmatpush.bf16.msra.mxu0 %v2967
    %4130 = vmatpush.bf16.msra.mxu0 %v2959
    %4131 = vmatpush.bf16.msra.mxu0 %v2951
    %4132 = vmatpush.bf16.msra.mxu0 %v2943
    %4133 = vmatmul.bf16.gmra.mxu0 %v423
    %v4134 = vpop.f32.mrf.mxu0
    %v4135 = vadd.f32 %v4122, %v4134
    %v4136 = vpop.f32.mrf.mxu0
    %4137 = vdwg.mxu0
    %4138 = vmatpush.bf16.msra.mxu0 %v2552
    %4139 = vmatpush.bf16.msra.mxu0 %v2544
    %4140 = vmatpush.bf16.msra.mxu0 %v2536
    %4141 = vmatpush.bf16.msra.mxu0 %v2528
    %4142 = vmatpush.bf16.msra.mxu0 %v2520
    %4143 = vmatpush.bf16.msra.mxu0 %v2512
    %4144 = vmatpush.bf16.msra.mxu0 %v2504
    %4145 = vmatpush.bf16.msra.mxu0 %v2496
    %4146 = vmatmul.bf16.gmra.mxu0 %v416
    %v4147 = vpop.f32.mrf.mxu0
    %v4148 = vadd.f32 %v944, %v4147
    %v4149 = vpop.f32.mrf.mxu0
    %4150 = vdwg.mxu0
    %4151 = vmatpush.bf16.msra.mxu0 %v2616
    %4152 = vmatpush.bf16.msra.mxu0 %v2608
    %4153 = vmatpush.bf16.msra.mxu0 %v2600
    %4154 = vmatpush.bf16.msra.mxu0 %v2592
    %4155 = vmatpush.bf16.msra.mxu0 %v2584
    %4156 = vmatpush.bf16.msra.mxu0 %v2576
    %4157 = vmatpush.bf16.msra.mxu0 %v2568
    %4158 = vmatpush.bf16.msra.mxu0 %v2560
    %4159 = vmatmul.bf16.gmra.mxu0 %v417
    %v4160 = vpop.f32.mrf.mxu0
    %v4161 = vadd.f32 %v4148, %v4160
    %v4162 = vpop.f32.mrf.mxu0
    %4163 = vdwg.mxu0
    %4164 = vmatpush.bf16.msra.mxu0 %v2680
    %4165 = vmatpush.bf16.msra.mxu0 %v2672
    %4166 = vmatpush.bf16.msra.mxu0 %v2664
    %4167 = vmatpush.bf16.msra.mxu0 %v2656
    %4168 = vmatpush.bf16.msra.mxu0 %v2648
    %4169 = vmatpush.bf16.msra.mxu0 %v2640
    %4170 = vmatpush.bf16.msra.mxu0 %v2632
    %4171 = vmatpush.bf16.msra.mxu0 %v2624
    %4172 = vmatmul.bf16.gmra.mxu0 %v418
    %v4173 = vpop.f32.mrf.mxu0
    %v4174 = vadd.f32 %v4161, %v4173
    %v4175 = vpop.f32.mrf.mxu0
    %4176 = vdwg.mxu0
    %4177 = vmatpush.bf16.msra.mxu0 %v2744
    %4178 = vmatpush.bf16.msra.mxu0 %v2736
    %4179 = vmatpush.bf16.msra.mxu0 %v2728
    %4180 = vmatpush.bf16.msra.mxu0 %v2720
    %4181 = vmatpush.bf16.msra.mxu0 %v2712
    %4182 = vmatpush.bf16.msra.mxu0 %v2704
    %4183 = vmatpush.bf16.msra.mxu0 %v2696
    %4184 = vmatpush.bf16.msra.mxu0 %v2688
    %4185 = vmatmul.bf16.gmra.mxu0 %v419
    %v4186 = vpop.f32.mrf.mxu0
    %v4187 = vadd.f32 %v4174, %v4186
    %v4188 = vpop.f32.mrf.mxu0
    %4189 = vdwg.mxu0
    %4190 = vmatpush.bf16.msra.mxu0 %v2808
    %4191 = vmatpush.bf16.msra.mxu0 %v2800
    %4192 = vmatpush.bf16.msra.mxu0 %v2792
    %4193 = vmatpush.bf16.msra.mxu0 %v2784
    %4194 = vmatpush.bf16.msra.mxu0 %v2776
    %4195 = vmatpush.bf16.msra.mxu0 %v2768
    %4196 = vmatpush.bf16.msra.mxu0 %v2760
    %4197 = vmatpush.bf16.msra.mxu0 %v2752
    %4198 = vmatmul.bf16.gmra.mxu0 %v420
    %v4199 = vpop.f32.mrf.mxu0
    %v4200 = vadd.f32 %v4187, %v4199
    %v4201 = vpop.f32.mrf.mxu0
    %4202 = vdwg.mxu0
    %4203 = vmatpush.bf16.msra.mxu0 %v2872
    %4204 = vmatpush.bf16.msra.mxu0 %v2864
    %4205 = vmatpush.bf16.msra.mxu0 %v2856
    %4206 = vmatpush.bf16.msra.mxu0 %v2848
    %4207 = vmatpush.bf16.msra.mxu0 %v2840
    %4208 = vmatpush.bf16.msra.mxu0 %v2832
    %4209 = vmatpush.bf16.msra.mxu0 %v2824
    %4210 = vmatpush.bf16.msra.mxu0 %v2816
    %4211 = vmatmul.bf16.gmra.mxu0 %v421
    %v4212 = vpop.f32.mrf.mxu0
    %v4213 = vadd.f32 %v4200, %v4212
    %v4214 = vpop.f32.mrf.mxu0
    %4215 = vdwg.mxu0
    %4216 = vmatpush.bf16.msra.mxu0 %v2936
    %4217 = vmatpush.bf16.msra.mxu0 %v2928
    %4218 = vmatpush.bf16.msra.mxu0 %v2920
    %4219 = vmatpush.bf16.msra.mxu0 %v2912
    %4220 = vmatpush.bf16.msra.mxu0 %v2904
    %4221 = vmatpush.bf16.msra.mxu0 %v2896
    %4222 = vmatpush.bf16.msra.mxu0 %v2888
    %4223 = vmatpush.bf16.msra.mxu0 %v2880
    %4224 = vmatmul.bf16.gmra.mxu0 %v422
    %v4225 = vpop.f32.mrf.mxu0
    %v4226 = vadd.f32 %v4213, %v4225
    %v4227 = vpop.f32.mrf.mxu0
    %4228 = vdwg.mxu0
    %4229 = vmatpush.bf16.msra.mxu0 %v3000
    %4230 = vmatpush.bf16.msra.mxu0 %v2992
    %4231 = vmatpush.bf16.msra.mxu0 %v2984
    %4232 = vmatpush.bf16.msra.mxu0 %v2976
    %4233 = vmatpush.bf16.msra.mxu0 %v2968
    %4234 = vmatpush.bf16.msra.mxu0 %v2960
    %4235 = vmatpush.bf16.msra.mxu0 %v2952
    %4236 = vmatpush.bf16.msra.mxu0 %v2944
    %4237 = vmatmul.bf16.gmra.mxu0 %v423
    %v4238 = vpop.f32.mrf.mxu0
    %v4239 = vadd.f32 %v4226, %v4238
    %v4240 = vpop.f32.mrf.mxu0
    %4241 = vdwg.mxu0
    %4242 = vmatpush.bf16.msra.mxu0 %v2553
    %4243 = vmatpush.bf16.msra.mxu0 %v2545
    %4244 = vmatpush.bf16.msra.mxu0 %v2537
    %4245 = vmatpush.bf16.msra.mxu0 %v2529
    %4246 = vmatpush.bf16.msra.mxu0 %v2521
    %4247 = vmatpush.bf16.msra.mxu0 %v2513
    %4248 = vmatpush.bf16.msra.mxu0 %v2505
    %4249 = vmatpush.bf16.msra.mxu0 %v2497
    %4250 = vmatmul.bf16.gmra.mxu0 %v416
    %v4251 = vpop.f32.mrf.mxu0
    %v4252 = vadd.f32 %v945, %v4251
    %v4253 = vpop.f32.mrf.mxu0
    %4254 = vdwg.mxu0
    %4255 = vmatpush.bf16.msra.mxu0 %v2617
    %4256 = vmatpush.bf16.msra.mxu0 %v2609
    %4257 = vmatpush.bf16.msra.mxu0 %v2601
    %4258 = vmatpush.bf16.msra.mxu0 %v2593
    %4259 = vmatpush.bf16.msra.mxu0 %v2585
    %4260 = vmatpush.bf16.msra.mxu0 %v2577
    %4261 = vmatpush.bf16.msra.mxu0 %v2569
    %4262 = vmatpush.bf16.msra.mxu0 %v2561
    %4263 = vmatmul.bf16.gmra.mxu0 %v417
    %v4264 = vpop.f32.mrf.mxu0
    %v4265 = vadd.f32 %v4252, %v4264
    %v4266 = vpop.f32.mrf.mxu0
    %4267 = vdwg.mxu0
    %4268 = vmatpush.bf16.msra.mxu0 %v2681
    %4269 = vmatpush.bf16.msra.mxu0 %v2673
    %4270 = vmatpush.bf16.msra.mxu0 %v2665
    %4271 = vmatpush.bf16.msra.mxu0 %v2657
    %4272 = vmatpush.bf16.msra.mxu0 %v2649
    %4273 = vmatpush.bf16.msra.mxu0 %v2641
    %4274 = vmatpush.bf16.msra.mxu0 %v2633
    %4275 = vmatpush.bf16.msra.mxu0 %v2625
    %4276 = vmatmul.bf16.gmra.mxu0 %v418
    %v4277 = vpop.f32.mrf.mxu0
    %v4278 = vadd.f32 %v4265, %v4277
    %v4279 = vpop.f32.mrf.mxu0
    %4280 = vdwg.mxu0
    %4281 = vmatpush.bf16.msra.mxu0 %v2745
    %4282 = vmatpush.bf16.msra.mxu0 %v2737
    %4283 = vmatpush.bf16.msra.mxu0 %v2729
    %4284 = vmatpush.bf16.msra.mxu0 %v2721
    %4285 = vmatpush.bf16.msra.mxu0 %v2713
    %4286 = vmatpush.bf16.msra.mxu0 %v2705
    %4287 = vmatpush.bf16.msra.mxu0 %v2697
    %4288 = vmatpush.bf16.msra.mxu0 %v2689
    %4289 = vmatmul.bf16.gmra.mxu0 %v419
    %v4290 = vpop.f32.mrf.mxu0
    %v4291 = vadd.f32 %v4278, %v4290
    %v4292 = vpop.f32.mrf.mxu0
    %4293 = vdwg.mxu0
    %4294 = vmatpush.bf16.msra.mxu0 %v2809
    %4295 = vmatpush.bf16.msra.mxu0 %v2801
    %4296 = vmatpush.bf16.msra.mxu0 %v2793
    %4297 = vmatpush.bf16.msra.mxu0 %v2785
    %4298 = vmatpush.bf16.msra.mxu0 %v2777
    %4299 = vmatpush.bf16.msra.mxu0 %v2769
    %4300 = vmatpush.bf16.msra.mxu0 %v2761
    %4301 = vmatpush.bf16.msra.mxu0 %v2753
    %4302 = vmatmul.bf16.gmra.mxu0 %v420
    %v4303 = vpop.f32.mrf.mxu0
    %v4304 = vadd.f32 %v4291, %v4303
    %v4305 = vpop.f32.mrf.mxu0
    %4306 = vdwg.mxu0
    %4307 = vmatpush.bf16.msra.mxu0 %v2873
    %4308 = vmatpush.bf16.msra.mxu0 %v2865
    %4309 = vmatpush.bf16.msra.mxu0 %v2857
    %4310 = vmatpush.bf16.msra.mxu0 %v2849
    %4311 = vmatpush.bf16.msra.mxu0 %v2841
    %4312 = vmatpush.bf16.msra.mxu0 %v2833
    %4313 = vmatpush.bf16.msra.mxu0 %v2825
    %4314 = vmatpush.bf16.msra.mxu0 %v2817
    %4315 = vmatmul.bf16.gmra.mxu0 %v421
    %v4316 = vpop.f32.mrf.mxu0
    %v4317 = vadd.f32 %v4304, %v4316
    %v4318 = vpop.f32.mrf.mxu0
    %4319 = vdwg.mxu0
    %4320 = vmatpush.bf16.msra.mxu0 %v2937
    %4321 = vmatpush.bf16.msra.mxu0 %v2929
    %4322 = vmatpush.bf16.msra.mxu0 %v2921
    %4323 = vmatpush.bf16.msra.mxu0 %v2913
    %4324 = vmatpush.bf16.msra.mxu0 %v2905
    %4325 = vmatpush.bf16.msra.mxu0 %v2897
    %4326 = vmatpush.bf16.msra.mxu0 %v2889
    %4327 = vmatpush.bf16.msra.mxu0 %v2881
    %4328 = vmatmul.bf16.gmra.mxu0 %v422
    %v4329 = vpop.f32.mrf.mxu0
    %v4330 = vadd.f32 %v4317, %v4329
    %v4331 = vpop.f32.mrf.mxu0
    %4332 = vdwg.mxu0
    %4333 = vmatpush.bf16.msra.mxu0 %v3001
    %4334 = vmatpush.bf16.msra.mxu0 %v2993
    %4335 = vmatpush.bf16.msra.mxu0 %v2985
    %4336 = vmatpush.bf16.msra.mxu0 %v2977
    %4337 = vmatpush.bf16.msra.mxu0 %v2969
    %4338 = vmatpush.bf16.msra.mxu0 %v2961
    %4339 = vmatpush.bf16.msra.mxu0 %v2953
    %4340 = vmatpush.bf16.msra.mxu0 %v2945
    %4341 = vmatmul.bf16.gmra.mxu0 %v423
    %v4342 = vpop.f32.mrf.mxu0
    %v4343 = vadd.f32 %v4330, %v4342
    %v4344 = vpop.f32.mrf.mxu0
    %4345 = vdwg.mxu0
    %v4346 = vmax.f32 %v3615, 0.0
    %v4347 = vmax.f32 %v3719, 0.0
    %v4348 = vmax.f32 %v3823, 0.0
    %v4349 = vmax.f32 %v3927, 0.0
    %v4350 = vmax.f32 %v4031, 0.0
    %v4351 = vmax.f32 %v4135, 0.0
    %v4352 = vmax.f32 %v4239, 0.0
    %v4353 = vmax.f32 %v4343, 0.0
    %v4354 = vpack.c.bf16 %v4346, %v4346
    %v4355 = vpack.c.bf16 %v4347, %v4347
    %v4356 = vpack.c.bf16 %v4348, %v4348
    %v4357 = vpack.c.bf16 %v4349, %v4349
    %v4358 = vpack.c.bf16 %v4350, %v4350
    %v4359 = vpack.c.bf16 %v4351, %v4351
    %v4360 = vpack.c.bf16 %v4352, %v4352
    %v4361 = vpack.c.bf16 %v4353, %v4353
    %v4362 = vld [vmem:[#allocation11] sm:$0xff]
    %v4363 = vld [vmem:[#allocation11 + $0x8] sm:$0xff]
    %v4364 = vld [vmem:[#allocation11 + $0x10] sm:$0xff]
    %v4365 = vld [vmem:[#allocation11 + $0x18] sm:$0xff]
    %v4366 = vld [vmem:[#allocation11 + $0x20] sm:$0xff]
    %v4367 = vld [vmem:[#allocation11 + $0x28] sm:$0xff]
    %v4368 = vld [vmem:[#allocation11 + $0x30] sm:$0xff]
    %v4369 = vld [vmem:[#allocation11 + $0x38] sm:$0xff]
    %v4370 = vld [vmem:[#allocation11 + $0x40] sm:$0xff]
    %v4371 = vld [vmem:[#allocation11 + $0x48] sm:$0xff]
    %v4372 = vld [vmem:[#allocation11 + $0x50] sm:$0xff]
    %v4373 = vld [vmem:[#allocation11 + $0x58] sm:$0xff]
    %v4374 = vld [vmem:[#allocation11 + $0x60] sm:$0xff]
    %v4375 = vld [vmem:[#allocation11 + $0x68] sm:$0xff]
    %v4376 = vld [vmem:[#allocation11 + $0x70] sm:$0xff]
    %v4377 = vld [vmem:[#allocation11 + $0x78] sm:$0xff]
    %v4378 = vld [vmem:[#allocation11 + $0x80] sm:$0xff]
    %v4379 = vld [vmem:[#allocation11 + $0x88] sm:$0xff]
    %v4380 = vld [vmem:[#allocation11 + $0x90] sm:$0xff]
    %v4381 = vld [vmem:[#allocation11 + $0x98] sm:$0xff]
    %v4382 = vld [vmem:[#allocation11 + $0xa0] sm:$0xff]
    %v4383 = vld [vmem:[#allocation11 + $0xa8] sm:$0xff]
    %v4384 = vld [vmem:[#allocation11 + $0xb0] sm:$0xff]
    %v4385 = vld [vmem:[#allocation11 + $0xb8] sm:$0xff]
    %v4386 = vld [vmem:[#allocation11 + $0xc0] sm:$0xff]
    %v4387 = vld [vmem:[#allocation11 + $0xc8] sm:$0xff]
    %v4388 = vld [vmem:[#allocation11 + $0xd0] sm:$0xff]
    %v4389 = vld [vmem:[#allocation11 + $0xd8] sm:$0xff]
    %v4390 = vld [vmem:[#allocation11 + $0xe0] sm:$0xff]
    %v4391 = vld [vmem:[#allocation11 + $0xe8] sm:$0xff]
    %v4392 = vld [vmem:[#allocation11 + $0xf0] sm:$0xff]
    %v4393 = vld [vmem:[#allocation11 + $0xf8] sm:$0xff]
    %v4394 = vld [vmem:[#allocation11 + $0x100] sm:$0xff]
    %v4395 = vld [vmem:[#allocation11 + $0x108] sm:$0xff]
    %v4396 = vld [vmem:[#allocation11 + $0x110] sm:$0xff]
    %v4397 = vld [vmem:[#allocation11 + $0x118] sm:$0xff]
    %v4398 = vld [vmem:[#allocation11 + $0x120] sm:$0xff]
    %v4399 = vld [vmem:[#allocation11 + $0x128] sm:$0xff]
    %v4400 = vld [vmem:[#allocation11 + $0x130] sm:$0xff]
    %v4401 = vld [vmem:[#allocation11 + $0x138] sm:$0xff]
    %v4402 = vld [vmem:[#allocation11 + $0x140] sm:$0xff]
    %v4403 = vld [vmem:[#allocation11 + $0x148] sm:$0xff]
    %v4404 = vld [vmem:[#allocation11 + $0x150] sm:$0xff]
    %v4405 = vld [vmem:[#allocation11 + $0x158] sm:$0xff]
    %v4406 = vld [vmem:[#allocation11 + $0x160] sm:$0xff]
    %v4407 = vld [vmem:[#allocation11 + $0x168] sm:$0xff]
    %v4408 = vld [vmem:[#allocation11 + $0x170] sm:$0xff]
    %v4409 = vld [vmem:[#allocation11 + $0x178] sm:$0xff]
    %v4410 = vld [vmem:[#allocation11 + $0x180] sm:$0xff]
    %v4411 = vld [vmem:[#allocation11 + $0x188] sm:$0xff]
    %v4412 = vld [vmem:[#allocation11 + $0x190] sm:$0xff]
    %v4413 = vld [vmem:[#allocation11 + $0x198] sm:$0xff]
    %v4414 = vld [vmem:[#allocation11 + $0x1a0] sm:$0xff]
    %v4415 = vld [vmem:[#allocation11 + $0x1a8] sm:$0xff]
    %v4416 = vld [vmem:[#allocation11 + $0x1b0] sm:$0xff]
    %v4417 = vld [vmem:[#allocation11 + $0x1b8] sm:$0xff]
    %v4418 = vld [vmem:[#allocation11 + $0x1c0] sm:$0xff]
    %v4419 = vld [vmem:[#allocation11 + $0x1c8] sm:$0xff]
    %v4420 = vld [vmem:[#allocation11 + $0x1d0] sm:$0xff]
    %v4421 = vld [vmem:[#allocation11 + $0x1d8] sm:$0xff]
    %v4422 = vld [vmem:[#allocation11 + $0x1e0] sm:$0xff]
    %v4423 = vld [vmem:[#allocation11 + $0x1e8] sm:$0xff]
    %v4424 = vld [vmem:[#allocation11 + $0x1f0] sm:$0xff]
    %v4425 = vld [vmem:[#allocation11 + $0x1f8] sm:$0xff]
    %v4426 = vld [vmem:[#allocation11 + $0x200] sm:$0xff]
    %v4427 = vld [vmem:[#allocation11 + $0x208] sm:$0xff]
    %v4428 = vld [vmem:[#allocation11 + $0x210] sm:$0xff]
    %v4429 = vld [vmem:[#allocation11 + $0x218] sm:$0xff]
    %v4430 = vld [vmem:[#allocation11 + $0x220] sm:$0xff]
    %v4431 = vld [vmem:[#allocation11 + $0x228] sm:$0xff]
    %v4432 = vld [vmem:[#allocation11 + $0x230] sm:$0xff]
    %v4433 = vld [vmem:[#allocation11 + $0x238] sm:$0xff]
    %v4434 = vld [vmem:[#allocation11 + $0x240] sm:$0xff]
    %v4435 = vld [vmem:[#allocation11 + $0x248] sm:$0xff]
    %v4436 = vld [vmem:[#allocation11 + $0x250] sm:$0xff]
    %v4437 = vld [vmem:[#allocation11 + $0x258] sm:$0xff]
    %v4438 = vld [vmem:[#allocation11 + $0x260] sm:$0xff]
    %v4439 = vld [vmem:[#allocation11 + $0x268] sm:$0xff]
    %v4440 = vld [vmem:[#allocation11 + $0x270] sm:$0xff]
    %v4441 = vld [vmem:[#allocation11 + $0x278] sm:$0xff]
    %v4442 = vld [vmem:[#allocation11 + $0x280] sm:$0xff]
    %v4443 = vld [vmem:[#allocation11 + $0x288] sm:$0xff]
    %v4444 = vld [vmem:[#allocation11 + $0x290] sm:$0xff]
    %v4445 = vld [vmem:[#allocation11 + $0x298] sm:$0xff]
    %v4446 = vld [vmem:[#allocation11 + $0x2a0] sm:$0xff]
    %v4447 = vld [vmem:[#allocation11 + $0x2a8] sm:$0xff]
    %v4448 = vld [vmem:[#allocation11 + $0x2b0] sm:$0xff]
    %v4449 = vld [vmem:[#allocation11 + $0x2b8] sm:$0xff]
    %v4450 = vld [vmem:[#allocation11 + $0x2c0] sm:$0xff]
    %v4451 = vld [vmem:[#allocation11 + $0x2c8] sm:$0xff]
    %v4452 = vld [vmem:[#allocation11 + $0x2d0] sm:$0xff]
    %v4453 = vld [vmem:[#allocation11 + $0x2d8] sm:$0xff]
    %v4454 = vld [vmem:[#allocation11 + $0x2e0] sm:$0xff]
    %v4455 = vld [vmem:[#allocation11 + $0x2e8] sm:$0xff]
    %v4456 = vld [vmem:[#allocation11 + $0x2f0] sm:$0xff]
    %v4457 = vld [vmem:[#allocation11 + $0x2f8] sm:$0xff]
    %v4458 = vld [vmem:[#allocation11 + $0x300] sm:$0xff]
    %v4459 = vld [vmem:[#allocation11 + $0x308] sm:$0xff]
    %v4460 = vld [vmem:[#allocation11 + $0x310] sm:$0xff]
    %v4461 = vld [vmem:[#allocation11 + $0x318] sm:$0xff]
    %v4462 = vld [vmem:[#allocation11 + $0x320] sm:$0xff]
    %v4463 = vld [vmem:[#allocation11 + $0x328] sm:$0xff]
    %v4464 = vld [vmem:[#allocation11 + $0x330] sm:$0xff]
    %v4465 = vld [vmem:[#allocation11 + $0x338] sm:$0xff]
    %v4466 = vld [vmem:[#allocation11 + $0x340] sm:$0xff]
    %v4467 = vld [vmem:[#allocation11 + $0x348] sm:$0xff]
    %v4468 = vld [vmem:[#allocation11 + $0x350] sm:$0xff]
    %v4469 = vld [vmem:[#allocation11 + $0x358] sm:$0xff]
    %v4470 = vld [vmem:[#allocation11 + $0x360] sm:$0xff]
    %v4471 = vld [vmem:[#allocation11 + $0x368] sm:$0xff]
    %v4472 = vld [vmem:[#allocation11 + $0x370] sm:$0xff]
    %v4473 = vld [vmem:[#allocation11 + $0x378] sm:$0xff]
    %v4474 = vld [vmem:[#allocation11 + $0x380] sm:$0xff]
    %v4475 = vld [vmem:[#allocation11 + $0x388] sm:$0xff]
    %v4476 = vld [vmem:[#allocation11 + $0x390] sm:$0xff]
    %v4477 = vld [vmem:[#allocation11 + $0x398] sm:$0xff]
    %v4478 = vld [vmem:[#allocation11 + $0x3a0] sm:$0xff]
    %v4479 = vld [vmem:[#allocation11 + $0x3a8] sm:$0xff]
    %v4480 = vld [vmem:[#allocation11 + $0x3b0] sm:$0xff]
    %v4481 = vld [vmem:[#allocation11 + $0x3b8] sm:$0xff]
    %v4482 = vld [vmem:[#allocation11 + $0x3c0] sm:$0xff]
    %v4483 = vld [vmem:[#allocation11 + $0x3c8] sm:$0xff]
    %v4484 = vld [vmem:[#allocation11 + $0x3d0] sm:$0xff]
    %v4485 = vld [vmem:[#allocation11 + $0x3d8] sm:$0xff]
    %v4486 = vld [vmem:[#allocation11 + $0x3e0] sm:$0xff]
    %v4487 = vld [vmem:[#allocation11 + $0x3e8] sm:$0xff]
    %v4488 = vld [vmem:[#allocation11 + $0x3f0] sm:$0xff]
    %v4489 = vld [vmem:[#allocation11 + $0x3f8] sm:$0xff]
    %v4490 = vld [vmem:[#allocation11 + $0x400] sm:$0xff]
    %v4491 = vld [vmem:[#allocation11 + $0x408] sm:$0xff]
    %v4492 = vld [vmem:[#allocation11 + $0x410] sm:$0xff]
    %v4493 = vld [vmem:[#allocation11 + $0x418] sm:$0xff]
    %v4494 = vld [vmem:[#allocation11 + $0x420] sm:$0xff]
    %v4495 = vld [vmem:[#allocation11 + $0x428] sm:$0xff]
    %v4496 = vld [vmem:[#allocation11 + $0x430] sm:$0xff]
    %v4497 = vld [vmem:[#allocation11 + $0x438] sm:$0xff]
    %v4498 = vld [vmem:[#allocation11 + $0x440] sm:$0xff]
    %v4499 = vld [vmem:[#allocation11 + $0x448] sm:$0xff]
    %v4500 = vld [vmem:[#allocation11 + $0x450] sm:$0xff]
    %v4501 = vld [vmem:[#allocation11 + $0x458] sm:$0xff]
    %v4502 = vld [vmem:[#allocation11 + $0x460] sm:$0xff]
    %v4503 = vld [vmem:[#allocation11 + $0x468] sm:$0xff]
    %v4504 = vld [vmem:[#allocation11 + $0x470] sm:$0xff]
    %v4505 = vld [vmem:[#allocation11 + $0x478] sm:$0xff]
    %v4506 = vld [vmem:[#allocation11 + $0x480] sm:$0xff]
    %v4507 = vld [vmem:[#allocation11 + $0x488] sm:$0xff]
    %v4508 = vld [vmem:[#allocation11 + $0x490] sm:$0xff]
    %v4509 = vld [vmem:[#allocation11 + $0x498] sm:$0xff]
    %v4510 = vld [vmem:[#allocation11 + $0x4a0] sm:$0xff]
    %v4511 = vld [vmem:[#allocation11 + $0x4a8] sm:$0xff]
    %v4512 = vld [vmem:[#allocation11 + $0x4b0] sm:$0xff]
    %v4513 = vld [vmem:[#allocation11 + $0x4b8] sm:$0xff]
    %v4514 = vld [vmem:[#allocation11 + $0x4c0] sm:$0xff]
    %v4515 = vld [vmem:[#allocation11 + $0x4c8] sm:$0xff]
    %v4516 = vld [vmem:[#allocation11 + $0x4d0] sm:$0xff]
    %v4517 = vld [vmem:[#allocation11 + $0x4d8] sm:$0xff]
    %v4518 = vld [vmem:[#allocation11 + $0x4e0] sm:$0xff]
    %v4519 = vld [vmem:[#allocation11 + $0x4e8] sm:$0xff]
    %v4520 = vld [vmem:[#allocation11 + $0x4f0] sm:$0xff]
    %v4521 = vld [vmem:[#allocation11 + $0x4f8] sm:$0xff]
    %v4522 = vld [vmem:[#allocation11 + $0x500] sm:$0xff]
    %v4523 = vld [vmem:[#allocation11 + $0x508] sm:$0xff]
    %v4524 = vld [vmem:[#allocation11 + $0x510] sm:$0xff]
    %v4525 = vld [vmem:[#allocation11 + $0x518] sm:$0xff]
    %v4526 = vld [vmem:[#allocation11 + $0x520] sm:$0xff]
    %v4527 = vld [vmem:[#allocation11 + $0x528] sm:$0xff]
    %v4528 = vld [vmem:[#allocation11 + $0x530] sm:$0xff]
    %v4529 = vld [vmem:[#allocation11 + $0x538] sm:$0xff]
    %v4530 = vld [vmem:[#allocation11 + $0x540] sm:$0xff]
    %v4531 = vld [vmem:[#allocation11 + $0x548] sm:$0xff]
    %v4532 = vld [vmem:[#allocation11 + $0x550] sm:$0xff]
    %v4533 = vld [vmem:[#allocation11 + $0x558] sm:$0xff]
    %v4534 = vld [vmem:[#allocation11 + $0x560] sm:$0xff]
    %v4535 = vld [vmem:[#allocation11 + $0x568] sm:$0xff]
    %v4536 = vld [vmem:[#allocation11 + $0x570] sm:$0xff]
    %v4537 = vld [vmem:[#allocation11 + $0x578] sm:$0xff]
    %v4538 = vld [vmem:[#allocation11 + $0x580] sm:$0xff]
    %v4539 = vld [vmem:[#allocation11 + $0x588] sm:$0xff]
    %v4540 = vld [vmem:[#allocation11 + $0x590] sm:$0xff]
    %v4541 = vld [vmem:[#allocation11 + $0x598] sm:$0xff]
    %v4542 = vld [vmem:[#allocation11 + $0x5a0] sm:$0xff]
    %v4543 = vld [vmem:[#allocation11 + $0x5a8] sm:$0xff]
    %v4544 = vld [vmem:[#allocation11 + $0x5b0] sm:$0xff]
    %v4545 = vld [vmem:[#allocation11 + $0x5b8] sm:$0xff]
    %v4546 = vld [vmem:[#allocation11 + $0x5c0] sm:$0xff]
    %v4547 = vld [vmem:[#allocation11 + $0x5c8] sm:$0xff]
    %v4548 = vld [vmem:[#allocation11 + $0x5d0] sm:$0xff]
    %v4549 = vld [vmem:[#allocation11 + $0x5d8] sm:$0xff]
    %v4550 = vld [vmem:[#allocation11 + $0x5e0] sm:$0xff]
    %v4551 = vld [vmem:[#allocation11 + $0x5e8] sm:$0xff]
    %v4552 = vld [vmem:[#allocation11 + $0x5f0] sm:$0xff]
    %v4553 = vld [vmem:[#allocation11 + $0x5f8] sm:$0xff]
    %v4554 = vld [vmem:[#allocation11 + $0x600] sm:$0xff]
    %v4555 = vld [vmem:[#allocation11 + $0x608] sm:$0xff]
    %v4556 = vld [vmem:[#allocation11 + $0x610] sm:$0xff]
    %v4557 = vld [vmem:[#allocation11 + $0x618] sm:$0xff]
    %v4558 = vld [vmem:[#allocation11 + $0x620] sm:$0xff]
    %v4559 = vld [vmem:[#allocation11 + $0x628] sm:$0xff]
    %v4560 = vld [vmem:[#allocation11 + $0x630] sm:$0xff]
    %v4561 = vld [vmem:[#allocation11 + $0x638] sm:$0xff]
    %v4562 = vld [vmem:[#allocation11 + $0x640] sm:$0xff]
    %v4563 = vld [vmem:[#allocation11 + $0x648] sm:$0xff]
    %v4564 = vld [vmem:[#allocation11 + $0x650] sm:$0xff]
    %v4565 = vld [vmem:[#allocation11 + $0x658] sm:$0xff]
    %v4566 = vld [vmem:[#allocation11 + $0x660] sm:$0xff]
    %v4567 = vld [vmem:[#allocation11 + $0x668] sm:$0xff]
    %v4568 = vld [vmem:[#allocation11 + $0x670] sm:$0xff]
    %v4569 = vld [vmem:[#allocation11 + $0x678] sm:$0xff]
    %v4570 = vld [vmem:[#allocation11 + $0x680] sm:$0xff]
    %v4571 = vld [vmem:[#allocation11 + $0x688] sm:$0xff]
    %v4572 = vld [vmem:[#allocation11 + $0x690] sm:$0xff]
    %v4573 = vld [vmem:[#allocation11 + $0x698] sm:$0xff]
    %v4574 = vld [vmem:[#allocation11 + $0x6a0] sm:$0xff]
    %v4575 = vld [vmem:[#allocation11 + $0x6a8] sm:$0xff]
    %v4576 = vld [vmem:[#allocation11 + $0x6b0] sm:$0xff]
    %v4577 = vld [vmem:[#allocation11 + $0x6b8] sm:$0xff]
    %v4578 = vld [vmem:[#allocation11 + $0x6c0] sm:$0xff]
    %v4579 = vld [vmem:[#allocation11 + $0x6c8] sm:$0xff]
    %v4580 = vld [vmem:[#allocation11 + $0x6d0] sm:$0xff]
    %v4581 = vld [vmem:[#allocation11 + $0x6d8] sm:$0xff]
    %v4582 = vld [vmem:[#allocation11 + $0x6e0] sm:$0xff]
    %v4583 = vld [vmem:[#allocation11 + $0x6e8] sm:$0xff]
    %v4584 = vld [vmem:[#allocation11 + $0x6f0] sm:$0xff]
    %v4585 = vld [vmem:[#allocation11 + $0x6f8] sm:$0xff]
    %v4586 = vld [vmem:[#allocation11 + $0x700] sm:$0xff]
    %v4587 = vld [vmem:[#allocation11 + $0x708] sm:$0xff]
    %v4588 = vld [vmem:[#allocation11 + $0x710] sm:$0xff]
    %v4589 = vld [vmem:[#allocation11 + $0x718] sm:$0xff]
    %v4590 = vld [vmem:[#allocation11 + $0x720] sm:$0xff]
    %v4591 = vld [vmem:[#allocation11 + $0x728] sm:$0xff]
    %v4592 = vld [vmem:[#allocation11 + $0x730] sm:$0xff]
    %v4593 = vld [vmem:[#allocation11 + $0x738] sm:$0xff]
    %v4594 = vld [vmem:[#allocation11 + $0x740] sm:$0xff]
    %v4595 = vld [vmem:[#allocation11 + $0x748] sm:$0xff]
    %v4596 = vld [vmem:[#allocation11 + $0x750] sm:$0xff]
    %v4597 = vld [vmem:[#allocation11 + $0x758] sm:$0xff]
    %v4598 = vld [vmem:[#allocation11 + $0x760] sm:$0xff]
    %v4599 = vld [vmem:[#allocation11 + $0x768] sm:$0xff]
    %v4600 = vld [vmem:[#allocation11 + $0x770] sm:$0xff]
    %v4601 = vld [vmem:[#allocation11 + $0x778] sm:$0xff]
    %v4602 = vld [vmem:[#allocation11 + $0x780] sm:$0xff]
    %v4603 = vld [vmem:[#allocation11 + $0x788] sm:$0xff]
    %v4604 = vld [vmem:[#allocation11 + $0x790] sm:$0xff]
    %v4605 = vld [vmem:[#allocation11 + $0x798] sm:$0xff]
    %v4606 = vld [vmem:[#allocation11 + $0x7a0] sm:$0xff]
    %v4607 = vld [vmem:[#allocation11 + $0x7a8] sm:$0xff]
    %v4608 = vld [vmem:[#allocation11 + $0x7b0] sm:$0xff]
    %v4609 = vld [vmem:[#allocation11 + $0x7b8] sm:$0xff]
    %v4610 = vld [vmem:[#allocation11 + $0x7c0] sm:$0xff]
    %v4611 = vld [vmem:[#allocation11 + $0x7c8] sm:$0xff]
    %v4612 = vld [vmem:[#allocation11 + $0x7d0] sm:$0xff]
    %v4613 = vld [vmem:[#allocation11 + $0x7d8] sm:$0xff]
    %v4614 = vld [vmem:[#allocation11 + $0x7e0] sm:$0xff]
    %v4615 = vld [vmem:[#allocation11 + $0x7e8] sm:$0xff]
    %v4616 = vld [vmem:[#allocation11 + $0x7f0] sm:$0xff]
    %v4617 = vld [vmem:[#allocation11 + $0x7f8] sm:$0xff]
    %v4618 = vld [vmem:[#allocation11 + $0x800] sm:$0xff]
    %v4619 = vld [vmem:[#allocation11 + $0x808] sm:$0xff]
    %v4620 = vld [vmem:[#allocation11 + $0x810] sm:$0xff]
    %v4621 = vld [vmem:[#allocation11 + $0x818] sm:$0xff]
    %v4622 = vld [vmem:[#allocation11 + $0x820] sm:$0xff]
    %v4623 = vld [vmem:[#allocation11 + $0x828] sm:$0xff]
    %v4624 = vld [vmem:[#allocation11 + $0x830] sm:$0xff]
    %v4625 = vld [vmem:[#allocation11 + $0x838] sm:$0xff]
    %v4626 = vld [vmem:[#allocation11 + $0x840] sm:$0xff]
    %v4627 = vld [vmem:[#allocation11 + $0x848] sm:$0xff]
    %v4628 = vld [vmem:[#allocation11 + $0x850] sm:$0xff]
    %v4629 = vld [vmem:[#allocation11 + $0x858] sm:$0xff]
    %v4630 = vld [vmem:[#allocation11 + $0x860] sm:$0xff]
    %v4631 = vld [vmem:[#allocation11 + $0x868] sm:$0xff]
    %v4632 = vld [vmem:[#allocation11 + $0x870] sm:$0xff]
    %v4633 = vld [vmem:[#allocation11 + $0x878] sm:$0xff]
    %v4634 = vld [vmem:[#allocation11 + $0x880] sm:$0xff]
    %v4635 = vld [vmem:[#allocation11 + $0x888] sm:$0xff]
    %v4636 = vld [vmem:[#allocation11 + $0x890] sm:$0xff]
    %v4637 = vld [vmem:[#allocation11 + $0x898] sm:$0xff]
    %v4638 = vld [vmem:[#allocation11 + $0x8a0] sm:$0xff]
    %v4639 = vld [vmem:[#allocation11 + $0x8a8] sm:$0xff]
    %v4640 = vld [vmem:[#allocation11 + $0x8b0] sm:$0xff]
    %v4641 = vld [vmem:[#allocation11 + $0x8b8] sm:$0xff]
    %v4642 = vld [vmem:[#allocation11 + $0x8c0] sm:$0xff]
    %v4643 = vld [vmem:[#allocation11 + $0x8c8] sm:$0xff]
    %v4644 = vld [vmem:[#allocation11 + $0x8d0] sm:$0xff]
    %v4645 = vld [vmem:[#allocation11 + $0x8d8] sm:$0xff]
    %v4646 = vld [vmem:[#allocation11 + $0x8e0] sm:$0xff]
    %v4647 = vld [vmem:[#allocation11 + $0x8e8] sm:$0xff]
    %v4648 = vld [vmem:[#allocation11 + $0x8f0] sm:$0xff]
    %v4649 = vld [vmem:[#allocation11 + $0x8f8] sm:$0xff]
    %v4650 = vld [vmem:[#allocation11 + $0x900] sm:$0xff]
    %v4651 = vld [vmem:[#allocation11 + $0x908] sm:$0xff]
    %v4652 = vld [vmem:[#allocation11 + $0x910] sm:$0xff]
    %v4653 = vld [vmem:[#allocation11 + $0x918] sm:$0xff]
    %v4654 = vld [vmem:[#allocation11 + $0x920] sm:$0xff]
    %v4655 = vld [vmem:[#allocation11 + $0x928] sm:$0xff]
    %v4656 = vld [vmem:[#allocation11 + $0x930] sm:$0xff]
    %v4657 = vld [vmem:[#allocation11 + $0x938] sm:$0xff]
    %v4658 = vld [vmem:[#allocation11 + $0x940] sm:$0xff]
    %v4659 = vld [vmem:[#allocation11 + $0x948] sm:$0xff]
    %v4660 = vld [vmem:[#allocation11 + $0x950] sm:$0xff]
    %v4661 = vld [vmem:[#allocation11 + $0x958] sm:$0xff]
    %v4662 = vld [vmem:[#allocation11 + $0x960] sm:$0xff]
    %v4663 = vld [vmem:[#allocation11 + $0x968] sm:$0xff]
    %v4664 = vld [vmem:[#allocation11 + $0x970] sm:$0xff]
    %v4665 = vld [vmem:[#allocation11 + $0x978] sm:$0xff]
    %v4666 = vld [vmem:[#allocation11 + $0x980] sm:$0xff]
    %v4667 = vld [vmem:[#allocation11 + $0x988] sm:$0xff]
    %v4668 = vld [vmem:[#allocation11 + $0x990] sm:$0xff]
    %v4669 = vld [vmem:[#allocation11 + $0x998] sm:$0xff]
    %v4670 = vld [vmem:[#allocation11 + $0x9a0] sm:$0xff]
    %v4671 = vld [vmem:[#allocation11 + $0x9a8] sm:$0xff]
    %v4672 = vld [vmem:[#allocation11 + $0x9b0] sm:$0xff]
    %v4673 = vld [vmem:[#allocation11 + $0x9b8] sm:$0xff]
    %v4674 = vld [vmem:[#allocation11 + $0x9c0] sm:$0xff]
    %v4675 = vld [vmem:[#allocation11 + $0x9c8] sm:$0xff]
    %v4676 = vld [vmem:[#allocation11 + $0x9d0] sm:$0xff]
    %v4677 = vld [vmem:[#allocation11 + $0x9d8] sm:$0xff]
    %v4678 = vld [vmem:[#allocation11 + $0x9e0] sm:$0xff]
    %v4679 = vld [vmem:[#allocation11 + $0x9e8] sm:$0xff]
    %v4680 = vld [vmem:[#allocation11 + $0x9f0] sm:$0xff]
    %v4681 = vld [vmem:[#allocation11 + $0x9f8] sm:$0xff]
    %v4682 = vld [vmem:[#allocation11 + $0xa00] sm:$0xff]
    %v4683 = vld [vmem:[#allocation11 + $0xa08] sm:$0xff]
    %v4684 = vld [vmem:[#allocation11 + $0xa10] sm:$0xff]
    %v4685 = vld [vmem:[#allocation11 + $0xa18] sm:$0xff]
    %v4686 = vld [vmem:[#allocation11 + $0xa20] sm:$0xff]
    %v4687 = vld [vmem:[#allocation11 + $0xa28] sm:$0xff]
    %v4688 = vld [vmem:[#allocation11 + $0xa30] sm:$0xff]
    %v4689 = vld [vmem:[#allocation11 + $0xa38] sm:$0xff]
    %v4690 = vld [vmem:[#allocation11 + $0xa40] sm:$0xff]
    %v4691 = vld [vmem:[#allocation11 + $0xa48] sm:$0xff]
    %v4692 = vld [vmem:[#allocation11 + $0xa50] sm:$0xff]
    %v4693 = vld [vmem:[#allocation11 + $0xa58] sm:$0xff]
    %v4694 = vld [vmem:[#allocation11 + $0xa60] sm:$0xff]
    %v4695 = vld [vmem:[#allocation11 + $0xa68] sm:$0xff]
    %v4696 = vld [vmem:[#allocation11 + $0xa70] sm:$0xff]
    %v4697 = vld [vmem:[#allocation11 + $0xa78] sm:$0xff]
    %v4698 = vld [vmem:[#allocation11 + $0xa80] sm:$0xff]
    %v4699 = vld [vmem:[#allocation11 + $0xa88] sm:$0xff]
    %v4700 = vld [vmem:[#allocation11 + $0xa90] sm:$0xff]
    %v4701 = vld [vmem:[#allocation11 + $0xa98] sm:$0xff]
    %v4702 = vld [vmem:[#allocation11 + $0xaa0] sm:$0xff]
    %v4703 = vld [vmem:[#allocation11 + $0xaa8] sm:$0xff]
    %v4704 = vld [vmem:[#allocation11 + $0xab0] sm:$0xff]
    %v4705 = vld [vmem:[#allocation11 + $0xab8] sm:$0xff]
    %v4706 = vld [vmem:[#allocation11 + $0xac0] sm:$0xff]
    %v4707 = vld [vmem:[#allocation11 + $0xac8] sm:$0xff]
    %v4708 = vld [vmem:[#allocation11 + $0xad0] sm:$0xff]
    %v4709 = vld [vmem:[#allocation11 + $0xad8] sm:$0xff]
    %v4710 = vld [vmem:[#allocation11 + $0xae0] sm:$0xff]
    %v4711 = vld [vmem:[#allocation11 + $0xae8] sm:$0xff]
    %v4712 = vld [vmem:[#allocation11 + $0xaf0] sm:$0xff]
    %v4713 = vld [vmem:[#allocation11 + $0xaf8] sm:$0xff]
    %v4714 = vld [vmem:[#allocation11 + $0xb00] sm:$0xff]
    %v4715 = vld [vmem:[#allocation11 + $0xb08] sm:$0xff]
    %v4716 = vld [vmem:[#allocation11 + $0xb10] sm:$0xff]
    %v4717 = vld [vmem:[#allocation11 + $0xb18] sm:$0xff]
    %v4718 = vld [vmem:[#allocation11 + $0xb20] sm:$0xff]
    %v4719 = vld [vmem:[#allocation11 + $0xb28] sm:$0xff]
    %v4720 = vld [vmem:[#allocation11 + $0xb30] sm:$0xff]
    %v4721 = vld [vmem:[#allocation11 + $0xb38] sm:$0xff]
    %v4722 = vld [vmem:[#allocation11 + $0xb40] sm:$0xff]
    %v4723 = vld [vmem:[#allocation11 + $0xb48] sm:$0xff]
    %v4724 = vld [vmem:[#allocation11 + $0xb50] sm:$0xff]
    %v4725 = vld [vmem:[#allocation11 + $0xb58] sm:$0xff]
    %v4726 = vld [vmem:[#allocation11 + $0xb60] sm:$0xff]
    %v4727 = vld [vmem:[#allocation11 + $0xb68] sm:$0xff]
    %v4728 = vld [vmem:[#allocation11 + $0xb70] sm:$0xff]
    %v4729 = vld [vmem:[#allocation11 + $0xb78] sm:$0xff]
    %v4730 = vld [vmem:[#allocation11 + $0xb80] sm:$0xff]
    %v4731 = vld [vmem:[#allocation11 + $0xb88] sm:$0xff]
    %v4732 = vld [vmem:[#allocation11 + $0xb90] sm:$0xff]
    %v4733 = vld [vmem:[#allocation11 + $0xb98] sm:$0xff]
    %v4734 = vld [vmem:[#allocation11 + $0xba0] sm:$0xff]
    %v4735 = vld [vmem:[#allocation11 + $0xba8] sm:$0xff]
    %v4736 = vld [vmem:[#allocation11 + $0xbb0] sm:$0xff]
    %v4737 = vld [vmem:[#allocation11 + $0xbb8] sm:$0xff]
    %v4738 = vld [vmem:[#allocation11 + $0xbc0] sm:$0xff]
    %v4739 = vld [vmem:[#allocation11 + $0xbc8] sm:$0xff]
    %v4740 = vld [vmem:[#allocation11 + $0xbd0] sm:$0xff]
    %v4741 = vld [vmem:[#allocation11 + $0xbd8] sm:$0xff]
    %v4742 = vld [vmem:[#allocation11 + $0xbe0] sm:$0xff]
    %v4743 = vld [vmem:[#allocation11 + $0xbe8] sm:$0xff]
    %v4744 = vld [vmem:[#allocation11 + $0xbf0] sm:$0xff]
    %v4745 = vld [vmem:[#allocation11 + $0xbf8] sm:$0xff]
    %v4746 = vld [vmem:[#allocation11 + $0xc00] sm:$0xff]
    %v4747 = vld [vmem:[#allocation11 + $0xc08] sm:$0xff]
    %v4748 = vld [vmem:[#allocation11 + $0xc10] sm:$0xff]
    %v4749 = vld [vmem:[#allocation11 + $0xc18] sm:$0xff]
    %v4750 = vld [vmem:[#allocation11 + $0xc20] sm:$0xff]
    %v4751 = vld [vmem:[#allocation11 + $0xc28] sm:$0xff]
    %v4752 = vld [vmem:[#allocation11 + $0xc30] sm:$0xff]
    %v4753 = vld [vmem:[#allocation11 + $0xc38] sm:$0xff]
    %v4754 = vld [vmem:[#allocation11 + $0xc40] sm:$0xff]
    %v4755 = vld [vmem:[#allocation11 + $0xc48] sm:$0xff]
    %v4756 = vld [vmem:[#allocation11 + $0xc50] sm:$0xff]
    %v4757 = vld [vmem:[#allocation11 + $0xc58] sm:$0xff]
    %v4758 = vld [vmem:[#allocation11 + $0xc60] sm:$0xff]
    %v4759 = vld [vmem:[#allocation11 + $0xc68] sm:$0xff]
    %v4760 = vld [vmem:[#allocation11 + $0xc70] sm:$0xff]
    %v4761 = vld [vmem:[#allocation11 + $0xc78] sm:$0xff]
    %v4762 = vld [vmem:[#allocation11 + $0xc80] sm:$0xff]
    %v4763 = vld [vmem:[#allocation11 + $0xc88] sm:$0xff]
    %v4764 = vld [vmem:[#allocation11 + $0xc90] sm:$0xff]
    %v4765 = vld [vmem:[#allocation11 + $0xc98] sm:$0xff]
    %v4766 = vld [vmem:[#allocation11 + $0xca0] sm:$0xff]
    %v4767 = vld [vmem:[#allocation11 + $0xca8] sm:$0xff]
    %v4768 = vld [vmem:[#allocation11 + $0xcb0] sm:$0xff]
    %v4769 = vld [vmem:[#allocation11 + $0xcb8] sm:$0xff]
    %v4770 = vld [vmem:[#allocation11 + $0xcc0] sm:$0xff]
    %v4771 = vld [vmem:[#allocation11 + $0xcc8] sm:$0xff]
    %v4772 = vld [vmem:[#allocation11 + $0xcd0] sm:$0xff]
    %v4773 = vld [vmem:[#allocation11 + $0xcd8] sm:$0xff]
    %v4774 = vld [vmem:[#allocation11 + $0xce0] sm:$0xff]
    %v4775 = vld [vmem:[#allocation11 + $0xce8] sm:$0xff]
    %v4776 = vld [vmem:[#allocation11 + $0xcf0] sm:$0xff]
    %v4777 = vld [vmem:[#allocation11 + $0xcf8] sm:$0xff]
    %v4778 = vld [vmem:[#allocation11 + $0xd00] sm:$0xff]
    %v4779 = vld [vmem:[#allocation11 + $0xd08] sm:$0xff]
    %v4780 = vld [vmem:[#allocation11 + $0xd10] sm:$0xff]
    %v4781 = vld [vmem:[#allocation11 + $0xd18] sm:$0xff]
    %v4782 = vld [vmem:[#allocation11 + $0xd20] sm:$0xff]
    %v4783 = vld [vmem:[#allocation11 + $0xd28] sm:$0xff]
    %v4784 = vld [vmem:[#allocation11 + $0xd30] sm:$0xff]
    %v4785 = vld [vmem:[#allocation11 + $0xd38] sm:$0xff]
    %v4786 = vld [vmem:[#allocation11 + $0xd40] sm:$0xff]
    %v4787 = vld [vmem:[#allocation11 + $0xd48] sm:$0xff]
    %v4788 = vld [vmem:[#allocation11 + $0xd50] sm:$0xff]
    %v4789 = vld [vmem:[#allocation11 + $0xd58] sm:$0xff]
    %v4790 = vld [vmem:[#allocation11 + $0xd60] sm:$0xff]
    %v4791 = vld [vmem:[#allocation11 + $0xd68] sm:$0xff]
    %v4792 = vld [vmem:[#allocation11 + $0xd70] sm:$0xff]
    %v4793 = vld [vmem:[#allocation11 + $0xd78] sm:$0xff]
    %v4794 = vld [vmem:[#allocation11 + $0xd80] sm:$0xff]
    %v4795 = vld [vmem:[#allocation11 + $0xd88] sm:$0xff]
    %v4796 = vld [vmem:[#allocation11 + $0xd90] sm:$0xff]
    %v4797 = vld [vmem:[#allocation11 + $0xd98] sm:$0xff]
    %v4798 = vld [vmem:[#allocation11 + $0xda0] sm:$0xff]
    %v4799 = vld [vmem:[#allocation11 + $0xda8] sm:$0xff]
    %v4800 = vld [vmem:[#allocation11 + $0xdb0] sm:$0xff]
    %v4801 = vld [vmem:[#allocation11 + $0xdb8] sm:$0xff]
    %v4802 = vld [vmem:[#allocation11 + $0xdc0] sm:$0xff]
    %v4803 = vld [vmem:[#allocation11 + $0xdc8] sm:$0xff]
    %v4804 = vld [vmem:[#allocation11 + $0xdd0] sm:$0xff]
    %v4805 = vld [vmem:[#allocation11 + $0xdd8] sm:$0xff]
    %v4806 = vld [vmem:[#allocation11 + $0xde0] sm:$0xff]
    %v4807 = vld [vmem:[#allocation11 + $0xde8] sm:$0xff]
    %v4808 = vld [vmem:[#allocation11 + $0xdf0] sm:$0xff]
    %v4809 = vld [vmem:[#allocation11 + $0xdf8] sm:$0xff]
    %v4810 = vld [vmem:[#allocation11 + $0xe00] sm:$0xff]
    %v4811 = vld [vmem:[#allocation11 + $0xe08] sm:$0xff]
    %v4812 = vld [vmem:[#allocation11 + $0xe10] sm:$0xff]
    %v4813 = vld [vmem:[#allocation11 + $0xe18] sm:$0xff]
    %v4814 = vld [vmem:[#allocation11 + $0xe20] sm:$0xff]
    %v4815 = vld [vmem:[#allocation11 + $0xe28] sm:$0xff]
    %v4816 = vld [vmem:[#allocation11 + $0xe30] sm:$0xff]
    %v4817 = vld [vmem:[#allocation11 + $0xe38] sm:$0xff]
    %v4818 = vld [vmem:[#allocation11 + $0xe40] sm:$0xff]
    %v4819 = vld [vmem:[#allocation11 + $0xe48] sm:$0xff]
    %v4820 = vld [vmem:[#allocation11 + $0xe50] sm:$0xff]
    %v4821 = vld [vmem:[#allocation11 + $0xe58] sm:$0xff]
    %v4822 = vld [vmem:[#allocation11 + $0xe60] sm:$0xff]
    %v4823 = vld [vmem:[#allocation11 + $0xe68] sm:$0xff]
    %v4824 = vld [vmem:[#allocation11 + $0xe70] sm:$0xff]
    %v4825 = vld [vmem:[#allocation11 + $0xe78] sm:$0xff]
    %v4826 = vld [vmem:[#allocation11 + $0xe80] sm:$0xff]
    %v4827 = vld [vmem:[#allocation11 + $0xe88] sm:$0xff]
    %v4828 = vld [vmem:[#allocation11 + $0xe90] sm:$0xff]
    %v4829 = vld [vmem:[#allocation11 + $0xe98] sm:$0xff]
    %v4830 = vld [vmem:[#allocation11 + $0xea0] sm:$0xff]
    %v4831 = vld [vmem:[#allocation11 + $0xea8] sm:$0xff]
    %v4832 = vld [vmem:[#allocation11 + $0xeb0] sm:$0xff]
    %v4833 = vld [vmem:[#allocation11 + $0xeb8] sm:$0xff]
    %v4834 = vld [vmem:[#allocation11 + $0xec0] sm:$0xff]
    %v4835 = vld [vmem:[#allocation11 + $0xec8] sm:$0xff]
    %v4836 = vld [vmem:[#allocation11 + $0xed0] sm:$0xff]
    %v4837 = vld [vmem:[#allocation11 + $0xed8] sm:$0xff]
    %v4838 = vld [vmem:[#allocation11 + $0xee0] sm:$0xff]
    %v4839 = vld [vmem:[#allocation11 + $0xee8] sm:$0xff]
    %v4840 = vld [vmem:[#allocation11 + $0xef0] sm:$0xff]
    %v4841 = vld [vmem:[#allocation11 + $0xef8] sm:$0xff]
    %v4842 = vld [vmem:[#allocation11 + $0xf00] sm:$0xff]
    %v4843 = vld [vmem:[#allocation11 + $0xf08] sm:$0xff]
    %v4844 = vld [vmem:[#allocation11 + $0xf10] sm:$0xff]
    %v4845 = vld [vmem:[#allocation11 + $0xf18] sm:$0xff]
    %v4846 = vld [vmem:[#allocation11 + $0xf20] sm:$0xff]
    %v4847 = vld [vmem:[#allocation11 + $0xf28] sm:$0xff]
    %v4848 = vld [vmem:[#allocation11 + $0xf30] sm:$0xff]
    %v4849 = vld [vmem:[#allocation11 + $0xf38] sm:$0xff]
    %v4850 = vld [vmem:[#allocation11 + $0xf40] sm:$0xff]
    %v4851 = vld [vmem:[#allocation11 + $0xf48] sm:$0xff]
    %v4852 = vld [vmem:[#allocation11 + $0xf50] sm:$0xff]
    %v4853 = vld [vmem:[#allocation11 + $0xf58] sm:$0xff]
    %v4854 = vld [vmem:[#allocation11 + $0xf60] sm:$0xff]
    %v4855 = vld [vmem:[#allocation11 + $0xf68] sm:$0xff]
    %v4856 = vld [vmem:[#allocation11 + $0xf70] sm:$0xff]
    %v4857 = vld [vmem:[#allocation11 + $0xf78] sm:$0xff]
    %v4858 = vld [vmem:[#allocation11 + $0xf80] sm:$0xff]
    %v4859 = vld [vmem:[#allocation11 + $0xf88] sm:$0xff]
    %v4860 = vld [vmem:[#allocation11 + $0xf90] sm:$0xff]
    %v4861 = vld [vmem:[#allocation11 + $0xf98] sm:$0xff]
    %v4862 = vld [vmem:[#allocation11 + $0xfa0] sm:$0xff]
    %v4863 = vld [vmem:[#allocation11 + $0xfa8] sm:$0xff]
    %v4864 = vld [vmem:[#allocation11 + $0xfb0] sm:$0xff]
    %v4865 = vld [vmem:[#allocation11 + $0xfb8] sm:$0xff]
    %v4866 = vld [vmem:[#allocation11 + $0xfc0] sm:$0xff]
    %v4867 = vld [vmem:[#allocation11 + $0xfc8] sm:$0xff]
    %v4868 = vld [vmem:[#allocation11 + $0xfd0] sm:$0xff]
    %v4869 = vld [vmem:[#allocation11 + $0xfd8] sm:$0xff]
    %v4870 = vld [vmem:[#allocation11 + $0xfe0] sm:$0xff]
    %v4871 = vld [vmem:[#allocation11 + $0xfe8] sm:$0xff]
    %v4872 = vld [vmem:[#allocation11 + $0xff0] sm:$0xff]
    %v4873 = vld [vmem:[#allocation11 + $0xff8] sm:$0xff]
    %v4874 = vld [vmem:[#allocation13] sm:$0xff]
    %v4876 = vperm.slane %v4874, 0
    %v4877 = vperm.slane %v4874, 1
    %v4878 = vperm.slane %v4874, 2
    %v4879 = vperm.slane %v4874, 3
    %v4880 = vperm.slane %v4874, 4
    %v4881 = vperm.slane %v4874, 5
    %v4882 = vperm.slane %v4874, 6
    %v4883 = vperm.slane %v4874, 7
    %v5404 = vunpack.c.l.b16 %v4362
    %v5405 = vunpack.c.h.b16 %v4362
    %v5406 = vunpack.c.l.b16 %v4363
    %v5407 = vunpack.c.h.b16 %v4363
    %v5408 = vunpack.c.l.b16 %v4364
    %v5409 = vunpack.c.h.b16 %v4364
    %v5410 = vunpack.c.l.b16 %v4365
    %v5411 = vunpack.c.h.b16 %v4365
    %v5412 = vunpack.c.l.b16 %v4366
    %v5413 = vunpack.c.h.b16 %v4366
    %v5414 = vunpack.c.l.b16 %v4367
    %v5415 = vunpack.c.h.b16 %v4367
    %v5416 = vunpack.c.l.b16 %v4368
    %v5417 = vunpack.c.h.b16 %v4368
    %v5418 = vunpack.c.l.b16 %v4369
    %v5419 = vunpack.c.h.b16 %v4369
    %v5420 = vunpack.c.l.b16 %v4370
    %v5421 = vunpack.c.h.b16 %v4370
    %v5422 = vunpack.c.l.b16 %v4371
    %v5423 = vunpack.c.h.b16 %v4371
    %v5424 = vunpack.c.l.b16 %v4372
    %v5425 = vunpack.c.h.b16 %v4372
    %v5426 = vunpack.c.l.b16 %v4373
    %v5427 = vunpack.c.h.b16 %v4373
    %v5428 = vunpack.c.l.b16 %v4374
    %v5429 = vunpack.c.h.b16 %v4374
    %v5430 = vunpack.c.l.b16 %v4375
    %v5431 = vunpack.c.h.b16 %v4375
    %v5432 = vunpack.c.l.b16 %v4376
    %v5433 = vunpack.c.h.b16 %v4376
    %v5434 = vunpack.c.l.b16 %v4377
    %v5435 = vunpack.c.h.b16 %v4377
    %v5436 = vunpack.c.l.b16 %v4378
    %v5437 = vunpack.c.h.b16 %v4378
    %v5438 = vunpack.c.l.b16 %v4379
    %v5439 = vunpack.c.h.b16 %v4379
    %v5440 = vunpack.c.l.b16 %v4380
    %v5441 = vunpack.c.h.b16 %v4380
    %v5442 = vunpack.c.l.b16 %v4381
    %v5443 = vunpack.c.h.b16 %v4381
    %v5444 = vunpack.c.l.b16 %v4382
    %v5445 = vunpack.c.h.b16 %v4382
    %v5446 = vunpack.c.l.b16 %v4383
    %v5447 = vunpack.c.h.b16 %v4383
    %v5448 = vunpack.c.l.b16 %v4384
    %v5449 = vunpack.c.h.b16 %v4384
    %v5450 = vunpack.c.l.b16 %v4385
    %v5451 = vunpack.c.h.b16 %v4385
    %v5452 = vunpack.c.l.b16 %v4386
    %v5453 = vunpack.c.h.b16 %v4386
    %v5454 = vunpack.c.l.b16 %v4387
    %v5455 = vunpack.c.h.b16 %v4387
    %v5456 = vunpack.c.l.b16 %v4388
    %v5457 = vunpack.c.h.b16 %v4388
    %v5458 = vunpack.c.l.b16 %v4389
    %v5459 = vunpack.c.h.b16 %v4389
    %v5460 = vunpack.c.l.b16 %v4390
    %v5461 = vunpack.c.h.b16 %v4390
    %v5462 = vunpack.c.l.b16 %v4391
    %v5463 = vunpack.c.h.b16 %v4391
    %v5464 = vunpack.c.l.b16 %v4392
    %v5465 = vunpack.c.h.b16 %v4392
    %v5466 = vunpack.c.l.b16 %v4393
    %v5467 = vunpack.c.h.b16 %v4393
    %v5468 = vunpack.c.l.b16 %v4394
    %v5469 = vunpack.c.h.b16 %v4394
    %v5470 = vunpack.c.l.b16 %v4395
    %v5471 = vunpack.c.h.b16 %v4395
    %v5472 = vunpack.c.l.b16 %v4396
    %v5473 = vunpack.c.h.b16 %v4396
    %v5474 = vunpack.c.l.b16 %v4397
    %v5475 = vunpack.c.h.b16 %v4397
    %v5476 = vunpack.c.l.b16 %v4398
    %v5477 = vunpack.c.h.b16 %v4398
    %v5478 = vunpack.c.l.b16 %v4399
    %v5479 = vunpack.c.h.b16 %v4399
    %v5480 = vunpack.c.l.b16 %v4400
    %v5481 = vunpack.c.h.b16 %v4400
    %v5482 = vunpack.c.l.b16 %v4401
    %v5483 = vunpack.c.h.b16 %v4401
    %v5484 = vunpack.c.l.b16 %v4402
    %v5485 = vunpack.c.h.b16 %v4402
    %v5486 = vunpack.c.l.b16 %v4403
    %v5487 = vunpack.c.h.b16 %v4403
    %v5488 = vunpack.c.l.b16 %v4404
    %v5489 = vunpack.c.h.b16 %v4404
    %v5490 = vunpack.c.l.b16 %v4405
    %v5491 = vunpack.c.h.b16 %v4405
    %v5492 = vunpack.c.l.b16 %v4406
    %v5493 = vunpack.c.h.b16 %v4406
    %v5494 = vunpack.c.l.b16 %v4407
    %v5495 = vunpack.c.h.b16 %v4407
    %v5496 = vunpack.c.l.b16 %v4408
    %v5497 = vunpack.c.h.b16 %v4408
    %v5498 = vunpack.c.l.b16 %v4409
    %v5499 = vunpack.c.h.b16 %v4409
    %v5500 = vunpack.c.l.b16 %v4410
    %v5501 = vunpack.c.h.b16 %v4410
    %v5502 = vunpack.c.l.b16 %v4411
    %v5503 = vunpack.c.h.b16 %v4411
    %v5504 = vunpack.c.l.b16 %v4412
    %v5505 = vunpack.c.h.b16 %v4412
    %v5506 = vunpack.c.l.b16 %v4413
    %v5507 = vunpack.c.h.b16 %v4413
    %v5508 = vunpack.c.l.b16 %v4414
    %v5509 = vunpack.c.h.b16 %v4414
    %v5510 = vunpack.c.l.b16 %v4415
    %v5511 = vunpack.c.h.b16 %v4415
    %v5512 = vunpack.c.l.b16 %v4416
    %v5513 = vunpack.c.h.b16 %v4416
    %v5514 = vunpack.c.l.b16 %v4417
    %v5515 = vunpack.c.h.b16 %v4417
    %v5516 = vunpack.c.l.b16 %v4418
    %v5517 = vunpack.c.h.b16 %v4418
    %v5518 = vunpack.c.l.b16 %v4419
    %v5519 = vunpack.c.h.b16 %v4419
    %v5520 = vunpack.c.l.b16 %v4420
    %v5521 = vunpack.c.h.b16 %v4420
    %v5522 = vunpack.c.l.b16 %v4421
    %v5523 = vunpack.c.h.b16 %v4421
    %v5524 = vunpack.c.l.b16 %v4422
    %v5525 = vunpack.c.h.b16 %v4422
    %v5526 = vunpack.c.l.b16 %v4423
    %v5527 = vunpack.c.h.b16 %v4423
    %v5528 = vunpack.c.l.b16 %v4424
    %v5529 = vunpack.c.h.b16 %v4424
    %v5530 = vunpack.c.l.b16 %v4425
    %v5531 = vunpack.c.h.b16 %v4425
    %v5532 = vunpack.c.l.b16 %v4426
    %v5533 = vunpack.c.h.b16 %v4426
    %v5534 = vunpack.c.l.b16 %v4427
    %v5535 = vunpack.c.h.b16 %v4427
    %v5536 = vunpack.c.l.b16 %v4428
    %v5537 = vunpack.c.h.b16 %v4428
    %v5538 = vunpack.c.l.b16 %v4429
    %v5539 = vunpack.c.h.b16 %v4429
    %v5540 = vunpack.c.l.b16 %v4430
    %v5541 = vunpack.c.h.b16 %v4430
    %v5542 = vunpack.c.l.b16 %v4431
    %v5543 = vunpack.c.h.b16 %v4431
    %v5544 = vunpack.c.l.b16 %v4432
    %v5545 = vunpack.c.h.b16 %v4432
    %v5546 = vunpack.c.l.b16 %v4433
    %v5547 = vunpack.c.h.b16 %v4433
    %v5548 = vunpack.c.l.b16 %v4434
    %v5549 = vunpack.c.h.b16 %v4434
    %v5550 = vunpack.c.l.b16 %v4435
    %v5551 = vunpack.c.h.b16 %v4435
    %v5552 = vunpack.c.l.b16 %v4436
    %v5553 = vunpack.c.h.b16 %v4436
    %v5554 = vunpack.c.l.b16 %v4437
    %v5555 = vunpack.c.h.b16 %v4437
    %v5556 = vunpack.c.l.b16 %v4438
    %v5557 = vunpack.c.h.b16 %v4438
    %v5558 = vunpack.c.l.b16 %v4439
    %v5559 = vunpack.c.h.b16 %v4439
    %v5560 = vunpack.c.l.b16 %v4440
    %v5561 = vunpack.c.h.b16 %v4440
    %v5562 = vunpack.c.l.b16 %v4441
    %v5563 = vunpack.c.h.b16 %v4441
    %v5564 = vunpack.c.l.b16 %v4442
    %v5565 = vunpack.c.h.b16 %v4442
    %v5566 = vunpack.c.l.b16 %v4443
    %v5567 = vunpack.c.h.b16 %v4443
    %v5568 = vunpack.c.l.b16 %v4444
    %v5569 = vunpack.c.h.b16 %v4444
    %v5570 = vunpack.c.l.b16 %v4445
    %v5571 = vunpack.c.h.b16 %v4445
    %v5572 = vunpack.c.l.b16 %v4446
    %v5573 = vunpack.c.h.b16 %v4446
    %v5574 = vunpack.c.l.b16 %v4447
    %v5575 = vunpack.c.h.b16 %v4447
    %v5576 = vunpack.c.l.b16 %v4448
    %v5577 = vunpack.c.h.b16 %v4448
    %v5578 = vunpack.c.l.b16 %v4449
    %v5579 = vunpack.c.h.b16 %v4449
    %v5580 = vunpack.c.l.b16 %v4450
    %v5581 = vunpack.c.h.b16 %v4450
    %v5582 = vunpack.c.l.b16 %v4451
    %v5583 = vunpack.c.h.b16 %v4451
    %v5584 = vunpack.c.l.b16 %v4452
    %v5585 = vunpack.c.h.b16 %v4452
    %v5586 = vunpack.c.l.b16 %v4453
    %v5587 = vunpack.c.h.b16 %v4453
    %v5588 = vunpack.c.l.b16 %v4454
    %v5589 = vunpack.c.h.b16 %v4454
    %v5590 = vunpack.c.l.b16 %v4455
    %v5591 = vunpack.c.h.b16 %v4455
    %v5592 = vunpack.c.l.b16 %v4456
    %v5593 = vunpack.c.h.b16 %v4456
    %v5594 = vunpack.c.l.b16 %v4457
    %v5595 = vunpack.c.h.b16 %v4457
    %v5596 = vunpack.c.l.b16 %v4458
    %v5597 = vunpack.c.h.b16 %v4458
    %v5598 = vunpack.c.l.b16 %v4459
    %v5599 = vunpack.c.h.b16 %v4459
    %v5600 = vunpack.c.l.b16 %v4460
    %v5601 = vunpack.c.h.b16 %v4460
    %v5602 = vunpack.c.l.b16 %v4461
    %v5603 = vunpack.c.h.b16 %v4461
    %v5604 = vunpack.c.l.b16 %v4462
    %v5605 = vunpack.c.h.b16 %v4462
    %v5606 = vunpack.c.l.b16 %v4463
    %v5607 = vunpack.c.h.b16 %v4463
    %v5608 = vunpack.c.l.b16 %v4464
    %v5609 = vunpack.c.h.b16 %v4464
    %v5610 = vunpack.c.l.b16 %v4465
    %v5611 = vunpack.c.h.b16 %v4465
    %v5612 = vunpack.c.l.b16 %v4466
    %v5613 = vunpack.c.h.b16 %v4466
    %v5614 = vunpack.c.l.b16 %v4467
    %v5615 = vunpack.c.h.b16 %v4467
    %v5616 = vunpack.c.l.b16 %v4468
    %v5617 = vunpack.c.h.b16 %v4468
    %v5618 = vunpack.c.l.b16 %v4469
    %v5619 = vunpack.c.h.b16 %v4469
    %v5620 = vunpack.c.l.b16 %v4470
    %v5621 = vunpack.c.h.b16 %v4470
    %v5622 = vunpack.c.l.b16 %v4471
    %v5623 = vunpack.c.h.b16 %v4471
    %v5624 = vunpack.c.l.b16 %v4472
    %v5625 = vunpack.c.h.b16 %v4472
    %v5626 = vunpack.c.l.b16 %v4473
    %v5627 = vunpack.c.h.b16 %v4473
    %v5628 = vunpack.c.l.b16 %v4474
    %v5629 = vunpack.c.h.b16 %v4474
    %v5630 = vunpack.c.l.b16 %v4475
    %v5631 = vunpack.c.h.b16 %v4475
    %v5632 = vunpack.c.l.b16 %v4476
    %v5633 = vunpack.c.h.b16 %v4476
    %v5634 = vunpack.c.l.b16 %v4477
    %v5635 = vunpack.c.h.b16 %v4477
    %v5636 = vunpack.c.l.b16 %v4478
    %v5637 = vunpack.c.h.b16 %v4478
    %v5638 = vunpack.c.l.b16 %v4479
    %v5639 = vunpack.c.h.b16 %v4479
    %v5640 = vunpack.c.l.b16 %v4480
    %v5641 = vunpack.c.h.b16 %v4480
    %v5642 = vunpack.c.l.b16 %v4481
    %v5643 = vunpack.c.h.b16 %v4481
    %v5644 = vunpack.c.l.b16 %v4482
    %v5645 = vunpack.c.h.b16 %v4482
    %v5646 = vunpack.c.l.b16 %v4483
    %v5647 = vunpack.c.h.b16 %v4483
    %v5648 = vunpack.c.l.b16 %v4484
    %v5649 = vunpack.c.h.b16 %v4484
    %v5650 = vunpack.c.l.b16 %v4485
    %v5651 = vunpack.c.h.b16 %v4485
    %v5652 = vunpack.c.l.b16 %v4486
    %v5653 = vunpack.c.h.b16 %v4486
    %v5654 = vunpack.c.l.b16 %v4487
    %v5655 = vunpack.c.h.b16 %v4487
    %v5656 = vunpack.c.l.b16 %v4488
    %v5657 = vunpack.c.h.b16 %v4488
    %v5658 = vunpack.c.l.b16 %v4489
    %v5659 = vunpack.c.h.b16 %v4489
    %v5660 = vunpack.c.l.b16 %v4490
    %v5661 = vunpack.c.h.b16 %v4490
    %v5662 = vunpack.c.l.b16 %v4491
    %v5663 = vunpack.c.h.b16 %v4491
    %v5664 = vunpack.c.l.b16 %v4492
    %v5665 = vunpack.c.h.b16 %v4492
    %v5666 = vunpack.c.l.b16 %v4493
    %v5667 = vunpack.c.h.b16 %v4493
    %v5668 = vunpack.c.l.b16 %v4494
    %v5669 = vunpack.c.h.b16 %v4494
    %v5670 = vunpack.c.l.b16 %v4495
    %v5671 = vunpack.c.h.b16 %v4495
    %v5672 = vunpack.c.l.b16 %v4496
    %v5673 = vunpack.c.h.b16 %v4496
    %v5674 = vunpack.c.l.b16 %v4497
    %v5675 = vunpack.c.h.b16 %v4497
    %v5676 = vunpack.c.l.b16 %v4498
    %v5677 = vunpack.c.h.b16 %v4498
    %v5678 = vunpack.c.l.b16 %v4499
    %v5679 = vunpack.c.h.b16 %v4499
    %v5680 = vunpack.c.l.b16 %v4500
    %v5681 = vunpack.c.h.b16 %v4500
    %v5682 = vunpack.c.l.b16 %v4501
    %v5683 = vunpack.c.h.b16 %v4501
    %v5684 = vunpack.c.l.b16 %v4502
    %v5685 = vunpack.c.h.b16 %v4502
    %v5686 = vunpack.c.l.b16 %v4503
    %v5687 = vunpack.c.h.b16 %v4503
    %v5688 = vunpack.c.l.b16 %v4504
    %v5689 = vunpack.c.h.b16 %v4504
    %v5690 = vunpack.c.l.b16 %v4505
    %v5691 = vunpack.c.h.b16 %v4505
    %v5692 = vunpack.c.l.b16 %v4506
    %v5693 = vunpack.c.h.b16 %v4506
    %v5694 = vunpack.c.l.b16 %v4507
    %v5695 = vunpack.c.h.b16 %v4507
    %v5696 = vunpack.c.l.b16 %v4508
    %v5697 = vunpack.c.h.b16 %v4508
    %v5698 = vunpack.c.l.b16 %v4509
    %v5699 = vunpack.c.h.b16 %v4509
    %v5700 = vunpack.c.l.b16 %v4510
    %v5701 = vunpack.c.h.b16 %v4510
    %v5702 = vunpack.c.l.b16 %v4511
    %v5703 = vunpack.c.h.b16 %v4511
    %v5704 = vunpack.c.l.b16 %v4512
    %v5705 = vunpack.c.h.b16 %v4512
    %v5706 = vunpack.c.l.b16 %v4513
    %v5707 = vunpack.c.h.b16 %v4513
    %v5708 = vunpack.c.l.b16 %v4514
    %v5709 = vunpack.c.h.b16 %v4514
    %v5710 = vunpack.c.l.b16 %v4515
    %v5711 = vunpack.c.h.b16 %v4515
    %v5712 = vunpack.c.l.b16 %v4516
    %v5713 = vunpack.c.h.b16 %v4516
    %v5714 = vunpack.c.l.b16 %v4517
    %v5715 = vunpack.c.h.b16 %v4517
    %v5716 = vunpack.c.l.b16 %v4518
    %v5717 = vunpack.c.h.b16 %v4518
    %v5718 = vunpack.c.l.b16 %v4519
    %v5719 = vunpack.c.h.b16 %v4519
    %v5720 = vunpack.c.l.b16 %v4520
    %v5721 = vunpack.c.h.b16 %v4520
    %v5722 = vunpack.c.l.b16 %v4521
    %v5723 = vunpack.c.h.b16 %v4521
    %v5724 = vunpack.c.l.b16 %v4522
    %v5725 = vunpack.c.h.b16 %v4522
    %v5726 = vunpack.c.l.b16 %v4523
    %v5727 = vunpack.c.h.b16 %v4523
    %v5728 = vunpack.c.l.b16 %v4524
    %v5729 = vunpack.c.h.b16 %v4524
    %v5730 = vunpack.c.l.b16 %v4525
    %v5731 = vunpack.c.h.b16 %v4525
    %v5732 = vunpack.c.l.b16 %v4526
    %v5733 = vunpack.c.h.b16 %v4526
    %v5734 = vunpack.c.l.b16 %v4527
    %v5735 = vunpack.c.h.b16 %v4527
    %v5736 = vunpack.c.l.b16 %v4528
    %v5737 = vunpack.c.h.b16 %v4528
    %v5738 = vunpack.c.l.b16 %v4529
    %v5739 = vunpack.c.h.b16 %v4529
    %v5740 = vunpack.c.l.b16 %v4530
    %v5741 = vunpack.c.h.b16 %v4530
    %v5742 = vunpack.c.l.b16 %v4531
    %v5743 = vunpack.c.h.b16 %v4531
    %v5744 = vunpack.c.l.b16 %v4532
    %v5745 = vunpack.c.h.b16 %v4532
    %v5746 = vunpack.c.l.b16 %v4533
    %v5747 = vunpack.c.h.b16 %v4533
    %v5748 = vunpack.c.l.b16 %v4534
    %v5749 = vunpack.c.h.b16 %v4534
    %v5750 = vunpack.c.l.b16 %v4535
    %v5751 = vunpack.c.h.b16 %v4535
    %v5752 = vunpack.c.l.b16 %v4536
    %v5753 = vunpack.c.h.b16 %v4536
    %v5754 = vunpack.c.l.b16 %v4537
    %v5755 = vunpack.c.h.b16 %v4537
    %v5756 = vunpack.c.l.b16 %v4538
    %v5757 = vunpack.c.h.b16 %v4538
    %v5758 = vunpack.c.l.b16 %v4539
    %v5759 = vunpack.c.h.b16 %v4539
    %v5760 = vunpack.c.l.b16 %v4540
    %v5761 = vunpack.c.h.b16 %v4540
    %v5762 = vunpack.c.l.b16 %v4541
    %v5763 = vunpack.c.h.b16 %v4541
    %v5764 = vunpack.c.l.b16 %v4542
    %v5765 = vunpack.c.h.b16 %v4542
    %v5766 = vunpack.c.l.b16 %v4543
    %v5767 = vunpack.c.h.b16 %v4543
    %v5768 = vunpack.c.l.b16 %v4544
    %v5769 = vunpack.c.h.b16 %v4544
    %v5770 = vunpack.c.l.b16 %v4545
    %v5771 = vunpack.c.h.b16 %v4545
    %v5772 = vunpack.c.l.b16 %v4546
    %v5773 = vunpack.c.h.b16 %v4546
    %v5774 = vunpack.c.l.b16 %v4547
    %v5775 = vunpack.c.h.b16 %v4547
    %v5776 = vunpack.c.l.b16 %v4548
    %v5777 = vunpack.c.h.b16 %v4548
    %v5778 = vunpack.c.l.b16 %v4549
    %v5779 = vunpack.c.h.b16 %v4549
    %v5780 = vunpack.c.l.b16 %v4550
    %v5781 = vunpack.c.h.b16 %v4550
    %v5782 = vunpack.c.l.b16 %v4551
    %v5783 = vunpack.c.h.b16 %v4551
    %v5784 = vunpack.c.l.b16 %v4552
    %v5785 = vunpack.c.h.b16 %v4552
    %v5786 = vunpack.c.l.b16 %v4553
    %v5787 = vunpack.c.h.b16 %v4553
    %v5788 = vunpack.c.l.b16 %v4554
    %v5789 = vunpack.c.h.b16 %v4554
    %v5790 = vunpack.c.l.b16 %v4555
    %v5791 = vunpack.c.h.b16 %v4555
    %v5792 = vunpack.c.l.b16 %v4556
    %v5793 = vunpack.c.h.b16 %v4556
    %v5794 = vunpack.c.l.b16 %v4557
    %v5795 = vunpack.c.h.b16 %v4557
    %v5796 = vunpack.c.l.b16 %v4558
    %v5797 = vunpack.c.h.b16 %v4558
    %v5798 = vunpack.c.l.b16 %v4559
    %v5799 = vunpack.c.h.b16 %v4559
    %v5800 = vunpack.c.l.b16 %v4560
    %v5801 = vunpack.c.h.b16 %v4560
    %v5802 = vunpack.c.l.b16 %v4561
    %v5803 = vunpack.c.h.b16 %v4561
    %v5804 = vunpack.c.l.b16 %v4562
    %v5805 = vunpack.c.h.b16 %v4562
    %v5806 = vunpack.c.l.b16 %v4563
    %v5807 = vunpack.c.h.b16 %v4563
    %v5808 = vunpack.c.l.b16 %v4564
    %v5809 = vunpack.c.h.b16 %v4564
    %v5810 = vunpack.c.l.b16 %v4565
    %v5811 = vunpack.c.h.b16 %v4565
    %v5812 = vunpack.c.l.b16 %v4566
    %v5813 = vunpack.c.h.b16 %v4566
    %v5814 = vunpack.c.l.b16 %v4567
    %v5815 = vunpack.c.h.b16 %v4567
    %v5816 = vunpack.c.l.b16 %v4568
    %v5817 = vunpack.c.h.b16 %v4568
    %v5818 = vunpack.c.l.b16 %v4569
    %v5819 = vunpack.c.h.b16 %v4569
    %v5820 = vunpack.c.l.b16 %v4570
    %v5821 = vunpack.c.h.b16 %v4570
    %v5822 = vunpack.c.l.b16 %v4571
    %v5823 = vunpack.c.h.b16 %v4571
    %v5824 = vunpack.c.l.b16 %v4572
    %v5825 = vunpack.c.h.b16 %v4572
    %v5826 = vunpack.c.l.b16 %v4573
    %v5827 = vunpack.c.h.b16 %v4573
    %v5828 = vunpack.c.l.b16 %v4574
    %v5829 = vunpack.c.h.b16 %v4574
    %v5830 = vunpack.c.l.b16 %v4575
    %v5831 = vunpack.c.h.b16 %v4575
    %v5832 = vunpack.c.l.b16 %v4576
    %v5833 = vunpack.c.h.b16 %v4576
    %v5834 = vunpack.c.l.b16 %v4577
    %v5835 = vunpack.c.h.b16 %v4577
    %v5836 = vunpack.c.l.b16 %v4578
    %v5837 = vunpack.c.h.b16 %v4578
    %v5838 = vunpack.c.l.b16 %v4579
    %v5839 = vunpack.c.h.b16 %v4579
    %v5840 = vunpack.c.l.b16 %v4580
    %v5841 = vunpack.c.h.b16 %v4580
    %v5842 = vunpack.c.l.b16 %v4581
    %v5843 = vunpack.c.h.b16 %v4581
    %v5844 = vunpack.c.l.b16 %v4582
    %v5845 = vunpack.c.h.b16 %v4582
    %v5846 = vunpack.c.l.b16 %v4583
    %v5847 = vunpack.c.h.b16 %v4583
    %v5848 = vunpack.c.l.b16 %v4584
    %v5849 = vunpack.c.h.b16 %v4584
    %v5850 = vunpack.c.l.b16 %v4585
    %v5851 = vunpack.c.h.b16 %v4585
    %v5852 = vunpack.c.l.b16 %v4586
    %v5853 = vunpack.c.h.b16 %v4586
    %v5854 = vunpack.c.l.b16 %v4587
    %v5855 = vunpack.c.h.b16 %v4587
    %v5856 = vunpack.c.l.b16 %v4588
    %v5857 = vunpack.c.h.b16 %v4588
    %v5858 = vunpack.c.l.b16 %v4589
    %v5859 = vunpack.c.h.b16 %v4589
    %v5860 = vunpack.c.l.b16 %v4590
    %v5861 = vunpack.c.h.b16 %v4590
    %v5862 = vunpack.c.l.b16 %v4591
    %v5863 = vunpack.c.h.b16 %v4591
    %v5864 = vunpack.c.l.b16 %v4592
    %v5865 = vunpack.c.h.b16 %v4592
    %v5866 = vunpack.c.l.b16 %v4593
    %v5867 = vunpack.c.h.b16 %v4593
    %v5868 = vunpack.c.l.b16 %v4594
    %v5869 = vunpack.c.h.b16 %v4594
    %v5870 = vunpack.c.l.b16 %v4595
    %v5871 = vunpack.c.h.b16 %v4595
    %v5872 = vunpack.c.l.b16 %v4596
    %v5873 = vunpack.c.h.b16 %v4596
    %v5874 = vunpack.c.l.b16 %v4597
    %v5875 = vunpack.c.h.b16 %v4597
    %v5876 = vunpack.c.l.b16 %v4598
    %v5877 = vunpack.c.h.b16 %v4598
    %v5878 = vunpack.c.l.b16 %v4599
    %v5879 = vunpack.c.h.b16 %v4599
    %v5880 = vunpack.c.l.b16 %v4600
    %v5881 = vunpack.c.h.b16 %v4600
    %v5882 = vunpack.c.l.b16 %v4601
    %v5883 = vunpack.c.h.b16 %v4601
    %v5884 = vunpack.c.l.b16 %v4602
    %v5885 = vunpack.c.h.b16 %v4602
    %v5886 = vunpack.c.l.b16 %v4603
    %v5887 = vunpack.c.h.b16 %v4603
    %v5888 = vunpack.c.l.b16 %v4604
    %v5889 = vunpack.c.h.b16 %v4604
    %v5890 = vunpack.c.l.b16 %v4605
    %v5891 = vunpack.c.h.b16 %v4605
    %v5892 = vunpack.c.l.b16 %v4606
    %v5893 = vunpack.c.h.b16 %v4606
    %v5894 = vunpack.c.l.b16 %v4607
    %v5895 = vunpack.c.h.b16 %v4607
    %v5896 = vunpack.c.l.b16 %v4608
    %v5897 = vunpack.c.h.b16 %v4608
    %v5898 = vunpack.c.l.b16 %v4609
    %v5899 = vunpack.c.h.b16 %v4609
    %v5900 = vunpack.c.l.b16 %v4610
    %v5901 = vunpack.c.h.b16 %v4610
    %v5902 = vunpack.c.l.b16 %v4611
    %v5903 = vunpack.c.h.b16 %v4611
    %v5904 = vunpack.c.l.b16 %v4612
    %v5905 = vunpack.c.h.b16 %v4612
    %v5906 = vunpack.c.l.b16 %v4613
    %v5907 = vunpack.c.h.b16 %v4613
    %v5908 = vunpack.c.l.b16 %v4614
    %v5909 = vunpack.c.h.b16 %v4614
    %v5910 = vunpack.c.l.b16 %v4615
    %v5911 = vunpack.c.h.b16 %v4615
    %v5912 = vunpack.c.l.b16 %v4616
    %v5913 = vunpack.c.h.b16 %v4616
    %v5914 = vunpack.c.l.b16 %v4617
    %v5915 = vunpack.c.h.b16 %v4617
    %v5916 = vunpack.c.l.b16 %v4618
    %v5917 = vunpack.c.h.b16 %v4618
    %v5918 = vunpack.c.l.b16 %v4619
    %v5919 = vunpack.c.h.b16 %v4619
    %v5920 = vunpack.c.l.b16 %v4620
    %v5921 = vunpack.c.h.b16 %v4620
    %v5922 = vunpack.c.l.b16 %v4621
    %v5923 = vunpack.c.h.b16 %v4621
    %v5924 = vunpack.c.l.b16 %v4622
    %v5925 = vunpack.c.h.b16 %v4622
    %v5926 = vunpack.c.l.b16 %v4623
    %v5927 = vunpack.c.h.b16 %v4623
    %v5928 = vunpack.c.l.b16 %v4624
    %v5929 = vunpack.c.h.b16 %v4624
    %v5930 = vunpack.c.l.b16 %v4625
    %v5931 = vunpack.c.h.b16 %v4625
    %v5932 = vunpack.c.l.b16 %v4626
    %v5933 = vunpack.c.h.b16 %v4626
    %v5934 = vunpack.c.l.b16 %v4627
    %v5935 = vunpack.c.h.b16 %v4627
    %v5936 = vunpack.c.l.b16 %v4628
    %v5937 = vunpack.c.h.b16 %v4628
    %v5938 = vunpack.c.l.b16 %v4629
    %v5939 = vunpack.c.h.b16 %v4629
    %v5940 = vunpack.c.l.b16 %v4630
    %v5941 = vunpack.c.h.b16 %v4630
    %v5942 = vunpack.c.l.b16 %v4631
    %v5943 = vunpack.c.h.b16 %v4631
    %v5944 = vunpack.c.l.b16 %v4632
    %v5945 = vunpack.c.h.b16 %v4632
    %v5946 = vunpack.c.l.b16 %v4633
    %v5947 = vunpack.c.h.b16 %v4633
    %v5948 = vunpack.c.l.b16 %v4634
    %v5949 = vunpack.c.h.b16 %v4634
    %v5950 = vunpack.c.l.b16 %v4635
    %v5951 = vunpack.c.h.b16 %v4635
    %v5952 = vunpack.c.l.b16 %v4636
    %v5953 = vunpack.c.h.b16 %v4636
    %v5954 = vunpack.c.l.b16 %v4637
    %v5955 = vunpack.c.h.b16 %v4637
    %v5956 = vunpack.c.l.b16 %v4638
    %v5957 = vunpack.c.h.b16 %v4638
    %v5958 = vunpack.c.l.b16 %v4639
    %v5959 = vunpack.c.h.b16 %v4639
    %v5960 = vunpack.c.l.b16 %v4640
    %v5961 = vunpack.c.h.b16 %v4640
    %v5962 = vunpack.c.l.b16 %v4641
    %v5963 = vunpack.c.h.b16 %v4641
    %v5964 = vunpack.c.l.b16 %v4642
    %v5965 = vunpack.c.h.b16 %v4642
    %v5966 = vunpack.c.l.b16 %v4643
    %v5967 = vunpack.c.h.b16 %v4643
    %v5968 = vunpack.c.l.b16 %v4644
    %v5969 = vunpack.c.h.b16 %v4644
    %v5970 = vunpack.c.l.b16 %v4645
    %v5971 = vunpack.c.h.b16 %v4645
    %v5972 = vunpack.c.l.b16 %v4646
    %v5973 = vunpack.c.h.b16 %v4646
    %v5974 = vunpack.c.l.b16 %v4647
    %v5975 = vunpack.c.h.b16 %v4647
    %v5976 = vunpack.c.l.b16 %v4648
    %v5977 = vunpack.c.h.b16 %v4648
    %v5978 = vunpack.c.l.b16 %v4649
    %v5979 = vunpack.c.h.b16 %v4649
    %v5980 = vunpack.c.l.b16 %v4650
    %v5981 = vunpack.c.h.b16 %v4650
    %v5982 = vunpack.c.l.b16 %v4651
    %v5983 = vunpack.c.h.b16 %v4651
    %v5984 = vunpack.c.l.b16 %v4652
    %v5985 = vunpack.c.h.b16 %v4652
    %v5986 = vunpack.c.l.b16 %v4653
    %v5987 = vunpack.c.h.b16 %v4653
    %v5988 = vunpack.c.l.b16 %v4654
    %v5989 = vunpack.c.h.b16 %v4654
    %v5990 = vunpack.c.l.b16 %v4655
    %v5991 = vunpack.c.h.b16 %v4655
    %v5992 = vunpack.c.l.b16 %v4656
    %v5993 = vunpack.c.h.b16 %v4656
    %v5994 = vunpack.c.l.b16 %v4657
    %v5995 = vunpack.c.h.b16 %v4657
    %v5996 = vunpack.c.l.b16 %v4658
    %v5997 = vunpack.c.h.b16 %v4658
    %v5998 = vunpack.c.l.b16 %v4659
    %v5999 = vunpack.c.h.b16 %v4659
    %v6000 = vunpack.c.l.b16 %v4660
    %v6001 = vunpack.c.h.b16 %v4660
    %v6002 = vunpack.c.l.b16 %v4661
    %v6003 = vunpack.c.h.b16 %v4661
    %v6004 = vunpack.c.l.b16 %v4662
    %v6005 = vunpack.c.h.b16 %v4662
    %v6006 = vunpack.c.l.b16 %v4663
    %v6007 = vunpack.c.h.b16 %v4663
    %v6008 = vunpack.c.l.b16 %v4664
    %v6009 = vunpack.c.h.b16 %v4664
    %v6010 = vunpack.c.l.b16 %v4665
    %v6011 = vunpack.c.h.b16 %v4665
    %v6012 = vunpack.c.l.b16 %v4666
    %v6013 = vunpack.c.h.b16 %v4666
    %v6014 = vunpack.c.l.b16 %v4667
    %v6015 = vunpack.c.h.b16 %v4667
    %v6016 = vunpack.c.l.b16 %v4668
    %v6017 = vunpack.c.h.b16 %v4668
    %v6018 = vunpack.c.l.b16 %v4669
    %v6019 = vunpack.c.h.b16 %v4669
    %v6020 = vunpack.c.l.b16 %v4670
    %v6021 = vunpack.c.h.b16 %v4670
    %v6022 = vunpack.c.l.b16 %v4671
    %v6023 = vunpack.c.h.b16 %v4671
    %v6024 = vunpack.c.l.b16 %v4672
    %v6025 = vunpack.c.h.b16 %v4672
    %v6026 = vunpack.c.l.b16 %v4673
    %v6027 = vunpack.c.h.b16 %v4673
    %v6028 = vunpack.c.l.b16 %v4674
    %v6029 = vunpack.c.h.b16 %v4674
    %v6030 = vunpack.c.l.b16 %v4675
    %v6031 = vunpack.c.h.b16 %v4675
    %v6032 = vunpack.c.l.b16 %v4676
    %v6033 = vunpack.c.h.b16 %v4676
    %v6034 = vunpack.c.l.b16 %v4677
    %v6035 = vunpack.c.h.b16 %v4677
    %v6036 = vunpack.c.l.b16 %v4678
    %v6037 = vunpack.c.h.b16 %v4678
    %v6038 = vunpack.c.l.b16 %v4679
    %v6039 = vunpack.c.h.b16 %v4679
    %v6040 = vunpack.c.l.b16 %v4680
    %v6041 = vunpack.c.h.b16 %v4680
    %v6042 = vunpack.c.l.b16 %v4681
    %v6043 = vunpack.c.h.b16 %v4681
    %v6044 = vunpack.c.l.b16 %v4682
    %v6045 = vunpack.c.h.b16 %v4682
    %v6046 = vunpack.c.l.b16 %v4683
    %v6047 = vunpack.c.h.b16 %v4683
    %v6048 = vunpack.c.l.b16 %v4684
    %v6049 = vunpack.c.h.b16 %v4684
    %v6050 = vunpack.c.l.b16 %v4685
    %v6051 = vunpack.c.h.b16 %v4685
    %v6052 = vunpack.c.l.b16 %v4686
    %v6053 = vunpack.c.h.b16 %v4686
    %v6054 = vunpack.c.l.b16 %v4687
    %v6055 = vunpack.c.h.b16 %v4687
    %v6056 = vunpack.c.l.b16 %v4688
    %v6057 = vunpack.c.h.b16 %v4688
    %v6058 = vunpack.c.l.b16 %v4689
    %v6059 = vunpack.c.h.b16 %v4689
    %v6060 = vunpack.c.l.b16 %v4690
    %v6061 = vunpack.c.h.b16 %v4690
    %v6062 = vunpack.c.l.b16 %v4691
    %v6063 = vunpack.c.h.b16 %v4691
    %v6064 = vunpack.c.l.b16 %v4692
    %v6065 = vunpack.c.h.b16 %v4692
    %v6066 = vunpack.c.l.b16 %v4693
    %v6067 = vunpack.c.h.b16 %v4693
    %v6068 = vunpack.c.l.b16 %v4694
    %v6069 = vunpack.c.h.b16 %v4694
    %v6070 = vunpack.c.l.b16 %v4695
    %v6071 = vunpack.c.h.b16 %v4695
    %v6072 = vunpack.c.l.b16 %v4696
    %v6073 = vunpack.c.h.b16 %v4696
    %v6074 = vunpack.c.l.b16 %v4697
    %v6075 = vunpack.c.h.b16 %v4697
    %v6076 = vunpack.c.l.b16 %v4698
    %v6077 = vunpack.c.h.b16 %v4698
    %v6078 = vunpack.c.l.b16 %v4699
    %v6079 = vunpack.c.h.b16 %v4699
    %v6080 = vunpack.c.l.b16 %v4700
    %v6081 = vunpack.c.h.b16 %v4700
    %v6082 = vunpack.c.l.b16 %v4701
    %v6083 = vunpack.c.h.b16 %v4701
    %v6084 = vunpack.c.l.b16 %v4702
    %v6085 = vunpack.c.h.b16 %v4702
    %v6086 = vunpack.c.l.b16 %v4703
    %v6087 = vunpack.c.h.b16 %v4703
    %v6088 = vunpack.c.l.b16 %v4704
    %v6089 = vunpack.c.h.b16 %v4704
    %v6090 = vunpack.c.l.b16 %v4705
    %v6091 = vunpack.c.h.b16 %v4705
    %v6092 = vunpack.c.l.b16 %v4706
    %v6093 = vunpack.c.h.b16 %v4706
    %v6094 = vunpack.c.l.b16 %v4707
    %v6095 = vunpack.c.h.b16 %v4707
    %v6096 = vunpack.c.l.b16 %v4708
    %v6097 = vunpack.c.h.b16 %v4708
    %v6098 = vunpack.c.l.b16 %v4709
    %v6099 = vunpack.c.h.b16 %v4709
    %v6100 = vunpack.c.l.b16 %v4710
    %v6101 = vunpack.c.h.b16 %v4710
    %v6102 = vunpack.c.l.b16 %v4711
    %v6103 = vunpack.c.h.b16 %v4711
    %v6104 = vunpack.c.l.b16 %v4712
    %v6105 = vunpack.c.h.b16 %v4712
    %v6106 = vunpack.c.l.b16 %v4713
    %v6107 = vunpack.c.h.b16 %v4713
    %v6108 = vunpack.c.l.b16 %v4714
    %v6109 = vunpack.c.h.b16 %v4714
    %v6110 = vunpack.c.l.b16 %v4715
    %v6111 = vunpack.c.h.b16 %v4715
    %v6112 = vunpack.c.l.b16 %v4716
    %v6113 = vunpack.c.h.b16 %v4716
    %v6114 = vunpack.c.l.b16 %v4717
    %v6115 = vunpack.c.h.b16 %v4717
    %v6116 = vunpack.c.l.b16 %v4718
    %v6117 = vunpack.c.h.b16 %v4718
    %v6118 = vunpack.c.l.b16 %v4719
    %v6119 = vunpack.c.h.b16 %v4719
    %v6120 = vunpack.c.l.b16 %v4720
    %v6121 = vunpack.c.h.b16 %v4720
    %v6122 = vunpack.c.l.b16 %v4721
    %v6123 = vunpack.c.h.b16 %v4721
    %v6124 = vunpack.c.l.b16 %v4722
    %v6125 = vunpack.c.h.b16 %v4722
    %v6126 = vunpack.c.l.b16 %v4723
    %v6127 = vunpack.c.h.b16 %v4723
    %v6128 = vunpack.c.l.b16 %v4724
    %v6129 = vunpack.c.h.b16 %v4724
    %v6130 = vunpack.c.l.b16 %v4725
    %v6131 = vunpack.c.h.b16 %v4725
    %v6132 = vunpack.c.l.b16 %v4726
    %v6133 = vunpack.c.h.b16 %v4726
    %v6134 = vunpack.c.l.b16 %v4727
    %v6135 = vunpack.c.h.b16 %v4727
    %v6136 = vunpack.c.l.b16 %v4728
    %v6137 = vunpack.c.h.b16 %v4728
    %v6138 = vunpack.c.l.b16 %v4729
    %v6139 = vunpack.c.h.b16 %v4729
    %v6140 = vunpack.c.l.b16 %v4730
    %v6141 = vunpack.c.h.b16 %v4730
    %v6142 = vunpack.c.l.b16 %v4731
    %v6143 = vunpack.c.h.b16 %v4731
    %v6144 = vunpack.c.l.b16 %v4732
    %v6145 = vunpack.c.h.b16 %v4732
    %v6146 = vunpack.c.l.b16 %v4733
    %v6147 = vunpack.c.h.b16 %v4733
    %v6148 = vunpack.c.l.b16 %v4734
    %v6149 = vunpack.c.h.b16 %v4734
    %v6150 = vunpack.c.l.b16 %v4735
    %v6151 = vunpack.c.h.b16 %v4735
    %v6152 = vunpack.c.l.b16 %v4736
    %v6153 = vunpack.c.h.b16 %v4736
    %v6154 = vunpack.c.l.b16 %v4737
    %v6155 = vunpack.c.h.b16 %v4737
    %v6156 = vunpack.c.l.b16 %v4738
    %v6157 = vunpack.c.h.b16 %v4738
    %v6158 = vunpack.c.l.b16 %v4739
    %v6159 = vunpack.c.h.b16 %v4739
    %v6160 = vunpack.c.l.b16 %v4740
    %v6161 = vunpack.c.h.b16 %v4740
    %v6162 = vunpack.c.l.b16 %v4741
    %v6163 = vunpack.c.h.b16 %v4741
    %v6164 = vunpack.c.l.b16 %v4742
    %v6165 = vunpack.c.h.b16 %v4742
    %v6166 = vunpack.c.l.b16 %v4743
    %v6167 = vunpack.c.h.b16 %v4743
    %v6168 = vunpack.c.l.b16 %v4744
    %v6169 = vunpack.c.h.b16 %v4744
    %v6170 = vunpack.c.l.b16 %v4745
    %v6171 = vunpack.c.h.b16 %v4745
    %v6172 = vunpack.c.l.b16 %v4746
    %v6173 = vunpack.c.h.b16 %v4746
    %v6174 = vunpack.c.l.b16 %v4747
    %v6175 = vunpack.c.h.b16 %v4747
    %v6176 = vunpack.c.l.b16 %v4748
    %v6177 = vunpack.c.h.b16 %v4748
    %v6178 = vunpack.c.l.b16 %v4749
    %v6179 = vunpack.c.h.b16 %v4749
    %v6180 = vunpack.c.l.b16 %v4750
    %v6181 = vunpack.c.h.b16 %v4750
    %v6182 = vunpack.c.l.b16 %v4751
    %v6183 = vunpack.c.h.b16 %v4751
    %v6184 = vunpack.c.l.b16 %v4752
    %v6185 = vunpack.c.h.b16 %v4752
    %v6186 = vunpack.c.l.b16 %v4753
    %v6187 = vunpack.c.h.b16 %v4753
    %v6188 = vunpack.c.l.b16 %v4754
    %v6189 = vunpack.c.h.b16 %v4754
    %v6190 = vunpack.c.l.b16 %v4755
    %v6191 = vunpack.c.h.b16 %v4755
    %v6192 = vunpack.c.l.b16 %v4756
    %v6193 = vunpack.c.h.b16 %v4756
    %v6194 = vunpack.c.l.b16 %v4757
    %v6195 = vunpack.c.h.b16 %v4757
    %v6196 = vunpack.c.l.b16 %v4758
    %v6197 = vunpack.c.h.b16 %v4758
    %v6198 = vunpack.c.l.b16 %v4759
    %v6199 = vunpack.c.h.b16 %v4759
    %v6200 = vunpack.c.l.b16 %v4760
    %v6201 = vunpack.c.h.b16 %v4760
    %v6202 = vunpack.c.l.b16 %v4761
    %v6203 = vunpack.c.h.b16 %v4761
    %v6204 = vunpack.c.l.b16 %v4762
    %v6205 = vunpack.c.h.b16 %v4762
    %v6206 = vunpack.c.l.b16 %v4763
    %v6207 = vunpack.c.h.b16 %v4763
    %v6208 = vunpack.c.l.b16 %v4764
    %v6209 = vunpack.c.h.b16 %v4764
    %v6210 = vunpack.c.l.b16 %v4765
    %v6211 = vunpack.c.h.b16 %v4765
    %v6212 = vunpack.c.l.b16 %v4766
    %v6213 = vunpack.c.h.b16 %v4766
    %v6214 = vunpack.c.l.b16 %v4767
    %v6215 = vunpack.c.h.b16 %v4767
    %v6216 = vunpack.c.l.b16 %v4768
    %v6217 = vunpack.c.h.b16 %v4768
    %v6218 = vunpack.c.l.b16 %v4769
    %v6219 = vunpack.c.h.b16 %v4769
    %v6220 = vunpack.c.l.b16 %v4770
    %v6221 = vunpack.c.h.b16 %v4770
    %v6222 = vunpack.c.l.b16 %v4771
    %v6223 = vunpack.c.h.b16 %v4771
    %v6224 = vunpack.c.l.b16 %v4772
    %v6225 = vunpack.c.h.b16 %v4772
    %v6226 = vunpack.c.l.b16 %v4773
    %v6227 = vunpack.c.h.b16 %v4773
    %v6228 = vunpack.c.l.b16 %v4774
    %v6229 = vunpack.c.h.b16 %v4774
    %v6230 = vunpack.c.l.b16 %v4775
    %v6231 = vunpack.c.h.b16 %v4775
    %v6232 = vunpack.c.l.b16 %v4776
    %v6233 = vunpack.c.h.b16 %v4776
    %v6234 = vunpack.c.l.b16 %v4777
    %v6235 = vunpack.c.h.b16 %v4777
    %v6236 = vunpack.c.l.b16 %v4778
    %v6237 = vunpack.c.h.b16 %v4778
    %v6238 = vunpack.c.l.b16 %v4779
    %v6239 = vunpack.c.h.b16 %v4779
    %v6240 = vunpack.c.l.b16 %v4780
    %v6241 = vunpack.c.h.b16 %v4780
    %v6242 = vunpack.c.l.b16 %v4781
    %v6243 = vunpack.c.h.b16 %v4781
    %v6244 = vunpack.c.l.b16 %v4782
    %v6245 = vunpack.c.h.b16 %v4782
    %v6246 = vunpack.c.l.b16 %v4783
    %v6247 = vunpack.c.h.b16 %v4783
    %v6248 = vunpack.c.l.b16 %v4784
    %v6249 = vunpack.c.h.b16 %v4784
    %v6250 = vunpack.c.l.b16 %v4785
    %v6251 = vunpack.c.h.b16 %v4785
    %v6252 = vunpack.c.l.b16 %v4786
    %v6253 = vunpack.c.h.b16 %v4786
    %v6254 = vunpack.c.l.b16 %v4787
    %v6255 = vunpack.c.h.b16 %v4787
    %v6256 = vunpack.c.l.b16 %v4788
    %v6257 = vunpack.c.h.b16 %v4788
    %v6258 = vunpack.c.l.b16 %v4789
    %v6259 = vunpack.c.h.b16 %v4789
    %v6260 = vunpack.c.l.b16 %v4790
    %v6261 = vunpack.c.h.b16 %v4790
    %v6262 = vunpack.c.l.b16 %v4791
    %v6263 = vunpack.c.h.b16 %v4791
    %v6264 = vunpack.c.l.b16 %v4792
    %v6265 = vunpack.c.h.b16 %v4792
    %v6266 = vunpack.c.l.b16 %v4793
    %v6267 = vunpack.c.h.b16 %v4793
    %v6268 = vunpack.c.l.b16 %v4794
    %v6269 = vunpack.c.h.b16 %v4794
    %v6270 = vunpack.c.l.b16 %v4795
    %v6271 = vunpack.c.h.b16 %v4795
    %v6272 = vunpack.c.l.b16 %v4796
    %v6273 = vunpack.c.h.b16 %v4796
    %v6274 = vunpack.c.l.b16 %v4797
    %v6275 = vunpack.c.h.b16 %v4797
    %v6276 = vunpack.c.l.b16 %v4798
    %v6277 = vunpack.c.h.b16 %v4798
    %v6278 = vunpack.c.l.b16 %v4799
    %v6279 = vunpack.c.h.b16 %v4799
    %v6280 = vunpack.c.l.b16 %v4800
    %v6281 = vunpack.c.h.b16 %v4800
    %v6282 = vunpack.c.l.b16 %v4801
    %v6283 = vunpack.c.h.b16 %v4801
    %v6284 = vunpack.c.l.b16 %v4802
    %v6285 = vunpack.c.h.b16 %v4802
    %v6286 = vunpack.c.l.b16 %v4803
    %v6287 = vunpack.c.h.b16 %v4803
    %v6288 = vunpack.c.l.b16 %v4804
    %v6289 = vunpack.c.h.b16 %v4804
    %v6290 = vunpack.c.l.b16 %v4805
    %v6291 = vunpack.c.h.b16 %v4805
    %v6292 = vunpack.c.l.b16 %v4806
    %v6293 = vunpack.c.h.b16 %v4806
    %v6294 = vunpack.c.l.b16 %v4807
    %v6295 = vunpack.c.h.b16 %v4807
    %v6296 = vunpack.c.l.b16 %v4808
    %v6297 = vunpack.c.h.b16 %v4808
    %v6298 = vunpack.c.l.b16 %v4809
    %v6299 = vunpack.c.h.b16 %v4809
    %v6300 = vunpack.c.l.b16 %v4810
    %v6301 = vunpack.c.h.b16 %v4810
    %v6302 = vunpack.c.l.b16 %v4811
    %v6303 = vunpack.c.h.b16 %v4811
    %v6304 = vunpack.c.l.b16 %v4812
    %v6305 = vunpack.c.h.b16 %v4812
    %v6306 = vunpack.c.l.b16 %v4813
    %v6307 = vunpack.c.h.b16 %v4813
    %v6308 = vunpack.c.l.b16 %v4814
    %v6309 = vunpack.c.h.b16 %v4814
    %v6310 = vunpack.c.l.b16 %v4815
    %v6311 = vunpack.c.h.b16 %v4815
    %v6312 = vunpack.c.l.b16 %v4816
    %v6313 = vunpack.c.h.b16 %v4816
    %v6314 = vunpack.c.l.b16 %v4817
    %v6315 = vunpack.c.h.b16 %v4817
    %v6316 = vunpack.c.l.b16 %v4818
    %v6317 = vunpack.c.h.b16 %v4818
    %v6318 = vunpack.c.l.b16 %v4819
    %v6319 = vunpack.c.h.b16 %v4819
    %v6320 = vunpack.c.l.b16 %v4820
    %v6321 = vunpack.c.h.b16 %v4820
    %v6322 = vunpack.c.l.b16 %v4821
    %v6323 = vunpack.c.h.b16 %v4821
    %v6324 = vunpack.c.l.b16 %v4822
    %v6325 = vunpack.c.h.b16 %v4822
    %v6326 = vunpack.c.l.b16 %v4823
    %v6327 = vunpack.c.h.b16 %v4823
    %v6328 = vunpack.c.l.b16 %v4824
    %v6329 = vunpack.c.h.b16 %v4824
    %v6330 = vunpack.c.l.b16 %v4825
    %v6331 = vunpack.c.h.b16 %v4825
    %v6332 = vunpack.c.l.b16 %v4826
    %v6333 = vunpack.c.h.b16 %v4826
    %v6334 = vunpack.c.l.b16 %v4827
    %v6335 = vunpack.c.h.b16 %v4827
    %v6336 = vunpack.c.l.b16 %v4828
    %v6337 = vunpack.c.h.b16 %v4828
    %v6338 = vunpack.c.l.b16 %v4829
    %v6339 = vunpack.c.h.b16 %v4829
    %v6340 = vunpack.c.l.b16 %v4830
    %v6341 = vunpack.c.h.b16 %v4830
    %v6342 = vunpack.c.l.b16 %v4831
    %v6343 = vunpack.c.h.b16 %v4831
    %v6344 = vunpack.c.l.b16 %v4832
    %v6345 = vunpack.c.h.b16 %v4832
    %v6346 = vunpack.c.l.b16 %v4833
    %v6347 = vunpack.c.h.b16 %v4833
    %v6348 = vunpack.c.l.b16 %v4834
    %v6349 = vunpack.c.h.b16 %v4834
    %v6350 = vunpack.c.l.b16 %v4835
    %v6351 = vunpack.c.h.b16 %v4835
    %v6352 = vunpack.c.l.b16 %v4836
    %v6353 = vunpack.c.h.b16 %v4836
    %v6354 = vunpack.c.l.b16 %v4837
    %v6355 = vunpack.c.h.b16 %v4837
    %v6356 = vunpack.c.l.b16 %v4838
    %v6357 = vunpack.c.h.b16 %v4838
    %v6358 = vunpack.c.l.b16 %v4839
    %v6359 = vunpack.c.h.b16 %v4839
    %v6360 = vunpack.c.l.b16 %v4840
    %v6361 = vunpack.c.h.b16 %v4840
    %v6362 = vunpack.c.l.b16 %v4841
    %v6363 = vunpack.c.h.b16 %v4841
    %v6364 = vunpack.c.l.b16 %v4842
    %v6365 = vunpack.c.h.b16 %v4842
    %v6366 = vunpack.c.l.b16 %v4843
    %v6367 = vunpack.c.h.b16 %v4843
    %v6368 = vunpack.c.l.b16 %v4844
    %v6369 = vunpack.c.h.b16 %v4844
    %v6370 = vunpack.c.l.b16 %v4845
    %v6371 = vunpack.c.h.b16 %v4845
    %v6372 = vunpack.c.l.b16 %v4846
    %v6373 = vunpack.c.h.b16 %v4846
    %v6374 = vunpack.c.l.b16 %v4847
    %v6375 = vunpack.c.h.b16 %v4847
    %v6376 = vunpack.c.l.b16 %v4848
    %v6377 = vunpack.c.h.b16 %v4848
    %v6378 = vunpack.c.l.b16 %v4849
    %v6379 = vunpack.c.h.b16 %v4849
    %v6380 = vunpack.c.l.b16 %v4850
    %v6381 = vunpack.c.h.b16 %v4850
    %v6382 = vunpack.c.l.b16 %v4851
    %v6383 = vunpack.c.h.b16 %v4851
    %v6384 = vunpack.c.l.b16 %v4852
    %v6385 = vunpack.c.h.b16 %v4852
    %v6386 = vunpack.c.l.b16 %v4853
    %v6387 = vunpack.c.h.b16 %v4853
    %v6388 = vunpack.c.l.b16 %v4854
    %v6389 = vunpack.c.h.b16 %v4854
    %v6390 = vunpack.c.l.b16 %v4855
    %v6391 = vunpack.c.h.b16 %v4855
    %v6392 = vunpack.c.l.b16 %v4856
    %v6393 = vunpack.c.h.b16 %v4856
    %v6394 = vunpack.c.l.b16 %v4857
    %v6395 = vunpack.c.h.b16 %v4857
    %v6396 = vunpack.c.l.b16 %v4858
    %v6397 = vunpack.c.h.b16 %v4858
    %v6398 = vunpack.c.l.b16 %v4859
    %v6399 = vunpack.c.h.b16 %v4859
    %v6400 = vunpack.c.l.b16 %v4860
    %v6401 = vunpack.c.h.b16 %v4860
    %v6402 = vunpack.c.l.b16 %v4861
    %v6403 = vunpack.c.h.b16 %v4861
    %v6404 = vunpack.c.l.b16 %v4862
    %v6405 = vunpack.c.h.b16 %v4862
    %v6406 = vunpack.c.l.b16 %v4863
    %v6407 = vunpack.c.h.b16 %v4863
    %v6408 = vunpack.c.l.b16 %v4864
    %v6409 = vunpack.c.h.b16 %v4864
    %v6410 = vunpack.c.l.b16 %v4865
    %v6411 = vunpack.c.h.b16 %v4865
    %v6412 = vunpack.c.l.b16 %v4866
    %v6413 = vunpack.c.h.b16 %v4866
    %v6414 = vunpack.c.l.b16 %v4867
    %v6415 = vunpack.c.h.b16 %v4867
    %v6416 = vunpack.c.l.b16 %v4868
    %v6417 = vunpack.c.h.b16 %v4868
    %v6418 = vunpack.c.l.b16 %v4869
    %v6419 = vunpack.c.h.b16 %v4869
    %v6420 = vunpack.c.l.b16 %v4870
    %v6421 = vunpack.c.h.b16 %v4870
    %v6422 = vunpack.c.l.b16 %v4871
    %v6423 = vunpack.c.h.b16 %v4871
    %v6424 = vunpack.c.l.b16 %v4872
    %v6425 = vunpack.c.h.b16 %v4872
    %v6426 = vunpack.c.l.b16 %v4873
    %v6427 = vunpack.c.h.b16 %v4873
    %v6428 = vpack.c.b16 %v5412, %v5404
    %v6429 = vpack.c.b16 %v5413, %v5405
    %v6430 = vpack.c.b16 %v5414, %v5406
    %v6431 = vpack.c.b16 %v5415, %v5407
    %v6432 = vpack.c.b16 %v5416, %v5408
    %v6433 = vpack.c.b16 %v5417, %v5409
    %v6434 = vpack.c.b16 %v5418, %v5410
    %v6435 = vpack.c.b16 %v5419, %v5411
    %v6436 = vpack.c.b16 %v5428, %v5420
    %v6437 = vpack.c.b16 %v5429, %v5421
    %v6438 = vpack.c.b16 %v5430, %v5422
    %v6439 = vpack.c.b16 %v5431, %v5423
    %v6440 = vpack.c.b16 %v5432, %v5424
    %v6441 = vpack.c.b16 %v5433, %v5425
    %v6442 = vpack.c.b16 %v5434, %v5426
    %v6443 = vpack.c.b16 %v5435, %v5427
    %v6444 = vpack.c.b16 %v5444, %v5436
    %v6445 = vpack.c.b16 %v5445, %v5437
    %v6446 = vpack.c.b16 %v5446, %v5438
    %v6447 = vpack.c.b16 %v5447, %v5439
    %v6448 = vpack.c.b16 %v5448, %v5440
    %v6449 = vpack.c.b16 %v5449, %v5441
    %v6450 = vpack.c.b16 %v5450, %v5442
    %v6451 = vpack.c.b16 %v5451, %v5443
    %v6452 = vpack.c.b16 %v5460, %v5452
    %v6453 = vpack.c.b16 %v5461, %v5453
    %v6454 = vpack.c.b16 %v5462, %v5454
    %v6455 = vpack.c.b16 %v5463, %v5455
    %v6456 = vpack.c.b16 %v5464, %v5456
    %v6457 = vpack.c.b16 %v5465, %v5457
    %v6458 = vpack.c.b16 %v5466, %v5458
    %v6459 = vpack.c.b16 %v5467, %v5459
    %v6460 = vpack.c.b16 %v5476, %v5468
    %v6461 = vpack.c.b16 %v5477, %v5469
    %v6462 = vpack.c.b16 %v5478, %v5470
    %v6463 = vpack.c.b16 %v5479, %v5471
    %v6464 = vpack.c.b16 %v5480, %v5472
    %v6465 = vpack.c.b16 %v5481, %v5473
    %v6466 = vpack.c.b16 %v5482, %v5474
    %v6467 = vpack.c.b16 %v5483, %v5475
    %v6468 = vpack.c.b16 %v5492, %v5484
    %v6469 = vpack.c.b16 %v5493, %v5485
    %v6470 = vpack.c.b16 %v5494, %v5486
    %v6471 = vpack.c.b16 %v5495, %v5487
    %v6472 = vpack.c.b16 %v5496, %v5488
    %v6473 = vpack.c.b16 %v5497, %v5489
    %v6474 = vpack.c.b16 %v5498, %v5490
    %v6475 = vpack.c.b16 %v5499, %v5491
    %v6476 = vpack.c.b16 %v5508, %v5500
    %v6477 = vpack.c.b16 %v5509, %v5501
    %v6478 = vpack.c.b16 %v5510, %v5502
    %v6479 = vpack.c.b16 %v5511, %v5503
    %v6480 = vpack.c.b16 %v5512, %v5504
    %v6481 = vpack.c.b16 %v5513, %v5505
    %v6482 = vpack.c.b16 %v5514, %v5506
    %v6483 = vpack.c.b16 %v5515, %v5507
    %v6484 = vpack.c.b16 %v5524, %v5516
    %v6485 = vpack.c.b16 %v5525, %v5517
    %v6486 = vpack.c.b16 %v5526, %v5518
    %v6487 = vpack.c.b16 %v5527, %v5519
    %v6488 = vpack.c.b16 %v5528, %v5520
    %v6489 = vpack.c.b16 %v5529, %v5521
    %v6490 = vpack.c.b16 %v5530, %v5522
    %v6491 = vpack.c.b16 %v5531, %v5523
    %v6492 = vpack.c.b16 %v5540, %v5532
    %v6493 = vpack.c.b16 %v5541, %v5533
    %v6494 = vpack.c.b16 %v5542, %v5534
    %v6495 = vpack.c.b16 %v5543, %v5535
    %v6496 = vpack.c.b16 %v5544, %v5536
    %v6497 = vpack.c.b16 %v5545, %v5537
    %v6498 = vpack.c.b16 %v5546, %v5538
    %v6499 = vpack.c.b16 %v5547, %v5539
    %v6500 = vpack.c.b16 %v5556, %v5548
    %v6501 = vpack.c.b16 %v5557, %v5549
    %v6502 = vpack.c.b16 %v5558, %v5550
    %v6503 = vpack.c.b16 %v5559, %v5551
    %v6504 = vpack.c.b16 %v5560, %v5552
    %v6505 = vpack.c.b16 %v5561, %v5553
    %v6506 = vpack.c.b16 %v5562, %v5554
    %v6507 = vpack.c.b16 %v5563, %v5555
    %v6508 = vpack.c.b16 %v5572, %v5564
    %v6509 = vpack.c.b16 %v5573, %v5565
    %v6510 = vpack.c.b16 %v5574, %v5566
    %v6511 = vpack.c.b16 %v5575, %v5567
    %v6512 = vpack.c.b16 %v5576, %v5568
    %v6513 = vpack.c.b16 %v5577, %v5569
    %v6514 = vpack.c.b16 %v5578, %v5570
    %v6515 = vpack.c.b16 %v5579, %v5571
    %v6516 = vpack.c.b16 %v5588, %v5580
    %v6517 = vpack.c.b16 %v5589, %v5581
    %v6518 = vpack.c.b16 %v5590, %v5582
    %v6519 = vpack.c.b16 %v5591, %v5583
    %v6520 = vpack.c.b16 %v5592, %v5584
    %v6521 = vpack.c.b16 %v5593, %v5585
    %v6522 = vpack.c.b16 %v5594, %v5586
    %v6523 = vpack.c.b16 %v5595, %v5587
    %v6524 = vpack.c.b16 %v5604, %v5596
    %v6525 = vpack.c.b16 %v5605, %v5597
    %v6526 = vpack.c.b16 %v5606, %v5598
    %v6527 = vpack.c.b16 %v5607, %v5599
    %v6528 = vpack.c.b16 %v5608, %v5600
    %v6529 = vpack.c.b16 %v5609, %v5601
    %v6530 = vpack.c.b16 %v5610, %v5602
    %v6531 = vpack.c.b16 %v5611, %v5603
    %v6532 = vpack.c.b16 %v5620, %v5612
    %v6533 = vpack.c.b16 %v5621, %v5613
    %v6534 = vpack.c.b16 %v5622, %v5614
    %v6535 = vpack.c.b16 %v5623, %v5615
    %v6536 = vpack.c.b16 %v5624, %v5616
    %v6537 = vpack.c.b16 %v5625, %v5617
    %v6538 = vpack.c.b16 %v5626, %v5618
    %v6539 = vpack.c.b16 %v5627, %v5619
    %v6540 = vpack.c.b16 %v5636, %v5628
    %v6541 = vpack.c.b16 %v5637, %v5629
    %v6542 = vpack.c.b16 %v5638, %v5630
    %v6543 = vpack.c.b16 %v5639, %v5631
    %v6544 = vpack.c.b16 %v5640, %v5632
    %v6545 = vpack.c.b16 %v5641, %v5633
    %v6546 = vpack.c.b16 %v5642, %v5634
    %v6547 = vpack.c.b16 %v5643, %v5635
    %v6548 = vpack.c.b16 %v5652, %v5644
    %v6549 = vpack.c.b16 %v5653, %v5645
    %v6550 = vpack.c.b16 %v5654, %v5646
    %v6551 = vpack.c.b16 %v5655, %v5647
    %v6552 = vpack.c.b16 %v5656, %v5648
    %v6553 = vpack.c.b16 %v5657, %v5649
    %v6554 = vpack.c.b16 %v5658, %v5650
    %v6555 = vpack.c.b16 %v5659, %v5651
    %v6556 = vpack.c.b16 %v5668, %v5660
    %v6557 = vpack.c.b16 %v5669, %v5661
    %v6558 = vpack.c.b16 %v5670, %v5662
    %v6559 = vpack.c.b16 %v5671, %v5663
    %v6560 = vpack.c.b16 %v5672, %v5664
    %v6561 = vpack.c.b16 %v5673, %v5665
    %v6562 = vpack.c.b16 %v5674, %v5666
    %v6563 = vpack.c.b16 %v5675, %v5667
    %v6564 = vpack.c.b16 %v5684, %v5676
    %v6565 = vpack.c.b16 %v5685, %v5677
    %v6566 = vpack.c.b16 %v5686, %v5678
    %v6567 = vpack.c.b16 %v5687, %v5679
    %v6568 = vpack.c.b16 %v5688, %v5680
    %v6569 = vpack.c.b16 %v5689, %v5681
    %v6570 = vpack.c.b16 %v5690, %v5682
    %v6571 = vpack.c.b16 %v5691, %v5683
    %v6572 = vpack.c.b16 %v5700, %v5692
    %v6573 = vpack.c.b16 %v5701, %v5693
    %v6574 = vpack.c.b16 %v5702, %v5694
    %v6575 = vpack.c.b16 %v5703, %v5695
    %v6576 = vpack.c.b16 %v5704, %v5696
    %v6577 = vpack.c.b16 %v5705, %v5697
    %v6578 = vpack.c.b16 %v5706, %v5698
    %v6579 = vpack.c.b16 %v5707, %v5699
    %v6580 = vpack.c.b16 %v5716, %v5708
    %v6581 = vpack.c.b16 %v5717, %v5709
    %v6582 = vpack.c.b16 %v5718, %v5710
    %v6583 = vpack.c.b16 %v5719, %v5711
    %v6584 = vpack.c.b16 %v5720, %v5712
    %v6585 = vpack.c.b16 %v5721, %v5713
    %v6586 = vpack.c.b16 %v5722, %v5714
    %v6587 = vpack.c.b16 %v5723, %v5715
    %v6588 = vpack.c.b16 %v5732, %v5724
    %v6589 = vpack.c.b16 %v5733, %v5725
    %v6590 = vpack.c.b16 %v5734, %v5726
    %v6591 = vpack.c.b16 %v5735, %v5727
    %v6592 = vpack.c.b16 %v5736, %v5728
    %v6593 = vpack.c.b16 %v5737, %v5729
    %v6594 = vpack.c.b16 %v5738, %v5730
    %v6595 = vpack.c.b16 %v5739, %v5731
    %v6596 = vpack.c.b16 %v5748, %v5740
    %v6597 = vpack.c.b16 %v5749, %v5741
    %v6598 = vpack.c.b16 %v5750, %v5742
    %v6599 = vpack.c.b16 %v5751, %v5743
    %v6600 = vpack.c.b16 %v5752, %v5744
    %v6601 = vpack.c.b16 %v5753, %v5745
    %v6602 = vpack.c.b16 %v5754, %v5746
    %v6603 = vpack.c.b16 %v5755, %v5747
    %v6604 = vpack.c.b16 %v5764, %v5756
    %v6605 = vpack.c.b16 %v5765, %v5757
    %v6606 = vpack.c.b16 %v5766, %v5758
    %v6607 = vpack.c.b16 %v5767, %v5759
    %v6608 = vpack.c.b16 %v5768, %v5760
    %v6609 = vpack.c.b16 %v5769, %v5761
    %v6610 = vpack.c.b16 %v5770, %v5762
    %v6611 = vpack.c.b16 %v5771, %v5763
    %v6612 = vpack.c.b16 %v5780, %v5772
    %v6613 = vpack.c.b16 %v5781, %v5773
    %v6614 = vpack.c.b16 %v5782, %v5774
    %v6615 = vpack.c.b16 %v5783, %v5775
    %v6616 = vpack.c.b16 %v5784, %v5776
    %v6617 = vpack.c.b16 %v5785, %v5777
    %v6618 = vpack.c.b16 %v5786, %v5778
    %v6619 = vpack.c.b16 %v5787, %v5779
    %v6620 = vpack.c.b16 %v5796, %v5788
    %v6621 = vpack.c.b16 %v5797, %v5789
    %v6622 = vpack.c.b16 %v5798, %v5790
    %v6623 = vpack.c.b16 %v5799, %v5791
    %v6624 = vpack.c.b16 %v5800, %v5792
    %v6625 = vpack.c.b16 %v5801, %v5793
    %v6626 = vpack.c.b16 %v5802, %v5794
    %v6627 = vpack.c.b16 %v5803, %v5795
    %v6628 = vpack.c.b16 %v5812, %v5804
    %v6629 = vpack.c.b16 %v5813, %v5805
    %v6630 = vpack.c.b16 %v5814, %v5806
    %v6631 = vpack.c.b16 %v5815, %v5807
    %v6632 = vpack.c.b16 %v5816, %v5808
    %v6633 = vpack.c.b16 %v5817, %v5809
    %v6634 = vpack.c.b16 %v5818, %v5810
    %v6635 = vpack.c.b16 %v5819, %v5811
    %v6636 = vpack.c.b16 %v5828, %v5820
    %v6637 = vpack.c.b16 %v5829, %v5821
    %v6638 = vpack.c.b16 %v5830, %v5822
    %v6639 = vpack.c.b16 %v5831, %v5823
    %v6640 = vpack.c.b16 %v5832, %v5824
    %v6641 = vpack.c.b16 %v5833, %v5825
    %v6642 = vpack.c.b16 %v5834, %v5826
    %v6643 = vpack.c.b16 %v5835, %v5827
    %v6644 = vpack.c.b16 %v5844, %v5836
    %v6645 = vpack.c.b16 %v5845, %v5837
    %v6646 = vpack.c.b16 %v5846, %v5838
    %v6647 = vpack.c.b16 %v5847, %v5839
    %v6648 = vpack.c.b16 %v5848, %v5840
    %v6649 = vpack.c.b16 %v5849, %v5841
    %v6650 = vpack.c.b16 %v5850, %v5842
    %v6651 = vpack.c.b16 %v5851, %v5843
    %v6652 = vpack.c.b16 %v5860, %v5852
    %v6653 = vpack.c.b16 %v5861, %v5853
    %v6654 = vpack.c.b16 %v5862, %v5854
    %v6655 = vpack.c.b16 %v5863, %v5855
    %v6656 = vpack.c.b16 %v5864, %v5856
    %v6657 = vpack.c.b16 %v5865, %v5857
    %v6658 = vpack.c.b16 %v5866, %v5858
    %v6659 = vpack.c.b16 %v5867, %v5859
    %v6660 = vpack.c.b16 %v5876, %v5868
    %v6661 = vpack.c.b16 %v5877, %v5869
    %v6662 = vpack.c.b16 %v5878, %v5870
    %v6663 = vpack.c.b16 %v5879, %v5871
    %v6664 = vpack.c.b16 %v5880, %v5872
    %v6665 = vpack.c.b16 %v5881, %v5873
    %v6666 = vpack.c.b16 %v5882, %v5874
    %v6667 = vpack.c.b16 %v5883, %v5875
    %v6668 = vpack.c.b16 %v5892, %v5884
    %v6669 = vpack.c.b16 %v5893, %v5885
    %v6670 = vpack.c.b16 %v5894, %v5886
    %v6671 = vpack.c.b16 %v5895, %v5887
    %v6672 = vpack.c.b16 %v5896, %v5888
    %v6673 = vpack.c.b16 %v5897, %v5889
    %v6674 = vpack.c.b16 %v5898, %v5890
    %v6675 = vpack.c.b16 %v5899, %v5891
    %v6676 = vpack.c.b16 %v5908, %v5900
    %v6677 = vpack.c.b16 %v5909, %v5901
    %v6678 = vpack.c.b16 %v5910, %v5902
    %v6679 = vpack.c.b16 %v5911, %v5903
    %v6680 = vpack.c.b16 %v5912, %v5904
    %v6681 = vpack.c.b16 %v5913, %v5905
    %v6682 = vpack.c.b16 %v5914, %v5906
    %v6683 = vpack.c.b16 %v5915, %v5907
    %v6684 = vpack.c.b16 %v5924, %v5916
    %v6685 = vpack.c.b16 %v5925, %v5917
    %v6686 = vpack.c.b16 %v5926, %v5918
    %v6687 = vpack.c.b16 %v5927, %v5919
    %v6688 = vpack.c.b16 %v5928, %v5920
    %v6689 = vpack.c.b16 %v5929, %v5921
    %v6690 = vpack.c.b16 %v5930, %v5922
    %v6691 = vpack.c.b16 %v5931, %v5923
    %v6692 = vpack.c.b16 %v5940, %v5932
    %v6693 = vpack.c.b16 %v5941, %v5933
    %v6694 = vpack.c.b16 %v5942, %v5934
    %v6695 = vpack.c.b16 %v5943, %v5935
    %v6696 = vpack.c.b16 %v5944, %v5936
    %v6697 = vpack.c.b16 %v5945, %v5937
    %v6698 = vpack.c.b16 %v5946, %v5938
    %v6699 = vpack.c.b16 %v5947, %v5939
    %v6700 = vpack.c.b16 %v5956, %v5948
    %v6701 = vpack.c.b16 %v5957, %v5949
    %v6702 = vpack.c.b16 %v5958, %v5950
    %v6703 = vpack.c.b16 %v5959, %v5951
    %v6704 = vpack.c.b16 %v5960, %v5952
    %v6705 = vpack.c.b16 %v5961, %v5953
    %v6706 = vpack.c.b16 %v5962, %v5954
    %v6707 = vpack.c.b16 %v5963, %v5955
    %v6708 = vpack.c.b16 %v5972, %v5964
    %v6709 = vpack.c.b16 %v5973, %v5965
    %v6710 = vpack.c.b16 %v5974, %v5966
    %v6711 = vpack.c.b16 %v5975, %v5967
    %v6712 = vpack.c.b16 %v5976, %v5968
    %v6713 = vpack.c.b16 %v5977, %v5969
    %v6714 = vpack.c.b16 %v5978, %v5970
    %v6715 = vpack.c.b16 %v5979, %v5971
    %v6716 = vpack.c.b16 %v5988, %v5980
    %v6717 = vpack.c.b16 %v5989, %v5981
    %v6718 = vpack.c.b16 %v5990, %v5982
    %v6719 = vpack.c.b16 %v5991, %v5983
    %v6720 = vpack.c.b16 %v5992, %v5984
    %v6721 = vpack.c.b16 %v5993, %v5985
    %v6722 = vpack.c.b16 %v5994, %v5986
    %v6723 = vpack.c.b16 %v5995, %v5987
    %v6724 = vpack.c.b16 %v6004, %v5996
    %v6725 = vpack.c.b16 %v6005, %v5997
    %v6726 = vpack.c.b16 %v6006, %v5998
    %v6727 = vpack.c.b16 %v6007, %v5999
    %v6728 = vpack.c.b16 %v6008, %v6000
    %v6729 = vpack.c.b16 %v6009, %v6001
    %v6730 = vpack.c.b16 %v6010, %v6002
    %v6731 = vpack.c.b16 %v6011, %v6003
    %v6732 = vpack.c.b16 %v6020, %v6012
    %v6733 = vpack.c.b16 %v6021, %v6013
    %v6734 = vpack.c.b16 %v6022, %v6014
    %v6735 = vpack.c.b16 %v6023, %v6015
    %v6736 = vpack.c.b16 %v6024, %v6016
    %v6737 = vpack.c.b16 %v6025, %v6017
    %v6738 = vpack.c.b16 %v6026, %v6018
    %v6739 = vpack.c.b16 %v6027, %v6019
    %v6740 = vpack.c.b16 %v6036, %v6028
    %v6741 = vpack.c.b16 %v6037, %v6029
    %v6742 = vpack.c.b16 %v6038, %v6030
    %v6743 = vpack.c.b16 %v6039, %v6031
    %v6744 = vpack.c.b16 %v6040, %v6032
    %v6745 = vpack.c.b16 %v6041, %v6033
    %v6746 = vpack.c.b16 %v6042, %v6034
    %v6747 = vpack.c.b16 %v6043, %v6035
    %v6748 = vpack.c.b16 %v6052, %v6044
    %v6749 = vpack.c.b16 %v6053, %v6045
    %v6750 = vpack.c.b16 %v6054, %v6046
    %v6751 = vpack.c.b16 %v6055, %v6047
    %v6752 = vpack.c.b16 %v6056, %v6048
    %v6753 = vpack.c.b16 %v6057, %v6049
    %v6754 = vpack.c.b16 %v6058, %v6050
    %v6755 = vpack.c.b16 %v6059, %v6051
    %v6756 = vpack.c.b16 %v6068, %v6060
    %v6757 = vpack.c.b16 %v6069, %v6061
    %v6758 = vpack.c.b16 %v6070, %v6062
    %v6759 = vpack.c.b16 %v6071, %v6063
    %v6760 = vpack.c.b16 %v6072, %v6064
    %v6761 = vpack.c.b16 %v6073, %v6065
    %v6762 = vpack.c.b16 %v6074, %v6066
    %v6763 = vpack.c.b16 %v6075, %v6067
    %v6764 = vpack.c.b16 %v6084, %v6076
    %v6765 = vpack.c.b16 %v6085, %v6077
    %v6766 = vpack.c.b16 %v6086, %v6078
    %v6767 = vpack.c.b16 %v6087, %v6079
    %v6768 = vpack.c.b16 %v6088, %v6080
    %v6769 = vpack.c.b16 %v6089, %v6081
    %v6770 = vpack.c.b16 %v6090, %v6082
    %v6771 = vpack.c.b16 %v6091, %v6083
    %v6772 = vpack.c.b16 %v6100, %v6092
    %v6773 = vpack.c.b16 %v6101, %v6093
    %v6774 = vpack.c.b16 %v6102, %v6094
    %v6775 = vpack.c.b16 %v6103, %v6095
    %v6776 = vpack.c.b16 %v6104, %v6096
    %v6777 = vpack.c.b16 %v6105, %v6097
    %v6778 = vpack.c.b16 %v6106, %v6098
    %v6779 = vpack.c.b16 %v6107, %v6099
    %v6780 = vpack.c.b16 %v6116, %v6108
    %v6781 = vpack.c.b16 %v6117, %v6109
    %v6782 = vpack.c.b16 %v6118, %v6110
    %v6783 = vpack.c.b16 %v6119, %v6111
    %v6784 = vpack.c.b16 %v6120, %v6112
    %v6785 = vpack.c.b16 %v6121, %v6113
    %v6786 = vpack.c.b16 %v6122, %v6114
    %v6787 = vpack.c.b16 %v6123, %v6115
    %v6788 = vpack.c.b16 %v6132, %v6124
    %v6789 = vpack.c.b16 %v6133, %v6125
    %v6790 = vpack.c.b16 %v6134, %v6126
    %v6791 = vpack.c.b16 %v6135, %v6127
    %v6792 = vpack.c.b16 %v6136, %v6128
    %v6793 = vpack.c.b16 %v6137, %v6129
    %v6794 = vpack.c.b16 %v6138, %v6130
    %v6795 = vpack.c.b16 %v6139, %v6131
    %v6796 = vpack.c.b16 %v6148, %v6140
    %v6797 = vpack.c.b16 %v6149, %v6141
    %v6798 = vpack.c.b16 %v6150, %v6142
    %v6799 = vpack.c.b16 %v6151, %v6143
    %v6800 = vpack.c.b16 %v6152, %v6144
    %v6801 = vpack.c.b16 %v6153, %v6145
    %v6802 = vpack.c.b16 %v6154, %v6146
    %v6803 = vpack.c.b16 %v6155, %v6147
    %v6804 = vpack.c.b16 %v6164, %v6156
    %v6805 = vpack.c.b16 %v6165, %v6157
    %v6806 = vpack.c.b16 %v6166, %v6158
    %v6807 = vpack.c.b16 %v6167, %v6159
    %v6808 = vpack.c.b16 %v6168, %v6160
    %v6809 = vpack.c.b16 %v6169, %v6161
    %v6810 = vpack.c.b16 %v6170, %v6162
    %v6811 = vpack.c.b16 %v6171, %v6163
    %v6812 = vpack.c.b16 %v6180, %v6172
    %v6813 = vpack.c.b16 %v6181, %v6173
    %v6814 = vpack.c.b16 %v6182, %v6174
    %v6815 = vpack.c.b16 %v6183, %v6175
    %v6816 = vpack.c.b16 %v6184, %v6176
    %v6817 = vpack.c.b16 %v6185, %v6177
    %v6818 = vpack.c.b16 %v6186, %v6178
    %v6819 = vpack.c.b16 %v6187, %v6179
    %v6820 = vpack.c.b16 %v6196, %v6188
    %v6821 = vpack.c.b16 %v6197, %v6189
    %v6822 = vpack.c.b16 %v6198, %v6190
    %v6823 = vpack.c.b16 %v6199, %v6191
    %v6824 = vpack.c.b16 %v6200, %v6192
    %v6825 = vpack.c.b16 %v6201, %v6193
    %v6826 = vpack.c.b16 %v6202, %v6194
    %v6827 = vpack.c.b16 %v6203, %v6195
    %v6828 = vpack.c.b16 %v6212, %v6204
    %v6829 = vpack.c.b16 %v6213, %v6205
    %v6830 = vpack.c.b16 %v6214, %v6206
    %v6831 = vpack.c.b16 %v6215, %v6207
    %v6832 = vpack.c.b16 %v6216, %v6208
    %v6833 = vpack.c.b16 %v6217, %v6209
    %v6834 = vpack.c.b16 %v6218, %v6210
    %v6835 = vpack.c.b16 %v6219, %v6211
    %v6836 = vpack.c.b16 %v6228, %v6220
    %v6837 = vpack.c.b16 %v6229, %v6221
    %v6838 = vpack.c.b16 %v6230, %v6222
    %v6839 = vpack.c.b16 %v6231, %v6223
    %v6840 = vpack.c.b16 %v6232, %v6224
    %v6841 = vpack.c.b16 %v6233, %v6225
    %v6842 = vpack.c.b16 %v6234, %v6226
    %v6843 = vpack.c.b16 %v6235, %v6227
    %v6844 = vpack.c.b16 %v6244, %v6236
    %v6845 = vpack.c.b16 %v6245, %v6237
    %v6846 = vpack.c.b16 %v6246, %v6238
    %v6847 = vpack.c.b16 %v6247, %v6239
    %v6848 = vpack.c.b16 %v6248, %v6240
    %v6849 = vpack.c.b16 %v6249, %v6241
    %v6850 = vpack.c.b16 %v6250, %v6242
    %v6851 = vpack.c.b16 %v6251, %v6243
    %v6852 = vpack.c.b16 %v6260, %v6252
    %v6853 = vpack.c.b16 %v6261, %v6253
    %v6854 = vpack.c.b16 %v6262, %v6254
    %v6855 = vpack.c.b16 %v6263, %v6255
    %v6856 = vpack.c.b16 %v6264, %v6256
    %v6857 = vpack.c.b16 %v6265, %v6257
    %v6858 = vpack.c.b16 %v6266, %v6258
    %v6859 = vpack.c.b16 %v6267, %v6259
    %v6860 = vpack.c.b16 %v6276, %v6268
    %v6861 = vpack.c.b16 %v6277, %v6269
    %v6862 = vpack.c.b16 %v6278, %v6270
    %v6863 = vpack.c.b16 %v6279, %v6271
    %v6864 = vpack.c.b16 %v6280, %v6272
    %v6865 = vpack.c.b16 %v6281, %v6273
    %v6866 = vpack.c.b16 %v6282, %v6274
    %v6867 = vpack.c.b16 %v6283, %v6275
    %v6868 = vpack.c.b16 %v6292, %v6284
    %v6869 = vpack.c.b16 %v6293, %v6285
    %v6870 = vpack.c.b16 %v6294, %v6286
    %v6871 = vpack.c.b16 %v6295, %v6287
    %v6872 = vpack.c.b16 %v6296, %v6288
    %v6873 = vpack.c.b16 %v6297, %v6289
    %v6874 = vpack.c.b16 %v6298, %v6290
    %v6875 = vpack.c.b16 %v6299, %v6291
    %v6876 = vpack.c.b16 %v6308, %v6300
    %v6877 = vpack.c.b16 %v6309, %v6301
    %v6878 = vpack.c.b16 %v6310, %v6302
    %v6879 = vpack.c.b16 %v6311, %v6303
    %v6880 = vpack.c.b16 %v6312, %v6304
    %v6881 = vpack.c.b16 %v6313, %v6305
    %v6882 = vpack.c.b16 %v6314, %v6306
    %v6883 = vpack.c.b16 %v6315, %v6307
    %v6884 = vpack.c.b16 %v6324, %v6316
    %v6885 = vpack.c.b16 %v6325, %v6317
    %v6886 = vpack.c.b16 %v6326, %v6318
    %v6887 = vpack.c.b16 %v6327, %v6319
    %v6888 = vpack.c.b16 %v6328, %v6320
    %v6889 = vpack.c.b16 %v6329, %v6321
    %v6890 = vpack.c.b16 %v6330, %v6322
    %v6891 = vpack.c.b16 %v6331, %v6323
    %v6892 = vpack.c.b16 %v6340, %v6332
    %v6893 = vpack.c.b16 %v6341, %v6333
    %v6894 = vpack.c.b16 %v6342, %v6334
    %v6895 = vpack.c.b16 %v6343, %v6335
    %v6896 = vpack.c.b16 %v6344, %v6336
    %v6897 = vpack.c.b16 %v6345, %v6337
    %v6898 = vpack.c.b16 %v6346, %v6338
    %v6899 = vpack.c.b16 %v6347, %v6339
    %v6900 = vpack.c.b16 %v6356, %v6348
    %v6901 = vpack.c.b16 %v6357, %v6349
    %v6902 = vpack.c.b16 %v6358, %v6350
    %v6903 = vpack.c.b16 %v6359, %v6351
    %v6904 = vpack.c.b16 %v6360, %v6352
    %v6905 = vpack.c.b16 %v6361, %v6353
    %v6906 = vpack.c.b16 %v6362, %v6354
    %v6907 = vpack.c.b16 %v6363, %v6355
    %v6908 = vpack.c.b16 %v6372, %v6364
    %v6909 = vpack.c.b16 %v6373, %v6365
    %v6910 = vpack.c.b16 %v6374, %v6366
    %v6911 = vpack.c.b16 %v6375, %v6367
    %v6912 = vpack.c.b16 %v6376, %v6368
    %v6913 = vpack.c.b16 %v6377, %v6369
    %v6914 = vpack.c.b16 %v6378, %v6370
    %v6915 = vpack.c.b16 %v6379, %v6371
    %v6916 = vpack.c.b16 %v6388, %v6380
    %v6917 = vpack.c.b16 %v6389, %v6381
    %v6918 = vpack.c.b16 %v6390, %v6382
    %v6919 = vpack.c.b16 %v6391, %v6383
    %v6920 = vpack.c.b16 %v6392, %v6384
    %v6921 = vpack.c.b16 %v6393, %v6385
    %v6922 = vpack.c.b16 %v6394, %v6386
    %v6923 = vpack.c.b16 %v6395, %v6387
    %v6924 = vpack.c.b16 %v6404, %v6396
    %v6925 = vpack.c.b16 %v6405, %v6397
    %v6926 = vpack.c.b16 %v6406, %v6398
    %v6927 = vpack.c.b16 %v6407, %v6399
    %v6928 = vpack.c.b16 %v6408, %v6400
    %v6929 = vpack.c.b16 %v6409, %v6401
    %v6930 = vpack.c.b16 %v6410, %v6402
    %v6931 = vpack.c.b16 %v6411, %v6403
    %v6932 = vpack.c.b16 %v6420, %v6412
    %v6933 = vpack.c.b16 %v6421, %v6413
    %v6934 = vpack.c.b16 %v6422, %v6414
    %v6935 = vpack.c.b16 %v6423, %v6415
    %v6936 = vpack.c.b16 %v6424, %v6416
    %v6937 = vpack.c.b16 %v6425, %v6417
    %v6938 = vpack.c.b16 %v6426, %v6418
    %v6939 = vpack.c.b16 %v6427, %v6419
    %7452 = vmatpush.bf16.msra.mxu0 %v6484
    %7453 = vmatpush.bf16.msra.mxu0 %v6476
    %7454 = vmatpush.bf16.msra.mxu0 %v6468
    %7455 = vmatpush.bf16.msra.mxu0 %v6460
    %7456 = vmatpush.bf16.msra.mxu0 %v6452
    %7457 = vmatpush.bf16.msra.mxu0 %v6444
    %7458 = vmatpush.bf16.msra.mxu0 %v6436
    %7459 = vmatpush.bf16.msra.mxu0 %v6428
    %7460 = vmatmul.bf16.gmra.mxu0 %v4354
    %v7461 = vpop.f32.mrf.mxu0
    %v7462 = vadd.f32 %v4876, %v7461
    %v7463 = vpop.f32.mrf.mxu0
    %7464 = vdwg.mxu0
    %7465 = vmatpush.bf16.msra.mxu0 %v6548
    %7466 = vmatpush.bf16.msra.mxu0 %v6540
    %7467 = vmatpush.bf16.msra.mxu0 %v6532
    %7468 = vmatpush.bf16.msra.mxu0 %v6524
    %7469 = vmatpush.bf16.msra.mxu0 %v6516
    %7470 = vmatpush.bf16.msra.mxu0 %v6508
    %7471 = vmatpush.bf16.msra.mxu0 %v6500
    %7472 = vmatpush.bf16.msra.mxu0 %v6492
    %7473 = vmatmul.bf16.gmra.mxu0 %v4355
    %v7474 = vpop.f32.mrf.mxu0
    %v7475 = vadd.f32 %v7462, %v7474
    %v7476 = vpop.f32.mrf.mxu0
    %7477 = vdwg.mxu0
    %7478 = vmatpush.bf16.msra.mxu0 %v6612
    %7479 = vmatpush.bf16.msra.mxu0 %v6604
    %7480 = vmatpush.bf16.msra.mxu0 %v6596
    %7481 = vmatpush.bf16.msra.mxu0 %v6588
    %7482 = vmatpush.bf16.msra.mxu0 %v6580
    %7483 = vmatpush.bf16.msra.mxu0 %v6572
    %7484 = vmatpush.bf16.msra.mxu0 %v6564
    %7485 = vmatpush.bf16.msra.mxu0 %v6556
    %7486 = vmatmul.bf16.gmra.mxu0 %v4356
    %v7487 = vpop.f32.mrf.mxu0
    %v7488 = vadd.f32 %v7475, %v7487
    %v7489 = vpop.f32.mrf.mxu0
    %7490 = vdwg.mxu0
    %7491 = vmatpush.bf16.msra.mxu0 %v6676
    %7492 = vmatpush.bf16.msra.mxu0 %v6668
    %7493 = vmatpush.bf16.msra.mxu0 %v6660
    %7494 = vmatpush.bf16.msra.mxu0 %v6652
    %7495 = vmatpush.bf16.msra.mxu0 %v6644
    %7496 = vmatpush.bf16.msra.mxu0 %v6636
    %7497 = vmatpush.bf16.msra.mxu0 %v6628
    %7498 = vmatpush.bf16.msra.mxu0 %v6620
    %7499 = vmatmul.bf16.gmra.mxu0 %v4357
    %v7500 = vpop.f32.mrf.mxu0
    %v7501 = vadd.f32 %v7488, %v7500
    %v7502 = vpop.f32.mrf.mxu0
    %7503 = vdwg.mxu0
    %7504 = vmatpush.bf16.msra.mxu0 %v6740
    %7505 = vmatpush.bf16.msra.mxu0 %v6732
    %7506 = vmatpush.bf16.msra.mxu0 %v6724
    %7507 = vmatpush.bf16.msra.mxu0 %v6716
    %7508 = vmatpush.bf16.msra.mxu0 %v6708
    %7509 = vmatpush.bf16.msra.mxu0 %v6700
    %7510 = vmatpush.bf16.msra.mxu0 %v6692
    %7511 = vmatpush.bf16.msra.mxu0 %v6684
    %7512 = vmatmul.bf16.gmra.mxu0 %v4358
    %v7513 = vpop.f32.mrf.mxu0
    %v7514 = vadd.f32 %v7501, %v7513
    %v7515 = vpop.f32.mrf.mxu0
    %7516 = vdwg.mxu0
    %7517 = vmatpush.bf16.msra.mxu0 %v6804
    %7518 = vmatpush.bf16.msra.mxu0 %v6796
    %7519 = vmatpush.bf16.msra.mxu0 %v6788
    %7520 = vmatpush.bf16.msra.mxu0 %v6780
    %7521 = vmatpush.bf16.msra.mxu0 %v6772
    %7522 = vmatpush.bf16.msra.mxu0 %v6764
    %7523 = vmatpush.bf16.msra.mxu0 %v6756
    %7524 = vmatpush.bf16.msra.mxu0 %v6748
    %7525 = vmatmul.bf16.gmra.mxu0 %v4359
    %v7526 = vpop.f32.mrf.mxu0
    %v7527 = vadd.f32 %v7514, %v7526
    %v7528 = vpop.f32.mrf.mxu0
    %7529 = vdwg.mxu0
    %7530 = vmatpush.bf16.msra.mxu0 %v6868
    %7531 = vmatpush.bf16.msra.mxu0 %v6860
    %7532 = vmatpush.bf16.msra.mxu0 %v6852
    %7533 = vmatpush.bf16.msra.mxu0 %v6844
    %7534 = vmatpush.bf16.msra.mxu0 %v6836
    %7535 = vmatpush.bf16.msra.mxu0 %v6828
    %7536 = vmatpush.bf16.msra.mxu0 %v6820
    %7537 = vmatpush.bf16.msra.mxu0 %v6812
    %7538 = vmatmul.bf16.gmra.mxu0 %v4360
    %v7539 = vpop.f32.mrf.mxu0
    %v7540 = vadd.f32 %v7527, %v7539
    %v7541 = vpop.f32.mrf.mxu0
    %7542 = vdwg.mxu0
    %7543 = vmatpush.bf16.msra.mxu0 %v6932
    %7544 = vmatpush.bf16.msra.mxu0 %v6924
    %7545 = vmatpush.bf16.msra.mxu0 %v6916
    %7546 = vmatpush.bf16.msra.mxu0 %v6908
    %7547 = vmatpush.bf16.msra.mxu0 %v6900
    %7548 = vmatpush.bf16.msra.mxu0 %v6892
    %7549 = vmatpush.bf16.msra.mxu0 %v6884
    %7550 = vmatpush.bf16.msra.mxu0 %v6876
    %7551 = vmatmul.bf16.gmra.mxu0 %v4361
    %v7552 = vpop.f32.mrf.mxu0
    %v7553 = vadd.f32 %v7540, %v7552
    %v7554 = vpop.f32.mrf.mxu0
    %7555 = vdwg.mxu0
    %7556 = vmatpush.bf16.msra.mxu0 %v6485
    %7557 = vmatpush.bf16.msra.mxu0 %v6477
    %7558 = vmatpush.bf16.msra.mxu0 %v6469
    %7559 = vmatpush.bf16.msra.mxu0 %v6461
    %7560 = vmatpush.bf16.msra.mxu0 %v6453
    %7561 = vmatpush.bf16.msra.mxu0 %v6445
    %7562 = vmatpush.bf16.msra.mxu0 %v6437
    %7563 = vmatpush.bf16.msra.mxu0 %v6429
    %7564 = vmatmul.bf16.gmra.mxu0 %v4354
    %v7565 = vpop.f32.mrf.mxu0
    %v7566 = vadd.f32 %v4877, %v7565
    %v7567 = vpop.f32.mrf.mxu0
    %7568 = vdwg.mxu0
    %7569 = vmatpush.bf16.msra.mxu0 %v6549
    %7570 = vmatpush.bf16.msra.mxu0 %v6541
    %7571 = vmatpush.bf16.msra.mxu0 %v6533
    %7572 = vmatpush.bf16.msra.mxu0 %v6525
    %7573 = vmatpush.bf16.msra.mxu0 %v6517
    %7574 = vmatpush.bf16.msra.mxu0 %v6509
    %7575 = vmatpush.bf16.msra.mxu0 %v6501
    %7576 = vmatpush.bf16.msra.mxu0 %v6493
    %7577 = vmatmul.bf16.gmra.mxu0 %v4355
    %v7578 = vpop.f32.mrf.mxu0
    %v7579 = vadd.f32 %v7566, %v7578
    %v7580 = vpop.f32.mrf.mxu0
    %7581 = vdwg.mxu0
    %7582 = vmatpush.bf16.msra.mxu0 %v6613
    %7583 = vmatpush.bf16.msra.mxu0 %v6605
    %7584 = vmatpush.bf16.msra.mxu0 %v6597
    %7585 = vmatpush.bf16.msra.mxu0 %v6589
    %7586 = vmatpush.bf16.msra.mxu0 %v6581
    %7587 = vmatpush.bf16.msra.mxu0 %v6573
    %7588 = vmatpush.bf16.msra.mxu0 %v6565
    %7589 = vmatpush.bf16.msra.mxu0 %v6557
    %7590 = vmatmul.bf16.gmra.mxu0 %v4356
    %v7591 = vpop.f32.mrf.mxu0
    %v7592 = vadd.f32 %v7579, %v7591
    %v7593 = vpop.f32.mrf.mxu0
    %7594 = vdwg.mxu0
    %7595 = vmatpush.bf16.msra.mxu0 %v6677
    %7596 = vmatpush.bf16.msra.mxu0 %v6669
    %7597 = vmatpush.bf16.msra.mxu0 %v6661
    %7598 = vmatpush.bf16.msra.mxu0 %v6653
    %7599 = vmatpush.bf16.msra.mxu0 %v6645
    %7600 = vmatpush.bf16.msra.mxu0 %v6637
    %7601 = vmatpush.bf16.msra.mxu0 %v6629
    %7602 = vmatpush.bf16.msra.mxu0 %v6621
    %7603 = vmatmul.bf16.gmra.mxu0 %v4357
    %v7604 = vpop.f32.mrf.mxu0
    %v7605 = vadd.f32 %v7592, %v7604
    %v7606 = vpop.f32.mrf.mxu0
    %7607 = vdwg.mxu0
    %7608 = vmatpush.bf16.msra.mxu0 %v6741
    %7609 = vmatpush.bf16.msra.mxu0 %v6733
    %7610 = vmatpush.bf16.msra.mxu0 %v6725
    %7611 = vmatpush.bf16.msra.mxu0 %v6717
    %7612 = vmatpush.bf16.msra.mxu0 %v6709
    %7613 = vmatpush.bf16.msra.mxu0 %v6701
    %7614 = vmatpush.bf16.msra.mxu0 %v6693
    %7615 = vmatpush.bf16.msra.mxu0 %v6685
    %7616 = vmatmul.bf16.gmra.mxu0 %v4358
    %v7617 = vpop.f32.mrf.mxu0
    %v7618 = vadd.f32 %v7605, %v7617
    %v7619 = vpop.f32.mrf.mxu0
    %7620 = vdwg.mxu0
    %7621 = vmatpush.bf16.msra.mxu0 %v6805
    %7622 = vmatpush.bf16.msra.mxu0 %v6797
    %7623 = vmatpush.bf16.msra.mxu0 %v6789
    %7624 = vmatpush.bf16.msra.mxu0 %v6781
    %7625 = vmatpush.bf16.msra.mxu0 %v6773
    %7626 = vmatpush.bf16.msra.mxu0 %v6765
    %7627 = vmatpush.bf16.msra.mxu0 %v6757
    %7628 = vmatpush.bf16.msra.mxu0 %v6749
    %7629 = vmatmul.bf16.gmra.mxu0 %v4359
    %v7630 = vpop.f32.mrf.mxu0
    %v7631 = vadd.f32 %v7618, %v7630
    %v7632 = vpop.f32.mrf.mxu0
    %7633 = vdwg.mxu0
    %7634 = vmatpush.bf16.msra.mxu0 %v6869
    %7635 = vmatpush.bf16.msra.mxu0 %v6861
    %7636 = vmatpush.bf16.msra.mxu0 %v6853
    %7637 = vmatpush.bf16.msra.mxu0 %v6845
    %7638 = vmatpush.bf16.msra.mxu0 %v6837
    %7639 = vmatpush.bf16.msra.mxu0 %v6829
    %7640 = vmatpush.bf16.msra.mxu0 %v6821
    %7641 = vmatpush.bf16.msra.mxu0 %v6813
    %7642 = vmatmul.bf16.gmra.mxu0 %v4360
    %v7643 = vpop.f32.mrf.mxu0
    %v7644 = vadd.f32 %v7631, %v7643
    %v7645 = vpop.f32.mrf.mxu0
    %7646 = vdwg.mxu0
    %7647 = vmatpush.bf16.msra.mxu0 %v6933
    %7648 = vmatpush.bf16.msra.mxu0 %v6925
    %7649 = vmatpush.bf16.msra.mxu0 %v6917
    %7650 = vmatpush.bf16.msra.mxu0 %v6909
    %7651 = vmatpush.bf16.msra.mxu0 %v6901
    %7652 = vmatpush.bf16.msra.mxu0 %v6893
    %7653 = vmatpush.bf16.msra.mxu0 %v6885
    %7654 = vmatpush.bf16.msra.mxu0 %v6877
    %7655 = vmatmul.bf16.gmra.mxu0 %v4361
    %v7656 = vpop.f32.mrf.mxu0
    %v7657 = vadd.f32 %v7644, %v7656
    %v7658 = vpop.f32.mrf.mxu0
    %7659 = vdwg.mxu0
    %7660 = vmatpush.bf16.msra.mxu0 %v6486
    %7661 = vmatpush.bf16.msra.mxu0 %v6478
    %7662 = vmatpush.bf16.msra.mxu0 %v6470
    %7663 = vmatpush.bf16.msra.mxu0 %v6462
    %7664 = vmatpush.bf16.msra.mxu0 %v6454
    %7665 = vmatpush.bf16.msra.mxu0 %v6446
    %7666 = vmatpush.bf16.msra.mxu0 %v6438
    %7667 = vmatpush.bf16.msra.mxu0 %v6430
    %7668 = vmatmul.bf16.gmra.mxu0 %v4354
    %v7669 = vpop.f32.mrf.mxu0
    %v7670 = vadd.f32 %v4878, %v7669
    %v7671 = vpop.f32.mrf.mxu0
    %7672 = vdwg.mxu0
    %7673 = vmatpush.bf16.msra.mxu0 %v6550
    %7674 = vmatpush.bf16.msra.mxu0 %v6542
    %7675 = vmatpush.bf16.msra.mxu0 %v6534
    %7676 = vmatpush.bf16.msra.mxu0 %v6526
    %7677 = vmatpush.bf16.msra.mxu0 %v6518
    %7678 = vmatpush.bf16.msra.mxu0 %v6510
    %7679 = vmatpush.bf16.msra.mxu0 %v6502
    %7680 = vmatpush.bf16.msra.mxu0 %v6494
    %7681 = vmatmul.bf16.gmra.mxu0 %v4355
    %v7682 = vpop.f32.mrf.mxu0
    %v7683 = vadd.f32 %v7670, %v7682
    %v7684 = vpop.f32.mrf.mxu0
    %7685 = vdwg.mxu0
    %7686 = vmatpush.bf16.msra.mxu0 %v6614
    %7687 = vmatpush.bf16.msra.mxu0 %v6606
    %7688 = vmatpush.bf16.msra.mxu0 %v6598
    %7689 = vmatpush.bf16.msra.mxu0 %v6590
    %7690 = vmatpush.bf16.msra.mxu0 %v6582
    %7691 = vmatpush.bf16.msra.mxu0 %v6574
    %7692 = vmatpush.bf16.msra.mxu0 %v6566
    %7693 = vmatpush.bf16.msra.mxu0 %v6558
    %7694 = vmatmul.bf16.gmra.mxu0 %v4356
    %v7695 = vpop.f32.mrf.mxu0
    %v7696 = vadd.f32 %v7683, %v7695
    %v7697 = vpop.f32.mrf.mxu0
    %7698 = vdwg.mxu0
    %7699 = vmatpush.bf16.msra.mxu0 %v6678
    %7700 = vmatpush.bf16.msra.mxu0 %v6670
    %7701 = vmatpush.bf16.msra.mxu0 %v6662
    %7702 = vmatpush.bf16.msra.mxu0 %v6654
    %7703 = vmatpush.bf16.msra.mxu0 %v6646
    %7704 = vmatpush.bf16.msra.mxu0 %v6638
    %7705 = vmatpush.bf16.msra.mxu0 %v6630
    %7706 = vmatpush.bf16.msra.mxu0 %v6622
    %7707 = vmatmul.bf16.gmra.mxu0 %v4357
    %v7708 = vpop.f32.mrf.mxu0
    %v7709 = vadd.f32 %v7696, %v7708
    %v7710 = vpop.f32.mrf.mxu0
    %7711 = vdwg.mxu0
    %7712 = vmatpush.bf16.msra.mxu0 %v6742
    %7713 = vmatpush.bf16.msra.mxu0 %v6734
    %7714 = vmatpush.bf16.msra.mxu0 %v6726
    %7715 = vmatpush.bf16.msra.mxu0 %v6718
    %7716 = vmatpush.bf16.msra.mxu0 %v6710
    %7717 = vmatpush.bf16.msra.mxu0 %v6702
    %7718 = vmatpush.bf16.msra.mxu0 %v6694
    %7719 = vmatpush.bf16.msra.mxu0 %v6686
    %7720 = vmatmul.bf16.gmra.mxu0 %v4358
    %v7721 = vpop.f32.mrf.mxu0
    %v7722 = vadd.f32 %v7709, %v7721
    %v7723 = vpop.f32.mrf.mxu0
    %7724 = vdwg.mxu0
    %7725 = vmatpush.bf16.msra.mxu0 %v6806
    %7726 = vmatpush.bf16.msra.mxu0 %v6798
    %7727 = vmatpush.bf16.msra.mxu0 %v6790
    %7728 = vmatpush.bf16.msra.mxu0 %v6782
    %7729 = vmatpush.bf16.msra.mxu0 %v6774
    %7730 = vmatpush.bf16.msra.mxu0 %v6766
    %7731 = vmatpush.bf16.msra.mxu0 %v6758
    %7732 = vmatpush.bf16.msra.mxu0 %v6750
    %7733 = vmatmul.bf16.gmra.mxu0 %v4359
    %v7734 = vpop.f32.mrf.mxu0
    %v7735 = vadd.f32 %v7722, %v7734
    %v7736 = vpop.f32.mrf.mxu0
    %7737 = vdwg.mxu0
    %7738 = vmatpush.bf16.msra.mxu0 %v6870
    %7739 = vmatpush.bf16.msra.mxu0 %v6862
    %7740 = vmatpush.bf16.msra.mxu0 %v6854
    %7741 = vmatpush.bf16.msra.mxu0 %v6846
    %7742 = vmatpush.bf16.msra.mxu0 %v6838
    %7743 = vmatpush.bf16.msra.mxu0 %v6830
    %7744 = vmatpush.bf16.msra.mxu0 %v6822
    %7745 = vmatpush.bf16.msra.mxu0 %v6814
    %7746 = vmatmul.bf16.gmra.mxu0 %v4360
    %v7747 = vpop.f32.mrf.mxu0
    %v7748 = vadd.f32 %v7735, %v7747
    %v7749 = vpop.f32.mrf.mxu0
    %7750 = vdwg.mxu0
    %7751 = vmatpush.bf16.msra.mxu0 %v6934
    %7752 = vmatpush.bf16.msra.mxu0 %v6926
    %7753 = vmatpush.bf16.msra.mxu0 %v6918
    %7754 = vmatpush.bf16.msra.mxu0 %v6910
    %7755 = vmatpush.bf16.msra.mxu0 %v6902
    %7756 = vmatpush.bf16.msra.mxu0 %v6894
    %7757 = vmatpush.bf16.msra.mxu0 %v6886
    %7758 = vmatpush.bf16.msra.mxu0 %v6878
    %7759 = vmatmul.bf16.gmra.mxu0 %v4361
    %v7760 = vpop.f32.mrf.mxu0
    %v7761 = vadd.f32 %v7748, %v7760
    %v7762 = vpop.f32.mrf.mxu0
    %7763 = vdwg.mxu0
    %7764 = vmatpush.bf16.msra.mxu0 %v6487
    %7765 = vmatpush.bf16.msra.mxu0 %v6479
    %7766 = vmatpush.bf16.msra.mxu0 %v6471
    %7767 = vmatpush.bf16.msra.mxu0 %v6463
    %7768 = vmatpush.bf16.msra.mxu0 %v6455
    %7769 = vmatpush.bf16.msra.mxu0 %v6447
    %7770 = vmatpush.bf16.msra.mxu0 %v6439
    %7771 = vmatpush.bf16.msra.mxu0 %v6431
    %7772 = vmatmul.bf16.gmra.mxu0 %v4354
    %v7773 = vpop.f32.mrf.mxu0
    %v7774 = vadd.f32 %v4879, %v7773
    %v7775 = vpop.f32.mrf.mxu0
    %7776 = vdwg.mxu0
    %7777 = vmatpush.bf16.msra.mxu0 %v6551
    %7778 = vmatpush.bf16.msra.mxu0 %v6543
    %7779 = vmatpush.bf16.msra.mxu0 %v6535
    %7780 = vmatpush.bf16.msra.mxu0 %v6527
    %7781 = vmatpush.bf16.msra.mxu0 %v6519
    %7782 = vmatpush.bf16.msra.mxu0 %v6511
    %7783 = vmatpush.bf16.msra.mxu0 %v6503
    %7784 = vmatpush.bf16.msra.mxu0 %v6495
    %7785 = vmatmul.bf16.gmra.mxu0 %v4355
    %v7786 = vpop.f32.mrf.mxu0
    %v7787 = vadd.f32 %v7774, %v7786
    %v7788 = vpop.f32.mrf.mxu0
    %7789 = vdwg.mxu0
    %7790 = vmatpush.bf16.msra.mxu0 %v6615
    %7791 = vmatpush.bf16.msra.mxu0 %v6607
    %7792 = vmatpush.bf16.msra.mxu0 %v6599
    %7793 = vmatpush.bf16.msra.mxu0 %v6591
    %7794 = vmatpush.bf16.msra.mxu0 %v6583
    %7795 = vmatpush.bf16.msra.mxu0 %v6575
    %7796 = vmatpush.bf16.msra.mxu0 %v6567
    %7797 = vmatpush.bf16.msra.mxu0 %v6559
    %7798 = vmatmul.bf16.gmra.mxu0 %v4356
    %v7799 = vpop.f32.mrf.mxu0
    %v7800 = vadd.f32 %v7787, %v7799
    %v7801 = vpop.f32.mrf.mxu0
    %7802 = vdwg.mxu0
    %7803 = vmatpush.bf16.msra.mxu0 %v6679
    %7804 = vmatpush.bf16.msra.mxu0 %v6671
    %7805 = vmatpush.bf16.msra.mxu0 %v6663
    %7806 = vmatpush.bf16.msra.mxu0 %v6655
    %7807 = vmatpush.bf16.msra.mxu0 %v6647
    %7808 = vmatpush.bf16.msra.mxu0 %v6639
    %7809 = vmatpush.bf16.msra.mxu0 %v6631
    %7810 = vmatpush.bf16.msra.mxu0 %v6623
    %7811 = vmatmul.bf16.gmra.mxu0 %v4357
    %v7812 = vpop.f32.mrf.mxu0
    %v7813 = vadd.f32 %v7800, %v7812
    %v7814 = vpop.f32.mrf.mxu0
    %7815 = vdwg.mxu0
    %7816 = vmatpush.bf16.msra.mxu0 %v6743
    %7817 = vmatpush.bf16.msra.mxu0 %v6735
    %7818 = vmatpush.bf16.msra.mxu0 %v6727
    %7819 = vmatpush.bf16.msra.mxu0 %v6719
    %7820 = vmatpush.bf16.msra.mxu0 %v6711
    %7821 = vmatpush.bf16.msra.mxu0 %v6703
    %7822 = vmatpush.bf16.msra.mxu0 %v6695
    %7823 = vmatpush.bf16.msra.mxu0 %v6687
    %7824 = vmatmul.bf16.gmra.mxu0 %v4358
    %v7825 = vpop.f32.mrf.mxu0
    %v7826 = vadd.f32 %v7813, %v7825
    %v7827 = vpop.f32.mrf.mxu0
    %7828 = vdwg.mxu0
    %7829 = vmatpush.bf16.msra.mxu0 %v6807
    %7830 = vmatpush.bf16.msra.mxu0 %v6799
    %7831 = vmatpush.bf16.msra.mxu0 %v6791
    %7832 = vmatpush.bf16.msra.mxu0 %v6783
    %7833 = vmatpush.bf16.msra.mxu0 %v6775
    %7834 = vmatpush.bf16.msra.mxu0 %v6767
    %7835 = vmatpush.bf16.msra.mxu0 %v6759
    %7836 = vmatpush.bf16.msra.mxu0 %v6751
    %7837 = vmatmul.bf16.gmra.mxu0 %v4359
    %v7838 = vpop.f32.mrf.mxu0
    %v7839 = vadd.f32 %v7826, %v7838
    %v7840 = vpop.f32.mrf.mxu0
    %7841 = vdwg.mxu0
    %7842 = vmatpush.bf16.msra.mxu0 %v6871
    %7843 = vmatpush.bf16.msra.mxu0 %v6863
    %7844 = vmatpush.bf16.msra.mxu0 %v6855
    %7845 = vmatpush.bf16.msra.mxu0 %v6847
    %7846 = vmatpush.bf16.msra.mxu0 %v6839
    %7847 = vmatpush.bf16.msra.mxu0 %v6831
    %7848 = vmatpush.bf16.msra.mxu0 %v6823
    %7849 = vmatpush.bf16.msra.mxu0 %v6815
    %7850 = vmatmul.bf16.gmra.mxu0 %v4360
    %v7851 = vpop.f32.mrf.mxu0
    %v7852 = vadd.f32 %v7839, %v7851
    %v7853 = vpop.f32.mrf.mxu0
    %7854 = vdwg.mxu0
    %7855 = vmatpush.bf16.msra.mxu0 %v6935
    %7856 = vmatpush.bf16.msra.mxu0 %v6927
    %7857 = vmatpush.bf16.msra.mxu0 %v6919
    %7858 = vmatpush.bf16.msra.mxu0 %v6911
    %7859 = vmatpush.bf16.msra.mxu0 %v6903
    %7860 = vmatpush.bf16.msra.mxu0 %v6895
    %7861 = vmatpush.bf16.msra.mxu0 %v6887
    %7862 = vmatpush.bf16.msra.mxu0 %v6879
    %7863 = vmatmul.bf16.gmra.mxu0 %v4361
    %v7864 = vpop.f32.mrf.mxu0
    %v7865 = vadd.f32 %v7852, %v7864
    %v7866 = vpop.f32.mrf.mxu0
    %7867 = vdwg.mxu0
    %7868 = vmatpush.bf16.msra.mxu0 %v6488
    %7869 = vmatpush.bf16.msra.mxu0 %v6480
    %7870 = vmatpush.bf16.msra.mxu0 %v6472
    %7871 = vmatpush.bf16.msra.mxu0 %v6464
    %7872 = vmatpush.bf16.msra.mxu0 %v6456
    %7873 = vmatpush.bf16.msra.mxu0 %v6448
    %7874 = vmatpush.bf16.msra.mxu0 %v6440
    %7875 = vmatpush.bf16.msra.mxu0 %v6432
    %7876 = vmatmul.bf16.gmra.mxu0 %v4354
    %v7877 = vpop.f32.mrf.mxu0
    %v7878 = vadd.f32 %v4880, %v7877
    %v7879 = vpop.f32.mrf.mxu0
    %7880 = vdwg.mxu0
    %7881 = vmatpush.bf16.msra.mxu0 %v6552
    %7882 = vmatpush.bf16.msra.mxu0 %v6544
    %7883 = vmatpush.bf16.msra.mxu0 %v6536
    %7884 = vmatpush.bf16.msra.mxu0 %v6528
    %7885 = vmatpush.bf16.msra.mxu0 %v6520
    %7886 = vmatpush.bf16.msra.mxu0 %v6512
    %7887 = vmatpush.bf16.msra.mxu0 %v6504
    %7888 = vmatpush.bf16.msra.mxu0 %v6496
    %7889 = vmatmul.bf16.gmra.mxu0 %v4355
    %v7890 = vpop.f32.mrf.mxu0
    %v7891 = vadd.f32 %v7878, %v7890
    %v7892 = vpop.f32.mrf.mxu0
    %7893 = vdwg.mxu0
    %7894 = vmatpush.bf16.msra.mxu0 %v6616
    %7895 = vmatpush.bf16.msra.mxu0 %v6608
    %7896 = vmatpush.bf16.msra.mxu0 %v6600
    %7897 = vmatpush.bf16.msra.mxu0 %v6592
    %7898 = vmatpush.bf16.msra.mxu0 %v6584
    %7899 = vmatpush.bf16.msra.mxu0 %v6576
    %7900 = vmatpush.bf16.msra.mxu0 %v6568
    %7901 = vmatpush.bf16.msra.mxu0 %v6560
    %7902 = vmatmul.bf16.gmra.mxu0 %v4356
    %v7903 = vpop.f32.mrf.mxu0
    %v7904 = vadd.f32 %v7891, %v7903
    %v7905 = vpop.f32.mrf.mxu0
    %7906 = vdwg.mxu0
    %7907 = vmatpush.bf16.msra.mxu0 %v6680
    %7908 = vmatpush.bf16.msra.mxu0 %v6672
    %7909 = vmatpush.bf16.msra.mxu0 %v6664
    %7910 = vmatpush.bf16.msra.mxu0 %v6656
    %7911 = vmatpush.bf16.msra.mxu0 %v6648
    %7912 = vmatpush.bf16.msra.mxu0 %v6640
    %7913 = vmatpush.bf16.msra.mxu0 %v6632
    %7914 = vmatpush.bf16.msra.mxu0 %v6624
    %7915 = vmatmul.bf16.gmra.mxu0 %v4357
    %v7916 = vpop.f32.mrf.mxu0
    %v7917 = vadd.f32 %v7904, %v7916
    %v7918 = vpop.f32.mrf.mxu0
    %7919 = vdwg.mxu0
    %7920 = vmatpush.bf16.msra.mxu0 %v6744
    %7921 = vmatpush.bf16.msra.mxu0 %v6736
    %7922 = vmatpush.bf16.msra.mxu0 %v6728
    %7923 = vmatpush.bf16.msra.mxu0 %v6720
    %7924 = vmatpush.bf16.msra.mxu0 %v6712
    %7925 = vmatpush.bf16.msra.mxu0 %v6704
    %7926 = vmatpush.bf16.msra.mxu0 %v6696
    %7927 = vmatpush.bf16.msra.mxu0 %v6688
    %7928 = vmatmul.bf16.gmra.mxu0 %v4358
    %v7929 = vpop.f32.mrf.mxu0
    %v7930 = vadd.f32 %v7917, %v7929
    %v7931 = vpop.f32.mrf.mxu0
    %7932 = vdwg.mxu0
    %7933 = vmatpush.bf16.msra.mxu0 %v6808
    %7934 = vmatpush.bf16.msra.mxu0 %v6800
    %7935 = vmatpush.bf16.msra.mxu0 %v6792
    %7936 = vmatpush.bf16.msra.mxu0 %v6784
    %7937 = vmatpush.bf16.msra.mxu0 %v6776
    %7938 = vmatpush.bf16.msra.mxu0 %v6768
    %7939 = vmatpush.bf16.msra.mxu0 %v6760
    %7940 = vmatpush.bf16.msra.mxu0 %v6752
    %7941 = vmatmul.bf16.gmra.mxu0 %v4359
    %v7942 = vpop.f32.mrf.mxu0
    %v7943 = vadd.f32 %v7930, %v7942
    %v7944 = vpop.f32.mrf.mxu0
    %7945 = vdwg.mxu0
    %7946 = vmatpush.bf16.msra.mxu0 %v6872
    %7947 = vmatpush.bf16.msra.mxu0 %v6864
    %7948 = vmatpush.bf16.msra.mxu0 %v6856
    %7949 = vmatpush.bf16.msra.mxu0 %v6848
    %7950 = vmatpush.bf16.msra.mxu0 %v6840
    %7951 = vmatpush.bf16.msra.mxu0 %v6832
    %7952 = vmatpush.bf16.msra.mxu0 %v6824
    %7953 = vmatpush.bf16.msra.mxu0 %v6816
    %7954 = vmatmul.bf16.gmra.mxu0 %v4360
    %v7955 = vpop.f32.mrf.mxu0
    %v7956 = vadd.f32 %v7943, %v7955
    %v7957 = vpop.f32.mrf.mxu0
    %7958 = vdwg.mxu0
    %7959 = vmatpush.bf16.msra.mxu0 %v6936
    %7960 = vmatpush.bf16.msra.mxu0 %v6928
    %7961 = vmatpush.bf16.msra.mxu0 %v6920
    %7962 = vmatpush.bf16.msra.mxu0 %v6912
    %7963 = vmatpush.bf16.msra.mxu0 %v6904
    %7964 = vmatpush.bf16.msra.mxu0 %v6896
    %7965 = vmatpush.bf16.msra.mxu0 %v6888
    %7966 = vmatpush.bf16.msra.mxu0 %v6880
    %7967 = vmatmul.bf16.gmra.mxu0 %v4361
    %v7968 = vpop.f32.mrf.mxu0
    %v7969 = vadd.f32 %v7956, %v7968
    %v7970 = vpop.f32.mrf.mxu0
    %7971 = vdwg.mxu0
    %7972 = vmatpush.bf16.msra.mxu0 %v6489
    %7973 = vmatpush.bf16.msra.mxu0 %v6481
    %7974 = vmatpush.bf16.msra.mxu0 %v6473
    %7975 = vmatpush.bf16.msra.mxu0 %v6465
    %7976 = vmatpush.bf16.msra.mxu0 %v6457
    %7977 = vmatpush.bf16.msra.mxu0 %v6449
    %7978 = vmatpush.bf16.msra.mxu0 %v6441
    %7979 = vmatpush.bf16.msra.mxu0 %v6433
    %7980 = vmatmul.bf16.gmra.mxu0 %v4354
    %v7981 = vpop.f32.mrf.mxu0
    %v7982 = vadd.f32 %v4881, %v7981
    %v7983 = vpop.f32.mrf.mxu0
    %7984 = vdwg.mxu0
    %7985 = vmatpush.bf16.msra.mxu0 %v6553
    %7986 = vmatpush.bf16.msra.mxu0 %v6545
    %7987 = vmatpush.bf16.msra.mxu0 %v6537
    %7988 = vmatpush.bf16.msra.mxu0 %v6529
    %7989 = vmatpush.bf16.msra.mxu0 %v6521
    %7990 = vmatpush.bf16.msra.mxu0 %v6513
    %7991 = vmatpush.bf16.msra.mxu0 %v6505
    %7992 = vmatpush.bf16.msra.mxu0 %v6497
    %7993 = vmatmul.bf16.gmra.mxu0 %v4355
    %v7994 = vpop.f32.mrf.mxu0
    %v7995 = vadd.f32 %v7982, %v7994
    %v7996 = vpop.f32.mrf.mxu0
    %7997 = vdwg.mxu0
    %7998 = vmatpush.bf16.msra.mxu0 %v6617
    %7999 = vmatpush.bf16.msra.mxu0 %v6609
    %8000 = vmatpush.bf16.msra.mxu0 %v6601
    %8001 = vmatpush.bf16.msra.mxu0 %v6593
    %8002 = vmatpush.bf16.msra.mxu0 %v6585
    %8003 = vmatpush.bf16.msra.mxu0 %v6577
    %8004 = vmatpush.bf16.msra.mxu0 %v6569
    %8005 = vmatpush.bf16.msra.mxu0 %v6561
    %8006 = vmatmul.bf16.gmra.mxu0 %v4356
    %v8007 = vpop.f32.mrf.mxu0
    %v8008 = vadd.f32 %v7995, %v8007
    %v8009 = vpop.f32.mrf.mxu0
    %8010 = vdwg.mxu0
    %8011 = vmatpush.bf16.msra.mxu0 %v6681
    %8012 = vmatpush.bf16.msra.mxu0 %v6673
    %8013 = vmatpush.bf16.msra.mxu0 %v6665
    %8014 = vmatpush.bf16.msra.mxu0 %v6657
    %8015 = vmatpush.bf16.msra.mxu0 %v6649
    %8016 = vmatpush.bf16.msra.mxu0 %v6641
    %8017 = vmatpush.bf16.msra.mxu0 %v6633
    %8018 = vmatpush.bf16.msra.mxu0 %v6625
    %8019 = vmatmul.bf16.gmra.mxu0 %v4357
    %v8020 = vpop.f32.mrf.mxu0
    %v8021 = vadd.f32 %v8008, %v8020
    %v8022 = vpop.f32.mrf.mxu0
    %8023 = vdwg.mxu0
    %8024 = vmatpush.bf16.msra.mxu0 %v6745
    %8025 = vmatpush.bf16.msra.mxu0 %v6737
    %8026 = vmatpush.bf16.msra.mxu0 %v6729
    %8027 = vmatpush.bf16.msra.mxu0 %v6721
    %8028 = vmatpush.bf16.msra.mxu0 %v6713
    %8029 = vmatpush.bf16.msra.mxu0 %v6705
    %8030 = vmatpush.bf16.msra.mxu0 %v6697
    %8031 = vmatpush.bf16.msra.mxu0 %v6689
    %8032 = vmatmul.bf16.gmra.mxu0 %v4358
    %v8033 = vpop.f32.mrf.mxu0
    %v8034 = vadd.f32 %v8021, %v8033
    %v8035 = vpop.f32.mrf.mxu0
    %8036 = vdwg.mxu0
    %8037 = vmatpush.bf16.msra.mxu0 %v6809
    %8038 = vmatpush.bf16.msra.mxu0 %v6801
    %8039 = vmatpush.bf16.msra.mxu0 %v6793
    %8040 = vmatpush.bf16.msra.mxu0 %v6785
    %8041 = vmatpush.bf16.msra.mxu0 %v6777
    %8042 = vmatpush.bf16.msra.mxu0 %v6769
    %8043 = vmatpush.bf16.msra.mxu0 %v6761
    %8044 = vmatpush.bf16.msra.mxu0 %v6753
    %8045 = vmatmul.bf16.gmra.mxu0 %v4359
    %v8046 = vpop.f32.mrf.mxu0
    %v8047 = vadd.f32 %v8034, %v8046
    %v8048 = vpop.f32.mrf.mxu0
    %8049 = vdwg.mxu0
    %8050 = vmatpush.bf16.msra.mxu0 %v6873
    %8051 = vmatpush.bf16.msra.mxu0 %v6865
    %8052 = vmatpush.bf16.msra.mxu0 %v6857
    %8053 = vmatpush.bf16.msra.mxu0 %v6849
    %8054 = vmatpush.bf16.msra.mxu0 %v6841
    %8055 = vmatpush.bf16.msra.mxu0 %v6833
    %8056 = vmatpush.bf16.msra.mxu0 %v6825
    %8057 = vmatpush.bf16.msra.mxu0 %v6817
    %8058 = vmatmul.bf16.gmra.mxu0 %v4360
    %v8059 = vpop.f32.mrf.mxu0
    %v8060 = vadd.f32 %v8047, %v8059
    %v8061 = vpop.f32.mrf.mxu0
    %8062 = vdwg.mxu0
    %8063 = vmatpush.bf16.msra.mxu0 %v6937
    %8064 = vmatpush.bf16.msra.mxu0 %v6929
    %8065 = vmatpush.bf16.msra.mxu0 %v6921
    %8066 = vmatpush.bf16.msra.mxu0 %v6913
    %8067 = vmatpush.bf16.msra.mxu0 %v6905
    %8068 = vmatpush.bf16.msra.mxu0 %v6897
    %8069 = vmatpush.bf16.msra.mxu0 %v6889
    %8070 = vmatpush.bf16.msra.mxu0 %v6881
    %8071 = vmatmul.bf16.gmra.mxu0 %v4361
    %v8072 = vpop.f32.mrf.mxu0
    %v8073 = vadd.f32 %v8060, %v8072
    %v8074 = vpop.f32.mrf.mxu0
    %8075 = vdwg.mxu0
    %8076 = vmatpush.bf16.msra.mxu0 %v6490
    %8077 = vmatpush.bf16.msra.mxu0 %v6482
    %8078 = vmatpush.bf16.msra.mxu0 %v6474
    %8079 = vmatpush.bf16.msra.mxu0 %v6466
    %8080 = vmatpush.bf16.msra.mxu0 %v6458
    %8081 = vmatpush.bf16.msra.mxu0 %v6450
    %8082 = vmatpush.bf16.msra.mxu0 %v6442
    %8083 = vmatpush.bf16.msra.mxu0 %v6434
    %8084 = vmatmul.bf16.gmra.mxu0 %v4354
    %v8085 = vpop.f32.mrf.mxu0
    %v8086 = vadd.f32 %v4882, %v8085
    %v8087 = vpop.f32.mrf.mxu0
    %8088 = vdwg.mxu0
    %8089 = vmatpush.bf16.msra.mxu0 %v6554
    %8090 = vmatpush.bf16.msra.mxu0 %v6546
    %8091 = vmatpush.bf16.msra.mxu0 %v6538
    %8092 = vmatpush.bf16.msra.mxu0 %v6530
    %8093 = vmatpush.bf16.msra.mxu0 %v6522
    %8094 = vmatpush.bf16.msra.mxu0 %v6514
    %8095 = vmatpush.bf16.msra.mxu0 %v6506
    %8096 = vmatpush.bf16.msra.mxu0 %v6498
    %8097 = vmatmul.bf16.gmra.mxu0 %v4355
    %v8098 = vpop.f32.mrf.mxu0
    %v8099 = vadd.f32 %v8086, %v8098
    %v8100 = vpop.f32.mrf.mxu0
    %8101 = vdwg.mxu0
    %8102 = vmatpush.bf16.msra.mxu0 %v6618
    %8103 = vmatpush.bf16.msra.mxu0 %v6610
    %8104 = vmatpush.bf16.msra.mxu0 %v6602
    %8105 = vmatpush.bf16.msra.mxu0 %v6594
    %8106 = vmatpush.bf16.msra.mxu0 %v6586
    %8107 = vmatpush.bf16.msra.mxu0 %v6578
    %8108 = vmatpush.bf16.msra.mxu0 %v6570
    %8109 = vmatpush.bf16.msra.mxu0 %v6562
    %8110 = vmatmul.bf16.gmra.mxu0 %v4356
    %v8111 = vpop.f32.mrf.mxu0
    %v8112 = vadd.f32 %v8099, %v8111
    %v8113 = vpop.f32.mrf.mxu0
    %8114 = vdwg.mxu0
    %8115 = vmatpush.bf16.msra.mxu0 %v6682
    %8116 = vmatpush.bf16.msra.mxu0 %v6674
    %8117 = vmatpush.bf16.msra.mxu0 %v6666
    %8118 = vmatpush.bf16.msra.mxu0 %v6658
    %8119 = vmatpush.bf16.msra.mxu0 %v6650
    %8120 = vmatpush.bf16.msra.mxu0 %v6642
    %8121 = vmatpush.bf16.msra.mxu0 %v6634
    %8122 = vmatpush.bf16.msra.mxu0 %v6626
    %8123 = vmatmul.bf16.gmra.mxu0 %v4357
    %v8124 = vpop.f32.mrf.mxu0
    %v8125 = vadd.f32 %v8112, %v8124
    %v8126 = vpop.f32.mrf.mxu0
    %8127 = vdwg.mxu0
    %8128 = vmatpush.bf16.msra.mxu0 %v6746
    %8129 = vmatpush.bf16.msra.mxu0 %v6738
    %8130 = vmatpush.bf16.msra.mxu0 %v6730
    %8131 = vmatpush.bf16.msra.mxu0 %v6722
    %8132 = vmatpush.bf16.msra.mxu0 %v6714
    %8133 = vmatpush.bf16.msra.mxu0 %v6706
    %8134 = vmatpush.bf16.msra.mxu0 %v6698
    %8135 = vmatpush.bf16.msra.mxu0 %v6690
    %8136 = vmatmul.bf16.gmra.mxu0 %v4358
    %v8137 = vpop.f32.mrf.mxu0
    %v8138 = vadd.f32 %v8125, %v8137
    %v8139 = vpop.f32.mrf.mxu0
    %8140 = vdwg.mxu0
    %8141 = vmatpush.bf16.msra.mxu0 %v6810
    %8142 = vmatpush.bf16.msra.mxu0 %v6802
    %8143 = vmatpush.bf16.msra.mxu0 %v6794
    %8144 = vmatpush.bf16.msra.mxu0 %v6786
    %8145 = vmatpush.bf16.msra.mxu0 %v6778
    %8146 = vmatpush.bf16.msra.mxu0 %v6770
    %8147 = vmatpush.bf16.msra.mxu0 %v6762
    %8148 = vmatpush.bf16.msra.mxu0 %v6754
    %8149 = vmatmul.bf16.gmra.mxu0 %v4359
    %v8150 = vpop.f32.mrf.mxu0
    %v8151 = vadd.f32 %v8138, %v8150
    %v8152 = vpop.f32.mrf.mxu0
    %8153 = vdwg.mxu0
    %8154 = vmatpush.bf16.msra.mxu0 %v6874
    %8155 = vmatpush.bf16.msra.mxu0 %v6866
    %8156 = vmatpush.bf16.msra.mxu0 %v6858
    %8157 = vmatpush.bf16.msra.mxu0 %v6850
    %8158 = vmatpush.bf16.msra.mxu0 %v6842
    %8159 = vmatpush.bf16.msra.mxu0 %v6834
    %8160 = vmatpush.bf16.msra.mxu0 %v6826
    %8161 = vmatpush.bf16.msra.mxu0 %v6818
    %8162 = vmatmul.bf16.gmra.mxu0 %v4360
    %v8163 = vpop.f32.mrf.mxu0
    %v8164 = vadd.f32 %v8151, %v8163
    %v8165 = vpop.f32.mrf.mxu0
    %8166 = vdwg.mxu0
    %8167 = vmatpush.bf16.msra.mxu0 %v6938
    %8168 = vmatpush.bf16.msra.mxu0 %v6930
    %8169 = vmatpush.bf16.msra.mxu0 %v6922
    %8170 = vmatpush.bf16.msra.mxu0 %v6914
    %8171 = vmatpush.bf16.msra.mxu0 %v6906
    %8172 = vmatpush.bf16.msra.mxu0 %v6898
    %8173 = vmatpush.bf16.msra.mxu0 %v6890
    %8174 = vmatpush.bf16.msra.mxu0 %v6882
    %8175 = vmatmul.bf16.gmra.mxu0 %v4361
    %v8176 = vpop.f32.mrf.mxu0
    %v8177 = vadd.f32 %v8164, %v8176
    %v8178 = vpop.f32.mrf.mxu0
    %8179 = vdwg.mxu0
    %8180 = vmatpush.bf16.msra.mxu0 %v6491
    %8181 = vmatpush.bf16.msra.mxu0 %v6483
    %8182 = vmatpush.bf16.msra.mxu0 %v6475
    %8183 = vmatpush.bf16.msra.mxu0 %v6467
    %8184 = vmatpush.bf16.msra.mxu0 %v6459
    %8185 = vmatpush.bf16.msra.mxu0 %v6451
    %8186 = vmatpush.bf16.msra.mxu0 %v6443
    %8187 = vmatpush.bf16.msra.mxu0 %v6435
    %8188 = vmatmul.bf16.gmra.mxu0 %v4354
    %v8189 = vpop.f32.mrf.mxu0
    %v8190 = vadd.f32 %v4883, %v8189
    %v8191 = vpop.f32.mrf.mxu0
    %8192 = vdwg.mxu0
    %8193 = vmatpush.bf16.msra.mxu0 %v6555
    %8194 = vmatpush.bf16.msra.mxu0 %v6547
    %8195 = vmatpush.bf16.msra.mxu0 %v6539
    %8196 = vmatpush.bf16.msra.mxu0 %v6531
    %8197 = vmatpush.bf16.msra.mxu0 %v6523
    %8198 = vmatpush.bf16.msra.mxu0 %v6515
    %8199 = vmatpush.bf16.msra.mxu0 %v6507
    %8200 = vmatpush.bf16.msra.mxu0 %v6499
    %8201 = vmatmul.bf16.gmra.mxu0 %v4355
    %v8202 = vpop.f32.mrf.mxu0
    %v8203 = vadd.f32 %v8190, %v8202
    %v8204 = vpop.f32.mrf.mxu0
    %8205 = vdwg.mxu0
    %8206 = vmatpush.bf16.msra.mxu0 %v6619
    %8207 = vmatpush.bf16.msra.mxu0 %v6611
    %8208 = vmatpush.bf16.msra.mxu0 %v6603
    %8209 = vmatpush.bf16.msra.mxu0 %v6595
    %8210 = vmatpush.bf16.msra.mxu0 %v6587
    %8211 = vmatpush.bf16.msra.mxu0 %v6579
    %8212 = vmatpush.bf16.msra.mxu0 %v6571
    %8213 = vmatpush.bf16.msra.mxu0 %v6563
    %8214 = vmatmul.bf16.gmra.mxu0 %v4356
    %v8215 = vpop.f32.mrf.mxu0
    %v8216 = vadd.f32 %v8203, %v8215
    %v8217 = vpop.f32.mrf.mxu0
    %8218 = vdwg.mxu0
    %8219 = vmatpush.bf16.msra.mxu0 %v6683
    %8220 = vmatpush.bf16.msra.mxu0 %v6675
    %8221 = vmatpush.bf16.msra.mxu0 %v6667
    %8222 = vmatpush.bf16.msra.mxu0 %v6659
    %8223 = vmatpush.bf16.msra.mxu0 %v6651
    %8224 = vmatpush.bf16.msra.mxu0 %v6643
    %8225 = vmatpush.bf16.msra.mxu0 %v6635
    %8226 = vmatpush.bf16.msra.mxu0 %v6627
    %8227 = vmatmul.bf16.gmra.mxu0 %v4357
    %v8228 = vpop.f32.mrf.mxu0
    %v8229 = vadd.f32 %v8216, %v8228
    %v8230 = vpop.f32.mrf.mxu0
    %8231 = vdwg.mxu0
    %8232 = vmatpush.bf16.msra.mxu0 %v6747
    %8233 = vmatpush.bf16.msra.mxu0 %v6739
    %8234 = vmatpush.bf16.msra.mxu0 %v6731
    %8235 = vmatpush.bf16.msra.mxu0 %v6723
    %8236 = vmatpush.bf16.msra.mxu0 %v6715
    %8237 = vmatpush.bf16.msra.mxu0 %v6707
    %8238 = vmatpush.bf16.msra.mxu0 %v6699
    %8239 = vmatpush.bf16.msra.mxu0 %v6691
    %8240 = vmatmul.bf16.gmra.mxu0 %v4358
    %v8241 = vpop.f32.mrf.mxu0
    %v8242 = vadd.f32 %v8229, %v8241
    %v8243 = vpop.f32.mrf.mxu0
    %8244 = vdwg.mxu0
    %8245 = vmatpush.bf16.msra.mxu0 %v6811
    %8246 = vmatpush.bf16.msra.mxu0 %v6803
    %8247 = vmatpush.bf16.msra.mxu0 %v6795
    %8248 = vmatpush.bf16.msra.mxu0 %v6787
    %8249 = vmatpush.bf16.msra.mxu0 %v6779
    %8250 = vmatpush.bf16.msra.mxu0 %v6771
    %8251 = vmatpush.bf16.msra.mxu0 %v6763
    %8252 = vmatpush.bf16.msra.mxu0 %v6755
    %8253 = vmatmul.bf16.gmra.mxu0 %v4359
    %v8254 = vpop.f32.mrf.mxu0
    %v8255 = vadd.f32 %v8242, %v8254
    %v8256 = vpop.f32.mrf.mxu0
    %8257 = vdwg.mxu0
    %8258 = vmatpush.bf16.msra.mxu0 %v6875
    %8259 = vmatpush.bf16.msra.mxu0 %v6867
    %8260 = vmatpush.bf16.msra.mxu0 %v6859
    %8261 = vmatpush.bf16.msra.mxu0 %v6851
    %8262 = vmatpush.bf16.msra.mxu0 %v6843
    %8263 = vmatpush.bf16.msra.mxu0 %v6835
    %8264 = vmatpush.bf16.msra.mxu0 %v6827
    %8265 = vmatpush.bf16.msra.mxu0 %v6819
    %8266 = vmatmul.bf16.gmra.mxu0 %v4360
    %v8267 = vpop.f32.mrf.mxu0
    %v8268 = vadd.f32 %v8255, %v8267
    %v8269 = vpop.f32.mrf.mxu0
    %8270 = vdwg.mxu0
    %8271 = vmatpush.bf16.msra.mxu0 %v6939
    %8272 = vmatpush.bf16.msra.mxu0 %v6931
    %8273 = vmatpush.bf16.msra.mxu0 %v6923
    %8274 = vmatpush.bf16.msra.mxu0 %v6915
    %8275 = vmatpush.bf16.msra.mxu0 %v6907
    %8276 = vmatpush.bf16.msra.mxu0 %v6899
    %8277 = vmatpush.bf16.msra.mxu0 %v6891
    %8278 = vmatpush.bf16.msra.mxu0 %v6883
    %8279 = vmatmul.bf16.gmra.mxu0 %v4361
    %v8280 = vpop.f32.mrf.mxu0
    %v8281 = vadd.f32 %v8268, %v8280
    %v8282 = vpop.f32.mrf.mxu0
    %8283 = vdwg.mxu0
    %v8284 = vmax.f32 %v7553, 0.0
    %v8285 = vmax.f32 %v7657, 0.0
    %v8286 = vmax.f32 %v7761, 0.0
    %v8287 = vmax.f32 %v7865, 0.0
    %v8288 = vmax.f32 %v7969, 0.0
    %v8289 = vmax.f32 %v8073, 0.0
    %v8290 = vmax.f32 %v8177, 0.0
    %v8291 = vmax.f32 %v8281, 0.0
    %v8292 = vpack.c.bf16 %v8284, %v8284
    %v8293 = vpack.c.bf16 %v8285, %v8285
    %v8294 = vpack.c.bf16 %v8286, %v8286
    %v8295 = vpack.c.bf16 %v8287, %v8287
    %v8296 = vpack.c.bf16 %v8288, %v8288
    %v8297 = vpack.c.bf16 %v8289, %v8289
    %v8298 = vpack.c.bf16 %v8290, %v8290
    %v8299 = vpack.c.bf16 %v8291, %v8291
    %v8300 = vld [vmem:[#allocation14] sm:$0xff]
    %v8301 = vld [vmem:[#allocation14 + $0x8] sm:$0xff]
    %v8302 = vld [vmem:[#allocation14 + $0x10] sm:$0xff]
    %v8303 = vld [vmem:[#allocation14 + $0x18] sm:$0xff]
    %v8304 = vld [vmem:[#allocation14 + $0x20] sm:$0xff]
    %v8305 = vld [vmem:[#allocation14 + $0x28] sm:$0xff]
    %v8306 = vld [vmem:[#allocation14 + $0x30] sm:$0xff]
    %v8307 = vld [vmem:[#allocation14 + $0x38] sm:$0xff]
    %v8308 = vld [vmem:[#allocation14 + $0x40] sm:$0xff]
    %v8309 = vld [vmem:[#allocation14 + $0x48] sm:$0xff]
    %v8310 = vld [vmem:[#allocation14 + $0x50] sm:$0xff]
    %v8311 = vld [vmem:[#allocation14 + $0x58] sm:$0xff]
    %v8312 = vld [vmem:[#allocation14 + $0x60] sm:$0xff]
    %v8313 = vld [vmem:[#allocation14 + $0x68] sm:$0xff]
    %v8314 = vld [vmem:[#allocation14 + $0x70] sm:$0xff]
    %v8315 = vld [vmem:[#allocation14 + $0x78] sm:$0xff]
    %v8316 = vld [vmem:[#allocation14 + $0x80] sm:$0xff]
    %v8317 = vld [vmem:[#allocation14 + $0x88] sm:$0xff]
    %v8318 = vld [vmem:[#allocation14 + $0x90] sm:$0xff]
    %v8319 = vld [vmem:[#allocation14 + $0x98] sm:$0xff]
    %v8320 = vld [vmem:[#allocation14 + $0xa0] sm:$0xff]
    %v8321 = vld [vmem:[#allocation14 + $0xa8] sm:$0xff]
    %v8322 = vld [vmem:[#allocation14 + $0xb0] sm:$0xff]
    %v8323 = vld [vmem:[#allocation14 + $0xb8] sm:$0xff]
    %v8324 = vld [vmem:[#allocation14 + $0xc0] sm:$0xff]
    %v8325 = vld [vmem:[#allocation14 + $0xc8] sm:$0xff]
    %v8326 = vld [vmem:[#allocation14 + $0xd0] sm:$0xff]
    %v8327 = vld [vmem:[#allocation14 + $0xd8] sm:$0xff]
    %v8328 = vld [vmem:[#allocation14 + $0xe0] sm:$0xff]
    %v8329 = vld [vmem:[#allocation14 + $0xe8] sm:$0xff]
    %v8330 = vld [vmem:[#allocation14 + $0xf0] sm:$0xff]
    %v8331 = vld [vmem:[#allocation14 + $0xf8] sm:$0xff]
    %v8332 = vld [vmem:[#allocation14 + $0x100] sm:$0xff]
    %v8333 = vld [vmem:[#allocation14 + $0x108] sm:$0xff]
    %v8334 = vld [vmem:[#allocation14 + $0x110] sm:$0xff]
    %v8335 = vld [vmem:[#allocation14 + $0x118] sm:$0xff]
    %v8336 = vld [vmem:[#allocation14 + $0x120] sm:$0xff]
    %v8337 = vld [vmem:[#allocation14 + $0x128] sm:$0xff]
    %v8338 = vld [vmem:[#allocation14 + $0x130] sm:$0xff]
    %v8339 = vld [vmem:[#allocation14 + $0x138] sm:$0xff]
    %v8340 = vld [vmem:[#allocation14 + $0x140] sm:$0xff]
    %v8341 = vld [vmem:[#allocation14 + $0x148] sm:$0xff]
    %v8342 = vld [vmem:[#allocation14 + $0x150] sm:$0xff]
    %v8343 = vld [vmem:[#allocation14 + $0x158] sm:$0xff]
    %v8344 = vld [vmem:[#allocation14 + $0x160] sm:$0xff]
    %v8345 = vld [vmem:[#allocation14 + $0x168] sm:$0xff]
    %v8346 = vld [vmem:[#allocation14 + $0x170] sm:$0xff]
    %v8347 = vld [vmem:[#allocation14 + $0x178] sm:$0xff]
    %v8348 = vld [vmem:[#allocation14 + $0x180] sm:$0xff]
    %v8349 = vld [vmem:[#allocation14 + $0x188] sm:$0xff]
    %v8350 = vld [vmem:[#allocation14 + $0x190] sm:$0xff]
    %v8351 = vld [vmem:[#allocation14 + $0x198] sm:$0xff]
    %v8352 = vld [vmem:[#allocation14 + $0x1a0] sm:$0xff]
    %v8353 = vld [vmem:[#allocation14 + $0x1a8] sm:$0xff]
    %v8354 = vld [vmem:[#allocation14 + $0x1b0] sm:$0xff]
    %v8355 = vld [vmem:[#allocation14 + $0x1b8] sm:$0xff]
    %v8356 = vld [vmem:[#allocation14 + $0x1c0] sm:$0xff]
    %v8357 = vld [vmem:[#allocation14 + $0x1c8] sm:$0xff]
    %v8358 = vld [vmem:[#allocation14 + $0x1d0] sm:$0xff]
    %v8359 = vld [vmem:[#allocation14 + $0x1d8] sm:$0xff]
    %v8360 = vld [vmem:[#allocation14 + $0x1e0] sm:$0xff]
    %v8361 = vld [vmem:[#allocation14 + $0x1e8] sm:$0xff]
    %v8362 = vld [vmem:[#allocation14 + $0x1f0] sm:$0xff]
    %v8363 = vld [vmem:[#allocation14 + $0x1f8] sm:$0xff]
    %v8364 = vld [vmem:[#allocation14 + $0x200] sm:$0xff]
    %v8365 = vld [vmem:[#allocation14 + $0x208] sm:$0xff]
    %v8366 = vld [vmem:[#allocation14 + $0x210] sm:$0xff]
    %v8367 = vld [vmem:[#allocation14 + $0x218] sm:$0xff]
    %v8368 = vld [vmem:[#allocation14 + $0x220] sm:$0xff]
    %v8369 = vld [vmem:[#allocation14 + $0x228] sm:$0xff]
    %v8370 = vld [vmem:[#allocation14 + $0x230] sm:$0xff]
    %v8371 = vld [vmem:[#allocation14 + $0x238] sm:$0xff]
    %v8372 = vld [vmem:[#allocation14 + $0x240] sm:$0xff]
    %v8373 = vld [vmem:[#allocation14 + $0x248] sm:$0xff]
    %v8374 = vld [vmem:[#allocation14 + $0x250] sm:$0xff]
    %v8375 = vld [vmem:[#allocation14 + $0x258] sm:$0xff]
    %v8376 = vld [vmem:[#allocation14 + $0x260] sm:$0xff]
    %v8377 = vld [vmem:[#allocation14 + $0x268] sm:$0xff]
    %v8378 = vld [vmem:[#allocation14 + $0x270] sm:$0xff]
    %v8379 = vld [vmem:[#allocation14 + $0x278] sm:$0xff]
    %v8380 = vld [vmem:[#allocation14 + $0x280] sm:$0xff]
    %v8381 = vld [vmem:[#allocation14 + $0x288] sm:$0xff]
    %v8382 = vld [vmem:[#allocation14 + $0x290] sm:$0xff]
    %v8383 = vld [vmem:[#allocation14 + $0x298] sm:$0xff]
    %v8384 = vld [vmem:[#allocation14 + $0x2a0] sm:$0xff]
    %v8385 = vld [vmem:[#allocation14 + $0x2a8] sm:$0xff]
    %v8386 = vld [vmem:[#allocation14 + $0x2b0] sm:$0xff]
    %v8387 = vld [vmem:[#allocation14 + $0x2b8] sm:$0xff]
    %v8388 = vld [vmem:[#allocation14 + $0x2c0] sm:$0xff]
    %v8389 = vld [vmem:[#allocation14 + $0x2c8] sm:$0xff]
    %v8390 = vld [vmem:[#allocation14 + $0x2d0] sm:$0xff]
    %v8391 = vld [vmem:[#allocation14 + $0x2d8] sm:$0xff]
    %v8392 = vld [vmem:[#allocation14 + $0x2e0] sm:$0xff]
    %v8393 = vld [vmem:[#allocation14 + $0x2e8] sm:$0xff]
    %v8394 = vld [vmem:[#allocation14 + $0x2f0] sm:$0xff]
    %v8395 = vld [vmem:[#allocation14 + $0x2f8] sm:$0xff]
    %v8396 = vld [vmem:[#allocation14 + $0x300] sm:$0xff]
    %v8397 = vld [vmem:[#allocation14 + $0x308] sm:$0xff]
    %v8398 = vld [vmem:[#allocation14 + $0x310] sm:$0xff]
    %v8399 = vld [vmem:[#allocation14 + $0x318] sm:$0xff]
    %v8400 = vld [vmem:[#allocation14 + $0x320] sm:$0xff]
    %v8401 = vld [vmem:[#allocation14 + $0x328] sm:$0xff]
    %v8402 = vld [vmem:[#allocation14 + $0x330] sm:$0xff]
    %v8403 = vld [vmem:[#allocation14 + $0x338] sm:$0xff]
    %v8404 = vld [vmem:[#allocation14 + $0x340] sm:$0xff]
    %v8405 = vld [vmem:[#allocation14 + $0x348] sm:$0xff]
    %v8406 = vld [vmem:[#allocation14 + $0x350] sm:$0xff]
    %v8407 = vld [vmem:[#allocation14 + $0x358] sm:$0xff]
    %v8408 = vld [vmem:[#allocation14 + $0x360] sm:$0xff]
    %v8409 = vld [vmem:[#allocation14 + $0x368] sm:$0xff]
    %v8410 = vld [vmem:[#allocation14 + $0x370] sm:$0xff]
    %v8411 = vld [vmem:[#allocation14 + $0x378] sm:$0xff]
    %v8412 = vld [vmem:[#allocation14 + $0x380] sm:$0xff]
    %v8413 = vld [vmem:[#allocation14 + $0x388] sm:$0xff]
    %v8414 = vld [vmem:[#allocation14 + $0x390] sm:$0xff]
    %v8415 = vld [vmem:[#allocation14 + $0x398] sm:$0xff]
    %v8416 = vld [vmem:[#allocation14 + $0x3a0] sm:$0xff]
    %v8417 = vld [vmem:[#allocation14 + $0x3a8] sm:$0xff]
    %v8418 = vld [vmem:[#allocation14 + $0x3b0] sm:$0xff]
    %v8419 = vld [vmem:[#allocation14 + $0x3b8] sm:$0xff]
    %v8420 = vld [vmem:[#allocation14 + $0x3c0] sm:$0xff]
    %v8421 = vld [vmem:[#allocation14 + $0x3c8] sm:$0xff]
    %v8422 = vld [vmem:[#allocation14 + $0x3d0] sm:$0xff]
    %v8423 = vld [vmem:[#allocation14 + $0x3d8] sm:$0xff]
    %v8424 = vld [vmem:[#allocation14 + $0x3e0] sm:$0xff]
    %v8425 = vld [vmem:[#allocation14 + $0x3e8] sm:$0xff]
    %v8426 = vld [vmem:[#allocation14 + $0x3f0] sm:$0xff]
    %v8427 = vld [vmem:[#allocation14 + $0x3f8] sm:$0xff]
    %v8428 = vld [vmem:[#allocation14 + $0x400] sm:$0xff]
    %v8429 = vld [vmem:[#allocation14 + $0x408] sm:$0xff]
    %v8430 = vld [vmem:[#allocation14 + $0x410] sm:$0xff]
    %v8431 = vld [vmem:[#allocation14 + $0x418] sm:$0xff]
    %v8432 = vld [vmem:[#allocation14 + $0x420] sm:$0xff]
    %v8433 = vld [vmem:[#allocation14 + $0x428] sm:$0xff]
    %v8434 = vld [vmem:[#allocation14 + $0x430] sm:$0xff]
    %v8435 = vld [vmem:[#allocation14 + $0x438] sm:$0xff]
    %v8436 = vld [vmem:[#allocation14 + $0x440] sm:$0xff]
    %v8437 = vld [vmem:[#allocation14 + $0x448] sm:$0xff]
    %v8438 = vld [vmem:[#allocation14 + $0x450] sm:$0xff]
    %v8439 = vld [vmem:[#allocation14 + $0x458] sm:$0xff]
    %v8440 = vld [vmem:[#allocation14 + $0x460] sm:$0xff]
    %v8441 = vld [vmem:[#allocation14 + $0x468] sm:$0xff]
    %v8442 = vld [vmem:[#allocation14 + $0x470] sm:$0xff]
    %v8443 = vld [vmem:[#allocation14 + $0x478] sm:$0xff]
    %v8444 = vld [vmem:[#allocation14 + $0x480] sm:$0xff]
    %v8445 = vld [vmem:[#allocation14 + $0x488] sm:$0xff]
    %v8446 = vld [vmem:[#allocation14 + $0x490] sm:$0xff]
    %v8447 = vld [vmem:[#allocation14 + $0x498] sm:$0xff]
    %v8448 = vld [vmem:[#allocation14 + $0x4a0] sm:$0xff]
    %v8449 = vld [vmem:[#allocation14 + $0x4a8] sm:$0xff]
    %v8450 = vld [vmem:[#allocation14 + $0x4b0] sm:$0xff]
    %v8451 = vld [vmem:[#allocation14 + $0x4b8] sm:$0xff]
    %v8452 = vld [vmem:[#allocation14 + $0x4c0] sm:$0xff]
    %v8453 = vld [vmem:[#allocation14 + $0x4c8] sm:$0xff]
    %v8454 = vld [vmem:[#allocation14 + $0x4d0] sm:$0xff]
    %v8455 = vld [vmem:[#allocation14 + $0x4d8] sm:$0xff]
    %v8456 = vld [vmem:[#allocation14 + $0x4e0] sm:$0xff]
    %v8457 = vld [vmem:[#allocation14 + $0x4e8] sm:$0xff]
    %v8458 = vld [vmem:[#allocation14 + $0x4f0] sm:$0xff]
    %v8459 = vld [vmem:[#allocation14 + $0x4f8] sm:$0xff]
    %v8460 = vld [vmem:[#allocation14 + $0x500] sm:$0xff]
    %v8461 = vld [vmem:[#allocation14 + $0x508] sm:$0xff]
    %v8462 = vld [vmem:[#allocation14 + $0x510] sm:$0xff]
    %v8463 = vld [vmem:[#allocation14 + $0x518] sm:$0xff]
    %v8464 = vld [vmem:[#allocation14 + $0x520] sm:$0xff]
    %v8465 = vld [vmem:[#allocation14 + $0x528] sm:$0xff]
    %v8466 = vld [vmem:[#allocation14 + $0x530] sm:$0xff]
    %v8467 = vld [vmem:[#allocation14 + $0x538] sm:$0xff]
    %v8468 = vld [vmem:[#allocation14 + $0x540] sm:$0xff]
    %v8469 = vld [vmem:[#allocation14 + $0x548] sm:$0xff]
    %v8470 = vld [vmem:[#allocation14 + $0x550] sm:$0xff]
    %v8471 = vld [vmem:[#allocation14 + $0x558] sm:$0xff]
    %v8472 = vld [vmem:[#allocation14 + $0x560] sm:$0xff]
    %v8473 = vld [vmem:[#allocation14 + $0x568] sm:$0xff]
    %v8474 = vld [vmem:[#allocation14 + $0x570] sm:$0xff]
    %v8475 = vld [vmem:[#allocation14 + $0x578] sm:$0xff]
    %v8476 = vld [vmem:[#allocation14 + $0x580] sm:$0xff]
    %v8477 = vld [vmem:[#allocation14 + $0x588] sm:$0xff]
    %v8478 = vld [vmem:[#allocation14 + $0x590] sm:$0xff]
    %v8479 = vld [vmem:[#allocation14 + $0x598] sm:$0xff]
    %v8480 = vld [vmem:[#allocation14 + $0x5a0] sm:$0xff]
    %v8481 = vld [vmem:[#allocation14 + $0x5a8] sm:$0xff]
    %v8482 = vld [vmem:[#allocation14 + $0x5b0] sm:$0xff]
    %v8483 = vld [vmem:[#allocation14 + $0x5b8] sm:$0xff]
    %v8484 = vld [vmem:[#allocation14 + $0x5c0] sm:$0xff]
    %v8485 = vld [vmem:[#allocation14 + $0x5c8] sm:$0xff]
    %v8486 = vld [vmem:[#allocation14 + $0x5d0] sm:$0xff]
    %v8487 = vld [vmem:[#allocation14 + $0x5d8] sm:$0xff]
    %v8488 = vld [vmem:[#allocation14 + $0x5e0] sm:$0xff]
    %v8489 = vld [vmem:[#allocation14 + $0x5e8] sm:$0xff]
    %v8490 = vld [vmem:[#allocation14 + $0x5f0] sm:$0xff]
    %v8491 = vld [vmem:[#allocation14 + $0x5f8] sm:$0xff]
    %v8492 = vld [vmem:[#allocation14 + $0x600] sm:$0xff]
    %v8493 = vld [vmem:[#allocation14 + $0x608] sm:$0xff]
    %v8494 = vld [vmem:[#allocation14 + $0x610] sm:$0xff]
    %v8495 = vld [vmem:[#allocation14 + $0x618] sm:$0xff]
    %v8496 = vld [vmem:[#allocation14 + $0x620] sm:$0xff]
    %v8497 = vld [vmem:[#allocation14 + $0x628] sm:$0xff]
    %v8498 = vld [vmem:[#allocation14 + $0x630] sm:$0xff]
    %v8499 = vld [vmem:[#allocation14 + $0x638] sm:$0xff]
    %v8500 = vld [vmem:[#allocation14 + $0x640] sm:$0xff]
    %v8501 = vld [vmem:[#allocation14 + $0x648] sm:$0xff]
    %v8502 = vld [vmem:[#allocation14 + $0x650] sm:$0xff]
    %v8503 = vld [vmem:[#allocation14 + $0x658] sm:$0xff]
    %v8504 = vld [vmem:[#allocation14 + $0x660] sm:$0xff]
    %v8505 = vld [vmem:[#allocation14 + $0x668] sm:$0xff]
    %v8506 = vld [vmem:[#allocation14 + $0x670] sm:$0xff]
    %v8507 = vld [vmem:[#allocation14 + $0x678] sm:$0xff]
    %v8508 = vld [vmem:[#allocation14 + $0x680] sm:$0xff]
    %v8509 = vld [vmem:[#allocation14 + $0x688] sm:$0xff]
    %v8510 = vld [vmem:[#allocation14 + $0x690] sm:$0xff]
    %v8511 = vld [vmem:[#allocation14 + $0x698] sm:$0xff]
    %v8512 = vld [vmem:[#allocation14 + $0x6a0] sm:$0xff]
    %v8513 = vld [vmem:[#allocation14 + $0x6a8] sm:$0xff]
    %v8514 = vld [vmem:[#allocation14 + $0x6b0] sm:$0xff]
    %v8515 = vld [vmem:[#allocation14 + $0x6b8] sm:$0xff]
    %v8516 = vld [vmem:[#allocation14 + $0x6c0] sm:$0xff]
    %v8517 = vld [vmem:[#allocation14 + $0x6c8] sm:$0xff]
    %v8518 = vld [vmem:[#allocation14 + $0x6d0] sm:$0xff]
    %v8519 = vld [vmem:[#allocation14 + $0x6d8] sm:$0xff]
    %v8520 = vld [vmem:[#allocation14 + $0x6e0] sm:$0xff]
    %v8521 = vld [vmem:[#allocation14 + $0x6e8] sm:$0xff]
    %v8522 = vld [vmem:[#allocation14 + $0x6f0] sm:$0xff]
    %v8523 = vld [vmem:[#allocation14 + $0x6f8] sm:$0xff]
    %v8524 = vld [vmem:[#allocation14 + $0x700] sm:$0xff]
    %v8525 = vld [vmem:[#allocation14 + $0x708] sm:$0xff]
    %v8526 = vld [vmem:[#allocation14 + $0x710] sm:$0xff]
    %v8527 = vld [vmem:[#allocation14 + $0x718] sm:$0xff]
    %v8528 = vld [vmem:[#allocation14 + $0x720] sm:$0xff]
    %v8529 = vld [vmem:[#allocation14 + $0x728] sm:$0xff]
    %v8530 = vld [vmem:[#allocation14 + $0x730] sm:$0xff]
    %v8531 = vld [vmem:[#allocation14 + $0x738] sm:$0xff]
    %v8532 = vld [vmem:[#allocation14 + $0x740] sm:$0xff]
    %v8533 = vld [vmem:[#allocation14 + $0x748] sm:$0xff]
    %v8534 = vld [vmem:[#allocation14 + $0x750] sm:$0xff]
    %v8535 = vld [vmem:[#allocation14 + $0x758] sm:$0xff]
    %v8536 = vld [vmem:[#allocation14 + $0x760] sm:$0xff]
    %v8537 = vld [vmem:[#allocation14 + $0x768] sm:$0xff]
    %v8538 = vld [vmem:[#allocation14 + $0x770] sm:$0xff]
    %v8539 = vld [vmem:[#allocation14 + $0x778] sm:$0xff]
    %v8540 = vld [vmem:[#allocation14 + $0x780] sm:$0xff]
    %v8541 = vld [vmem:[#allocation14 + $0x788] sm:$0xff]
    %v8542 = vld [vmem:[#allocation14 + $0x790] sm:$0xff]
    %v8543 = vld [vmem:[#allocation14 + $0x798] sm:$0xff]
    %v8544 = vld [vmem:[#allocation14 + $0x7a0] sm:$0xff]
    %v8545 = vld [vmem:[#allocation14 + $0x7a8] sm:$0xff]
    %v8546 = vld [vmem:[#allocation14 + $0x7b0] sm:$0xff]
    %v8547 = vld [vmem:[#allocation14 + $0x7b8] sm:$0xff]
    %v8548 = vld [vmem:[#allocation14 + $0x7c0] sm:$0xff]
    %v8549 = vld [vmem:[#allocation14 + $0x7c8] sm:$0xff]
    %v8550 = vld [vmem:[#allocation14 + $0x7d0] sm:$0xff]
    %v8551 = vld [vmem:[#allocation14 + $0x7d8] sm:$0xff]
    %v8552 = vld [vmem:[#allocation14 + $0x7e0] sm:$0xff]
    %v8553 = vld [vmem:[#allocation14 + $0x7e8] sm:$0xff]
    %v8554 = vld [vmem:[#allocation14 + $0x7f0] sm:$0xff]
    %v8555 = vld [vmem:[#allocation14 + $0x7f8] sm:$0xff]
    %v8556 = vld [vmem:[#allocation14 + $0x800] sm:$0xff]
    %v8557 = vld [vmem:[#allocation14 + $0x808] sm:$0xff]
    %v8558 = vld [vmem:[#allocation14 + $0x810] sm:$0xff]
    %v8559 = vld [vmem:[#allocation14 + $0x818] sm:$0xff]
    %v8560 = vld [vmem:[#allocation14 + $0x820] sm:$0xff]
    %v8561 = vld [vmem:[#allocation14 + $0x828] sm:$0xff]
    %v8562 = vld [vmem:[#allocation14 + $0x830] sm:$0xff]
    %v8563 = vld [vmem:[#allocation14 + $0x838] sm:$0xff]
    %v8564 = vld [vmem:[#allocation14 + $0x840] sm:$0xff]
    %v8565 = vld [vmem:[#allocation14 + $0x848] sm:$0xff]
    %v8566 = vld [vmem:[#allocation14 + $0x850] sm:$0xff]
    %v8567 = vld [vmem:[#allocation14 + $0x858] sm:$0xff]
    %v8568 = vld [vmem:[#allocation14 + $0x860] sm:$0xff]
    %v8569 = vld [vmem:[#allocation14 + $0x868] sm:$0xff]
    %v8570 = vld [vmem:[#allocation14 + $0x870] sm:$0xff]
    %v8571 = vld [vmem:[#allocation14 + $0x878] sm:$0xff]
    %v8572 = vld [vmem:[#allocation14 + $0x880] sm:$0xff]
    %v8573 = vld [vmem:[#allocation14 + $0x888] sm:$0xff]
    %v8574 = vld [vmem:[#allocation14 + $0x890] sm:$0xff]
    %v8575 = vld [vmem:[#allocation14 + $0x898] sm:$0xff]
    %v8576 = vld [vmem:[#allocation14 + $0x8a0] sm:$0xff]
    %v8577 = vld [vmem:[#allocation14 + $0x8a8] sm:$0xff]
    %v8578 = vld [vmem:[#allocation14 + $0x8b0] sm:$0xff]
    %v8579 = vld [vmem:[#allocation14 + $0x8b8] sm:$0xff]
    %v8580 = vld [vmem:[#allocation14 + $0x8c0] sm:$0xff]
    %v8581 = vld [vmem:[#allocation14 + $0x8c8] sm:$0xff]
    %v8582 = vld [vmem:[#allocation14 + $0x8d0] sm:$0xff]
    %v8583 = vld [vmem:[#allocation14 + $0x8d8] sm:$0xff]
    %v8584 = vld [vmem:[#allocation14 + $0x8e0] sm:$0xff]
    %v8585 = vld [vmem:[#allocation14 + $0x8e8] sm:$0xff]
    %v8586 = vld [vmem:[#allocation14 + $0x8f0] sm:$0xff]
    %v8587 = vld [vmem:[#allocation14 + $0x8f8] sm:$0xff]
    %v8588 = vld [vmem:[#allocation14 + $0x900] sm:$0xff]
    %v8589 = vld [vmem:[#allocation14 + $0x908] sm:$0xff]
    %v8590 = vld [vmem:[#allocation14 + $0x910] sm:$0xff]
    %v8591 = vld [vmem:[#allocation14 + $0x918] sm:$0xff]
    %v8592 = vld [vmem:[#allocation14 + $0x920] sm:$0xff]
    %v8593 = vld [vmem:[#allocation14 + $0x928] sm:$0xff]
    %v8594 = vld [vmem:[#allocation14 + $0x930] sm:$0xff]
    %v8595 = vld [vmem:[#allocation14 + $0x938] sm:$0xff]
    %v8596 = vld [vmem:[#allocation14 + $0x940] sm:$0xff]
    %v8597 = vld [vmem:[#allocation14 + $0x948] sm:$0xff]
    %v8598 = vld [vmem:[#allocation14 + $0x950] sm:$0xff]
    %v8599 = vld [vmem:[#allocation14 + $0x958] sm:$0xff]
    %v8600 = vld [vmem:[#allocation14 + $0x960] sm:$0xff]
    %v8601 = vld [vmem:[#allocation14 + $0x968] sm:$0xff]
    %v8602 = vld [vmem:[#allocation14 + $0x970] sm:$0xff]
    %v8603 = vld [vmem:[#allocation14 + $0x978] sm:$0xff]
    %v8604 = vld [vmem:[#allocation14 + $0x980] sm:$0xff]
    %v8605 = vld [vmem:[#allocation14 + $0x988] sm:$0xff]
    %v8606 = vld [vmem:[#allocation14 + $0x990] sm:$0xff]
    %v8607 = vld [vmem:[#allocation14 + $0x998] sm:$0xff]
    %v8608 = vld [vmem:[#allocation14 + $0x9a0] sm:$0xff]
    %v8609 = vld [vmem:[#allocation14 + $0x9a8] sm:$0xff]
    %v8610 = vld [vmem:[#allocation14 + $0x9b0] sm:$0xff]
    %v8611 = vld [vmem:[#allocation14 + $0x9b8] sm:$0xff]
    %v8612 = vld [vmem:[#allocation14 + $0x9c0] sm:$0xff]
    %v8613 = vld [vmem:[#allocation14 + $0x9c8] sm:$0xff]
    %v8614 = vld [vmem:[#allocation14 + $0x9d0] sm:$0xff]
    %v8615 = vld [vmem:[#allocation14 + $0x9d8] sm:$0xff]
    %v8616 = vld [vmem:[#allocation14 + $0x9e0] sm:$0xff]
    %v8617 = vld [vmem:[#allocation14 + $0x9e8] sm:$0xff]
    %v8618 = vld [vmem:[#allocation14 + $0x9f0] sm:$0xff]
    %v8619 = vld [vmem:[#allocation14 + $0x9f8] sm:$0xff]
    %v8620 = vld [vmem:[#allocation14 + $0xa00] sm:$0xff]
    %v8621 = vld [vmem:[#allocation14 + $0xa08] sm:$0xff]
    %v8622 = vld [vmem:[#allocation14 + $0xa10] sm:$0xff]
    %v8623 = vld [vmem:[#allocation14 + $0xa18] sm:$0xff]
    %v8624 = vld [vmem:[#allocation14 + $0xa20] sm:$0xff]
    %v8625 = vld [vmem:[#allocation14 + $0xa28] sm:$0xff]
    %v8626 = vld [vmem:[#allocation14 + $0xa30] sm:$0xff]
    %v8627 = vld [vmem:[#allocation14 + $0xa38] sm:$0xff]
    %v8628 = vld [vmem:[#allocation14 + $0xa40] sm:$0xff]
    %v8629 = vld [vmem:[#allocation14 + $0xa48] sm:$0xff]
    %v8630 = vld [vmem:[#allocation14 + $0xa50] sm:$0xff]
    %v8631 = vld [vmem:[#allocation14 + $0xa58] sm:$0xff]
    %v8632 = vld [vmem:[#allocation14 + $0xa60] sm:$0xff]
    %v8633 = vld [vmem:[#allocation14 + $0xa68] sm:$0xff]
    %v8634 = vld [vmem:[#allocation14 + $0xa70] sm:$0xff]
    %v8635 = vld [vmem:[#allocation14 + $0xa78] sm:$0xff]
    %v8636 = vld [vmem:[#allocation14 + $0xa80] sm:$0xff]
    %v8637 = vld [vmem:[#allocation14 + $0xa88] sm:$0xff]
    %v8638 = vld [vmem:[#allocation14 + $0xa90] sm:$0xff]
    %v8639 = vld [vmem:[#allocation14 + $0xa98] sm:$0xff]
    %v8640 = vld [vmem:[#allocation14 + $0xaa0] sm:$0xff]
    %v8641 = vld [vmem:[#allocation14 + $0xaa8] sm:$0xff]
    %v8642 = vld [vmem:[#allocation14 + $0xab0] sm:$0xff]
    %v8643 = vld [vmem:[#allocation14 + $0xab8] sm:$0xff]
    %v8644 = vld [vmem:[#allocation14 + $0xac0] sm:$0xff]
    %v8645 = vld [vmem:[#allocation14 + $0xac8] sm:$0xff]
    %v8646 = vld [vmem:[#allocation14 + $0xad0] sm:$0xff]
    %v8647 = vld [vmem:[#allocation14 + $0xad8] sm:$0xff]
    %v8648 = vld [vmem:[#allocation14 + $0xae0] sm:$0xff]
    %v8649 = vld [vmem:[#allocation14 + $0xae8] sm:$0xff]
    %v8650 = vld [vmem:[#allocation14 + $0xaf0] sm:$0xff]
    %v8651 = vld [vmem:[#allocation14 + $0xaf8] sm:$0xff]
    %v8652 = vld [vmem:[#allocation14 + $0xb00] sm:$0xff]
    %v8653 = vld [vmem:[#allocation14 + $0xb08] sm:$0xff]
    %v8654 = vld [vmem:[#allocation14 + $0xb10] sm:$0xff]
    %v8655 = vld [vmem:[#allocation14 + $0xb18] sm:$0xff]
    %v8656 = vld [vmem:[#allocation14 + $0xb20] sm:$0xff]
    %v8657 = vld [vmem:[#allocation14 + $0xb28] sm:$0xff]
    %v8658 = vld [vmem:[#allocation14 + $0xb30] sm:$0xff]
    %v8659 = vld [vmem:[#allocation14 + $0xb38] sm:$0xff]
    %v8660 = vld [vmem:[#allocation14 + $0xb40] sm:$0xff]
    %v8661 = vld [vmem:[#allocation14 + $0xb48] sm:$0xff]
    %v8662 = vld [vmem:[#allocation14 + $0xb50] sm:$0xff]
    %v8663 = vld [vmem:[#allocation14 + $0xb58] sm:$0xff]
    %v8664 = vld [vmem:[#allocation14 + $0xb60] sm:$0xff]
    %v8665 = vld [vmem:[#allocation14 + $0xb68] sm:$0xff]
    %v8666 = vld [vmem:[#allocation14 + $0xb70] sm:$0xff]
    %v8667 = vld [vmem:[#allocation14 + $0xb78] sm:$0xff]
    %v8668 = vld [vmem:[#allocation14 + $0xb80] sm:$0xff]
    %v8669 = vld [vmem:[#allocation14 + $0xb88] sm:$0xff]
    %v8670 = vld [vmem:[#allocation14 + $0xb90] sm:$0xff]
    %v8671 = vld [vmem:[#allocation14 + $0xb98] sm:$0xff]
    %v8672 = vld [vmem:[#allocation14 + $0xba0] sm:$0xff]
    %v8673 = vld [vmem:[#allocation14 + $0xba8] sm:$0xff]
    %v8674 = vld [vmem:[#allocation14 + $0xbb0] sm:$0xff]
    %v8675 = vld [vmem:[#allocation14 + $0xbb8] sm:$0xff]
    %v8676 = vld [vmem:[#allocation14 + $0xbc0] sm:$0xff]
    %v8677 = vld [vmem:[#allocation14 + $0xbc8] sm:$0xff]
    %v8678 = vld [vmem:[#allocation14 + $0xbd0] sm:$0xff]
    %v8679 = vld [vmem:[#allocation14 + $0xbd8] sm:$0xff]
    %v8680 = vld [vmem:[#allocation14 + $0xbe0] sm:$0xff]
    %v8681 = vld [vmem:[#allocation14 + $0xbe8] sm:$0xff]
    %v8682 = vld [vmem:[#allocation14 + $0xbf0] sm:$0xff]
    %v8683 = vld [vmem:[#allocation14 + $0xbf8] sm:$0xff]
    %v8684 = vld [vmem:[#allocation14 + $0xc00] sm:$0xff]
    %v8685 = vld [vmem:[#allocation14 + $0xc08] sm:$0xff]
    %v8686 = vld [vmem:[#allocation14 + $0xc10] sm:$0xff]
    %v8687 = vld [vmem:[#allocation14 + $0xc18] sm:$0xff]
    %v8688 = vld [vmem:[#allocation14 + $0xc20] sm:$0xff]
    %v8689 = vld [vmem:[#allocation14 + $0xc28] sm:$0xff]
    %v8690 = vld [vmem:[#allocation14 + $0xc30] sm:$0xff]
    %v8691 = vld [vmem:[#allocation14 + $0xc38] sm:$0xff]
    %v8692 = vld [vmem:[#allocation14 + $0xc40] sm:$0xff]
    %v8693 = vld [vmem:[#allocation14 + $0xc48] sm:$0xff]
    %v8694 = vld [vmem:[#allocation14 + $0xc50] sm:$0xff]
    %v8695 = vld [vmem:[#allocation14 + $0xc58] sm:$0xff]
    %v8696 = vld [vmem:[#allocation14 + $0xc60] sm:$0xff]
    %v8697 = vld [vmem:[#allocation14 + $0xc68] sm:$0xff]
    %v8698 = vld [vmem:[#allocation14 + $0xc70] sm:$0xff]
    %v8699 = vld [vmem:[#allocation14 + $0xc78] sm:$0xff]
    %v8700 = vld [vmem:[#allocation14 + $0xc80] sm:$0xff]
    %v8701 = vld [vmem:[#allocation14 + $0xc88] sm:$0xff]
    %v8702 = vld [vmem:[#allocation14 + $0xc90] sm:$0xff]
    %v8703 = vld [vmem:[#allocation14 + $0xc98] sm:$0xff]
    %v8704 = vld [vmem:[#allocation14 + $0xca0] sm:$0xff]
    %v8705 = vld [vmem:[#allocation14 + $0xca8] sm:$0xff]
    %v8706 = vld [vmem:[#allocation14 + $0xcb0] sm:$0xff]
    %v8707 = vld [vmem:[#allocation14 + $0xcb8] sm:$0xff]
    %v8708 = vld [vmem:[#allocation14 + $0xcc0] sm:$0xff]
    %v8709 = vld [vmem:[#allocation14 + $0xcc8] sm:$0xff]
    %v8710 = vld [vmem:[#allocation14 + $0xcd0] sm:$0xff]
    %v8711 = vld [vmem:[#allocation14 + $0xcd8] sm:$0xff]
    %v8712 = vld [vmem:[#allocation14 + $0xce0] sm:$0xff]
    %v8713 = vld [vmem:[#allocation14 + $0xce8] sm:$0xff]
    %v8714 = vld [vmem:[#allocation14 + $0xcf0] sm:$0xff]
    %v8715 = vld [vmem:[#allocation14 + $0xcf8] sm:$0xff]
    %v8716 = vld [vmem:[#allocation14 + $0xd00] sm:$0xff]
    %v8717 = vld [vmem:[#allocation14 + $0xd08] sm:$0xff]
    %v8718 = vld [vmem:[#allocation14 + $0xd10] sm:$0xff]
    %v8719 = vld [vmem:[#allocation14 + $0xd18] sm:$0xff]
    %v8720 = vld [vmem:[#allocation14 + $0xd20] sm:$0xff]
    %v8721 = vld [vmem:[#allocation14 + $0xd28] sm:$0xff]
    %v8722 = vld [vmem:[#allocation14 + $0xd30] sm:$0xff]
    %v8723 = vld [vmem:[#allocation14 + $0xd38] sm:$0xff]
    %v8724 = vld [vmem:[#allocation14 + $0xd40] sm:$0xff]
    %v8725 = vld [vmem:[#allocation14 + $0xd48] sm:$0xff]
    %v8726 = vld [vmem:[#allocation14 + $0xd50] sm:$0xff]
    %v8727 = vld [vmem:[#allocation14 + $0xd58] sm:$0xff]
    %v8728 = vld [vmem:[#allocation14 + $0xd60] sm:$0xff]
    %v8729 = vld [vmem:[#allocation14 + $0xd68] sm:$0xff]
    %v8730 = vld [vmem:[#allocation14 + $0xd70] sm:$0xff]
    %v8731 = vld [vmem:[#allocation14 + $0xd78] sm:$0xff]
    %v8732 = vld [vmem:[#allocation14 + $0xd80] sm:$0xff]
    %v8733 = vld [vmem:[#allocation14 + $0xd88] sm:$0xff]
    %v8734 = vld [vmem:[#allocation14 + $0xd90] sm:$0xff]
    %v8735 = vld [vmem:[#allocation14 + $0xd98] sm:$0xff]
    %v8736 = vld [vmem:[#allocation14 + $0xda0] sm:$0xff]
    %v8737 = vld [vmem:[#allocation14 + $0xda8] sm:$0xff]
    %v8738 = vld [vmem:[#allocation14 + $0xdb0] sm:$0xff]
    %v8739 = vld [vmem:[#allocation14 + $0xdb8] sm:$0xff]
    %v8740 = vld [vmem:[#allocation14 + $0xdc0] sm:$0xff]
    %v8741 = vld [vmem:[#allocation14 + $0xdc8] sm:$0xff]
    %v8742 = vld [vmem:[#allocation14 + $0xdd0] sm:$0xff]
    %v8743 = vld [vmem:[#allocation14 + $0xdd8] sm:$0xff]
    %v8744 = vld [vmem:[#allocation14 + $0xde0] sm:$0xff]
    %v8745 = vld [vmem:[#allocation14 + $0xde8] sm:$0xff]
    %v8746 = vld [vmem:[#allocation14 + $0xdf0] sm:$0xff]
    %v8747 = vld [vmem:[#allocation14 + $0xdf8] sm:$0xff]
    %v8748 = vld [vmem:[#allocation14 + $0xe00] sm:$0xff]
    %v8749 = vld [vmem:[#allocation14 + $0xe08] sm:$0xff]
    %v8750 = vld [vmem:[#allocation14 + $0xe10] sm:$0xff]
    %v8751 = vld [vmem:[#allocation14 + $0xe18] sm:$0xff]
    %v8752 = vld [vmem:[#allocation14 + $0xe20] sm:$0xff]
    %v8753 = vld [vmem:[#allocation14 + $0xe28] sm:$0xff]
    %v8754 = vld [vmem:[#allocation14 + $0xe30] sm:$0xff]
    %v8755 = vld [vmem:[#allocation14 + $0xe38] sm:$0xff]
    %v8756 = vld [vmem:[#allocation14 + $0xe40] sm:$0xff]
    %v8757 = vld [vmem:[#allocation14 + $0xe48] sm:$0xff]
    %v8758 = vld [vmem:[#allocation14 + $0xe50] sm:$0xff]
    %v8759 = vld [vmem:[#allocation14 + $0xe58] sm:$0xff]
    %v8760 = vld [vmem:[#allocation14 + $0xe60] sm:$0xff]
    %v8761 = vld [vmem:[#allocation14 + $0xe68] sm:$0xff]
    %v8762 = vld [vmem:[#allocation14 + $0xe70] sm:$0xff]
    %v8763 = vld [vmem:[#allocation14 + $0xe78] sm:$0xff]
    %v8764 = vld [vmem:[#allocation14 + $0xe80] sm:$0xff]
    %v8765 = vld [vmem:[#allocation14 + $0xe88] sm:$0xff]
    %v8766 = vld [vmem:[#allocation14 + $0xe90] sm:$0xff]
    %v8767 = vld [vmem:[#allocation14 + $0xe98] sm:$0xff]
    %v8768 = vld [vmem:[#allocation14 + $0xea0] sm:$0xff]
    %v8769 = vld [vmem:[#allocation14 + $0xea8] sm:$0xff]
    %v8770 = vld [vmem:[#allocation14 + $0xeb0] sm:$0xff]
    %v8771 = vld [vmem:[#allocation14 + $0xeb8] sm:$0xff]
    %v8772 = vld [vmem:[#allocation14 + $0xec0] sm:$0xff]
    %v8773 = vld [vmem:[#allocation14 + $0xec8] sm:$0xff]
    %v8774 = vld [vmem:[#allocation14 + $0xed0] sm:$0xff]
    %v8775 = vld [vmem:[#allocation14 + $0xed8] sm:$0xff]
    %v8776 = vld [vmem:[#allocation14 + $0xee0] sm:$0xff]
    %v8777 = vld [vmem:[#allocation14 + $0xee8] sm:$0xff]
    %v8778 = vld [vmem:[#allocation14 + $0xef0] sm:$0xff]
    %v8779 = vld [vmem:[#allocation14 + $0xef8] sm:$0xff]
    %v8780 = vld [vmem:[#allocation14 + $0xf00] sm:$0xff]
    %v8781 = vld [vmem:[#allocation14 + $0xf08] sm:$0xff]
    %v8782 = vld [vmem:[#allocation14 + $0xf10] sm:$0xff]
    %v8783 = vld [vmem:[#allocation14 + $0xf18] sm:$0xff]
    %v8784 = vld [vmem:[#allocation14 + $0xf20] sm:$0xff]
    %v8785 = vld [vmem:[#allocation14 + $0xf28] sm:$0xff]
    %v8786 = vld [vmem:[#allocation14 + $0xf30] sm:$0xff]
    %v8787 = vld [vmem:[#allocation14 + $0xf38] sm:$0xff]
    %v8788 = vld [vmem:[#allocation14 + $0xf40] sm:$0xff]
    %v8789 = vld [vmem:[#allocation14 + $0xf48] sm:$0xff]
    %v8790 = vld [vmem:[#allocation14 + $0xf50] sm:$0xff]
    %v8791 = vld [vmem:[#allocation14 + $0xf58] sm:$0xff]
    %v8792 = vld [vmem:[#allocation14 + $0xf60] sm:$0xff]
    %v8793 = vld [vmem:[#allocation14 + $0xf68] sm:$0xff]
    %v8794 = vld [vmem:[#allocation14 + $0xf70] sm:$0xff]
    %v8795 = vld [vmem:[#allocation14 + $0xf78] sm:$0xff]
    %v8796 = vld [vmem:[#allocation14 + $0xf80] sm:$0xff]
    %v8797 = vld [vmem:[#allocation14 + $0xf88] sm:$0xff]
    %v8798 = vld [vmem:[#allocation14 + $0xf90] sm:$0xff]
    %v8799 = vld [vmem:[#allocation14 + $0xf98] sm:$0xff]
    %v8800 = vld [vmem:[#allocation14 + $0xfa0] sm:$0xff]
    %v8801 = vld [vmem:[#allocation14 + $0xfa8] sm:$0xff]
    %v8802 = vld [vmem:[#allocation14 + $0xfb0] sm:$0xff]
    %v8803 = vld [vmem:[#allocation14 + $0xfb8] sm:$0xff]
    %v8804 = vld [vmem:[#allocation14 + $0xfc0] sm:$0xff]
    %v8805 = vld [vmem:[#allocation14 + $0xfc8] sm:$0xff]
    %v8806 = vld [vmem:[#allocation14 + $0xfd0] sm:$0xff]
    %v8807 = vld [vmem:[#allocation14 + $0xfd8] sm:$0xff]
    %v8808 = vld [vmem:[#allocation14 + $0xfe0] sm:$0xff]
    %v8809 = vld [vmem:[#allocation14 + $0xfe8] sm:$0xff]
    %v8810 = vld [vmem:[#allocation14 + $0xff0] sm:$0xff]
    %v8811 = vld [vmem:[#allocation14 + $0xff8] sm:$0xff]
    %v8812 = vld [vmem:[#allocation16] sm:$0xff]
    %v8814 = vperm.slane %v8812, 0
    %v8815 = vperm.slane %v8812, 1
    %v8816 = vperm.slane %v8812, 2
    %v8817 = vperm.slane %v8812, 3
    %v8818 = vperm.slane %v8812, 4
    %v8819 = vperm.slane %v8812, 5
    %v8820 = vperm.slane %v8812, 6
    %v8821 = vperm.slane %v8812, 7
    %v9342 = vunpack.c.l.b16 %v8300
    %v9343 = vunpack.c.h.b16 %v8300
    %v9344 = vunpack.c.l.b16 %v8301
    %v9345 = vunpack.c.h.b16 %v8301
    %v9346 = vunpack.c.l.b16 %v8302
    %v9347 = vunpack.c.h.b16 %v8302
    %v9348 = vunpack.c.l.b16 %v8303
    %v9349 = vunpack.c.h.b16 %v8303
    %v9350 = vunpack.c.l.b16 %v8304
    %v9351 = vunpack.c.h.b16 %v8304
    %v9352 = vunpack.c.l.b16 %v8305
    %v9353 = vunpack.c.h.b16 %v8305
    %v9354 = vunpack.c.l.b16 %v8306
    %v9355 = vunpack.c.h.b16 %v8306
    %v9356 = vunpack.c.l.b16 %v8307
    %v9357 = vunpack.c.h.b16 %v8307
    %v9358 = vunpack.c.l.b16 %v8308
    %v9359 = vunpack.c.h.b16 %v8308
    %v9360 = vunpack.c.l.b16 %v8309
    %v9361 = vunpack.c.h.b16 %v8309
    %v9362 = vunpack.c.l.b16 %v8310
    %v9363 = vunpack.c.h.b16 %v8310
    %v9364 = vunpack.c.l.b16 %v8311
    %v9365 = vunpack.c.h.b16 %v8311
    %v9366 = vunpack.c.l.b16 %v8312
    %v9367 = vunpack.c.h.b16 %v8312
    %v9368 = vunpack.c.l.b16 %v8313
    %v9369 = vunpack.c.h.b16 %v8313
    %v9370 = vunpack.c.l.b16 %v8314
    %v9371 = vunpack.c.h.b16 %v8314
    %v9372 = vunpack.c.l.b16 %v8315
    %v9373 = vunpack.c.h.b16 %v8315
    %v9374 = vunpack.c.l.b16 %v8316
    %v9375 = vunpack.c.h.b16 %v8316
    %v9376 = vunpack.c.l.b16 %v8317
    %v9377 = vunpack.c.h.b16 %v8317
    %v9378 = vunpack.c.l.b16 %v8318
    %v9379 = vunpack.c.h.b16 %v8318
    %v9380 = vunpack.c.l.b16 %v8319
    %v9381 = vunpack.c.h.b16 %v8319
    %v9382 = vunpack.c.l.b16 %v8320
    %v9383 = vunpack.c.h.b16 %v8320
    %v9384 = vunpack.c.l.b16 %v8321
    %v9385 = vunpack.c.h.b16 %v8321
    %v9386 = vunpack.c.l.b16 %v8322
    %v9387 = vunpack.c.h.b16 %v8322
    %v9388 = vunpack.c.l.b16 %v8323
    %v9389 = vunpack.c.h.b16 %v8323
    %v9390 = vunpack.c.l.b16 %v8324
    %v9391 = vunpack.c.h.b16 %v8324
    %v9392 = vunpack.c.l.b16 %v8325
    %v9393 = vunpack.c.h.b16 %v8325
    %v9394 = vunpack.c.l.b16 %v8326
    %v9395 = vunpack.c.h.b16 %v8326
    %v9396 = vunpack.c.l.b16 %v8327
    %v9397 = vunpack.c.h.b16 %v8327
    %v9398 = vunpack.c.l.b16 %v8328
    %v9399 = vunpack.c.h.b16 %v8328
    %v9400 = vunpack.c.l.b16 %v8329
    %v9401 = vunpack.c.h.b16 %v8329
    %v9402 = vunpack.c.l.b16 %v8330
    %v9403 = vunpack.c.h.b16 %v8330
    %v9404 = vunpack.c.l.b16 %v8331
    %v9405 = vunpack.c.h.b16 %v8331
    %v9406 = vunpack.c.l.b16 %v8332
    %v9407 = vunpack.c.h.b16 %v8332
    %v9408 = vunpack.c.l.b16 %v8333
    %v9409 = vunpack.c.h.b16 %v8333
    %v9410 = vunpack.c.l.b16 %v8334
    %v9411 = vunpack.c.h.b16 %v8334
    %v9412 = vunpack.c.l.b16 %v8335
    %v9413 = vunpack.c.h.b16 %v8335
    %v9414 = vunpack.c.l.b16 %v8336
    %v9415 = vunpack.c.h.b16 %v8336
    %v9416 = vunpack.c.l.b16 %v8337
    %v9417 = vunpack.c.h.b16 %v8337
    %v9418 = vunpack.c.l.b16 %v8338
    %v9419 = vunpack.c.h.b16 %v8338
    %v9420 = vunpack.c.l.b16 %v8339
    %v9421 = vunpack.c.h.b16 %v8339
    %v9422 = vunpack.c.l.b16 %v8340
    %v9423 = vunpack.c.h.b16 %v8340
    %v9424 = vunpack.c.l.b16 %v8341
    %v9425 = vunpack.c.h.b16 %v8341
    %v9426 = vunpack.c.l.b16 %v8342
    %v9427 = vunpack.c.h.b16 %v8342
    %v9428 = vunpack.c.l.b16 %v8343
    %v9429 = vunpack.c.h.b16 %v8343
    %v9430 = vunpack.c.l.b16 %v8344
    %v9431 = vunpack.c.h.b16 %v8344
    %v9432 = vunpack.c.l.b16 %v8345
    %v9433 = vunpack.c.h.b16 %v8345
    %v9434 = vunpack.c.l.b16 %v8346
    %v9435 = vunpack.c.h.b16 %v8346
    %v9436 = vunpack.c.l.b16 %v8347
    %v9437 = vunpack.c.h.b16 %v8347
    %v9438 = vunpack.c.l.b16 %v8348
    %v9439 = vunpack.c.h.b16 %v8348
    %v9440 = vunpack.c.l.b16 %v8349
    %v9441 = vunpack.c.h.b16 %v8349
    %v9442 = vunpack.c.l.b16 %v8350
    %v9443 = vunpack.c.h.b16 %v8350
    %v9444 = vunpack.c.l.b16 %v8351
    %v9445 = vunpack.c.h.b16 %v8351
    %v9446 = vunpack.c.l.b16 %v8352
    %v9447 = vunpack.c.h.b16 %v8352
    %v9448 = vunpack.c.l.b16 %v8353
    %v9449 = vunpack.c.h.b16 %v8353
    %v9450 = vunpack.c.l.b16 %v8354
    %v9451 = vunpack.c.h.b16 %v8354
    %v9452 = vunpack.c.l.b16 %v8355
    %v9453 = vunpack.c.h.b16 %v8355
    %v9454 = vunpack.c.l.b16 %v8356
    %v9455 = vunpack.c.h.b16 %v8356
    %v9456 = vunpack.c.l.b16 %v8357
    %v9457 = vunpack.c.h.b16 %v8357
    %v9458 = vunpack.c.l.b16 %v8358
    %v9459 = vunpack.c.h.b16 %v8358
    %v9460 = vunpack.c.l.b16 %v8359
    %v9461 = vunpack.c.h.b16 %v8359
    %v9462 = vunpack.c.l.b16 %v8360
    %v9463 = vunpack.c.h.b16 %v8360
    %v9464 = vunpack.c.l.b16 %v8361
    %v9465 = vunpack.c.h.b16 %v8361
    %v9466 = vunpack.c.l.b16 %v8362
    %v9467 = vunpack.c.h.b16 %v8362
    %v9468 = vunpack.c.l.b16 %v8363
    %v9469 = vunpack.c.h.b16 %v8363
    %v9470 = vunpack.c.l.b16 %v8364
    %v9471 = vunpack.c.h.b16 %v8364
    %v9472 = vunpack.c.l.b16 %v8365
    %v9473 = vunpack.c.h.b16 %v8365
    %v9474 = vunpack.c.l.b16 %v8366
    %v9475 = vunpack.c.h.b16 %v8366
    %v9476 = vunpack.c.l.b16 %v8367
    %v9477 = vunpack.c.h.b16 %v8367
    %v9478 = vunpack.c.l.b16 %v8368
    %v9479 = vunpack.c.h.b16 %v8368
    %v9480 = vunpack.c.l.b16 %v8369
    %v9481 = vunpack.c.h.b16 %v8369
    %v9482 = vunpack.c.l.b16 %v8370
    %v9483 = vunpack.c.h.b16 %v8370
    %v9484 = vunpack.c.l.b16 %v8371
    %v9485 = vunpack.c.h.b16 %v8371
    %v9486 = vunpack.c.l.b16 %v8372
    %v9487 = vunpack.c.h.b16 %v8372
    %v9488 = vunpack.c.l.b16 %v8373
    %v9489 = vunpack.c.h.b16 %v8373
    %v9490 = vunpack.c.l.b16 %v8374
    %v9491 = vunpack.c.h.b16 %v8374
    %v9492 = vunpack.c.l.b16 %v8375
    %v9493 = vunpack.c.h.b16 %v8375
    %v9494 = vunpack.c.l.b16 %v8376
    %v9495 = vunpack.c.h.b16 %v8376
    %v9496 = vunpack.c.l.b16 %v8377
    %v9497 = vunpack.c.h.b16 %v8377
    %v9498 = vunpack.c.l.b16 %v8378
    %v9499 = vunpack.c.h.b16 %v8378
    %v9500 = vunpack.c.l.b16 %v8379
    %v9501 = vunpack.c.h.b16 %v8379
    %v9502 = vunpack.c.l.b16 %v8380
    %v9503 = vunpack.c.h.b16 %v8380
    %v9504 = vunpack.c.l.b16 %v8381
    %v9505 = vunpack.c.h.b16 %v8381
    %v9506 = vunpack.c.l.b16 %v8382
    %v9507 = vunpack.c.h.b16 %v8382
    %v9508 = vunpack.c.l.b16 %v8383
    %v9509 = vunpack.c.h.b16 %v8383
    %v9510 = vunpack.c.l.b16 %v8384
    %v9511 = vunpack.c.h.b16 %v8384
    %v9512 = vunpack.c.l.b16 %v8385
    %v9513 = vunpack.c.h.b16 %v8385
    %v9514 = vunpack.c.l.b16 %v8386
    %v9515 = vunpack.c.h.b16 %v8386
    %v9516 = vunpack.c.l.b16 %v8387
    %v9517 = vunpack.c.h.b16 %v8387
    %v9518 = vunpack.c.l.b16 %v8388
    %v9519 = vunpack.c.h.b16 %v8388
    %v9520 = vunpack.c.l.b16 %v8389
    %v9521 = vunpack.c.h.b16 %v8389
    %v9522 = vunpack.c.l.b16 %v8390
    %v9523 = vunpack.c.h.b16 %v8390
    %v9524 = vunpack.c.l.b16 %v8391
    %v9525 = vunpack.c.h.b16 %v8391
    %v9526 = vunpack.c.l.b16 %v8392
    %v9527 = vunpack.c.h.b16 %v8392
    %v9528 = vunpack.c.l.b16 %v8393
    %v9529 = vunpack.c.h.b16 %v8393
    %v9530 = vunpack.c.l.b16 %v8394
    %v9531 = vunpack.c.h.b16 %v8394
    %v9532 = vunpack.c.l.b16 %v8395
    %v9533 = vunpack.c.h.b16 %v8395
    %v9534 = vunpack.c.l.b16 %v8396
    %v9535 = vunpack.c.h.b16 %v8396
    %v9536 = vunpack.c.l.b16 %v8397
    %v9537 = vunpack.c.h.b16 %v8397
    %v9538 = vunpack.c.l.b16 %v8398
    %v9539 = vunpack.c.h.b16 %v8398
    %v9540 = vunpack.c.l.b16 %v8399
    %v9541 = vunpack.c.h.b16 %v8399
    %v9542 = vunpack.c.l.b16 %v8400
    %v9543 = vunpack.c.h.b16 %v8400
    %v9544 = vunpack.c.l.b16 %v8401
    %v9545 = vunpack.c.h.b16 %v8401
    %v9546 = vunpack.c.l.b16 %v8402
    %v9547 = vunpack.c.h.b16 %v8402
    %v9548 = vunpack.c.l.b16 %v8403
    %v9549 = vunpack.c.h.b16 %v8403
    %v9550 = vunpack.c.l.b16 %v8404
    %v9551 = vunpack.c.h.b16 %v8404
    %v9552 = vunpack.c.l.b16 %v8405
    %v9553 = vunpack.c.h.b16 %v8405
    %v9554 = vunpack.c.l.b16 %v8406
    %v9555 = vunpack.c.h.b16 %v8406
    %v9556 = vunpack.c.l.b16 %v8407
    %v9557 = vunpack.c.h.b16 %v8407
    %v9558 = vunpack.c.l.b16 %v8408
    %v9559 = vunpack.c.h.b16 %v8408
    %v9560 = vunpack.c.l.b16 %v8409
    %v9561 = vunpack.c.h.b16 %v8409
    %v9562 = vunpack.c.l.b16 %v8410
    %v9563 = vunpack.c.h.b16 %v8410
    %v9564 = vunpack.c.l.b16 %v8411
    %v9565 = vunpack.c.h.b16 %v8411
    %v9566 = vunpack.c.l.b16 %v8412
    %v9567 = vunpack.c.h.b16 %v8412
    %v9568 = vunpack.c.l.b16 %v8413
    %v9569 = vunpack.c.h.b16 %v8413
    %v9570 = vunpack.c.l.b16 %v8414
    %v9571 = vunpack.c.h.b16 %v8414
    %v9572 = vunpack.c.l.b16 %v8415
    %v9573 = vunpack.c.h.b16 %v8415
    %v9574 = vunpack.c.l.b16 %v8416
    %v9575 = vunpack.c.h.b16 %v8416
    %v9576 = vunpack.c.l.b16 %v8417
    %v9577 = vunpack.c.h.b16 %v8417
    %v9578 = vunpack.c.l.b16 %v8418
    %v9579 = vunpack.c.h.b16 %v8418
    %v9580 = vunpack.c.l.b16 %v8419
    %v9581 = vunpack.c.h.b16 %v8419
    %v9582 = vunpack.c.l.b16 %v8420
    %v9583 = vunpack.c.h.b16 %v8420
    %v9584 = vunpack.c.l.b16 %v8421
    %v9585 = vunpack.c.h.b16 %v8421
    %v9586 = vunpack.c.l.b16 %v8422
    %v9587 = vunpack.c.h.b16 %v8422
    %v9588 = vunpack.c.l.b16 %v8423
    %v9589 = vunpack.c.h.b16 %v8423
    %v9590 = vunpack.c.l.b16 %v8424
    %v9591 = vunpack.c.h.b16 %v8424
    %v9592 = vunpack.c.l.b16 %v8425
    %v9593 = vunpack.c.h.b16 %v8425
    %v9594 = vunpack.c.l.b16 %v8426
    %v9595 = vunpack.c.h.b16 %v8426
    %v9596 = vunpack.c.l.b16 %v8427
    %v9597 = vunpack.c.h.b16 %v8427
    %v9598 = vunpack.c.l.b16 %v8428
    %v9599 = vunpack.c.h.b16 %v8428
    %v9600 = vunpack.c.l.b16 %v8429
    %v9601 = vunpack.c.h.b16 %v8429
    %v9602 = vunpack.c.l.b16 %v8430
    %v9603 = vunpack.c.h.b16 %v8430
    %v9604 = vunpack.c.l.b16 %v8431
    %v9605 = vunpack.c.h.b16 %v8431
    %v9606 = vunpack.c.l.b16 %v8432
    %v9607 = vunpack.c.h.b16 %v8432
    %v9608 = vunpack.c.l.b16 %v8433
    %v9609 = vunpack.c.h.b16 %v8433
    %v9610 = vunpack.c.l.b16 %v8434
    %v9611 = vunpack.c.h.b16 %v8434
    %v9612 = vunpack.c.l.b16 %v8435
    %v9613 = vunpack.c.h.b16 %v8435
    %v9614 = vunpack.c.l.b16 %v8436
    %v9615 = vunpack.c.h.b16 %v8436
    %v9616 = vunpack.c.l.b16 %v8437
    %v9617 = vunpack.c.h.b16 %v8437
    %v9618 = vunpack.c.l.b16 %v8438
    %v9619 = vunpack.c.h.b16 %v8438
    %v9620 = vunpack.c.l.b16 %v8439
    %v9621 = vunpack.c.h.b16 %v8439
    %v9622 = vunpack.c.l.b16 %v8440
    %v9623 = vunpack.c.h.b16 %v8440
    %v9624 = vunpack.c.l.b16 %v8441
    %v9625 = vunpack.c.h.b16 %v8441
    %v9626 = vunpack.c.l.b16 %v8442
    %v9627 = vunpack.c.h.b16 %v8442
    %v9628 = vunpack.c.l.b16 %v8443
    %v9629 = vunpack.c.h.b16 %v8443
    %v9630 = vunpack.c.l.b16 %v8444
    %v9631 = vunpack.c.h.b16 %v8444
    %v9632 = vunpack.c.l.b16 %v8445
    %v9633 = vunpack.c.h.b16 %v8445
    %v9634 = vunpack.c.l.b16 %v8446
    %v9635 = vunpack.c.h.b16 %v8446
    %v9636 = vunpack.c.l.b16 %v8447
    %v9637 = vunpack.c.h.b16 %v8447
    %v9638 = vunpack.c.l.b16 %v8448
    %v9639 = vunpack.c.h.b16 %v8448
    %v9640 = vunpack.c.l.b16 %v8449
    %v9641 = vunpack.c.h.b16 %v8449
    %v9642 = vunpack.c.l.b16 %v8450
    %v9643 = vunpack.c.h.b16 %v8450
    %v9644 = vunpack.c.l.b16 %v8451
    %v9645 = vunpack.c.h.b16 %v8451
    %v9646 = vunpack.c.l.b16 %v8452
    %v9647 = vunpack.c.h.b16 %v8452
    %v9648 = vunpack.c.l.b16 %v8453
    %v9649 = vunpack.c.h.b16 %v8453
    %v9650 = vunpack.c.l.b16 %v8454
    %v9651 = vunpack.c.h.b16 %v8454
    %v9652 = vunpack.c.l.b16 %v8455
    %v9653 = vunpack.c.h.b16 %v8455
    %v9654 = vunpack.c.l.b16 %v8456
    %v9655 = vunpack.c.h.b16 %v8456
    %v9656 = vunpack.c.l.b16 %v8457
    %v9657 = vunpack.c.h.b16 %v8457
    %v9658 = vunpack.c.l.b16 %v8458
    %v9659 = vunpack.c.h.b16 %v8458
    %v9660 = vunpack.c.l.b16 %v8459
    %v9661 = vunpack.c.h.b16 %v8459
    %v9662 = vunpack.c.l.b16 %v8460
    %v9663 = vunpack.c.h.b16 %v8460
    %v9664 = vunpack.c.l.b16 %v8461
    %v9665 = vunpack.c.h.b16 %v8461
    %v9666 = vunpack.c.l.b16 %v8462
    %v9667 = vunpack.c.h.b16 %v8462
    %v9668 = vunpack.c.l.b16 %v8463
    %v9669 = vunpack.c.h.b16 %v8463
    %v9670 = vunpack.c.l.b16 %v8464
    %v9671 = vunpack.c.h.b16 %v8464
    %v9672 = vunpack.c.l.b16 %v8465
    %v9673 = vunpack.c.h.b16 %v8465
    %v9674 = vunpack.c.l.b16 %v8466
    %v9675 = vunpack.c.h.b16 %v8466
    %v9676 = vunpack.c.l.b16 %v8467
    %v9677 = vunpack.c.h.b16 %v8467
    %v9678 = vunpack.c.l.b16 %v8468
    %v9679 = vunpack.c.h.b16 %v8468
    %v9680 = vunpack.c.l.b16 %v8469
    %v9681 = vunpack.c.h.b16 %v8469
    %v9682 = vunpack.c.l.b16 %v8470
    %v9683 = vunpack.c.h.b16 %v8470
    %v9684 = vunpack.c.l.b16 %v8471
    %v9685 = vunpack.c.h.b16 %v8471
    %v9686 = vunpack.c.l.b16 %v8472
    %v9687 = vunpack.c.h.b16 %v8472
    %v9688 = vunpack.c.l.b16 %v8473
    %v9689 = vunpack.c.h.b16 %v8473
    %v9690 = vunpack.c.l.b16 %v8474
    %v9691 = vunpack.c.h.b16 %v8474
    %v9692 = vunpack.c.l.b16 %v8475
    %v9693 = vunpack.c.h.b16 %v8475
    %v9694 = vunpack.c.l.b16 %v8476
    %v9695 = vunpack.c.h.b16 %v8476
    %v9696 = vunpack.c.l.b16 %v8477
    %v9697 = vunpack.c.h.b16 %v8477
    %v9698 = vunpack.c.l.b16 %v8478
    %v9699 = vunpack.c.h.b16 %v8478
    %v9700 = vunpack.c.l.b16 %v8479
    %v9701 = vunpack.c.h.b16 %v8479
    %v9702 = vunpack.c.l.b16 %v8480
    %v9703 = vunpack.c.h.b16 %v8480
    %v9704 = vunpack.c.l.b16 %v8481
    %v9705 = vunpack.c.h.b16 %v8481
    %v9706 = vunpack.c.l.b16 %v8482
    %v9707 = vunpack.c.h.b16 %v8482
    %v9708 = vunpack.c.l.b16 %v8483
    %v9709 = vunpack.c.h.b16 %v8483
    %v9710 = vunpack.c.l.b16 %v8484
    %v9711 = vunpack.c.h.b16 %v8484
    %v9712 = vunpack.c.l.b16 %v8485
    %v9713 = vunpack.c.h.b16 %v8485
    %v9714 = vunpack.c.l.b16 %v8486
    %v9715 = vunpack.c.h.b16 %v8486
    %v9716 = vunpack.c.l.b16 %v8487
    %v9717 = vunpack.c.h.b16 %v8487
    %v9718 = vunpack.c.l.b16 %v8488
    %v9719 = vunpack.c.h.b16 %v8488
    %v9720 = vunpack.c.l.b16 %v8489
    %v9721 = vunpack.c.h.b16 %v8489
    %v9722 = vunpack.c.l.b16 %v8490
    %v9723 = vunpack.c.h.b16 %v8490
    %v9724 = vunpack.c.l.b16 %v8491
    %v9725 = vunpack.c.h.b16 %v8491
    %v9726 = vunpack.c.l.b16 %v8492
    %v9727 = vunpack.c.h.b16 %v8492
    %v9728 = vunpack.c.l.b16 %v8493
    %v9729 = vunpack.c.h.b16 %v8493
    %v9730 = vunpack.c.l.b16 %v8494
    %v9731 = vunpack.c.h.b16 %v8494
    %v9732 = vunpack.c.l.b16 %v8495
    %v9733 = vunpack.c.h.b16 %v8495
    %v9734 = vunpack.c.l.b16 %v8496
    %v9735 = vunpack.c.h.b16 %v8496
    %v9736 = vunpack.c.l.b16 %v8497
    %v9737 = vunpack.c.h.b16 %v8497
    %v9738 = vunpack.c.l.b16 %v8498
    %v9739 = vunpack.c.h.b16 %v8498
    %v9740 = vunpack.c.l.b16 %v8499
    %v9741 = vunpack.c.h.b16 %v8499
    %v9742 = vunpack.c.l.b16 %v8500
    %v9743 = vunpack.c.h.b16 %v8500
    %v9744 = vunpack.c.l.b16 %v8501
    %v9745 = vunpack.c.h.b16 %v8501
    %v9746 = vunpack.c.l.b16 %v8502
    %v9747 = vunpack.c.h.b16 %v8502
    %v9748 = vunpack.c.l.b16 %v8503
    %v9749 = vunpack.c.h.b16 %v8503
    %v9750 = vunpack.c.l.b16 %v8504
    %v9751 = vunpack.c.h.b16 %v8504
    %v9752 = vunpack.c.l.b16 %v8505
    %v9753 = vunpack.c.h.b16 %v8505
    %v9754 = vunpack.c.l.b16 %v8506
    %v9755 = vunpack.c.h.b16 %v8506
    %v9756 = vunpack.c.l.b16 %v8507
    %v9757 = vunpack.c.h.b16 %v8507
    %v9758 = vunpack.c.l.b16 %v8508
    %v9759 = vunpack.c.h.b16 %v8508
    %v9760 = vunpack.c.l.b16 %v8509
    %v9761 = vunpack.c.h.b16 %v8509
    %v9762 = vunpack.c.l.b16 %v8510
    %v9763 = vunpack.c.h.b16 %v8510
    %v9764 = vunpack.c.l.b16 %v8511
    %v9765 = vunpack.c.h.b16 %v8511
    %v9766 = vunpack.c.l.b16 %v8512
    %v9767 = vunpack.c.h.b16 %v8512
    %v9768 = vunpack.c.l.b16 %v8513
    %v9769 = vunpack.c.h.b16 %v8513
    %v9770 = vunpack.c.l.b16 %v8514
    %v9771 = vunpack.c.h.b16 %v8514
    %v9772 = vunpack.c.l.b16 %v8515
    %v9773 = vunpack.c.h.b16 %v8515
    %v9774 = vunpack.c.l.b16 %v8516
    %v9775 = vunpack.c.h.b16 %v8516
    %v9776 = vunpack.c.l.b16 %v8517
    %v9777 = vunpack.c.h.b16 %v8517
    %v9778 = vunpack.c.l.b16 %v8518
    %v9779 = vunpack.c.h.b16 %v8518
    %v9780 = vunpack.c.l.b16 %v8519
    %v9781 = vunpack.c.h.b16 %v8519
    %v9782 = vunpack.c.l.b16 %v8520
    %v9783 = vunpack.c.h.b16 %v8520
    %v9784 = vunpack.c.l.b16 %v8521
    %v9785 = vunpack.c.h.b16 %v8521
    %v9786 = vunpack.c.l.b16 %v8522
    %v9787 = vunpack.c.h.b16 %v8522
    %v9788 = vunpack.c.l.b16 %v8523
    %v9789 = vunpack.c.h.b16 %v8523
    %v9790 = vunpack.c.l.b16 %v8524
    %v9791 = vunpack.c.h.b16 %v8524
    %v9792 = vunpack.c.l.b16 %v8525
    %v9793 = vunpack.c.h.b16 %v8525
    %v9794 = vunpack.c.l.b16 %v8526
    %v9795 = vunpack.c.h.b16 %v8526
    %v9796 = vunpack.c.l.b16 %v8527
    %v9797 = vunpack.c.h.b16 %v8527
    %v9798 = vunpack.c.l.b16 %v8528
    %v9799 = vunpack.c.h.b16 %v8528
    %v9800 = vunpack.c.l.b16 %v8529
    %v9801 = vunpack.c.h.b16 %v8529
    %v9802 = vunpack.c.l.b16 %v8530
    %v9803 = vunpack.c.h.b16 %v8530
    %v9804 = vunpack.c.l.b16 %v8531
    %v9805 = vunpack.c.h.b16 %v8531
    %v9806 = vunpack.c.l.b16 %v8532
    %v9807 = vunpack.c.h.b16 %v8532
    %v9808 = vunpack.c.l.b16 %v8533
    %v9809 = vunpack.c.h.b16 %v8533
    %v9810 = vunpack.c.l.b16 %v8534
    %v9811 = vunpack.c.h.b16 %v8534
    %v9812 = vunpack.c.l.b16 %v8535
    %v9813 = vunpack.c.h.b16 %v8535
    %v9814 = vunpack.c.l.b16 %v8536
    %v9815 = vunpack.c.h.b16 %v8536
    %v9816 = vunpack.c.l.b16 %v8537
    %v9817 = vunpack.c.h.b16 %v8537
    %v9818 = vunpack.c.l.b16 %v8538
    %v9819 = vunpack.c.h.b16 %v8538
    %v9820 = vunpack.c.l.b16 %v8539
    %v9821 = vunpack.c.h.b16 %v8539
    %v9822 = vunpack.c.l.b16 %v8540
    %v9823 = vunpack.c.h.b16 %v8540
    %v9824 = vunpack.c.l.b16 %v8541
    %v9825 = vunpack.c.h.b16 %v8541
    %v9826 = vunpack.c.l.b16 %v8542
    %v9827 = vunpack.c.h.b16 %v8542
    %v9828 = vunpack.c.l.b16 %v8543
    %v9829 = vunpack.c.h.b16 %v8543
    %v9830 = vunpack.c.l.b16 %v8544
    %v9831 = vunpack.c.h.b16 %v8544
    %v9832 = vunpack.c.l.b16 %v8545
    %v9833 = vunpack.c.h.b16 %v8545
    %v9834 = vunpack.c.l.b16 %v8546
    %v9835 = vunpack.c.h.b16 %v8546
    %v9836 = vunpack.c.l.b16 %v8547
    %v9837 = vunpack.c.h.b16 %v8547
    %v9838 = vunpack.c.l.b16 %v8548
    %v9839 = vunpack.c.h.b16 %v8548
    %v9840 = vunpack.c.l.b16 %v8549
    %v9841 = vunpack.c.h.b16 %v8549
    %v9842 = vunpack.c.l.b16 %v8550
    %v9843 = vunpack.c.h.b16 %v8550
    %v9844 = vunpack.c.l.b16 %v8551
    %v9845 = vunpack.c.h.b16 %v8551
    %v9846 = vunpack.c.l.b16 %v8552
    %v9847 = vunpack.c.h.b16 %v8552
    %v9848 = vunpack.c.l.b16 %v8553
    %v9849 = vunpack.c.h.b16 %v8553
    %v9850 = vunpack.c.l.b16 %v8554
    %v9851 = vunpack.c.h.b16 %v8554
    %v9852 = vunpack.c.l.b16 %v8555
    %v9853 = vunpack.c.h.b16 %v8555
    %v9854 = vunpack.c.l.b16 %v8556
    %v9855 = vunpack.c.h.b16 %v8556
    %v9856 = vunpack.c.l.b16 %v8557
    %v9857 = vunpack.c.h.b16 %v8557
    %v9858 = vunpack.c.l.b16 %v8558
    %v9859 = vunpack.c.h.b16 %v8558
    %v9860 = vunpack.c.l.b16 %v8559
    %v9861 = vunpack.c.h.b16 %v8559
    %v9862 = vunpack.c.l.b16 %v8560
    %v9863 = vunpack.c.h.b16 %v8560
    %v9864 = vunpack.c.l.b16 %v8561
    %v9865 = vunpack.c.h.b16 %v8561
    %v9866 = vunpack.c.l.b16 %v8562
    %v9867 = vunpack.c.h.b16 %v8562
    %v9868 = vunpack.c.l.b16 %v8563
    %v9869 = vunpack.c.h.b16 %v8563
    %v9870 = vunpack.c.l.b16 %v8564
    %v9871 = vunpack.c.h.b16 %v8564
    %v9872 = vunpack.c.l.b16 %v8565
    %v9873 = vunpack.c.h.b16 %v8565
    %v9874 = vunpack.c.l.b16 %v8566
    %v9875 = vunpack.c.h.b16 %v8566
    %v9876 = vunpack.c.l.b16 %v8567
    %v9877 = vunpack.c.h.b16 %v8567
    %v9878 = vunpack.c.l.b16 %v8568
    %v9879 = vunpack.c.h.b16 %v8568
    %v9880 = vunpack.c.l.b16 %v8569
    %v9881 = vunpack.c.h.b16 %v8569
    %v9882 = vunpack.c.l.b16 %v8570
    %v9883 = vunpack.c.h.b16 %v8570
    %v9884 = vunpack.c.l.b16 %v8571
    %v9885 = vunpack.c.h.b16 %v8571
    %v9886 = vunpack.c.l.b16 %v8572
    %v9887 = vunpack.c.h.b16 %v8572
    %v9888 = vunpack.c.l.b16 %v8573
    %v9889 = vunpack.c.h.b16 %v8573
    %v9890 = vunpack.c.l.b16 %v8574
    %v9891 = vunpack.c.h.b16 %v8574
    %v9892 = vunpack.c.l.b16 %v8575
    %v9893 = vunpack.c.h.b16 %v8575
    %v9894 = vunpack.c.l.b16 %v8576
    %v9895 = vunpack.c.h.b16 %v8576
    %v9896 = vunpack.c.l.b16 %v8577
    %v9897 = vunpack.c.h.b16 %v8577
    %v9898 = vunpack.c.l.b16 %v8578
    %v9899 = vunpack.c.h.b16 %v8578
    %v9900 = vunpack.c.l.b16 %v8579
    %v9901 = vunpack.c.h.b16 %v8579
    %v9902 = vunpack.c.l.b16 %v8580
    %v9903 = vunpack.c.h.b16 %v8580
    %v9904 = vunpack.c.l.b16 %v8581
    %v9905 = vunpack.c.h.b16 %v8581
    %v9906 = vunpack.c.l.b16 %v8582
    %v9907 = vunpack.c.h.b16 %v8582
    %v9908 = vunpack.c.l.b16 %v8583
    %v9909 = vunpack.c.h.b16 %v8583
    %v9910 = vunpack.c.l.b16 %v8584
    %v9911 = vunpack.c.h.b16 %v8584
    %v9912 = vunpack.c.l.b16 %v8585
    %v9913 = vunpack.c.h.b16 %v8585
    %v9914 = vunpack.c.l.b16 %v8586
    %v9915 = vunpack.c.h.b16 %v8586
    %v9916 = vunpack.c.l.b16 %v8587
    %v9917 = vunpack.c.h.b16 %v8587
    %v9918 = vunpack.c.l.b16 %v8588
    %v9919 = vunpack.c.h.b16 %v8588
    %v9920 = vunpack.c.l.b16 %v8589
    %v9921 = vunpack.c.h.b16 %v8589
    %v9922 = vunpack.c.l.b16 %v8590
    %v9923 = vunpack.c.h.b16 %v8590
    %v9924 = vunpack.c.l.b16 %v8591
    %v9925 = vunpack.c.h.b16 %v8591
    %v9926 = vunpack.c.l.b16 %v8592
    %v9927 = vunpack.c.h.b16 %v8592
    %v9928 = vunpack.c.l.b16 %v8593
    %v9929 = vunpack.c.h.b16 %v8593
    %v9930 = vunpack.c.l.b16 %v8594
    %v9931 = vunpack.c.h.b16 %v8594
    %v9932 = vunpack.c.l.b16 %v8595
    %v9933 = vunpack.c.h.b16 %v8595
    %v9934 = vunpack.c.l.b16 %v8596
    %v9935 = vunpack.c.h.b16 %v8596
    %v9936 = vunpack.c.l.b16 %v8597
    %v9937 = vunpack.c.h.b16 %v8597
    %v9938 = vunpack.c.l.b16 %v8598
    %v9939 = vunpack.c.h.b16 %v8598
    %v9940 = vunpack.c.l.b16 %v8599
    %v9941 = vunpack.c.h.b16 %v8599
    %v9942 = vunpack.c.l.b16 %v8600
    %v9943 = vunpack.c.h.b16 %v8600
    %v9944 = vunpack.c.l.b16 %v8601
    %v9945 = vunpack.c.h.b16 %v8601
    %v9946 = vunpack.c.l.b16 %v8602
    %v9947 = vunpack.c.h.b16 %v8602
    %v9948 = vunpack.c.l.b16 %v8603
    %v9949 = vunpack.c.h.b16 %v8603
    %v9950 = vunpack.c.l.b16 %v8604
    %v9951 = vunpack.c.h.b16 %v8604
    %v9952 = vunpack.c.l.b16 %v8605
    %v9953 = vunpack.c.h.b16 %v8605
    %v9954 = vunpack.c.l.b16 %v8606
    %v9955 = vunpack.c.h.b16 %v8606
    %v9956 = vunpack.c.l.b16 %v8607
    %v9957 = vunpack.c.h.b16 %v8607
    %v9958 = vunpack.c.l.b16 %v8608
    %v9959 = vunpack.c.h.b16 %v8608
    %v9960 = vunpack.c.l.b16 %v8609
    %v9961 = vunpack.c.h.b16 %v8609
    %v9962 = vunpack.c.l.b16 %v8610
    %v9963 = vunpack.c.h.b16 %v8610
    %v9964 = vunpack.c.l.b16 %v8611
    %v9965 = vunpack.c.h.b16 %v8611
    %v9966 = vunpack.c.l.b16 %v8612
    %v9967 = vunpack.c.h.b16 %v8612
    %v9968 = vunpack.c.l.b16 %v8613
    %v9969 = vunpack.c.h.b16 %v8613
    %v9970 = vunpack.c.l.b16 %v8614
    %v9971 = vunpack.c.h.b16 %v8614
    %v9972 = vunpack.c.l.b16 %v8615
    %v9973 = vunpack.c.h.b16 %v8615
    %v9974 = vunpack.c.l.b16 %v8616
    %v9975 = vunpack.c.h.b16 %v8616
    %v9976 = vunpack.c.l.b16 %v8617
    %v9977 = vunpack.c.h.b16 %v8617
    %v9978 = vunpack.c.l.b16 %v8618
    %v9979 = vunpack.c.h.b16 %v8618
    %v9980 = vunpack.c.l.b16 %v8619
    %v9981 = vunpack.c.h.b16 %v8619
    %v9982 = vunpack.c.l.b16 %v8620
    %v9983 = vunpack.c.h.b16 %v8620
    %v9984 = vunpack.c.l.b16 %v8621
    %v9985 = vunpack.c.h.b16 %v8621
    %v9986 = vunpack.c.l.b16 %v8622
    %v9987 = vunpack.c.h.b16 %v8622
    %v9988 = vunpack.c.l.b16 %v8623
    %v9989 = vunpack.c.h.b16 %v8623
    %v9990 = vunpack.c.l.b16 %v8624
    %v9991 = vunpack.c.h.b16 %v8624
    %v9992 = vunpack.c.l.b16 %v8625
    %v9993 = vunpack.c.h.b16 %v8625
    %v9994 = vunpack.c.l.b16 %v8626
    %v9995 = vunpack.c.h.b16 %v8626
    %v9996 = vunpack.c.l.b16 %v8627
    %v9997 = vunpack.c.h.b16 %v8627
    %v9998 = vunpack.c.l.b16 %v8628
    %v9999 = vunpack.c.h.b16 %v8628
    %v10000 = vunpack.c.l.b16 %v8629
    %v10001 = vunpack.c.h.b16 %v8629
    %v10002 = vunpack.c.l.b16 %v8630
    %v10003 = vunpack.c.h.b16 %v8630
    %v10004 = vunpack.c.l.b16 %v8631
    %v10005 = vunpack.c.h.b16 %v8631
    %v10006 = vunpack.c.l.b16 %v8632
    %v10007 = vunpack.c.h.b16 %v8632
    %v10008 = vunpack.c.l.b16 %v8633
    %v10009 = vunpack.c.h.b16 %v8633
    %v10010 = vunpack.c.l.b16 %v8634
    %v10011 = vunpack.c.h.b16 %v8634
    %v10012 = vunpack.c.l.b16 %v8635
    %v10013 = vunpack.c.h.b16 %v8635
    %v10014 = vunpack.c.l.b16 %v8636
    %v10015 = vunpack.c.h.b16 %v8636
    %v10016 = vunpack.c.l.b16 %v8637
    %v10017 = vunpack.c.h.b16 %v8637
    %v10018 = vunpack.c.l.b16 %v8638
    %v10019 = vunpack.c.h.b16 %v8638
    %v10020 = vunpack.c.l.b16 %v8639
    %v10021 = vunpack.c.h.b16 %v8639
    %v10022 = vunpack.c.l.b16 %v8640
    %v10023 = vunpack.c.h.b16 %v8640
    %v10024 = vunpack.c.l.b16 %v8641
    %v10025 = vunpack.c.h.b16 %v8641
    %v10026 = vunpack.c.l.b16 %v8642
    %v10027 = vunpack.c.h.b16 %v8642
    %v10028 = vunpack.c.l.b16 %v8643
    %v10029 = vunpack.c.h.b16 %v8643
    %v10030 = vunpack.c.l.b16 %v8644
    %v10031 = vunpack.c.h.b16 %v8644
    %v10032 = vunpack.c.l.b16 %v8645
    %v10033 = vunpack.c.h.b16 %v8645
    %v10034 = vunpack.c.l.b16 %v8646
    %v10035 = vunpack.c.h.b16 %v8646
    %v10036 = vunpack.c.l.b16 %v8647
    %v10037 = vunpack.c.h.b16 %v8647
    %v10038 = vunpack.c.l.b16 %v8648
    %v10039 = vunpack.c.h.b16 %v8648
    %v10040 = vunpack.c.l.b16 %v8649
    %v10041 = vunpack.c.h.b16 %v8649
    %v10042 = vunpack.c.l.b16 %v8650
    %v10043 = vunpack.c.h.b16 %v8650
    %v10044 = vunpack.c.l.b16 %v8651
    %v10045 = vunpack.c.h.b16 %v8651
    %v10046 = vunpack.c.l.b16 %v8652
    %v10047 = vunpack.c.h.b16 %v8652
    %v10048 = vunpack.c.l.b16 %v8653
    %v10049 = vunpack.c.h.b16 %v8653
    %v10050 = vunpack.c.l.b16 %v8654
    %v10051 = vunpack.c.h.b16 %v8654
    %v10052 = vunpack.c.l.b16 %v8655
    %v10053 = vunpack.c.h.b16 %v8655
    %v10054 = vunpack.c.l.b16 %v8656
    %v10055 = vunpack.c.h.b16 %v8656
    %v10056 = vunpack.c.l.b16 %v8657
    %v10057 = vunpack.c.h.b16 %v8657
    %v10058 = vunpack.c.l.b16 %v8658
    %v10059 = vunpack.c.h.b16 %v8658
    %v10060 = vunpack.c.l.b16 %v8659
    %v10061 = vunpack.c.h.b16 %v8659
    %v10062 = vunpack.c.l.b16 %v8660
    %v10063 = vunpack.c.h.b16 %v8660
    %v10064 = vunpack.c.l.b16 %v8661
    %v10065 = vunpack.c.h.b16 %v8661
    %v10066 = vunpack.c.l.b16 %v8662
    %v10067 = vunpack.c.h.b16 %v8662
    %v10068 = vunpack.c.l.b16 %v8663
    %v10069 = vunpack.c.h.b16 %v8663
    %v10070 = vunpack.c.l.b16 %v8664
    %v10071 = vunpack.c.h.b16 %v8664
    %v10072 = vunpack.c.l.b16 %v8665
    %v10073 = vunpack.c.h.b16 %v8665
    %v10074 = vunpack.c.l.b16 %v8666
    %v10075 = vunpack.c.h.b16 %v8666
    %v10076 = vunpack.c.l.b16 %v8667
    %v10077 = vunpack.c.h.b16 %v8667
    %v10078 = vunpack.c.l.b16 %v8668
    %v10079 = vunpack.c.h.b16 %v8668
    %v10080 = vunpack.c.l.b16 %v8669
    %v10081 = vunpack.c.h.b16 %v8669
    %v10082 = vunpack.c.l.b16 %v8670
    %v10083 = vunpack.c.h.b16 %v8670
    %v10084 = vunpack.c.l.b16 %v8671
    %v10085 = vunpack.c.h.b16 %v8671
    %v10086 = vunpack.c.l.b16 %v8672
    %v10087 = vunpack.c.h.b16 %v8672
    %v10088 = vunpack.c.l.b16 %v8673
    %v10089 = vunpack.c.h.b16 %v8673
    %v10090 = vunpack.c.l.b16 %v8674
    %v10091 = vunpack.c.h.b16 %v8674
    %v10092 = vunpack.c.l.b16 %v8675
    %v10093 = vunpack.c.h.b16 %v8675
    %v10094 = vunpack.c.l.b16 %v8676
    %v10095 = vunpack.c.h.b16 %v8676
    %v10096 = vunpack.c.l.b16 %v8677
    %v10097 = vunpack.c.h.b16 %v8677
    %v10098 = vunpack.c.l.b16 %v8678
    %v10099 = vunpack.c.h.b16 %v8678
    %v10100 = vunpack.c.l.b16 %v8679
    %v10101 = vunpack.c.h.b16 %v8679
    %v10102 = vunpack.c.l.b16 %v8680
    %v10103 = vunpack.c.h.b16 %v8680
    %v10104 = vunpack.c.l.b16 %v8681
    %v10105 = vunpack.c.h.b16 %v8681
    %v10106 = vunpack.c.l.b16 %v8682
    %v10107 = vunpack.c.h.b16 %v8682
    %v10108 = vunpack.c.l.b16 %v8683
    %v10109 = vunpack.c.h.b16 %v8683
    %v10110 = vunpack.c.l.b16 %v8684
    %v10111 = vunpack.c.h.b16 %v8684
    %v10112 = vunpack.c.l.b16 %v8685
    %v10113 = vunpack.c.h.b16 %v8685
    %v10114 = vunpack.c.l.b16 %v8686
    %v10115 = vunpack.c.h.b16 %v8686
    %v10116 = vunpack.c.l.b16 %v8687
    %v10117 = vunpack.c.h.b16 %v8687
    %v10118 = vunpack.c.l.b16 %v8688
    %v10119 = vunpack.c.h.b16 %v8688
    %v10120 = vunpack.c.l.b16 %v8689
    %v10121 = vunpack.c.h.b16 %v8689
    %v10122 = vunpack.c.l.b16 %v8690
    %v10123 = vunpack.c.h.b16 %v8690
    %v10124 = vunpack.c.l.b16 %v8691
    %v10125 = vunpack.c.h.b16 %v8691
    %v10126 = vunpack.c.l.b16 %v8692
    %v10127 = vunpack.c.h.b16 %v8692
    %v10128 = vunpack.c.l.b16 %v8693
    %v10129 = vunpack.c.h.b16 %v8693
    %v10130 = vunpack.c.l.b16 %v8694
    %v10131 = vunpack.c.h.b16 %v8694
    %v10132 = vunpack.c.l.b16 %v8695
    %v10133 = vunpack.c.h.b16 %v8695
    %v10134 = vunpack.c.l.b16 %v8696
    %v10135 = vunpack.c.h.b16 %v8696
    %v10136 = vunpack.c.l.b16 %v8697
    %v10137 = vunpack.c.h.b16 %v8697
    %v10138 = vunpack.c.l.b16 %v8698
    %v10139 = vunpack.c.h.b16 %v8698
    %v10140 = vunpack.c.l.b16 %v8699
    %v10141 = vunpack.c.h.b16 %v8699
    %v10142 = vunpack.c.l.b16 %v8700
    %v10143 = vunpack.c.h.b16 %v8700
    %v10144 = vunpack.c.l.b16 %v8701
    %v10145 = vunpack.c.h.b16 %v8701
    %v10146 = vunpack.c.l.b16 %v8702
    %v10147 = vunpack.c.h.b16 %v8702
    %v10148 = vunpack.c.l.b16 %v8703
    %v10149 = vunpack.c.h.b16 %v8703
    %v10150 = vunpack.c.l.b16 %v8704
    %v10151 = vunpack.c.h.b16 %v8704
    %v10152 = vunpack.c.l.b16 %v8705
    %v10153 = vunpack.c.h.b16 %v8705
    %v10154 = vunpack.c.l.b16 %v8706
    %v10155 = vunpack.c.h.b16 %v8706
    %v10156 = vunpack.c.l.b16 %v8707
    %v10157 = vunpack.c.h.b16 %v8707
    %v10158 = vunpack.c.l.b16 %v8708
    %v10159 = vunpack.c.h.b16 %v8708
    %v10160 = vunpack.c.l.b16 %v8709
    %v10161 = vunpack.c.h.b16 %v8709
    %v10162 = vunpack.c.l.b16 %v8710
    %v10163 = vunpack.c.h.b16 %v8710
    %v10164 = vunpack.c.l.b16 %v8711
    %v10165 = vunpack.c.h.b16 %v8711
    %v10166 = vunpack.c.l.b16 %v8712
    %v10167 = vunpack.c.h.b16 %v8712
    %v10168 = vunpack.c.l.b16 %v8713
    %v10169 = vunpack.c.h.b16 %v8713
    %v10170 = vunpack.c.l.b16 %v8714
    %v10171 = vunpack.c.h.b16 %v8714
    %v10172 = vunpack.c.l.b16 %v8715
    %v10173 = vunpack.c.h.b16 %v8715
    %v10174 = vunpack.c.l.b16 %v8716
    %v10175 = vunpack.c.h.b16 %v8716
    %v10176 = vunpack.c.l.b16 %v8717
    %v10177 = vunpack.c.h.b16 %v8717
    %v10178 = vunpack.c.l.b16 %v8718
    %v10179 = vunpack.c.h.b16 %v8718
    %v10180 = vunpack.c.l.b16 %v8719
    %v10181 = vunpack.c.h.b16 %v8719
    %v10182 = vunpack.c.l.b16 %v8720
    %v10183 = vunpack.c.h.b16 %v8720
    %v10184 = vunpack.c.l.b16 %v8721
    %v10185 = vunpack.c.h.b16 %v8721
    %v10186 = vunpack.c.l.b16 %v8722
    %v10187 = vunpack.c.h.b16 %v8722
    %v10188 = vunpack.c.l.b16 %v8723
    %v10189 = vunpack.c.h.b16 %v8723
    %v10190 = vunpack.c.l.b16 %v8724
    %v10191 = vunpack.c.h.b16 %v8724
    %v10192 = vunpack.c.l.b16 %v8725
    %v10193 = vunpack.c.h.b16 %v8725
    %v10194 = vunpack.c.l.b16 %v8726
    %v10195 = vunpack.c.h.b16 %v8726
    %v10196 = vunpack.c.l.b16 %v8727
    %v10197 = vunpack.c.h.b16 %v8727
    %v10198 = vunpack.c.l.b16 %v8728
    %v10199 = vunpack.c.h.b16 %v8728
    %v10200 = vunpack.c.l.b16 %v8729
    %v10201 = vunpack.c.h.b16 %v8729
    %v10202 = vunpack.c.l.b16 %v8730
    %v10203 = vunpack.c.h.b16 %v8730
    %v10204 = vunpack.c.l.b16 %v8731
    %v10205 = vunpack.c.h.b16 %v8731
    %v10206 = vunpack.c.l.b16 %v8732
    %v10207 = vunpack.c.h.b16 %v8732
    %v10208 = vunpack.c.l.b16 %v8733
    %v10209 = vunpack.c.h.b16 %v8733
    %v10210 = vunpack.c.l.b16 %v8734
    %v10211 = vunpack.c.h.b16 %v8734
    %v10212 = vunpack.c.l.b16 %v8735
    %v10213 = vunpack.c.h.b16 %v8735
    %v10214 = vunpack.c.l.b16 %v8736
    %v10215 = vunpack.c.h.b16 %v8736
    %v10216 = vunpack.c.l.b16 %v8737
    %v10217 = vunpack.c.h.b16 %v8737
    %v10218 = vunpack.c.l.b16 %v8738
    %v10219 = vunpack.c.h.b16 %v8738
    %v10220 = vunpack.c.l.b16 %v8739
    %v10221 = vunpack.c.h.b16 %v8739
    %v10222 = vunpack.c.l.b16 %v8740
    %v10223 = vunpack.c.h.b16 %v8740
    %v10224 = vunpack.c.l.b16 %v8741
    %v10225 = vunpack.c.h.b16 %v8741
    %v10226 = vunpack.c.l.b16 %v8742
    %v10227 = vunpack.c.h.b16 %v8742
    %v10228 = vunpack.c.l.b16 %v8743
    %v10229 = vunpack.c.h.b16 %v8743
    %v10230 = vunpack.c.l.b16 %v8744
    %v10231 = vunpack.c.h.b16 %v8744
    %v10232 = vunpack.c.l.b16 %v8745
    %v10233 = vunpack.c.h.b16 %v8745
    %v10234 = vunpack.c.l.b16 %v8746
    %v10235 = vunpack.c.h.b16 %v8746
    %v10236 = vunpack.c.l.b16 %v8747
    %v10237 = vunpack.c.h.b16 %v8747
    %v10238 = vunpack.c.l.b16 %v8748
    %v10239 = vunpack.c.h.b16 %v8748
    %v10240 = vunpack.c.l.b16 %v8749
    %v10241 = vunpack.c.h.b16 %v8749
    %v10242 = vunpack.c.l.b16 %v8750
    %v10243 = vunpack.c.h.b16 %v8750
    %v10244 = vunpack.c.l.b16 %v8751
    %v10245 = vunpack.c.h.b16 %v8751
    %v10246 = vunpack.c.l.b16 %v8752
    %v10247 = vunpack.c.h.b16 %v8752
    %v10248 = vunpack.c.l.b16 %v8753
    %v10249 = vunpack.c.h.b16 %v8753
    %v10250 = vunpack.c.l.b16 %v8754
    %v10251 = vunpack.c.h.b16 %v8754
    %v10252 = vunpack.c.l.b16 %v8755
    %v10253 = vunpack.c.h.b16 %v8755
    %v10254 = vunpack.c.l.b16 %v8756
    %v10255 = vunpack.c.h.b16 %v8756
    %v10256 = vunpack.c.l.b16 %v8757
    %v10257 = vunpack.c.h.b16 %v8757
    %v10258 = vunpack.c.l.b16 %v8758
    %v10259 = vunpack.c.h.b16 %v8758
    %v10260 = vunpack.c.l.b16 %v8759
    %v10261 = vunpack.c.h.b16 %v8759
    %v10262 = vunpack.c.l.b16 %v8760
    %v10263 = vunpack.c.h.b16 %v8760
    %v10264 = vunpack.c.l.b16 %v8761
    %v10265 = vunpack.c.h.b16 %v8761
    %v10266 = vunpack.c.l.b16 %v8762
    %v10267 = vunpack.c.h.b16 %v8762
    %v10268 = vunpack.c.l.b16 %v8763
    %v10269 = vunpack.c.h.b16 %v8763
    %v10270 = vunpack.c.l.b16 %v8764
    %v10271 = vunpack.c.h.b16 %v8764
    %v10272 = vunpack.c.l.b16 %v8765
    %v10273 = vunpack.c.h.b16 %v8765
    %v10274 = vunpack.c.l.b16 %v8766
    %v10275 = vunpack.c.h.b16 %v8766
    %v10276 = vunpack.c.l.b16 %v8767
    %v10277 = vunpack.c.h.b16 %v8767
    %v10278 = vunpack.c.l.b16 %v8768
    %v10279 = vunpack.c.h.b16 %v8768
    %v10280 = vunpack.c.l.b16 %v8769
    %v10281 = vunpack.c.h.b16 %v8769
    %v10282 = vunpack.c.l.b16 %v8770
    %v10283 = vunpack.c.h.b16 %v8770
    %v10284 = vunpack.c.l.b16 %v8771
    %v10285 = vunpack.c.h.b16 %v8771
    %v10286 = vunpack.c.l.b16 %v8772
    %v10287 = vunpack.c.h.b16 %v8772
    %v10288 = vunpack.c.l.b16 %v8773
    %v10289 = vunpack.c.h.b16 %v8773
    %v10290 = vunpack.c.l.b16 %v8774
    %v10291 = vunpack.c.h.b16 %v8774
    %v10292 = vunpack.c.l.b16 %v8775
    %v10293 = vunpack.c.h.b16 %v8775
    %v10294 = vunpack.c.l.b16 %v8776
    %v10295 = vunpack.c.h.b16 %v8776
    %v10296 = vunpack.c.l.b16 %v8777
    %v10297 = vunpack.c.h.b16 %v8777
    %v10298 = vunpack.c.l.b16 %v8778
    %v10299 = vunpack.c.h.b16 %v8778
    %v10300 = vunpack.c.l.b16 %v8779
    %v10301 = vunpack.c.h.b16 %v8779
    %v10302 = vunpack.c.l.b16 %v8780
    %v10303 = vunpack.c.h.b16 %v8780
    %v10304 = vunpack.c.l.b16 %v8781
    %v10305 = vunpack.c.h.b16 %v8781
    %v10306 = vunpack.c.l.b16 %v8782
    %v10307 = vunpack.c.h.b16 %v8782
    %v10308 = vunpack.c.l.b16 %v8783
    %v10309 = vunpack.c.h.b16 %v8783
    %v10310 = vunpack.c.l.b16 %v8784
    %v10311 = vunpack.c.h.b16 %v8784
    %v10312 = vunpack.c.l.b16 %v8785
    %v10313 = vunpack.c.h.b16 %v8785
    %v10314 = vunpack.c.l.b16 %v8786
    %v10315 = vunpack.c.h.b16 %v8786
    %v10316 = vunpack.c.l.b16 %v8787
    %v10317 = vunpack.c.h.b16 %v8787
    %v10318 = vunpack.c.l.b16 %v8788
    %v10319 = vunpack.c.h.b16 %v8788
    %v10320 = vunpack.c.l.b16 %v8789
    %v10321 = vunpack.c.h.b16 %v8789
    %v10322 = vunpack.c.l.b16 %v8790
    %v10323 = vunpack.c.h.b16 %v8790
    %v10324 = vunpack.c.l.b16 %v8791
    %v10325 = vunpack.c.h.b16 %v8791
    %v10326 = vunpack.c.l.b16 %v8792
    %v10327 = vunpack.c.h.b16 %v8792
    %v10328 = vunpack.c.l.b16 %v8793
    %v10329 = vunpack.c.h.b16 %v8793
    %v10330 = vunpack.c.l.b16 %v8794
    %v10331 = vunpack.c.h.b16 %v8794
    %v10332 = vunpack.c.l.b16 %v8795
    %v10333 = vunpack.c.h.b16 %v8795
    %v10334 = vunpack.c.l.b16 %v8796
    %v10335 = vunpack.c.h.b16 %v8796
    %v10336 = vunpack.c.l.b16 %v8797
    %v10337 = vunpack.c.h.b16 %v8797
    %v10338 = vunpack.c.l.b16 %v8798
    %v10339 = vunpack.c.h.b16 %v8798
    %v10340 = vunpack.c.l.b16 %v8799
    %v10341 = vunpack.c.h.b16 %v8799
    %v10342 = vunpack.c.l.b16 %v8800
    %v10343 = vunpack.c.h.b16 %v8800
    %v10344 = vunpack.c.l.b16 %v8801
    %v10345 = vunpack.c.h.b16 %v8801
    %v10346 = vunpack.c.l.b16 %v8802
    %v10347 = vunpack.c.h.b16 %v8802
    %v10348 = vunpack.c.l.b16 %v8803
    %v10349 = vunpack.c.h.b16 %v8803
    %v10350 = vunpack.c.l.b16 %v8804
    %v10351 = vunpack.c.h.b16 %v8804
    %v10352 = vunpack.c.l.b16 %v8805
    %v10353 = vunpack.c.h.b16 %v8805
    %v10354 = vunpack.c.l.b16 %v8806
    %v10355 = vunpack.c.h.b16 %v8806
    %v10356 = vunpack.c.l.b16 %v8807
    %v10357 = vunpack.c.h.b16 %v8807
    %v10358 = vunpack.c.l.b16 %v8808
    %v10359 = vunpack.c.h.b16 %v8808
    %v10360 = vunpack.c.l.b16 %v8809
    %v10361 = vunpack.c.h.b16 %v8809
    %v10362 = vunpack.c.l.b16 %v8810
    %v10363 = vunpack.c.h.b16 %v8810
    %v10364 = vunpack.c.l.b16 %v8811
    %v10365 = vunpack.c.h.b16 %v8811
    %v10366 = vpack.c.b16 %v9350, %v9342
    %v10367 = vpack.c.b16 %v9351, %v9343
    %v10368 = vpack.c.b16 %v9352, %v9344
    %v10369 = vpack.c.b16 %v9353, %v9345
    %v10370 = vpack.c.b16 %v9354, %v9346
    %v10371 = vpack.c.b16 %v9355, %v9347
    %v10372 = vpack.c.b16 %v9356, %v9348
    %v10373 = vpack.c.b16 %v9357, %v9349
    %v10374 = vpack.c.b16 %v9366, %v9358
    %v10375 = vpack.c.b16 %v9367, %v9359
    %v10376 = vpack.c.b16 %v9368, %v9360
    %v10377 = vpack.c.b16 %v9369, %v9361
    %v10378 = vpack.c.b16 %v9370, %v9362
    %v10379 = vpack.c.b16 %v9371, %v9363
    %v10380 = vpack.c.b16 %v9372, %v9364
    %v10381 = vpack.c.b16 %v9373, %v9365
    %v10382 = vpack.c.b16 %v9382, %v9374
    %v10383 = vpack.c.b16 %v9383, %v9375
    %v10384 = vpack.c.b16 %v9384, %v9376
    %v10385 = vpack.c.b16 %v9385, %v9377
    %v10386 = vpack.c.b16 %v9386, %v9378
    %v10387 = vpack.c.b16 %v9387, %v9379
    %v10388 = vpack.c.b16 %v9388, %v9380
    %v10389 = vpack.c.b16 %v9389, %v9381
    %v10390 = vpack.c.b16 %v9398, %v9390
    %v10391 = vpack.c.b16 %v9399, %v9391
    %v10392 = vpack.c.b16 %v9400, %v9392
    %v10393 = vpack.c.b16 %v9401, %v9393
    %v10394 = vpack.c.b16 %v9402, %v9394
    %v10395 = vpack.c.b16 %v9403, %v9395
    %v10396 = vpack.c.b16 %v9404, %v9396
    %v10397 = vpack.c.b16 %v9405, %v9397
    %v10398 = vpack.c.b16 %v9414, %v9406
    %v10399 = vpack.c.b16 %v9415, %v9407
    %v10400 = vpack.c.b16 %v9416, %v9408
    %v10401 = vpack.c.b16 %v9417, %v9409
    %v10402 = vpack.c.b16 %v9418, %v9410
    %v10403 = vpack.c.b16 %v9419, %v9411
    %v10404 = vpack.c.b16 %v9420, %v9412
    %v10405 = vpack.c.b16 %v9421, %v9413
    %v10406 = vpack.c.b16 %v9430, %v9422
    %v10407 = vpack.c.b16 %v9431, %v9423
    %v10408 = vpack.c.b16 %v9432, %v9424
    %v10409 = vpack.c.b16 %v9433, %v9425
    %v10410 = vpack.c.b16 %v9434, %v9426
    %v10411 = vpack.c.b16 %v9435, %v9427
    %v10412 = vpack.c.b16 %v9436, %v9428
    %v10413 = vpack.c.b16 %v9437, %v9429
    %v10414 = vpack.c.b16 %v9446, %v9438
    %v10415 = vpack.c.b16 %v9447, %v9439
    %v10416 = vpack.c.b16 %v9448, %v9440
    %v10417 = vpack.c.b16 %v9449, %v9441
    %v10418 = vpack.c.b16 %v9450, %v9442
    %v10419 = vpack.c.b16 %v9451, %v9443
    %v10420 = vpack.c.b16 %v9452, %v9444
    %v10421 = vpack.c.b16 %v9453, %v9445
    %v10422 = vpack.c.b16 %v9462, %v9454
    %v10423 = vpack.c.b16 %v9463, %v9455
    %v10424 = vpack.c.b16 %v9464, %v9456
    %v10425 = vpack.c.b16 %v9465, %v9457
    %v10426 = vpack.c.b16 %v9466, %v9458
    %v10427 = vpack.c.b16 %v9467, %v9459
    %v10428 = vpack.c.b16 %v9468, %v9460
    %v10429 = vpack.c.b16 %v9469, %v9461
    %v10430 = vpack.c.b16 %v9478, %v9470
    %v10431 = vpack.c.b16 %v9479, %v9471
    %v10432 = vpack.c.b16 %v9480, %v9472
    %v10433 = vpack.c.b16 %v9481, %v9473
    %v10434 = vpack.c.b16 %v9482, %v9474
    %v10435 = vpack.c.b16 %v9483, %v9475
    %v10436 = vpack.c.b16 %v9484, %v9476
    %v10437 = vpack.c.b16 %v9485, %v9477
    %v10438 = vpack.c.b16 %v9494, %v9486
    %v10439 = vpack.c.b16 %v9495, %v9487
    %v10440 = vpack.c.b16 %v9496, %v9488
    %v10441 = vpack.c.b16 %v9497, %v9489
    %v10442 = vpack.c.b16 %v9498, %v9490
    %v10443 = vpack.c.b16 %v9499, %v9491
    %v10444 = vpack.c.b16 %v9500, %v9492
    %v10445 = vpack.c.b16 %v9501, %v9493
    %v10446 = vpack.c.b16 %v9510, %v9502
    %v10447 = vpack.c.b16 %v9511, %v9503
    %v10448 = vpack.c.b16 %v9512, %v9504
    %v10449 = vpack.c.b16 %v9513, %v9505
    %v10450 = vpack.c.b16 %v9514, %v9506
    %v10451 = vpack.c.b16 %v9515, %v9507
    %v10452 = vpack.c.b16 %v9516, %v9508
    %v10453 = vpack.c.b16 %v9517, %v9509
    %v10454 = vpack.c.b16 %v9526, %v9518
    %v10455 = vpack.c.b16 %v9527, %v9519
    %v10456 = vpack.c.b16 %v9528, %v9520
    %v10457 = vpack.c.b16 %v9529, %v9521
    %v10458 = vpack.c.b16 %v9530, %v9522
    %v10459 = vpack.c.b16 %v9531, %v9523
    %v10460 = vpack.c.b16 %v9532, %v9524
    %v10461 = vpack.c.b16 %v9533, %v9525
    %v10462 = vpack.c.b16 %v9542, %v9534
    %v10463 = vpack.c.b16 %v9543, %v9535
    %v10464 = vpack.c.b16 %v9544, %v9536
    %v10465 = vpack.c.b16 %v9545, %v9537
    %v10466 = vpack.c.b16 %v9546, %v9538
    %v10467 = vpack.c.b16 %v9547, %v9539
    %v10468 = vpack.c.b16 %v9548, %v9540
    %v10469 = vpack.c.b16 %v9549, %v9541
    %v10470 = vpack.c.b16 %v9558, %v9550
    %v10471 = vpack.c.b16 %v9559, %v9551
    %v10472 = vpack.c.b16 %v9560, %v9552
    %v10473 = vpack.c.b16 %v9561, %v9553
    %v10474 = vpack.c.b16 %v9562, %v9554
    %v10475 = vpack.c.b16 %v9563, %v9555
    %v10476 = vpack.c.b16 %v9564, %v9556
    %v10477 = vpack.c.b16 %v9565, %v9557
    %v10478 = vpack.c.b16 %v9574, %v9566
    %v10479 = vpack.c.b16 %v9575, %v9567
    %v10480 = vpack.c.b16 %v9576, %v9568
    %v10481 = vpack.c.b16 %v9577, %v9569
    %v10482 = vpack.c.b16 %v9578, %v9570
    %v10483 = vpack.c.b16 %v9579, %v9571
    %v10484 = vpack.c.b16 %v9580, %v9572
    %v10485 = vpack.c.b16 %v9581, %v9573
    %v10486 = vpack.c.b16 %v9590, %v9582
    %v10487 = vpack.c.b16 %v9591, %v9583
    %v10488 = vpack.c.b16 %v9592, %v9584
    %v10489 = vpack.c.b16 %v9593, %v9585
    %v10490 = vpack.c.b16 %v9594, %v9586
    %v10491 = vpack.c.b16 %v9595, %v9587
    %v10492 = vpack.c.b16 %v9596, %v9588
    %v10493 = vpack.c.b16 %v9597, %v9589
    %v10494 = vpack.c.b16 %v9606, %v9598
    %v10495 = vpack.c.b16 %v9607, %v9599
    %v10496 = vpack.c.b16 %v9608, %v9600
    %v10497 = vpack.c.b16 %v9609, %v9601
    %v10498 = vpack.c.b16 %v9610, %v9602
    %v10499 = vpack.c.b16 %v9611, %v9603
    %v10500 = vpack.c.b16 %v9612, %v9604
    %v10501 = vpack.c.b16 %v9613, %v9605
    %v10502 = vpack.c.b16 %v9622, %v9614
    %v10503 = vpack.c.b16 %v9623, %v9615
    %v10504 = vpack.c.b16 %v9624, %v9616
    %v10505 = vpack.c.b16 %v9625, %v9617
    %v10506 = vpack.c.b16 %v9626, %v9618
    %v10507 = vpack.c.b16 %v9627, %v9619
    %v10508 = vpack.c.b16 %v9628, %v9620
    %v10509 = vpack.c.b16 %v9629, %v9621
    %v10510 = vpack.c.b16 %v9638, %v9630
    %v10511 = vpack.c.b16 %v9639, %v9631
    %v10512 = vpack.c.b16 %v9640, %v9632
    %v10513 = vpack.c.b16 %v9641, %v9633
    %v10514 = vpack.c.b16 %v9642, %v9634
    %v10515 = vpack.c.b16 %v9643, %v9635
    %v10516 = vpack.c.b16 %v9644, %v9636
    %v10517 = vpack.c.b16 %v9645, %v9637
    %v10518 = vpack.c.b16 %v9654, %v9646
    %v10519 = vpack.c.b16 %v9655, %v9647
    %v10520 = vpack.c.b16 %v9656, %v9648
    %v10521 = vpack.c.b16 %v9657, %v9649
    %v10522 = vpack.c.b16 %v9658, %v9650
    %v10523 = vpack.c.b16 %v9659, %v9651
    %v10524 = vpack.c.b16 %v9660, %v9652
    %v10525 = vpack.c.b16 %v9661, %v9653
    %v10526 = vpack.c.b16 %v9670, %v9662
    %v10527 = vpack.c.b16 %v9671, %v9663
    %v10528 = vpack.c.b16 %v9672, %v9664
    %v10529 = vpack.c.b16 %v9673, %v9665
    %v10530 = vpack.c.b16 %v9674, %v9666
    %v10531 = vpack.c.b16 %v9675, %v9667
    %v10532 = vpack.c.b16 %v9676, %v9668
    %v10533 = vpack.c.b16 %v9677, %v9669
    %v10534 = vpack.c.b16 %v9686, %v9678
    %v10535 = vpack.c.b16 %v9687, %v9679
    %v10536 = vpack.c.b16 %v9688, %v9680
    %v10537 = vpack.c.b16 %v9689, %v9681
    %v10538 = vpack.c.b16 %v9690, %v9682
    %v10539 = vpack.c.b16 %v9691, %v9683
    %v10540 = vpack.c.b16 %v9692, %v9684
    %v10541 = vpack.c.b16 %v9693, %v9685
    %v10542 = vpack.c.b16 %v9702, %v9694
    %v10543 = vpack.c.b16 %v9703, %v9695
    %v10544 = vpack.c.b16 %v9704, %v9696
    %v10545 = vpack.c.b16 %v9705, %v9697
    %v10546 = vpack.c.b16 %v9706, %v9698
    %v10547 = vpack.c.b16 %v9707, %v9699
    %v10548 = vpack.c.b16 %v9708, %v9700
    %v10549 = vpack.c.b16 %v9709, %v9701
    %v10550 = vpack.c.b16 %v9718, %v9710
    %v10551 = vpack.c.b16 %v9719, %v9711
    %v10552 = vpack.c.b16 %v9720, %v9712
    %v10553 = vpack.c.b16 %v9721, %v9713
    %v10554 = vpack.c.b16 %v9722, %v9714
    %v10555 = vpack.c.b16 %v9723, %v9715
    %v10556 = vpack.c.b16 %v9724, %v9716
    %v10557 = vpack.c.b16 %v9725, %v9717
    %v10558 = vpack.c.b16 %v9734, %v9726
    %v10559 = vpack.c.b16 %v9735, %v9727
    %v10560 = vpack.c.b16 %v9736, %v9728
    %v10561 = vpack.c.b16 %v9737, %v9729
    %v10562 = vpack.c.b16 %v9738, %v9730
    %v10563 = vpack.c.b16 %v9739, %v9731
    %v10564 = vpack.c.b16 %v9740, %v9732
    %v10565 = vpack.c.b16 %v9741, %v9733
    %v10566 = vpack.c.b16 %v9750, %v9742
    %v10567 = vpack.c.b16 %v9751, %v9743
    %v10568 = vpack.c.b16 %v9752, %v9744
    %v10569 = vpack.c.b16 %v9753, %v9745
    %v10570 = vpack.c.b16 %v9754, %v9746
    %v10571 = vpack.c.b16 %v9755, %v9747
    %v10572 = vpack.c.b16 %v9756, %v9748
    %v10573 = vpack.c.b16 %v9757, %v9749
    %v10574 = vpack.c.b16 %v9766, %v9758
    %v10575 = vpack.c.b16 %v9767, %v9759
    %v10576 = vpack.c.b16 %v9768, %v9760
    %v10577 = vpack.c.b16 %v9769, %v9761
    %v10578 = vpack.c.b16 %v9770, %v9762
    %v10579 = vpack.c.b16 %v9771, %v9763
    %v10580 = vpack.c.b16 %v9772, %v9764
    %v10581 = vpack.c.b16 %v9773, %v9765
    %v10582 = vpack.c.b16 %v9782, %v9774
    %v10583 = vpack.c.b16 %v9783, %v9775
    %v10584 = vpack.c.b16 %v9784, %v9776
    %v10585 = vpack.c.b16 %v9785, %v9777
    %v10586 = vpack.c.b16 %v9786, %v9778
    %v10587 = vpack.c.b16 %v9787, %v9779
    %v10588 = vpack.c.b16 %v9788, %v9780
    %v10589 = vpack.c.b16 %v9789, %v9781
    %v10590 = vpack.c.b16 %v9798, %v9790
    %v10591 = vpack.c.b16 %v9799, %v9791
    %v10592 = vpack.c.b16 %v9800, %v9792
    %v10593 = vpack.c.b16 %v9801, %v9793
    %v10594 = vpack.c.b16 %v9802, %v9794
    %v10595 = vpack.c.b16 %v9803, %v9795
    %v10596 = vpack.c.b16 %v9804, %v9796
    %v10597 = vpack.c.b16 %v9805, %v9797
    %v10598 = vpack.c.b16 %v9814, %v9806
    %v10599 = vpack.c.b16 %v9815, %v9807
    %v10600 = vpack.c.b16 %v9816, %v9808
    %v10601 = vpack.c.b16 %v9817, %v9809
    %v10602 = vpack.c.b16 %v9818, %v9810
    %v10603 = vpack.c.b16 %v9819, %v9811
    %v10604 = vpack.c.b16 %v9820, %v9812
    %v10605 = vpack.c.b16 %v9821, %v9813
    %v10606 = vpack.c.b16 %v9830, %v9822
    %v10607 = vpack.c.b16 %v9831, %v9823
    %v10608 = vpack.c.b16 %v9832, %v9824
    %v10609 = vpack.c.b16 %v9833, %v9825
    %v10610 = vpack.c.b16 %v9834, %v9826
    %v10611 = vpack.c.b16 %v9835, %v9827
    %v10612 = vpack.c.b16 %v9836, %v9828
    %v10613 = vpack.c.b16 %v9837, %v9829
    %v10614 = vpack.c.b16 %v9846, %v9838
    %v10615 = vpack.c.b16 %v9847, %v9839
    %v10616 = vpack.c.b16 %v9848, %v9840
    %v10617 = vpack.c.b16 %v9849, %v9841
    %v10618 = vpack.c.b16 %v9850, %v9842
    %v10619 = vpack.c.b16 %v9851, %v9843
    %v10620 = vpack.c.b16 %v9852, %v9844
    %v10621 = vpack.c.b16 %v9853, %v9845
    %v10622 = vpack.c.b16 %v9862, %v9854
    %v10623 = vpack.c.b16 %v9863, %v9855
    %v10624 = vpack.c.b16 %v9864, %v9856
    %v10625 = vpack.c.b16 %v9865, %v9857
    %v10626 = vpack.c.b16 %v9866, %v9858
    %v10627 = vpack.c.b16 %v9867, %v9859
    %v10628 = vpack.c.b16 %v9868, %v9860
    %v10629 = vpack.c.b16 %v9869, %v9861
    %v10630 = vpack.c.b16 %v9878, %v9870
    %v10631 = vpack.c.b16 %v9879, %v9871
    %v10632 = vpack.c.b16 %v9880, %v9872
    %v10633 = vpack.c.b16 %v9881, %v9873
    %v10634 = vpack.c.b16 %v9882, %v9874
    %v10635 = vpack.c.b16 %v9883, %v9875
    %v10636 = vpack.c.b16 %v9884, %v9876
    %v10637 = vpack.c.b16 %v9885, %v9877
    %v10638 = vpack.c.b16 %v9894, %v9886
    %v10639 = vpack.c.b16 %v9895, %v9887
    %v10640 = vpack.c.b16 %v9896, %v9888
    %v10641 = vpack.c.b16 %v9897, %v9889
    %v10642 = vpack.c.b16 %v9898, %v9890
    %v10643 = vpack.c.b16 %v9899, %v9891
    %v10644 = vpack.c.b16 %v9900, %v9892
    %v10645 = vpack.c.b16 %v9901, %v9893
    %v10646 = vpack.c.b16 %v9910, %v9902
    %v10647 = vpack.c.b16 %v9911, %v9903
    %v10648 = vpack.c.b16 %v9912, %v9904
    %v10649 = vpack.c.b16 %v9913, %v9905
    %v10650 = vpack.c.b16 %v9914, %v9906
    %v10651 = vpack.c.b16 %v9915, %v9907
    %v10652 = vpack.c.b16 %v9916, %v9908
    %v10653 = vpack.c.b16 %v9917, %v9909
    %v10654 = vpack.c.b16 %v9926, %v9918
    %v10655 = vpack.c.b16 %v9927, %v9919
    %v10656 = vpack.c.b16 %v9928, %v9920
    %v10657 = vpack.c.b16 %v9929, %v9921
    %v10658 = vpack.c.b16 %v9930, %v9922
    %v10659 = vpack.c.b16 %v9931, %v9923
    %v10660 = vpack.c.b16 %v9932, %v9924
    %v10661 = vpack.c.b16 %v9933, %v9925
    %v10662 = vpack.c.b16 %v9942, %v9934
    %v10663 = vpack.c.b16 %v9943, %v9935
    %v10664 = vpack.c.b16 %v9944, %v9936
    %v10665 = vpack.c.b16 %v9945, %v9937
    %v10666 = vpack.c.b16 %v9946, %v9938
    %v10667 = vpack.c.b16 %v9947, %v9939
    %v10668 = vpack.c.b16 %v9948, %v9940
    %v10669 = vpack.c.b16 %v9949, %v9941
    %v10670 = vpack.c.b16 %v9958, %v9950
    %v10671 = vpack.c.b16 %v9959, %v9951
    %v10672 = vpack.c.b16 %v9960, %v9952
    %v10673 = vpack.c.b16 %v9961, %v9953
    %v10674 = vpack.c.b16 %v9962, %v9954
    %v10675 = vpack.c.b16 %v9963, %v9955
    %v10676 = vpack.c.b16 %v9964, %v9956
    %v10677 = vpack.c.b16 %v9965, %v9957
    %v10678 = vpack.c.b16 %v9974, %v9966
    %v10679 = vpack.c.b16 %v9975, %v9967
    %v10680 = vpack.c.b16 %v9976, %v9968
    %v10681 = vpack.c.b16 %v9977, %v9969
    %v10682 = vpack.c.b16 %v9978, %v9970
    %v10683 = vpack.c.b16 %v9979, %v9971
    %v10684 = vpack.c.b16 %v9980, %v9972
    %v10685 = vpack.c.b16 %v9981, %v9973
    %v10686 = vpack.c.b16 %v9990, %v9982
    %v10687 = vpack.c.b16 %v9991, %v9983
    %v10688 = vpack.c.b16 %v9992, %v9984
    %v10689 = vpack.c.b16 %v9993, %v9985
    %v10690 = vpack.c.b16 %v9994, %v9986
    %v10691 = vpack.c.b16 %v9995, %v9987
    %v10692 = vpack.c.b16 %v9996, %v9988
    %v10693 = vpack.c.b16 %v9997, %v9989
    %v10694 = vpack.c.b16 %v10006, %v9998
    %v10695 = vpack.c.b16 %v10007, %v9999
    %v10696 = vpack.c.b16 %v10008, %v10000
    %v10697 = vpack.c.b16 %v10009, %v10001
    %v10698 = vpack.c.b16 %v10010, %v10002
    %v10699 = vpack.c.b16 %v10011, %v10003
    %v10700 = vpack.c.b16 %v10012, %v10004
    %v10701 = vpack.c.b16 %v10013, %v10005
    %v10702 = vpack.c.b16 %v10022, %v10014
    %v10703 = vpack.c.b16 %v10023, %v10015
    %v10704 = vpack.c.b16 %v10024, %v10016
    %v10705 = vpack.c.b16 %v10025, %v10017
    %v10706 = vpack.c.b16 %v10026, %v10018
    %v10707 = vpack.c.b16 %v10027, %v10019
    %v10708 = vpack.c.b16 %v10028, %v10020
    %v10709 = vpack.c.b16 %v10029, %v10021
    %v10710 = vpack.c.b16 %v10038, %v10030
    %v10711 = vpack.c.b16 %v10039, %v10031
    %v10712 = vpack.c.b16 %v10040, %v10032
    %v10713 = vpack.c.b16 %v10041, %v10033
    %v10714 = vpack.c.b16 %v10042, %v10034
    %v10715 = vpack.c.b16 %v10043, %v10035
    %v10716 = vpack.c.b16 %v10044, %v10036
    %v10717 = vpack.c.b16 %v10045, %v10037
    %v10718 = vpack.c.b16 %v10054, %v10046
    %v10719 = vpack.c.b16 %v10055, %v10047
    %v10720 = vpack.c.b16 %v10056, %v10048
    %v10721 = vpack.c.b16 %v10057, %v10049
    %v10722 = vpack.c.b16 %v10058, %v10050
    %v10723 = vpack.c.b16 %v10059, %v10051
    %v10724 = vpack.c.b16 %v10060, %v10052
    %v10725 = vpack.c.b16 %v10061, %v10053
    %v10726 = vpack.c.b16 %v10070, %v10062
    %v10727 = vpack.c.b16 %v10071, %v10063
    %v10728 = vpack.c.b16 %v10072, %v10064
    %v10729 = vpack.c.b16 %v10073, %v10065
    %v10730 = vpack.c.b16 %v10074, %v10066
    %v10731 = vpack.c.b16 %v10075, %v10067
    %v10732 = vpack.c.b16 %v10076, %v10068
    %v10733 = vpack.c.b16 %v10077, %v10069
    %v10734 = vpack.c.b16 %v10086, %v10078
    %v10735 = vpack.c.b16 %v10087, %v10079
    %v10736 = vpack.c.b16 %v10088, %v10080
    %v10737 = vpack.c.b16 %v10089, %v10081
    %v10738 = vpack.c.b16 %v10090, %v10082
    %v10739 = vpack.c.b16 %v10091, %v10083
    %v10740 = vpack.c.b16 %v10092, %v10084
    %v10741 = vpack.c.b16 %v10093, %v10085
    %v10742 = vpack.c.b16 %v10102, %v10094
    %v10743 = vpack.c.b16 %v10103, %v10095
    %v10744 = vpack.c.b16 %v10104, %v10096
    %v10745 = vpack.c.b16 %v10105, %v10097
    %v10746 = vpack.c.b16 %v10106, %v10098
    %v10747 = vpack.c.b16 %v10107, %v10099
    %v10748 = vpack.c.b16 %v10108, %v10100
    %v10749 = vpack.c.b16 %v10109, %v10101
    %v10750 = vpack.c.b16 %v10118, %v10110
    %v10751 = vpack.c.b16 %v10119, %v10111
    %v10752 = vpack.c.b16 %v10120, %v10112
    %v10753 = vpack.c.b16 %v10121, %v10113
    %v10754 = vpack.c.b16 %v10122, %v10114
    %v10755 = vpack.c.b16 %v10123, %v10115
    %v10756 = vpack.c.b16 %v10124, %v10116
    %v10757 = vpack.c.b16 %v10125, %v10117
    %v10758 = vpack.c.b16 %v10134, %v10126
    %v10759 = vpack.c.b16 %v10135, %v10127
    %v10760 = vpack.c.b16 %v10136, %v10128
    %v10761 = vpack.c.b16 %v10137, %v10129
    %v10762 = vpack.c.b16 %v10138, %v10130
    %v10763 = vpack.c.b16 %v10139, %v10131
    %v10764 = vpack.c.b16 %v10140, %v10132
    %v10765 = vpack.c.b16 %v10141, %v10133
    %v10766 = vpack.c.b16 %v10150, %v10142
    %v10767 = vpack.c.b16 %v10151, %v10143
    %v10768 = vpack.c.b16 %v10152, %v10144
    %v10769 = vpack.c.b16 %v10153, %v10145
    %v10770 = vpack.c.b16 %v10154, %v10146
    %v10771 = vpack.c.b16 %v10155, %v10147
    %v10772 = vpack.c.b16 %v10156, %v10148
    %v10773 = vpack.c.b16 %v10157, %v10149
    %v10774 = vpack.c.b16 %v10166, %v10158
    %v10775 = vpack.c.b16 %v10167, %v10159
    %v10776 = vpack.c.b16 %v10168, %v10160
    %v10777 = vpack.c.b16 %v10169, %v10161
    %v10778 = vpack.c.b16 %v10170, %v10162
    %v10779 = vpack.c.b16 %v10171, %v10163
    %v10780 = vpack.c.b16 %v10172, %v10164
    %v10781 = vpack.c.b16 %v10173, %v10165
    %v10782 = vpack.c.b16 %v10182, %v10174
    %v10783 = vpack.c.b16 %v10183, %v10175
    %v10784 = vpack.c.b16 %v10184, %v10176
    %v10785 = vpack.c.b16 %v10185, %v10177
    %v10786 = vpack.c.b16 %v10186, %v10178
    %v10787 = vpack.c.b16 %v10187, %v10179
    %v10788 = vpack.c.b16 %v10188, %v10180
    %v10789 = vpack.c.b16 %v10189, %v10181
    %v10790 = vpack.c.b16 %v10198, %v10190
    %v10791 = vpack.c.b16 %v10199, %v10191
    %v10792 = vpack.c.b16 %v10200, %v10192
    %v10793 = vpack.c.b16 %v10201, %v10193
    %v10794 = vpack.c.b16 %v10202, %v10194
    %v10795 = vpack.c.b16 %v10203, %v10195
    %v10796 = vpack.c.b16 %v10204, %v10196
    %v10797 = vpack.c.b16 %v10205, %v10197
    %v10798 = vpack.c.b16 %v10214, %v10206
    %v10799 = vpack.c.b16 %v10215, %v10207
    %v10800 = vpack.c.b16 %v10216, %v10208
    %v10801 = vpack.c.b16 %v10217, %v10209
    %v10802 = vpack.c.b16 %v10218, %v10210
    %v10803 = vpack.c.b16 %v10219, %v10211
    %v10804 = vpack.c.b16 %v10220, %v10212
    %v10805 = vpack.c.b16 %v10221, %v10213
    %v10806 = vpack.c.b16 %v10230, %v10222
    %v10807 = vpack.c.b16 %v10231, %v10223
    %v10808 = vpack.c.b16 %v10232, %v10224
    %v10809 = vpack.c.b16 %v10233, %v10225
    %v10810 = vpack.c.b16 %v10234, %v10226
    %v10811 = vpack.c.b16 %v10235, %v10227
    %v10812 = vpack.c.b16 %v10236, %v10228
    %v10813 = vpack.c.b16 %v10237, %v10229
    %v10814 = vpack.c.b16 %v10246, %v10238
    %v10815 = vpack.c.b16 %v10247, %v10239
    %v10816 = vpack.c.b16 %v10248, %v10240
    %v10817 = vpack.c.b16 %v10249, %v10241
    %v10818 = vpack.c.b16 %v10250, %v10242
    %v10819 = vpack.c.b16 %v10251, %v10243
    %v10820 = vpack.c.b16 %v10252, %v10244
    %v10821 = vpack.c.b16 %v10253, %v10245
    %v10822 = vpack.c.b16 %v10262, %v10254
    %v10823 = vpack.c.b16 %v10263, %v10255
    %v10824 = vpack.c.b16 %v10264, %v10256
    %v10825 = vpack.c.b16 %v10265, %v10257
    %v10826 = vpack.c.b16 %v10266, %v10258
    %v10827 = vpack.c.b16 %v10267, %v10259
    %v10828 = vpack.c.b16 %v10268, %v10260
    %v10829 = vpack.c.b16 %v10269, %v10261
    %v10830 = vpack.c.b16 %v10278, %v10270
    %v10831 = vpack.c.b16 %v10279, %v10271
    %v10832 = vpack.c.b16 %v10280, %v10272
    %v10833 = vpack.c.b16 %v10281, %v10273
    %v10834 = vpack.c.b16 %v10282, %v10274
    %v10835 = vpack.c.b16 %v10283, %v10275
    %v10836 = vpack.c.b16 %v10284, %v10276
    %v10837 = vpack.c.b16 %v10285, %v10277
    %v10838 = vpack.c.b16 %v10294, %v10286
    %v10839 = vpack.c.b16 %v10295, %v10287
    %v10840 = vpack.c.b16 %v10296, %v10288
    %v10841 = vpack.c.b16 %v10297, %v10289
    %v10842 = vpack.c.b16 %v10298, %v10290
    %v10843 = vpack.c.b16 %v10299, %v10291
    %v10844 = vpack.c.b16 %v10300, %v10292
    %v10845 = vpack.c.b16 %v10301, %v10293
    %v10846 = vpack.c.b16 %v10310, %v10302
    %v10847 = vpack.c.b16 %v10311, %v10303
    %v10848 = vpack.c.b16 %v10312, %v10304
    %v10849 = vpack.c.b16 %v10313, %v10305
    %v10850 = vpack.c.b16 %v10314, %v10306
    %v10851 = vpack.c.b16 %v10315, %v10307
    %v10852 = vpack.c.b16 %v10316, %v10308
    %v10853 = vpack.c.b16 %v10317, %v10309
    %v10854 = vpack.c.b16 %v10326, %v10318
    %v10855 = vpack.c.b16 %v10327, %v10319
    %v10856 = vpack.c.b16 %v10328, %v10320
    %v10857 = vpack.c.b16 %v10329, %v10321
    %v10858 = vpack.c.b16 %v10330, %v10322
    %v10859 = vpack.c.b16 %v10331, %v10323
    %v10860 = vpack.c.b16 %v10332, %v10324
    %v10861 = vpack.c.b16 %v10333, %v10325
    %v10862 = vpack.c.b16 %v10342, %v10334
    %v10863 = vpack.c.b16 %v10343, %v10335
    %v10864 = vpack.c.b16 %v10344, %v10336
    %v10865 = vpack.c.b16 %v10345, %v10337
    %v10866 = vpack.c.b16 %v10346, %v10338
    %v10867 = vpack.c.b16 %v10347, %v10339
    %v10868 = vpack.c.b16 %v10348, %v10340
    %v10869 = vpack.c.b16 %v10349, %v10341
    %v10870 = vpack.c.b16 %v10358, %v10350
    %v10871 = vpack.c.b16 %v10359, %v10351
    %v10872 = vpack.c.b16 %v10360, %v10352
    %v10873 = vpack.c.b16 %v10361, %v10353
    %v10874 = vpack.c.b16 %v10362, %v10354
    %v10875 = vpack.c.b16 %v10363, %v10355
    %v10876 = vpack.c.b16 %v10364, %v10356
    %v10877 = vpack.c.b16 %v10365, %v10357
    %11390 = vmatpush.bf16.msra.mxu0 %v10422
    %11391 = vmatpush.bf16.msra.mxu0 %v10414
    %11392 = vmatpush.bf16.msra.mxu0 %v10406
    %11393 = vmatpush.bf16.msra.mxu0 %v10398
    %11394 = vmatpush.bf16.msra.mxu0 %v10390
    %11395 = vmatpush.bf16.msra.mxu0 %v10382
    %11396 = vmatpush.bf16.msra.mxu0 %v10374
    %11397 = vmatpush.bf16.msra.mxu0 %v10366
    %11398 = vmatmul.bf16.gmra.mxu0 %v8292
    %v11399 = vpop.f32.mrf.mxu0
    %v11400 = vadd.f32 %v8814, %v11399
    %v11401 = vpop.f32.mrf.mxu0
    %11402 = vdwg.mxu0
    %11403 = vmatpush.bf16.msra.mxu0 %v10486
    %11404 = vmatpush.bf16.msra.mxu0 %v10478
    %11405 = vmatpush.bf16.msra.mxu0 %v10470
    %11406 = vmatpush.bf16.msra.mxu0 %v10462
    %11407 = vmatpush.bf16.msra.mxu0 %v10454
    %11408 = vmatpush.bf16.msra.mxu0 %v10446
    %11409 = vmatpush.bf16.msra.mxu0 %v10438
    %11410 = vmatpush.bf16.msra.mxu0 %v10430
    %11411 = vmatmul.bf16.gmra.mxu0 %v8293
    %v11412 = vpop.f32.mrf.mxu0
    %v11413 = vadd.f32 %v11400, %v11412
    %v11414 = vpop.f32.mrf.mxu0
    %11415 = vdwg.mxu0
    %11416 = vmatpush.bf16.msra.mxu0 %v10550
    %11417 = vmatpush.bf16.msra.mxu0 %v10542
    %11418 = vmatpush.bf16.msra.mxu0 %v10534
    %11419 = vmatpush.bf16.msra.mxu0 %v10526
    %11420 = vmatpush.bf16.msra.mxu0 %v10518
    %11421 = vmatpush.bf16.msra.mxu0 %v10510
    %11422 = vmatpush.bf16.msra.mxu0 %v10502
    %11423 = vmatpush.bf16.msra.mxu0 %v10494
    %11424 = vmatmul.bf16.gmra.mxu0 %v8294
    %v11425 = vpop.f32.mrf.mxu0
    %v11426 = vadd.f32 %v11413, %v11425
    %v11427 = vpop.f32.mrf.mxu0
    %11428 = vdwg.mxu0
    %11429 = vmatpush.bf16.msra.mxu0 %v10614
    %11430 = vmatpush.bf16.msra.mxu0 %v10606
    %11431 = vmatpush.bf16.msra.mxu0 %v10598
    %11432 = vmatpush.bf16.msra.mxu0 %v10590
    %11433 = vmatpush.bf16.msra.mxu0 %v10582
    %11434 = vmatpush.bf16.msra.mxu0 %v10574
    %11435 = vmatpush.bf16.msra.mxu0 %v10566
    %11436 = vmatpush.bf16.msra.mxu0 %v10558
    %11437 = vmatmul.bf16.gmra.mxu0 %v8295
    %v11438 = vpop.f32.mrf.mxu0
    %v11439 = vadd.f32 %v11426, %v11438
    %v11440 = vpop.f32.mrf.mxu0
    %11441 = vdwg.mxu0
    %11442 = vmatpush.bf16.msra.mxu0 %v10678
    %11443 = vmatpush.bf16.msra.mxu0 %v10670
    %11444 = vmatpush.bf16.msra.mxu0 %v10662
    %11445 = vmatpush.bf16.msra.mxu0 %v10654
    %11446 = vmatpush.bf16.msra.mxu0 %v10646
    %11447 = vmatpush.bf16.msra.mxu0 %v10638
    %11448 = vmatpush.bf16.msra.mxu0 %v10630
    %11449 = vmatpush.bf16.msra.mxu0 %v10622
    %11450 = vmatmul.bf16.gmra.mxu0 %v8296
    %v11451 = vpop.f32.mrf.mxu0
    %v11452 = vadd.f32 %v11439, %v11451
    %v11453 = vpop.f32.mrf.mxu0
    %11454 = vdwg.mxu0
    %11455 = vmatpush.bf16.msra.mxu0 %v10742
    %11456 = vmatpush.bf16.msra.mxu0 %v10734
    %11457 = vmatpush.bf16.msra.mxu0 %v10726
    %11458 = vmatpush.bf16.msra.mxu0 %v10718
    %11459 = vmatpush.bf16.msra.mxu0 %v10710
    %11460 = vmatpush.bf16.msra.mxu0 %v10702
    %11461 = vmatpush.bf16.msra.mxu0 %v10694
    %11462 = vmatpush.bf16.msra.mxu0 %v10686
    %11463 = vmatmul.bf16.gmra.mxu0 %v8297
    %v11464 = vpop.f32.mrf.mxu0
    %v11465 = vadd.f32 %v11452, %v11464
    %v11466 = vpop.f32.mrf.mxu0
    %11467 = vdwg.mxu0
    %11468 = vmatpush.bf16.msra.mxu0 %v10806
    %11469 = vmatpush.bf16.msra.mxu0 %v10798
    %11470 = vmatpush.bf16.msra.mxu0 %v10790
    %11471 = vmatpush.bf16.msra.mxu0 %v10782
    %11472 = vmatpush.bf16.msra.mxu0 %v10774
    %11473 = vmatpush.bf16.msra.mxu0 %v10766
    %11474 = vmatpush.bf16.msra.mxu0 %v10758
    %11475 = vmatpush.bf16.msra.mxu0 %v10750
    %11476 = vmatmul.bf16.gmra.mxu0 %v8298
    %v11477 = vpop.f32.mrf.mxu0
    %v11478 = vadd.f32 %v11465, %v11477
    %v11479 = vpop.f32.mrf.mxu0
    %11480 = vdwg.mxu0
    %11481 = vmatpush.bf16.msra.mxu0 %v10870
    %11482 = vmatpush.bf16.msra.mxu0 %v10862
    %11483 = vmatpush.bf16.msra.mxu0 %v10854
    %11484 = vmatpush.bf16.msra.mxu0 %v10846
    %11485 = vmatpush.bf16.msra.mxu0 %v10838
    %11486 = vmatpush.bf16.msra.mxu0 %v10830
    %11487 = vmatpush.bf16.msra.mxu0 %v10822
    %11488 = vmatpush.bf16.msra.mxu0 %v10814
    %11489 = vmatmul.bf16.gmra.mxu0 %v8299
    %v11490 = vpop.f32.mrf.mxu0
    %v11491 = vadd.f32 %v11478, %v11490
    %v11492 = vpop.f32.mrf.mxu0
    %11493 = vdwg.mxu0
    %11494 = vmatpush.bf16.msra.mxu0 %v10423
    %11495 = vmatpush.bf16.msra.mxu0 %v10415
    %11496 = vmatpush.bf16.msra.mxu0 %v10407
    %11497 = vmatpush.bf16.msra.mxu0 %v10399
    %11498 = vmatpush.bf16.msra.mxu0 %v10391
    %11499 = vmatpush.bf16.msra.mxu0 %v10383
    %11500 = vmatpush.bf16.msra.mxu0 %v10375
    %11501 = vmatpush.bf16.msra.mxu0 %v10367
    %11502 = vmatmul.bf16.gmra.mxu0 %v8292
    %v11503 = vpop.f32.mrf.mxu0
    %v11504 = vadd.f32 %v8815, %v11503
    %v11505 = vpop.f32.mrf.mxu0
    %11506 = vdwg.mxu0
    %11507 = vmatpush.bf16.msra.mxu0 %v10487
    %11508 = vmatpush.bf16.msra.mxu0 %v10479
    %11509 = vmatpush.bf16.msra.mxu0 %v10471
    %11510 = vmatpush.bf16.msra.mxu0 %v10463
    %11511 = vmatpush.bf16.msra.mxu0 %v10455
    %11512 = vmatpush.bf16.msra.mxu0 %v10447
    %11513 = vmatpush.bf16.msra.mxu0 %v10439
    %11514 = vmatpush.bf16.msra.mxu0 %v10431
    %11515 = vmatmul.bf16.gmra.mxu0 %v8293
    %v11516 = vpop.f32.mrf.mxu0
    %v11517 = vadd.f32 %v11504, %v11516
    %v11518 = vpop.f32.mrf.mxu0
    %11519 = vdwg.mxu0
    %11520 = vmatpush.bf16.msra.mxu0 %v10551
    %11521 = vmatpush.bf16.msra.mxu0 %v10543
    %11522 = vmatpush.bf16.msra.mxu0 %v10535
    %11523 = vmatpush.bf16.msra.mxu0 %v10527
    %11524 = vmatpush.bf16.msra.mxu0 %v10519
    %11525 = vmatpush.bf16.msra.mxu0 %v10511
    %11526 = vmatpush.bf16.msra.mxu0 %v10503
    %11527 = vmatpush.bf16.msra.mxu0 %v10495
    %11528 = vmatmul.bf16.gmra.mxu0 %v8294
    %v11529 = vpop.f32.mrf.mxu0
    %v11530 = vadd.f32 %v11517, %v11529
    %v11531 = vpop.f32.mrf.mxu0
    %11532 = vdwg.mxu0
    %11533 = vmatpush.bf16.msra.mxu0 %v10615
    %11534 = vmatpush.bf16.msra.mxu0 %v10607
    %11535 = vmatpush.bf16.msra.mxu0 %v10599
    %11536 = vmatpush.bf16.msra.mxu0 %v10591
    %11537 = vmatpush.bf16.msra.mxu0 %v10583
    %11538 = vmatpush.bf16.msra.mxu0 %v10575
    %11539 = vmatpush.bf16.msra.mxu0 %v10567
    %11540 = vmatpush.bf16.msra.mxu0 %v10559
    %11541 = vmatmul.bf16.gmra.mxu0 %v8295
    %v11542 = vpop.f32.mrf.mxu0
    %v11543 = vadd.f32 %v11530, %v11542
    %v11544 = vpop.f32.mrf.mxu0
    %11545 = vdwg.mxu0
    %11546 = vmatpush.bf16.msra.mxu0 %v10679
    %11547 = vmatpush.bf16.msra.mxu0 %v10671
    %11548 = vmatpush.bf16.msra.mxu0 %v10663
    %11549 = vmatpush.bf16.msra.mxu0 %v10655
    %11550 = vmatpush.bf16.msra.mxu0 %v10647
    %11551 = vmatpush.bf16.msra.mxu0 %v10639
    %11552 = vmatpush.bf16.msra.mxu0 %v10631
    %11553 = vmatpush.bf16.msra.mxu0 %v10623
    %11554 = vmatmul.bf16.gmra.mxu0 %v8296
    %v11555 = vpop.f32.mrf.mxu0
    %v11556 = vadd.f32 %v11543, %v11555
    %v11557 = vpop.f32.mrf.mxu0
    %11558 = vdwg.mxu0
    %11559 = vmatpush.bf16.msra.mxu0 %v10743
    %11560 = vmatpush.bf16.msra.mxu0 %v10735
    %11561 = vmatpush.bf16.msra.mxu0 %v10727
    %11562 = vmatpush.bf16.msra.mxu0 %v10719
    %11563 = vmatpush.bf16.msra.mxu0 %v10711
    %11564 = vmatpush.bf16.msra.mxu0 %v10703
    %11565 = vmatpush.bf16.msra.mxu0 %v10695
    %11566 = vmatpush.bf16.msra.mxu0 %v10687
    %11567 = vmatmul.bf16.gmra.mxu0 %v8297
    %v11568 = vpop.f32.mrf.mxu0
    %v11569 = vadd.f32 %v11556, %v11568
    %v11570 = vpop.f32.mrf.mxu0
    %11571 = vdwg.mxu0
    %11572 = vmatpush.bf16.msra.mxu0 %v10807
    %11573 = vmatpush.bf16.msra.mxu0 %v10799
    %11574 = vmatpush.bf16.msra.mxu0 %v10791
    %11575 = vmatpush.bf16.msra.mxu0 %v10783
    %11576 = vmatpush.bf16.msra.mxu0 %v10775
    %11577 = vmatpush.bf16.msra.mxu0 %v10767
    %11578 = vmatpush.bf16.msra.mxu0 %v10759
    %11579 = vmatpush.bf16.msra.mxu0 %v10751
    %11580 = vmatmul.bf16.gmra.mxu0 %v8298
    %v11581 = vpop.f32.mrf.mxu0
    %v11582 = vadd.f32 %v11569, %v11581
    %v11583 = vpop.f32.mrf.mxu0
    %11584 = vdwg.mxu0
    %11585 = vmatpush.bf16.msra.mxu0 %v10871
    %11586 = vmatpush.bf16.msra.mxu0 %v10863
    %11587 = vmatpush.bf16.msra.mxu0 %v10855
    %11588 = vmatpush.bf16.msra.mxu0 %v10847
    %11589 = vmatpush.bf16.msra.mxu0 %v10839
    %11590 = vmatpush.bf16.msra.mxu0 %v10831
    %11591 = vmatpush.bf16.msra.mxu0 %v10823
    %11592 = vmatpush.bf16.msra.mxu0 %v10815
    %11593 = vmatmul.bf16.gmra.mxu0 %v8299
    %v11594 = vpop.f32.mrf.mxu0
    %v11595 = vadd.f32 %v11582, %v11594
    %v11596 = vpop.f32.mrf.mxu0
    %11597 = vdwg.mxu0
    %11598 = vmatpush.bf16.msra.mxu0 %v10424
    %11599 = vmatpush.bf16.msra.mxu0 %v10416
    %11600 = vmatpush.bf16.msra.mxu0 %v10408
    %11601 = vmatpush.bf16.msra.mxu0 %v10400
    %11602 = vmatpush.bf16.msra.mxu0 %v10392
    %11603 = vmatpush.bf16.msra.mxu0 %v10384
    %11604 = vmatpush.bf16.msra.mxu0 %v10376
    %11605 = vmatpush.bf16.msra.mxu0 %v10368
    %11606 = vmatmul.bf16.gmra.mxu0 %v8292
    %v11607 = vpop.f32.mrf.mxu0
    %v11608 = vadd.f32 %v8816, %v11607
    %v11609 = vpop.f32.mrf.mxu0
    %11610 = vdwg.mxu0
    %11611 = vmatpush.bf16.msra.mxu0 %v10488
    %11612 = vmatpush.bf16.msra.mxu0 %v10480
    %11613 = vmatpush.bf16.msra.mxu0 %v10472
    %11614 = vmatpush.bf16.msra.mxu0 %v10464
    %11615 = vmatpush.bf16.msra.mxu0 %v10456
    %11616 = vmatpush.bf16.msra.mxu0 %v10448
    %11617 = vmatpush.bf16.msra.mxu0 %v10440
    %11618 = vmatpush.bf16.msra.mxu0 %v10432
    %11619 = vmatmul.bf16.gmra.mxu0 %v8293
    %v11620 = vpop.f32.mrf.mxu0
    %v11621 = vadd.f32 %v11608, %v11620
    %v11622 = vpop.f32.mrf.mxu0
    %11623 = vdwg.mxu0
    %11624 = vmatpush.bf16.msra.mxu0 %v10552
    %11625 = vmatpush.bf16.msra.mxu0 %v10544
    %11626 = vmatpush.bf16.msra.mxu0 %v10536
    %11627 = vmatpush.bf16.msra.mxu0 %v10528
    %11628 = vmatpush.bf16.msra.mxu0 %v10520
    %11629 = vmatpush.bf16.msra.mxu0 %v10512
    %11630 = vmatpush.bf16.msra.mxu0 %v10504
    %11631 = vmatpush.bf16.msra.mxu0 %v10496
    %11632 = vmatmul.bf16.gmra.mxu0 %v8294
    %v11633 = vpop.f32.mrf.mxu0
    %v11634 = vadd.f32 %v11621, %v11633
    %v11635 = vpop.f32.mrf.mxu0
    %11636 = vdwg.mxu0
    %11637 = vmatpush.bf16.msra.mxu0 %v10616
    %11638 = vmatpush.bf16.msra.mxu0 %v10608
    %11639 = vmatpush.bf16.msra.mxu0 %v10600
    %11640 = vmatpush.bf16.msra.mxu0 %v10592
    %11641 = vmatpush.bf16.msra.mxu0 %v10584
    %11642 = vmatpush.bf16.msra.mxu0 %v10576
    %11643 = vmatpush.bf16.msra.mxu0 %v10568
    %11644 = vmatpush.bf16.msra.mxu0 %v10560
    %11645 = vmatmul.bf16.gmra.mxu0 %v8295
    %v11646 = vpop.f32.mrf.mxu0
    %v11647 = vadd.f32 %v11634, %v11646
    %v11648 = vpop.f32.mrf.mxu0
    %11649 = vdwg.mxu0
    %11650 = vmatpush.bf16.msra.mxu0 %v10680
    %11651 = vmatpush.bf16.msra.mxu0 %v10672
    %11652 = vmatpush.bf16.msra.mxu0 %v10664
    %11653 = vmatpush.bf16.msra.mxu0 %v10656
    %11654 = vmatpush.bf16.msra.mxu0 %v10648
    %11655 = vmatpush.bf16.msra.mxu0 %v10640
    %11656 = vmatpush.bf16.msra.mxu0 %v10632
    %11657 = vmatpush.bf16.msra.mxu0 %v10624
    %11658 = vmatmul.bf16.gmra.mxu0 %v8296
    %v11659 = vpop.f32.mrf.mxu0
    %v11660 = vadd.f32 %v11647, %v11659
    %v11661 = vpop.f32.mrf.mxu0
    %11662 = vdwg.mxu0
    %11663 = vmatpush.bf16.msra.mxu0 %v10744
    %11664 = vmatpush.bf16.msra.mxu0 %v10736
    %11665 = vmatpush.bf16.msra.mxu0 %v10728
    %11666 = vmatpush.bf16.msra.mxu0 %v10720
    %11667 = vmatpush.bf16.msra.mxu0 %v10712
    %11668 = vmatpush.bf16.msra.mxu0 %v10704
    %11669 = vmatpush.bf16.msra.mxu0 %v10696
    %11670 = vmatpush.bf16.msra.mxu0 %v10688
    %11671 = vmatmul.bf16.gmra.mxu0 %v8297
    %v11672 = vpop.f32.mrf.mxu0
    %v11673 = vadd.f32 %v11660, %v11672
    %v11674 = vpop.f32.mrf.mxu0
    %11675 = vdwg.mxu0
    %11676 = vmatpush.bf16.msra.mxu0 %v10808
    %11677 = vmatpush.bf16.msra.mxu0 %v10800
    %11678 = vmatpush.bf16.msra.mxu0 %v10792
    %11679 = vmatpush.bf16.msra.mxu0 %v10784
    %11680 = vmatpush.bf16.msra.mxu0 %v10776
    %11681 = vmatpush.bf16.msra.mxu0 %v10768
    %11682 = vmatpush.bf16.msra.mxu0 %v10760
    %11683 = vmatpush.bf16.msra.mxu0 %v10752
    %11684 = vmatmul.bf16.gmra.mxu0 %v8298
    %v11685 = vpop.f32.mrf.mxu0
    %v11686 = vadd.f32 %v11673, %v11685
    %v11687 = vpop.f32.mrf.mxu0
    %11688 = vdwg.mxu0
    %11689 = vmatpush.bf16.msra.mxu0 %v10872
    %11690 = vmatpush.bf16.msra.mxu0 %v10864
    %11691 = vmatpush.bf16.msra.mxu0 %v10856
    %11692 = vmatpush.bf16.msra.mxu0 %v10848
    %11693 = vmatpush.bf16.msra.mxu0 %v10840
    %11694 = vmatpush.bf16.msra.mxu0 %v10832
    %11695 = vmatpush.bf16.msra.mxu0 %v10824
    %11696 = vmatpush.bf16.msra.mxu0 %v10816
    %11697 = vmatmul.bf16.gmra.mxu0 %v8299
    %v11698 = vpop.f32.mrf.mxu0
    %v11699 = vadd.f32 %v11686, %v11698
    %v11700 = vpop.f32.mrf.mxu0
    %11701 = vdwg.mxu0
    %11702 = vmatpush.bf16.msra.mxu0 %v10425
    %11703 = vmatpush.bf16.msra.mxu0 %v10417
    %11704 = vmatpush.bf16.msra.mxu0 %v10409
    %11705 = vmatpush.bf16.msra.mxu0 %v10401
    %11706 = vmatpush.bf16.msra.mxu0 %v10393
    %11707 = vmatpush.bf16.msra.mxu0 %v10385
    %11708 = vmatpush.bf16.msra.mxu0 %v10377
    %11709 = vmatpush.bf16.msra.mxu0 %v10369
    %11710 = vmatmul.bf16.gmra.mxu0 %v8292
    %v11711 = vpop.f32.mrf.mxu0
    %v11712 = vadd.f32 %v8817, %v11711
    %v11713 = vpop.f32.mrf.mxu0
    %11714 = vdwg.mxu0
    %11715 = vmatpush.bf16.msra.mxu0 %v10489
    %11716 = vmatpush.bf16.msra.mxu0 %v10481
    %11717 = vmatpush.bf16.msra.mxu0 %v10473
    %11718 = vmatpush.bf16.msra.mxu0 %v10465
    %11719 = vmatpush.bf16.msra.mxu0 %v10457
    %11720 = vmatpush.bf16.msra.mxu0 %v10449
    %11721 = vmatpush.bf16.msra.mxu0 %v10441
    %11722 = vmatpush.bf16.msra.mxu0 %v10433
    %11723 = vmatmul.bf16.gmra.mxu0 %v8293
    %v11724 = vpop.f32.mrf.mxu0
    %v11725 = vadd.f32 %v11712, %v11724
    %v11726 = vpop.f32.mrf.mxu0
    %11727 = vdwg.mxu0
    %11728 = vmatpush.bf16.msra.mxu0 %v10553
    %11729 = vmatpush.bf16.msra.mxu0 %v10545
    %11730 = vmatpush.bf16.msra.mxu0 %v10537
    %11731 = vmatpush.bf16.msra.mxu0 %v10529
    %11732 = vmatpush.bf16.msra.mxu0 %v10521
    %11733 = vmatpush.bf16.msra.mxu0 %v10513
    %11734 = vmatpush.bf16.msra.mxu0 %v10505
    %11735 = vmatpush.bf16.msra.mxu0 %v10497
    %11736 = vmatmul.bf16.gmra.mxu0 %v8294
    %v11737 = vpop.f32.mrf.mxu0
    %v11738 = vadd.f32 %v11725, %v11737
    %v11739 = vpop.f32.mrf.mxu0
    %11740 = vdwg.mxu0
    %11741 = vmatpush.bf16.msra.mxu0 %v10617
    %11742 = vmatpush.bf16.msra.mxu0 %v10609
    %11743 = vmatpush.bf16.msra.mxu0 %v10601
    %11744 = vmatpush.bf16.msra.mxu0 %v10593
    %11745 = vmatpush.bf16.msra.mxu0 %v10585
    %11746 = vmatpush.bf16.msra.mxu0 %v10577
    %11747 = vmatpush.bf16.msra.mxu0 %v10569
    %11748 = vmatpush.bf16.msra.mxu0 %v10561
    %11749 = vmatmul.bf16.gmra.mxu0 %v8295
    %v11750 = vpop.f32.mrf.mxu0
    %v11751 = vadd.f32 %v11738, %v11750
    %v11752 = vpop.f32.mrf.mxu0
    %11753 = vdwg.mxu0
    %11754 = vmatpush.bf16.msra.mxu0 %v10681
    %11755 = vmatpush.bf16.msra.mxu0 %v10673
    %11756 = vmatpush.bf16.msra.mxu0 %v10665
    %11757 = vmatpush.bf16.msra.mxu0 %v10657
    %11758 = vmatpush.bf16.msra.mxu0 %v10649
    %11759 = vmatpush.bf16.msra.mxu0 %v10641
    %11760 = vmatpush.bf16.msra.mxu0 %v10633
    %11761 = vmatpush.bf16.msra.mxu0 %v10625
    %11762 = vmatmul.bf16.gmra.mxu0 %v8296
    %v11763 = vpop.f32.mrf.mxu0
    %v11764 = vadd.f32 %v11751, %v11763
    %v11765 = vpop.f32.mrf.mxu0
    %11766 = vdwg.mxu0
    %11767 = vmatpush.bf16.msra.mxu0 %v10745
    %11768 = vmatpush.bf16.msra.mxu0 %v10737
    %11769 = vmatpush.bf16.msra.mxu0 %v10729
    %11770 = vmatpush.bf16.msra.mxu0 %v10721
    %11771 = vmatpush.bf16.msra.mxu0 %v10713
    %11772 = vmatpush.bf16.msra.mxu0 %v10705
    %11773 = vmatpush.bf16.msra.mxu0 %v10697
    %11774 = vmatpush.bf16.msra.mxu0 %v10689
    %11775 = vmatmul.bf16.gmra.mxu0 %v8297
    %v11776 = vpop.f32.mrf.mxu0
    %v11777 = vadd.f32 %v11764, %v11776
    %v11778 = vpop.f32.mrf.mxu0
    %11779 = vdwg.mxu0
    %11780 = vmatpush.bf16.msra.mxu0 %v10809
    %11781 = vmatpush.bf16.msra.mxu0 %v10801
    %11782 = vmatpush.bf16.msra.mxu0 %v10793
    %11783 = vmatpush.bf16.msra.mxu0 %v10785
    %11784 = vmatpush.bf16.msra.mxu0 %v10777
    %11785 = vmatpush.bf16.msra.mxu0 %v10769
    %11786 = vmatpush.bf16.msra.mxu0 %v10761
    %11787 = vmatpush.bf16.msra.mxu0 %v10753
    %11788 = vmatmul.bf16.gmra.mxu0 %v8298
    %v11789 = vpop.f32.mrf.mxu0
    %v11790 = vadd.f32 %v11777, %v11789
    %v11791 = vpop.f32.mrf.mxu0
    %11792 = vdwg.mxu0
    %11793 = vmatpush.bf16.msra.mxu0 %v10873
    %11794 = vmatpush.bf16.msra.mxu0 %v10865
    %11795 = vmatpush.bf16.msra.mxu0 %v10857
    %11796 = vmatpush.bf16.msra.mxu0 %v10849
    %11797 = vmatpush.bf16.msra.mxu0 %v10841
    %11798 = vmatpush.bf16.msra.mxu0 %v10833
    %11799 = vmatpush.bf16.msra.mxu0 %v10825
    %11800 = vmatpush.bf16.msra.mxu0 %v10817
    %11801 = vmatmul.bf16.gmra.mxu0 %v8299
    %v11802 = vpop.f32.mrf.mxu0
    %v11803 = vadd.f32 %v11790, %v11802
    %v11804 = vpop.f32.mrf.mxu0
    %11805 = vdwg.mxu0
    %11806 = vmatpush.bf16.msra.mxu0 %v10426
    %11807 = vmatpush.bf16.msra.mxu0 %v10418
    %11808 = vmatpush.bf16.msra.mxu0 %v10410
    %11809 = vmatpush.bf16.msra.mxu0 %v10402
    %11810 = vmatpush.bf16.msra.mxu0 %v10394
    %11811 = vmatpush.bf16.msra.mxu0 %v10386
    %11812 = vmatpush.bf16.msra.mxu0 %v10378
    %11813 = vmatpush.bf16.msra.mxu0 %v10370
    %11814 = vmatmul.bf16.gmra.mxu0 %v8292
    %v11815 = vpop.f32.mrf.mxu0
    %v11816 = vadd.f32 %v8818, %v11815
    %v11817 = vpop.f32.mrf.mxu0
    %11818 = vdwg.mxu0
    %11819 = vmatpush.bf16.msra.mxu0 %v10490
    %11820 = vmatpush.bf16.msra.mxu0 %v10482
    %11821 = vmatpush.bf16.msra.mxu0 %v10474
    %11822 = vmatpush.bf16.msra.mxu0 %v10466
    %11823 = vmatpush.bf16.msra.mxu0 %v10458
    %11824 = vmatpush.bf16.msra.mxu0 %v10450
    %11825 = vmatpush.bf16.msra.mxu0 %v10442
    %11826 = vmatpush.bf16.msra.mxu0 %v10434
    %11827 = vmatmul.bf16.gmra.mxu0 %v8293
    %v11828 = vpop.f32.mrf.mxu0
    %v11829 = vadd.f32 %v11816, %v11828
    %v11830 = vpop.f32.mrf.mxu0
    %11831 = vdwg.mxu0
    %11832 = vmatpush.bf16.msra.mxu0 %v10554
    %11833 = vmatpush.bf16.msra.mxu0 %v10546
    %11834 = vmatpush.bf16.msra.mxu0 %v10538
    %11835 = vmatpush.bf16.msra.mxu0 %v10530
    %11836 = vmatpush.bf16.msra.mxu0 %v10522
    %11837 = vmatpush.bf16.msra.mxu0 %v10514
    %11838 = vmatpush.bf16.msra.mxu0 %v10506
    %11839 = vmatpush.bf16.msra.mxu0 %v10498
    %11840 = vmatmul.bf16.gmra.mxu0 %v8294
    %v11841 = vpop.f32.mrf.mxu0
    %v11842 = vadd.f32 %v11829, %v11841
    %v11843 = vpop.f32.mrf.mxu0
    %11844 = vdwg.mxu0
    %11845 = vmatpush.bf16.msra.mxu0 %v10618
    %11846 = vmatpush.bf16.msra.mxu0 %v10610
    %11847 = vmatpush.bf16.msra.mxu0 %v10602
    %11848 = vmatpush.bf16.msra.mxu0 %v10594
    %11849 = vmatpush.bf16.msra.mxu0 %v10586
    %11850 = vmatpush.bf16.msra.mxu0 %v10578
    %11851 = vmatpush.bf16.msra.mxu0 %v10570
    %11852 = vmatpush.bf16.msra.mxu0 %v10562
    %11853 = vmatmul.bf16.gmra.mxu0 %v8295
    %v11854 = vpop.f32.mrf.mxu0
    %v11855 = vadd.f32 %v11842, %v11854
    %v11856 = vpop.f32.mrf.mxu0
    %11857 = vdwg.mxu0
    %11858 = vmatpush.bf16.msra.mxu0 %v10682
    %11859 = vmatpush.bf16.msra.mxu0 %v10674
    %11860 = vmatpush.bf16.msra.mxu0 %v10666
    %11861 = vmatpush.bf16.msra.mxu0 %v10658
    %11862 = vmatpush.bf16.msra.mxu0 %v10650
    %11863 = vmatpush.bf16.msra.mxu0 %v10642
    %11864 = vmatpush.bf16.msra.mxu0 %v10634
    %11865 = vmatpush.bf16.msra.mxu0 %v10626
    %11866 = vmatmul.bf16.gmra.mxu0 %v8296
    %v11867 = vpop.f32.mrf.mxu0
    %v11868 = vadd.f32 %v11855, %v11867
    %v11869 = vpop.f32.mrf.mxu0
    %11870 = vdwg.mxu0
    %11871 = vmatpush.bf16.msra.mxu0 %v10746
    %11872 = vmatpush.bf16.msra.mxu0 %v10738
    %11873 = vmatpush.bf16.msra.mxu0 %v10730
    %11874 = vmatpush.bf16.msra.mxu0 %v10722
    %11875 = vmatpush.bf16.msra.mxu0 %v10714
    %11876 = vmatpush.bf16.msra.mxu0 %v10706
    %11877 = vmatpush.bf16.msra.mxu0 %v10698
    %11878 = vmatpush.bf16.msra.mxu0 %v10690
    %11879 = vmatmul.bf16.gmra.mxu0 %v8297
    %v11880 = vpop.f32.mrf.mxu0
    %v11881 = vadd.f32 %v11868, %v11880
    %v11882 = vpop.f32.mrf.mxu0
    %11883 = vdwg.mxu0
    %11884 = vmatpush.bf16.msra.mxu0 %v10810
    %11885 = vmatpush.bf16.msra.mxu0 %v10802
    %11886 = vmatpush.bf16.msra.mxu0 %v10794
    %11887 = vmatpush.bf16.msra.mxu0 %v10786
    %11888 = vmatpush.bf16.msra.mxu0 %v10778
    %11889 = vmatpush.bf16.msra.mxu0 %v10770
    %11890 = vmatpush.bf16.msra.mxu0 %v10762
    %11891 = vmatpush.bf16.msra.mxu0 %v10754
    %11892 = vmatmul.bf16.gmra.mxu0 %v8298
    %v11893 = vpop.f32.mrf.mxu0
    %v11894 = vadd.f32 %v11881, %v11893
    %v11895 = vpop.f32.mrf.mxu0
    %11896 = vdwg.mxu0
    %11897 = vmatpush.bf16.msra.mxu0 %v10874
    %11898 = vmatpush.bf16.msra.mxu0 %v10866
    %11899 = vmatpush.bf16.msra.mxu0 %v10858
    %11900 = vmatpush.bf16.msra.mxu0 %v10850
    %11901 = vmatpush.bf16.msra.mxu0 %v10842
    %11902 = vmatpush.bf16.msra.mxu0 %v10834
    %11903 = vmatpush.bf16.msra.mxu0 %v10826
    %11904 = vmatpush.bf16.msra.mxu0 %v10818
    %11905 = vmatmul.bf16.gmra.mxu0 %v8299
    %v11906 = vpop.f32.mrf.mxu0
    %v11907 = vadd.f32 %v11894, %v11906
    %v11908 = vpop.f32.mrf.mxu0
    %11909 = vdwg.mxu0
    %11910 = vmatpush.bf16.msra.mxu0 %v10427
    %11911 = vmatpush.bf16.msra.mxu0 %v10419
    %11912 = vmatpush.bf16.msra.mxu0 %v10411
    %11913 = vmatpush.bf16.msra.mxu0 %v10403
    %11914 = vmatpush.bf16.msra.mxu0 %v10395
    %11915 = vmatpush.bf16.msra.mxu0 %v10387
    %11916 = vmatpush.bf16.msra.mxu0 %v10379
    %11917 = vmatpush.bf16.msra.mxu0 %v10371
    %11918 = vmatmul.bf16.gmra.mxu0 %v8292
    %v11919 = vpop.f32.mrf.mxu0
    %v11920 = vadd.f32 %v8819, %v11919
    %v11921 = vpop.f32.mrf.mxu0
    %11922 = vdwg.mxu0
    %11923 = vmatpush.bf16.msra.mxu0 %v10491
    %11924 = vmatpush.bf16.msra.mxu0 %v10483
    %11925 = vmatpush.bf16.msra.mxu0 %v10475
    %11926 = vmatpush.bf16.msra.mxu0 %v10467
    %11927 = vmatpush.bf16.msra.mxu0 %v10459
    %11928 = vmatpush.bf16.msra.mxu0 %v10451
    %11929 = vmatpush.bf16.msra.mxu0 %v10443
    %11930 = vmatpush.bf16.msra.mxu0 %v10435
    %11931 = vmatmul.bf16.gmra.mxu0 %v8293
    %v11932 = vpop.f32.mrf.mxu0
    %v11933 = vadd.f32 %v11920, %v11932
    %v11934 = vpop.f32.mrf.mxu0
    %11935 = vdwg.mxu0
    %11936 = vmatpush.bf16.msra.mxu0 %v10555
    %11937 = vmatpush.bf16.msra.mxu0 %v10547
    %11938 = vmatpush.bf16.msra.mxu0 %v10539
    %11939 = vmatpush.bf16.msra.mxu0 %v10531
    %11940 = vmatpush.bf16.msra.mxu0 %v10523
    %11941 = vmatpush.bf16.msra.mxu0 %v10515
    %11942 = vmatpush.bf16.msra.mxu0 %v10507
    %11943 = vmatpush.bf16.msra.mxu0 %v10499
    %11944 = vmatmul.bf16.gmra.mxu0 %v8294
    %v11945 = vpop.f32.mrf.mxu0
    %v11946 = vadd.f32 %v11933, %v11945
    %v11947 = vpop.f32.mrf.mxu0
    %11948 = vdwg.mxu0
    %11949 = vmatpush.bf16.msra.mxu0 %v10619
    %11950 = vmatpush.bf16.msra.mxu0 %v10611
    %11951 = vmatpush.bf16.msra.mxu0 %v10603
    %11952 = vmatpush.bf16.msra.mxu0 %v10595
    %11953 = vmatpush.bf16.msra.mxu0 %v10587
    %11954 = vmatpush.bf16.msra.mxu0 %v10579
    %11955 = vmatpush.bf16.msra.mxu0 %v10571
    %11956 = vmatpush.bf16.msra.mxu0 %v10563
    %11957 = vmatmul.bf16.gmra.mxu0 %v8295
    %v11958 = vpop.f32.mrf.mxu0
    %v11959 = vadd.f32 %v11946, %v11958
    %v11960 = vpop.f32.mrf.mxu0
    %11961 = vdwg.mxu0
    %11962 = vmatpush.bf16.msra.mxu0 %v10683
    %11963 = vmatpush.bf16.msra.mxu0 %v10675
    %11964 = vmatpush.bf16.msra.mxu0 %v10667
    %11965 = vmatpush.bf16.msra.mxu0 %v10659
    %11966 = vmatpush.bf16.msra.mxu0 %v10651
    %11967 = vmatpush.bf16.msra.mxu0 %v10643
    %11968 = vmatpush.bf16.msra.mxu0 %v10635
    %11969 = vmatpush.bf16.msra.mxu0 %v10627
    %11970 = vmatmul.bf16.gmra.mxu0 %v8296
    %v11971 = vpop.f32.mrf.mxu0
    %v11972 = vadd.f32 %v11959, %v11971
    %v11973 = vpop.f32.mrf.mxu0
    %11974 = vdwg.mxu0
    %11975 = vmatpush.bf16.msra.mxu0 %v10747
    %11976 = vmatpush.bf16.msra.mxu0 %v10739
    %11977 = vmatpush.bf16.msra.mxu0 %v10731
    %11978 = vmatpush.bf16.msra.mxu0 %v10723
    %11979 = vmatpush.bf16.msra.mxu0 %v10715
    %11980 = vmatpush.bf16.msra.mxu0 %v10707
    %11981 = vmatpush.bf16.msra.mxu0 %v10699
    %11982 = vmatpush.bf16.msra.mxu0 %v10691
    %11983 = vmatmul.bf16.gmra.mxu0 %v8297
    %v11984 = vpop.f32.mrf.mxu0
    %v11985 = vadd.f32 %v11972, %v11984
    %v11986 = vpop.f32.mrf.mxu0
    %11987 = vdwg.mxu0
    %11988 = vmatpush.bf16.msra.mxu0 %v10811
    %11989 = vmatpush.bf16.msra.mxu0 %v10803
    %11990 = vmatpush.bf16.msra.mxu0 %v10795
    %11991 = vmatpush.bf16.msra.mxu0 %v10787
    %11992 = vmatpush.bf16.msra.mxu0 %v10779
    %11993 = vmatpush.bf16.msra.mxu0 %v10771
    %11994 = vmatpush.bf16.msra.mxu0 %v10763
    %11995 = vmatpush.bf16.msra.mxu0 %v10755
    %11996 = vmatmul.bf16.gmra.mxu0 %v8298
    %v11997 = vpop.f32.mrf.mxu0
    %v11998 = vadd.f32 %v11985, %v11997
    %v11999 = vpop.f32.mrf.mxu0
    %12000 = vdwg.mxu0
    %12001 = vmatpush.bf16.msra.mxu0 %v10875
    %12002 = vmatpush.bf16.msra.mxu0 %v10867
    %12003 = vmatpush.bf16.msra.mxu0 %v10859
    %12004 = vmatpush.bf16.msra.mxu0 %v10851
    %12005 = vmatpush.bf16.msra.mxu0 %v10843
    %12006 = vmatpush.bf16.msra.mxu0 %v10835
    %12007 = vmatpush.bf16.msra.mxu0 %v10827
    %12008 = vmatpush.bf16.msra.mxu0 %v10819
    %12009 = vmatmul.bf16.gmra.mxu0 %v8299
    %v12010 = vpop.f32.mrf.mxu0
    %v12011 = vadd.f32 %v11998, %v12010
    %v12012 = vpop.f32.mrf.mxu0
    %12013 = vdwg.mxu0
    %12014 = vmatpush.bf16.msra.mxu0 %v10428
    %12015 = vmatpush.bf16.msra.mxu0 %v10420
    %12016 = vmatpush.bf16.msra.mxu0 %v10412
    %12017 = vmatpush.bf16.msra.mxu0 %v10404
    %12018 = vmatpush.bf16.msra.mxu0 %v10396
    %12019 = vmatpush.bf16.msra.mxu0 %v10388
    %12020 = vmatpush.bf16.msra.mxu0 %v10380
    %12021 = vmatpush.bf16.msra.mxu0 %v10372
    %12022 = vmatmul.bf16.gmra.mxu0 %v8292
    %v12023 = vpop.f32.mrf.mxu0
    %v12024 = vadd.f32 %v8820, %v12023
    %v12025 = vpop.f32.mrf.mxu0
    %12026 = vdwg.mxu0
    %12027 = vmatpush.bf16.msra.mxu0 %v10492
    %12028 = vmatpush.bf16.msra.mxu0 %v10484
    %12029 = vmatpush.bf16.msra.mxu0 %v10476
    %12030 = vmatpush.bf16.msra.mxu0 %v10468
    %12031 = vmatpush.bf16.msra.mxu0 %v10460
    %12032 = vmatpush.bf16.msra.mxu0 %v10452
    %12033 = vmatpush.bf16.msra.mxu0 %v10444
    %12034 = vmatpush.bf16.msra.mxu0 %v10436
    %12035 = vmatmul.bf16.gmra.mxu0 %v8293
    %v12036 = vpop.f32.mrf.mxu0
    %v12037 = vadd.f32 %v12024, %v12036
    %v12038 = vpop.f32.mrf.mxu0
    %12039 = vdwg.mxu0
    %12040 = vmatpush.bf16.msra.mxu0 %v10556
    %12041 = vmatpush.bf16.msra.mxu0 %v10548
    %12042 = vmatpush.bf16.msra.mxu0 %v10540
    %12043 = vmatpush.bf16.msra.mxu0 %v10532
    %12044 = vmatpush.bf16.msra.mxu0 %v10524
    %12045 = vmatpush.bf16.msra.mxu0 %v10516
    %12046 = vmatpush.bf16.msra.mxu0 %v10508
    %12047 = vmatpush.bf16.msra.mxu0 %v10500
    %12048 = vmatmul.bf16.gmra.mxu0 %v8294
    %v12049 = vpop.f32.mrf.mxu0
    %v12050 = vadd.f32 %v12037, %v12049
    %v12051 = vpop.f32.mrf.mxu0
    %12052 = vdwg.mxu0
    %12053 = vmatpush.bf16.msra.mxu0 %v10620
    %12054 = vmatpush.bf16.msra.mxu0 %v10612
    %12055 = vmatpush.bf16.msra.mxu0 %v10604
    %12056 = vmatpush.bf16.msra.mxu0 %v10596
    %12057 = vmatpush.bf16.msra.mxu0 %v10588
    %12058 = vmatpush.bf16.msra.mxu0 %v10580
    %12059 = vmatpush.bf16.msra.mxu0 %v10572
    %12060 = vmatpush.bf16.msra.mxu0 %v10564
    %12061 = vmatmul.bf16.gmra.mxu0 %v8295
    %v12062 = vpop.f32.mrf.mxu0
    %v12063 = vadd.f32 %v12050, %v12062
    %v12064 = vpop.f32.mrf.mxu0
    %12065 = vdwg.mxu0
    %12066 = vmatpush.bf16.msra.mxu0 %v10684
    %12067 = vmatpush.bf16.msra.mxu0 %v10676
    %12068 = vmatpush.bf16.msra.mxu0 %v10668
    %12069 = vmatpush.bf16.msra.mxu0 %v10660
    %12070 = vmatpush.bf16.msra.mxu0 %v10652
    %12071 = vmatpush.bf16.msra.mxu0 %v10644
    %12072 = vmatpush.bf16.msra.mxu0 %v10636
    %12073 = vmatpush.bf16.msra.mxu0 %v10628
    %12074 = vmatmul.bf16.gmra.mxu0 %v8296
    %v12075 = vpop.f32.mrf.mxu0
    %v12076 = vadd.f32 %v12063, %v12075
    %v12077 = vpop.f32.mrf.mxu0
    %12078 = vdwg.mxu0
    %12079 = vmatpush.bf16.msra.mxu0 %v10748
    %12080 = vmatpush.bf16.msra.mxu0 %v10740
    %12081 = vmatpush.bf16.msra.mxu0 %v10732
    %12082 = vmatpush.bf16.msra.mxu0 %v10724
    %12083 = vmatpush.bf16.msra.mxu0 %v10716
    %12084 = vmatpush.bf16.msra.mxu0 %v10708
    %12085 = vmatpush.bf16.msra.mxu0 %v10700
    %12086 = vmatpush.bf16.msra.mxu0 %v10692
    %12087 = vmatmul.bf16.gmra.mxu0 %v8297
    %v12088 = vpop.f32.mrf.mxu0
    %v12089 = vadd.f32 %v12076, %v12088
    %v12090 = vpop.f32.mrf.mxu0
    %12091 = vdwg.mxu0
    %12092 = vmatpush.bf16.msra.mxu0 %v10812
    %12093 = vmatpush.bf16.msra.mxu0 %v10804
    %12094 = vmatpush.bf16.msra.mxu0 %v10796
    %12095 = vmatpush.bf16.msra.mxu0 %v10788
    %12096 = vmatpush.bf16.msra.mxu0 %v10780
    %12097 = vmatpush.bf16.msra.mxu0 %v10772
    %12098 = vmatpush.bf16.msra.mxu0 %v10764
    %12099 = vmatpush.bf16.msra.mxu0 %v10756
    %12100 = vmatmul.bf16.gmra.mxu0 %v8298
    %v12101 = vpop.f32.mrf.mxu0
    %v12102 = vadd.f32 %v12089, %v12101
    %v12103 = vpop.f32.mrf.mxu0
    %12104 = vdwg.mxu0
    %12105 = vmatpush.bf16.msra.mxu0 %v10876
    %12106 = vmatpush.bf16.msra.mxu0 %v10868
    %12107 = vmatpush.bf16.msra.mxu0 %v10860
    %12108 = vmatpush.bf16.msra.mxu0 %v10852
    %12109 = vmatpush.bf16.msra.mxu0 %v10844
    %12110 = vmatpush.bf16.msra.mxu0 %v10836
    %12111 = vmatpush.bf16.msra.mxu0 %v10828
    %12112 = vmatpush.bf16.msra.mxu0 %v10820
    %12113 = vmatmul.bf16.gmra.mxu0 %v8299
    %v12114 = vpop.f32.mrf.mxu0
    %v12115 = vadd.f32 %v12102, %v12114
    %v12116 = vpop.f32.mrf.mxu0
    %12117 = vdwg.mxu0
    %12118 = vmatpush.bf16.msra.mxu0 %v10429
    %12119 = vmatpush.bf16.msra.mxu0 %v10421
    %12120 = vmatpush.bf16.msra.mxu0 %v10413
    %12121 = vmatpush.bf16.msra.mxu0 %v10405
    %12122 = vmatpush.bf16.msra.mxu0 %v10397
    %12123 = vmatpush.bf16.msra.mxu0 %v10389
    %12124 = vmatpush.bf16.msra.mxu0 %v10381
    %12125 = vmatpush.bf16.msra.mxu0 %v10373
    %12126 = vmatmul.bf16.gmra.mxu0 %v8292
    %v12127 = vpop.f32.mrf.mxu0
    %v12128 = vadd.f32 %v8821, %v12127
    %v12129 = vpop.f32.mrf.mxu0
    %12130 = vdwg.mxu0
    %12131 = vmatpush.bf16.msra.mxu0 %v10493
    %12132 = vmatpush.bf16.msra.mxu0 %v10485
    %12133 = vmatpush.bf16.msra.mxu0 %v10477
    %12134 = vmatpush.bf16.msra.mxu0 %v10469
    %12135 = vmatpush.bf16.msra.mxu0 %v10461
    %12136 = vmatpush.bf16.msra.mxu0 %v10453
    %12137 = vmatpush.bf16.msra.mxu0 %v10445
    %12138 = vmatpush.bf16.msra.mxu0 %v10437
    %12139 = vmatmul.bf16.gmra.mxu0 %v8293
    %v12140 = vpop.f32.mrf.mxu0
    %v12141 = vadd.f32 %v12128, %v12140
    %v12142 = vpop.f32.mrf.mxu0
    %12143 = vdwg.mxu0
    %12144 = vmatpush.bf16.msra.mxu0 %v10557
    %12145 = vmatpush.bf16.msra.mxu0 %v10549
    %12146 = vmatpush.bf16.msra.mxu0 %v10541
    %12147 = vmatpush.bf16.msra.mxu0 %v10533
    %12148 = vmatpush.bf16.msra.mxu0 %v10525
    %12149 = vmatpush.bf16.msra.mxu0 %v10517
    %12150 = vmatpush.bf16.msra.mxu0 %v10509
    %12151 = vmatpush.bf16.msra.mxu0 %v10501
    %12152 = vmatmul.bf16.gmra.mxu0 %v8294
    %v12153 = vpop.f32.mrf.mxu0
    %v12154 = vadd.f32 %v12141, %v12153
    %v12155 = vpop.f32.mrf.mxu0
    %12156 = vdwg.mxu0
    %12157 = vmatpush.bf16.msra.mxu0 %v10621
    %12158 = vmatpush.bf16.msra.mxu0 %v10613
    %12159 = vmatpush.bf16.msra.mxu0 %v10605
    %12160 = vmatpush.bf16.msra.mxu0 %v10597
    %12161 = vmatpush.bf16.msra.mxu0 %v10589
    %12162 = vmatpush.bf16.msra.mxu0 %v10581
    %12163 = vmatpush.bf16.msra.mxu0 %v10573
    %12164 = vmatpush.bf16.msra.mxu0 %v10565
    %12165 = vmatmul.bf16.gmra.mxu0 %v8295
    %v12166 = vpop.f32.mrf.mxu0
    %v12167 = vadd.f32 %v12154, %v12166
    %v12168 = vpop.f32.mrf.mxu0
    %12169 = vdwg.mxu0
    %12170 = vmatpush.bf16.msra.mxu0 %v10685
    %12171 = vmatpush.bf16.msra.mxu0 %v10677
    %12172 = vmatpush.bf16.msra.mxu0 %v10669
    %12173 = vmatpush.bf16.msra.mxu0 %v10661
    %12174 = vmatpush.bf16.msra.mxu0 %v10653
    %12175 = vmatpush.bf16.msra.mxu0 %v10645
    %12176 = vmatpush.bf16.msra.mxu0 %v10637
    %12177 = vmatpush.bf16.msra.mxu0 %v10629
    %12178 = vmatmul.bf16.gmra.mxu0 %v8296
    %v12179 = vpop.f32.mrf.mxu0
    %v12180 = vadd.f32 %v12167, %v12179
    %v12181 = vpop.f32.mrf.mxu0
    %12182 = vdwg.mxu0
    %12183 = vmatpush.bf16.msra.mxu0 %v10749
    %12184 = vmatpush.bf16.msra.mxu0 %v10741
    %12185 = vmatpush.bf16.msra.mxu0 %v10733
    %12186 = vmatpush.bf16.msra.mxu0 %v10725
    %12187 = vmatpush.bf16.msra.mxu0 %v10717
    %12188 = vmatpush.bf16.msra.mxu0 %v10709
    %12189 = vmatpush.bf16.msra.mxu0 %v10701
    %12190 = vmatpush.bf16.msra.mxu0 %v10693
    %12191 = vmatmul.bf16.gmra.mxu0 %v8297
    %v12192 = vpop.f32.mrf.mxu0
    %v12193 = vadd.f32 %v12180, %v12192
    %v12194 = vpop.f32.mrf.mxu0
    %12195 = vdwg.mxu0
    %12196 = vmatpush.bf16.msra.mxu0 %v10813
    %12197 = vmatpush.bf16.msra.mxu0 %v10805
    %12198 = vmatpush.bf16.msra.mxu0 %v10797
    %12199 = vmatpush.bf16.msra.mxu0 %v10789
    %12200 = vmatpush.bf16.msra.mxu0 %v10781
    %12201 = vmatpush.bf16.msra.mxu0 %v10773
    %12202 = vmatpush.bf16.msra.mxu0 %v10765
    %12203 = vmatpush.bf16.msra.mxu0 %v10757
    %12204 = vmatmul.bf16.gmra.mxu0 %v8298
    %v12205 = vpop.f32.mrf.mxu0
    %v12206 = vadd.f32 %v12193, %v12205
    %v12207 = vpop.f32.mrf.mxu0
    %12208 = vdwg.mxu0
    %12209 = vmatpush.bf16.msra.mxu0 %v10877
    %12210 = vmatpush.bf16.msra.mxu0 %v10869
    %12211 = vmatpush.bf16.msra.mxu0 %v10861
    %12212 = vmatpush.bf16.msra.mxu0 %v10853
    %12213 = vmatpush.bf16.msra.mxu0 %v10845
    %12214 = vmatpush.bf16.msra.mxu0 %v10837
    %12215 = vmatpush.bf16.msra.mxu0 %v10829
    %12216 = vmatpush.bf16.msra.mxu0 %v10821
    %12217 = vmatmul.bf16.gmra.mxu0 %v8299
    %v12218 = vpop.f32.mrf.mxu0
    %v12219 = vadd.f32 %v12206, %v12218
    %v12220 = vpop.f32.mrf.mxu0
    %12221 = vdwg.mxu0
    %v12222 = vmax.f32 %v11491, 0.0
    %v12223 = vmax.f32 %v11595, 0.0
    %v12224 = vmax.f32 %v11699, 0.0
    %v12225 = vmax.f32 %v11803, 0.0
    %v12226 = vmax.f32 %v11907, 0.0
    %v12227 = vmax.f32 %v12011, 0.0
    %v12228 = vmax.f32 %v12115, 0.0
    %v12229 = vmax.f32 %v12219, 0.0
    %v12230 = vld [vmem:[#allocation17] sm:$0xff]
    %v12231 = vunpack.c.l.bf16 %v12230
    %v12232 = vunpack.c.h.bf16 %v12230
    %v12235 = vperm.slane %v12231, 0
    %v12236 = vperm.slane %v12231, 2
    %v12237 = vperm.slane %v12231, 4
    %v12238 = vperm.slane %v12231, 6
    %v12239 = vperm.slane %v12232, 0
    %v12240 = vperm.slane %v12232, 2
    %v12241 = vperm.slane %v12232, 4
    %v12242 = vperm.slane %v12232, 6
    %v12251 = vperm.slane %v12235, 0
    %v12252 = vperm.slane %v12236, 0
    %v12253 = vperm.slane %v12237, 0
    %v12254 = vperm.slane %v12238, 0
    %v12255 = vperm.slane %v12239, 0
    %v12256 = vperm.slane %v12240, 0
    %v12257 = vperm.slane %v12241, 0
    %v12258 = vperm.slane %v12242, 0
    %v12259 = vmul.f32 %v12222, %v12251
    %v12260 = vmul.f32 %v12223, %v12252
    %v12261 = vmul.f32 %v12224, %v12253
    %v12262 = vmul.f32 %v12225, %v12254
    %v12263 = vmul.f32 %v12226, %v12255
    %v12264 = vmul.f32 %v12227, %v12256
    %v12265 = vmul.f32 %v12228, %v12257
    %v12266 = vmul.f32 %v12229, %v12258
    %v12267 = vadd.f32 %v12259, %v12260
    %v12268 = vadd.f32 %v12267, %v12261
    %v12269 = vadd.f32 %v12268, %v12262
    %v12270 = vadd.f32 %v12269, %v12263
    %v12271 = vadd.f32 %v12270, %v12264
    %v12272 = vadd.f32 %v12271, %v12265
    %v12273 = vadd.f32 %v12272, %v12266
    %12274 = vadd.xlane.f32.xlu0 %v12273
    %v12275 = vpop.xlane.xlu0 %12274
    %v12276 = vld [vmem:[#allocation2] sm:$0x1]
    %v12278 = vperm.slane %v12276, 0
    %v12280 = vadd.f32 %v12275, %v12278
    %vm12281 = vcmask 7168
    %12282 = vst.msk [vmem:[%s11] sm:$0xff] %vm12281, %v12280
    // Predicated region
    $region86: #{tpu_custom_call.1} parent=1 // pred_check
      _
    $region87: #{tpu_custom_call.1} parent=1 // pred_check_branch
      %12284 = sbr.rel (0) target = $region89
    $region88: #{tpu_custom_call.1} parent=1 // pred_region
      _
    $region89: #{tpu_custom_call.1} parent=1 // pred_fallthru
      _
    // Predicated region
    $region90: #{tpu_custom_call.1} parent=1 // pred_check
      _
    $region91: #{tpu_custom_call.1} parent=1 // pred_check_branch
      %12286 = sbr.rel (0) target = $region93
    $region92: #{tpu_custom_call.1} parent=1 // pred_region
      _
    $region93: #{tpu_custom_call.1} parent=1 // pred_fallthru
      _
    %12287 = vsyncpa [#allocation4], 1
    %12288 = vsyncpa [#allocation6], 1
    %12289 = vsyncpa [#allocation9], 1
    %12290 = vsyncpa [#allocation12], 1
    %12291 = vsyncpa [#allocation15], 1
    %12292 = vsyncpa [#allocation18], 1

</llo_original>
